<compile_context>
chip_gen: v6e
topology: v6e:2x2x1
jax: 0.10.0
libtpu: 0.0.40
codegen_flags: <defaults>
</compile_context>

<pallas_src>
import functools

import jax
import jax.numpy as jnp
from jax.experimental import pallas as pl
from jax.experimental.pallas import tpu as pltpu


def basic_block_kernel(x_ref, b1_ref, s1_ref, t1_ref,
                       b2_ref, s2_ref, t2_ref, o_ref, *, img_h):
    # x_ref  : (M, W*Cin)        activation rows; channels folded into the lanes
    # b*_ref : (W*Cin, 3*W*Cout) banded conv matrix, three ky taps concatenated
    #                            along the output (lane) axis
    # s*/t*  : (1, W*Cout)       folded BatchNorm scale / bias (tiled over W)
    # o_ref  : (M, W*Cout)
    M = x_ref.shape[0]
    WCout = o_ref.shape[1]
    cdt = b1_ref.dtype                     # matmul operand dtype (bf16 or f32)

    x = x_ref[...]                         # f32; reused for the residual add

    # Banded shift matrices that pick the row above / below *within* each
    # image.  Built from iota so both the top/bottom zero padding and the
    # boundaries between images packed into one block are handled exactly.
    ri = jax.lax.broadcasted_iota(jnp.int32, (M, M), 0)
    cj = jax.lax.broadcasted_iota(jnp.int32, (M, M), 1)
    row_above = jnp.where((cj == ri - 1) & (ri % img_h != 0), 1.0, 0.0)
    row_below = jnp.where((cj == ri + 1) & (ri % img_h != img_h - 1), 1.0, 0.0)

    def conv3x3(act, bcat_ref):
        # One MXU matmul covers all 9 taps: K = W*Cin, N = 3*W*Cout.
        p = jnp.dot(act.astype(cdt), bcat_ref[...],
                    preferred_element_type=jnp.float32)      # (M, 3*W*Cout)
        p_top = p[:, 0:WCout]              # ky = 0 tap -> needs input row h-1
        p_mid = p[:, WCout:2 * WCout]      # ky = 1 tap
        p_bot = p[:, 2 * WCout:]           # ky = 2 tap -> needs input row h+1
        return (jnp.dot(row_above, p_top, preferred_element_type=jnp.float32)
                + p_mid
                + jnp.dot(row_below, p_bot, preferred_element_type=jnp.float32))

    y = conv3x3(x, b1_ref)
    y = jnp.maximum(y * s1_ref[...] + t1_ref[...], 0.0)      # BN1 (folded) + ReLU
    y = conv3x3(y, b2_ref)
    y = y * s2_ref[...] + t2_ref[...]                        # BN2 (folded)
    o_ref[...] = jnp.maximum(y + x, 0.0)                     # identity residual + ReLU


def _banded_conv_matrix(w_hwio, width):
    """(3,3,Cin,Cout) HWIO weights -> (width*Cin, 3*width*Cout) banded matrix.

    Row index is wi*Cin + ci, column index is ky*(width*Cout) + wo*Cout + co,
    holding w[ky, wi-wo+1, ci, co]; taps that fall outside [0, width) simply
    have no entry, reproducing the conv's zero padding along W.
    """
    kh, kw, cin, cout = w_hwio.shape
    # sel[kx, wi, wo] = 1 where wi == wo + kx - 1
    sel = jnp.stack([jnp.eye(width, k=1 - kx, dtype=w_hwio.dtype)
                     for kx in range(kw)])
    b = jnp.einsum("xab,yxio->yaibo", sel, w_hwio)            # (kh, W, Cin, W, Cout)
    b = b.reshape(kh, width * cin, width * cout)
    return jnp.concatenate([b[k] for k in range(kh)], axis=1)  # (W*Cin, kh*W*Cout)


@functools.partial(jax.jit,
                   static_argnames=("eps", "block_batch", "compute_dtype"))
def basic_block_forward(x_nchw, w1_oihw, gamma1, beta1, mean1, var1,
                        w2_oihw, gamma2, beta2, mean2, var2,
                        eps=1e-5, block_batch=1, compute_dtype=jnp.bfloat16):
    N, C, H, W = x_nchw.shape
    Cout = w1_oihw.shape[0]
    if Cout != C:
        # Identity residual requires inplanes == planes (module default:
        # stride=1, downsample=None).  TODO(synk): downsample branch.
        raise NotImplementedError("BasicBlock kernel requires inplanes == planes")
    if N % block_batch != 0:
        block_batch = 1

    WCin, WCout = W * C, W * Cout

    # NCHW -> (N*H, W*C): channels ride the lane dimension together with W,
    # making the minor dim lane-dense (128 for the test shape).
    x2d = jnp.transpose(x_nchw, (0, 2, 3, 1)).reshape(N * H, WCin)
    x2d = x2d.astype(jnp.float32)

    # OIHW -> HWIO, then banded conv matrices (MXU operands in compute_dtype).
    w1 = jnp.transpose(w1_oihw, (2, 3, 1, 0)).astype(jnp.float32)
    w2 = jnp.transpose(w2_oihw, (2, 3, 1, 0)).astype(jnp.float32)
    b1cat = _banded_conv_matrix(w1, W).astype(compute_dtype)   # (WCin, 3*WCout)
    b2cat = _banded_conv_matrix(w2, W).astype(compute_dtype)   # (WCout, 3*WCout)

    # Fold eval-mode BatchNorm into per-channel scale/bias, tiled over W so it
    # broadcasts directly over the (wo*Cout + co) lane layout.
    inv1 = gamma1 / jnp.sqrt(var1 + eps)
    inv2 = gamma2 / jnp.sqrt(var2 + eps)
    s1 = jnp.tile(inv1, W).reshape(1, WCout).astype(jnp.float32)
    t1 = jnp.tile(beta1 - mean1 * inv1, W).reshape(1, WCout).astype(jnp.float32)
    s2 = jnp.tile(inv2, W).reshape(1, WCout).astype(jnp.float32)
    t2 = jnp.tile(beta2 - mean2 * inv2, W).reshape(1, WCout).astype(jnp.float32)

    mb = block_batch * H                     # activation rows per grid step
    kernel = functools.partial(basic_block_kernel, img_h=H)

    out2d = pl.pallas_call(
        kernel,
        out_shape=jax.ShapeDtypeStruct((N * H, WCout), jnp.float32),
        grid_spec=pltpu.PrefetchScalarGridSpec(
            num_scalar_prefetch=0,
            grid=(N // block_batch,),
            in_specs=[
                pl.BlockSpec((mb, WCin), lambda i: (i, 0)),
                pl.BlockSpec((WCin, 3 * WCout), lambda i: (0, 0)),
                pl.BlockSpec((1, WCout), lambda i: (0, 0)),
                pl.BlockSpec((1, WCout), lambda i: (0, 0)),
                pl.BlockSpec((WCout, 3 * WCout), lambda i: (0, 0)),
                pl.BlockSpec((1, WCout), lambda i: (0, 0)),
                pl.BlockSpec((1, WCout), lambda i: (0, 0)),
            ],
            out_specs=pl.BlockSpec((mb, WCout), lambda i: (i, 0)),
        ),
        compiler_params=pltpu.CompilerParams(
            dimension_semantics=("parallel",),
            vmem_limit_bytes=32 * 1024 * 1024),
    )(x2d, b1cat, s1, t1, b2cat, s2, t2)

    out = out2d.reshape(N, H, W, Cout)
    return jnp.transpose(out, (0, 3, 1, 2))  # back to NCHW


def _reference(x_nchw, w1, g1, be1, m1, v1, w2, g2, be2, m2, v2, eps=1e-5):
    """Plain-JAX (f32) reference of the same forward pass (NCHW)."""
    def conv(x, w):
        return jax.lax.conv_general_dilated(
            x, w, window_strides=(1, 1), padding=((1, 1), (1, 1)),
            dimension_numbers=("NCHW", "OIHW", "NCHW"))

    def bn(x, g, b, m, v):
        inv = g / jnp.sqrt(v + eps)
        return x * inv[None, :, None, None] + (b - m * inv)[None, :, None, None]

    out = jax.nn.relu(bn(conv(x_nchw, w1), g1, be1, m1, v1))
    out = bn(conv(out, w2), g2, be2, m2, v2)
    return jax.nn.relu(out + x_nchw)


if __name__ == "__main__":
    # BasicBlock(inplanes=8, planes=8): identity residual works (Cin == Cout),
    # and W*C = 16*8 = 128 makes the lane dimension exactly full.
    N, C, H, W = 2, 8, 16, 16
    planes = 8

    key = jax.random.PRNGKey(0)
    kx, kw1, kw2, kg1, kg2, kb1, kb2, km1, km2, kv1, kv2 = jax.random.split(key, 11)

    x = jax.random.normal(kx, (N, C, H, W), dtype=jnp.float32)

    w1 = 0.1 * jax.random.normal(kw1, (planes, C, 3, 3), dtype=jnp.float32)
    w2 = 0.1 * jax.random.normal(kw2, (planes, planes, 3, 3), dtype=jnp.float32)

    gamma1 = 1.0 + 0.1 * jax.random.normal(kg1, (planes,), dtype=jnp.float32)
    beta1 = 0.1 * jax.random.normal(kb1, (planes,), dtype=jnp.float32)
    mean1 = 0.05 * jax.random.normal(km1, (planes,), dtype=jnp.float32)
    var1 = 1.0 + 0.1 * jnp.abs(jax.random.normal(kv1, (planes,), dtype=jnp.float32))

    gamma2 = 1.0 + 0.1 * jax.random.normal(kg2, (planes,), dtype=jnp.float32)
    beta2 = 0.1 * jax.random.normal(kb2, (planes,), dtype=jnp.float32)
    mean2 = 0.05 * jax.random.normal(km2, (planes,), dtype=jnp.float32)
    var2 = 1.0 + 0.1 * jnp.abs(jax.random.normal(kv2, (planes,), dtype=jnp.float32))

    args = (x, w1, gamma1, beta1, mean1, var1, w2, gamma2, beta2, mean2, var2)

    # Default (performance) path: bf16 MXU operands, f32 accumulation.
    out_bf16 = jax.block_until_ready(basic_block_forward(*args))
    # Exact-math path for a tight correctness check.
    out_f32 = jax.block_until_ready(
        basic_block_forward(*args, compute_dtype=jnp.float32))

    ref = jax.block_until_ready(_reference(*args))

    assert out_bf16.shape == (N, planes, H, W), out_bf16.shape
    err_f32 = float(jnp.max(jnp.abs(out_f32 - ref)))
    assert err_f32 < 1e-4, err_f32
    # bf16 operand rounding (f32 accumulation) across two 3x3 convs on O(1)
    # activations gives ~1e-2 worst-case abs error; 5e-2 is a safe bound.
    err_bf16 = float(jnp.max(jnp.abs(out_bf16 - ref)))
    assert err_bf16 < 5e-2, err_bf16

    print("KERNEL_OK")
</pallas_src>

<mosaic_0001>
module attributes {stable_mosaic.version = 11 : i64} {
  func.func @basic_block_kernel(%arg0: i32, %arg1: memref<16x128xf32, #tpu.memory_space<vmem>>, %arg2: memref<128x384xbf16, #tpu.memory_space<vmem>>, %arg3: memref<1x128xf32, #tpu.memory_space<vmem>>, %arg4: memref<1x128xf32, #tpu.memory_space<vmem>>, %arg5: memref<128x384xbf16, #tpu.memory_space<vmem>>, %arg6: memref<1x128xf32, #tpu.memory_space<vmem>>, %arg7: memref<1x128xf32, #tpu.memory_space<vmem>>, %arg8: memref<16x128xf32, #tpu.memory_space<vmem>>) attributes {dimension_semantics = [#tpu.dimension_semantics<parallel>], iteration_bounds = array<i64: 2>, scalar_prefetch = 0 : i64, scratch_operands = 0 : i64, tpu.core_type = #tpu.core_type<tc>, window_params = [{transform_indices = @transform_0, window_bounds = array<i64: 16, 128>}, {pipeline_mode = #tpu.pipeline_mode<synchronous>, transform_indices = @transform_1, window_bounds = array<i64: 128, 384>}, {pipeline_mode = #tpu.pipeline_mode<synchronous>, transform_indices = @transform_2, window_bounds = array<i64: 1, 128>}, {pipeline_mode = #tpu.pipeline_mode<synchronous>, transform_indices = @transform_3, window_bounds = array<i64: 1, 128>}, {pipeline_mode = #tpu.pipeline_mode<synchronous>, transform_indices = @transform_4, window_bounds = array<i64: 128, 384>}, {pipeline_mode = #tpu.pipeline_mode<synchronous>, transform_indices = @transform_5, window_bounds = array<i64: 1, 128>}, {pipeline_mode = #tpu.pipeline_mode<synchronous>, transform_indices = @transform_6, window_bounds = array<i64: 1, 128>}, {transform_indices = @transform_7, window_bounds = array<i64: 16, 128>}]} {
    %c0 = arith.constant 0 : index
    %c0_0 = arith.constant 0 : index
    %0 = vector.load %arg1[%c0, %c0_0] : memref<16x128xf32, #tpu.memory_space<vmem>>, vector<16x128xf32>
    %1 = tpu.iota {dimensions = array<i32: 0>} : vector<16x16xi32>
    %2 = tpu.iota {dimensions = array<i32: 1>} : vector<16x16xi32>
    %c1_i32 = arith.constant 1 : i32
    %3 = vector.broadcast %c1_i32 : i32 to vector<16x16xi32>
    %4 = arith.subi %1, %3 : vector<16x16xi32>
    %5 = arith.cmpi eq, %2, %4 : vector<16x16xi32>
    %c16_i32 = arith.constant 16 : i32
    %c0_i32 = arith.constant 0 : i32
    %6 = arith.cmpi eq, %c16_i32, %c0_i32 : i32
    %c1_i32_1 = arith.constant 1 : i32
    %7 = arith.select %6, %c1_i32_1, %c16_i32 : i32
    %8 = vector.broadcast %7 : i32 to vector<16x16xi32>
    %9 = arith.remsi %1, %8 : vector<16x16xi32>
    %c0_i32_2 = arith.constant 0 : i32
    %10 = vector.broadcast %c0_i32_2 : i32 to vector<16x16xi32>
    %11 = arith.cmpi ne, %9, %10 : vector<16x16xi32>
    %c0_i32_3 = arith.constant 0 : i32
    %12 = vector.broadcast %c0_i32_3 : i32 to vector<16x16xi32>
    %13 = arith.cmpi slt, %9, %12 : vector<16x16xi32>
    %c0_i32_4 = arith.constant 0 : i32
    %14 = arith.cmpi slt, %7, %c0_i32_4 : i32
    %15 = vector.broadcast %14 : i1 to vector<16x16xi1>
    %16 = vector.broadcast %15 : vector<16x16xi1> to vector<16x16xi1>
    %17 = arith.xori %13, %16 : vector<16x16xi1>
    %18 = arith.andi %17, %11 : vector<16x16xi1>
    %19 = vector.broadcast %7 : i32 to vector<16x16xi32>
    %20 = arith.addi %9, %19 : vector<16x16xi32>
    %21 = arith.select %18, %20, %9 : vector<16x16xi1>, vector<16x16xi32>
    %c0_i32_5 = arith.constant 0 : i32
    %22 = vector.broadcast %c0_i32_5 : i32 to vector<16x16xi32>
    %23 = arith.cmpi ne, %21, %22 : vector<16x16xi32>
    %24 = arith.andi %5, %23 : vector<16x16xi1>
    %cst = arith.constant 1.000000e+00 : f32
    %cst_6 = arith.constant 0.000000e+00 : f32
    %25 = vector.broadcast %cst : f32 to vector<16x16xf32>
    %26 = vector.broadcast %cst_6 : f32 to vector<16x16xf32>
    %27 = arith.select %24, %25, %26 : vector<16x16xi1>, vector<16x16xf32>
    %c1_i32_7 = arith.constant 1 : i32
    %28 = vector.broadcast %c1_i32_7 : i32 to vector<16x16xi32>
    %29 = arith.addi %1, %28 : vector<16x16xi32>
    %30 = arith.cmpi eq, %2, %29 : vector<16x16xi32>
    %c16_i32_8 = arith.constant 16 : i32
    %c0_i32_9 = arith.constant 0 : i32
    %31 = arith.cmpi eq, %c16_i32_8, %c0_i32_9 : i32
    %c1_i32_10 = arith.constant 1 : i32
    %32 = arith.select %31, %c1_i32_10, %c16_i32_8 : i32
    %33 = vector.broadcast %32 : i32 to vector<16x16xi32>
    %34 = arith.remsi %1, %33 : vector<16x16xi32>
    %c0_i32_11 = arith.constant 0 : i32
    %35 = vector.broadcast %c0_i32_11 : i32 to vector<16x16xi32>
    %36 = arith.cmpi ne, %34, %35 : vector<16x16xi32>
    %c0_i32_12 = arith.constant 0 : i32
    %37 = vector.broadcast %c0_i32_12 : i32 to vector<16x16xi32>
    %38 = arith.cmpi slt, %34, %37 : vector<16x16xi32>
    %c0_i32_13 = arith.constant 0 : i32
    %39 = arith.cmpi slt, %32, %c0_i32_13 : i32
    %40 = vector.broadcast %39 : i1 to vector<16x16xi1>
    %41 = vector.broadcast %40 : vector<16x16xi1> to vector<16x16xi1>
    %42 = arith.xori %38, %41 : vector<16x16xi1>
    %43 = arith.andi %42, %36 : vector<16x16xi1>
    %44 = vector.broadcast %32 : i32 to vector<16x16xi32>
    %45 = arith.addi %34, %44 : vector<16x16xi32>
    %46 = arith.select %43, %45, %34 : vector<16x16xi1>, vector<16x16xi32>
    %c15_i32 = arith.constant 15 : i32
    %47 = vector.broadcast %c15_i32 : i32 to vector<16x16xi32>
    %48 = arith.cmpi ne, %46, %47 : vector<16x16xi32>
    %49 = arith.andi %30, %48 : vector<16x16xi1>
    %cst_14 = arith.constant 1.000000e+00 : f32
    %cst_15 = arith.constant 0.000000e+00 : f32
    %50 = vector.broadcast %cst_14 : f32 to vector<16x16xf32>
    %51 = vector.broadcast %cst_15 : f32 to vector<16x16xf32>
    %52 = arith.select %49, %50, %51 : vector<16x16xi1>, vector<16x16xf32>
    %53 = arith.truncf %0 : vector<16x128xf32> to vector<16x128xbf16>
    %c0_16 = arith.constant 0 : index
    %c0_17 = arith.constant 0 : index
    %54 = vector.load %arg2[%c0_16, %c0_17] : memref<128x384xbf16, #tpu.memory_space<vmem>>, vector<128x384xbf16>
    %cst_18 = arith.constant dense<0.000000e+00> : vector<16x384xf32>
    %55 = tpu.matmul %53, %54, %cst_18 {dimension_numbers = #tpu.dot_dimension_numbers<[1], [0], [0], [1], [0, 0, 1, 1], [], []>} : vector<16x128xbf16>, vector<128x384xbf16>, vector<16x384xf32> -> vector<16x384xf32>
    %56 = vector.extract_strided_slice %55 {offsets = [0, 0], sizes = [16, 128], strides = [1, 1]} : vector<16x384xf32> to vector<16x128xf32>
    %57 = vector.extract_strided_slice %55 {offsets = [0, 128], sizes = [16, 128], strides = [1, 1]} : vector<16x384xf32> to vector<16x128xf32>
    %58 = vector.extract_strided_slice %55 {offsets = [0, 256], sizes = [16, 128], strides = [1, 1]} : vector<16x384xf32> to vector<16x128xf32>
    %cst_19 = arith.constant dense<0.000000e+00> : vector<16x128xf32>
    %59 = tpu.matmul %27, %56, %cst_19 {dimension_numbers = #tpu.dot_dimension_numbers<[1], [0], [0], [1], [0, 0, 1, 1], [], []>} : vector<16x16xf32>, vector<16x128xf32>, vector<16x128xf32> -> vector<16x128xf32>
    %60 = arith.addf %59, %57 : vector<16x128xf32>
    %cst_20 = arith.constant dense<0.000000e+00> : vector<16x128xf32>
    %61 = tpu.matmul %52, %58, %cst_20 {dimension_numbers = #tpu.dot_dimension_numbers<[1], [0], [0], [1], [0, 0, 1, 1], [], []>} : vector<16x16xf32>, vector<16x128xf32>, vector<16x128xf32> -> vector<16x128xf32>
    %62 = arith.addf %60, %61 : vector<16x128xf32>
    %c0_21 = arith.constant 0 : index
    %c0_22 = arith.constant 0 : index
    %63 = vector.load %arg3[%c0_21, %c0_22] : memref<1x128xf32, #tpu.memory_space<vmem>>, vector<1x128xf32>
    %64 = vector.broadcast %63 : vector<1x128xf32> to vector<16x128xf32>
    %65 = arith.mulf %62, %64 : vector<16x128xf32>
    %c0_23 = arith.constant 0 : index
    %c0_24 = arith.constant 0 : index
    %66 = vector.load %arg4[%c0_23, %c0_24] : memref<1x128xf32, #tpu.memory_space<vmem>>, vector<1x128xf32>
    %67 = vector.broadcast %66 : vector<1x128xf32> to vector<16x128xf32>
    %68 = arith.addf %65, %67 : vector<16x128xf32>
    %cst_25 = arith.constant 0.000000e+00 : f32
    %69 = vector.broadcast %cst_25 : f32 to vector<16x128xf32>
    %70 = arith.maximumf %68, %69 : vector<16x128xf32>
    %71 = arith.truncf %70 : vector<16x128xf32> to vector<16x128xbf16>
    %c0_26 = arith.constant 0 : index
    %c0_27 = arith.constant 0 : index
    %72 = vector.load %arg5[%c0_26, %c0_27] : memref<128x384xbf16, #tpu.memory_space<vmem>>, vector<128x384xbf16>
    %cst_28 = arith.constant dense<0.000000e+00> : vector<16x384xf32>
    %73 = tpu.matmul %71, %72, %cst_28 {dimension_numbers = #tpu.dot_dimension_numbers<[1], [0], [0], [1], [0, 0, 1, 1], [], []>} : vector<16x128xbf16>, vector<128x384xbf16>, vector<16x384xf32> -> vector<16x384xf32>
    %74 = vector.extract_strided_slice %73 {offsets = [0, 0], sizes = [16, 128], strides = [1, 1]} : vector<16x384xf32> to vector<16x128xf32>
    %75 = vector.extract_strided_slice %73 {offsets = [0, 128], sizes = [16, 128], strides = [1, 1]} : vector<16x384xf32> to vector<16x128xf32>
    %76 = vector.extract_strided_slice %73 {offsets = [0, 256], sizes = [16, 128], strides = [1, 1]} : vector<16x384xf32> to vector<16x128xf32>
    %cst_29 = arith.constant dense<0.000000e+00> : vector<16x128xf32>
    %77 = tpu.matmul %27, %74, %cst_29 {dimension_numbers = #tpu.dot_dimension_numbers<[1], [0], [0], [1], [0, 0, 1, 1], [], []>} : vector<16x16xf32>, vector<16x128xf32>, vector<16x128xf32> -> vector<16x128xf32>
    %78 = arith.addf %77, %75 : vector<16x128xf32>
    %cst_30 = arith.constant dense<0.000000e+00> : vector<16x128xf32>
    %79 = tpu.matmul %52, %76, %cst_30 {dimension_numbers = #tpu.dot_dimension_numbers<[1], [0], [0], [1], [0, 0, 1, 1], [], []>} : vector<16x16xf32>, vector<16x128xf32>, vector<16x128xf32> -> vector<16x128xf32>
    %80 = arith.addf %78, %79 : vector<16x128xf32>
    %c0_31 = arith.constant 0 : index
    %c0_32 = arith.constant 0 : index
    %81 = vector.load %arg6[%c0_31, %c0_32] : memref<1x128xf32, #tpu.memory_space<vmem>>, vector<1x128xf32>
    %82 = vector.broadcast %81 : vector<1x128xf32> to vector<16x128xf32>
    %83 = arith.mulf %80, %82 : vector<16x128xf32>
    %c0_33 = arith.constant 0 : index
    %c0_34 = arith.constant 0 : index
    %84 = vector.load %arg7[%c0_33, %c0_34] : memref<1x128xf32, #tpu.memory_space<vmem>>, vector<1x128xf32>
    %85 = vector.broadcast %84 : vector<1x128xf32> to vector<16x128xf32>
    %86 = arith.addf %83, %85 : vector<16x128xf32>
    %87 = arith.addf %86, %0 : vector<16x128xf32>
    %cst_35 = arith.constant 0.000000e+00 : f32
    %88 = vector.broadcast %cst_35 : f32 to vector<16x128xf32>
    %89 = arith.maximumf %87, %88 : vector<16x128xf32>
    %c0_36 = arith.constant 0 : index
    %c0_37 = arith.constant 0 : index
    %90 = vector.load %arg8[%c0_36, %c0_37] : memref<16x128xf32, #tpu.memory_space<vmem>>, vector<16x128xf32>
    tpu.vector_store %arg8[%c0_36, %c0_37], %89 {strides = array<i32>} : memref<16x128xf32, #tpu.memory_space<vmem>>, vector<16x128xf32>,
    return
  }
  func.func @transform_0(%arg0: i32) -> (i32, i32) {
    %c0_i32 = arith.constant 0 : i32
    %c0_i32_0 = arith.constant 0 : i32
    return %arg0, %c0_i32 : i32, i32
  }
  func.func @transform_1(%arg0: i32) -> (i32, i32) {
    %c0_i32 = arith.constant 0 : i32
    %c0_i32_0 = arith.constant 0 : i32
    %c0_i32_1 = arith.constant 0 : i32
    return %c0_i32, %c0_i32_0 : i32, i32
  }
  func.func @transform_2(%arg0: i32) -> (i32, i32) {
    %c0_i32 = arith.constant 0 : i32
    %c0_i32_0 = arith.constant 0 : i32
    %c0_i32_1 = arith.constant 0 : i32
    return %c0_i32, %c0_i32_0 : i32, i32
  }
  func.func @transform_3(%arg0: i32) -> (i32, i32) {
    %c0_i32 = arith.constant 0 : i32
    %c0_i32_0 = arith.constant 0 : i32
    %c0_i32_1 = arith.constant 0 : i32
    return %c0_i32, %c0_i32_0 : i32, i32
  }
  func.func @transform_4(%arg0: i32) -> (i32, i32) {
    %c0_i32 = arith.constant 0 : i32
    %c0_i32_0 = arith.constant 0 : i32
    %c0_i32_1 = arith.constant 0 : i32
    return %c0_i32, %c0_i32_0 : i32, i32
  }
  func.func @transform_5(%arg0: i32) -> (i32, i32) {
    %c0_i32 = arith.constant 0 : i32
    %c0_i32_0 = arith.constant 0 : i32
    %c0_i32_1 = arith.constant 0 : i32
    return %c0_i32, %c0_i32_0 : i32, i32
  }
  func.func @transform_6(%arg0: i32) -> (i32, i32) {
    %c0_i32 = arith.constant 0 : i32
    %c0_i32_0 = arith.constant 0 : i32
    %c0_i32_1 = arith.constant 0 : i32
    return %c0_i32, %c0_i32_0 : i32, i32
  }
  func.func @transform_7(%arg0: i32) -> (i32, i32) {
    %c0_i32 = arith.constant 0 : i32
    %c0_i32_0 = arith.constant 0 : i32
    return %arg0, %c0_i32 : i32, i32
  }
}

</mosaic_0001>

<llo_original>
// kernel: squeeze.2
$region0: #{squeeze.2}
  %s0 = inlined_call_operand.vmem [shape: bf16[1,16,8,16,8], index: 0, kind: input, shape index: {}]
  %s1 = inlined_call_operand.vmem [shape: bf16[128,128], index: 1, kind: output, shape index: {}]
  $region1: #{squeeze.2} parent=0
    #allocation0 [shape = 'u8[65536]{0}', space=vmem, size = 0x10000, scoped, tag = 'scoped mem for output reshape']
    #allocation1 [shape = 'u8[1048576]{0}', space=vmem, size = 0x100000, scoped, tag = 'scoped mem for input reshape']
    %s3 = smul.u32 4, 2
    %s4 = sshll.u32 1, %s3
    %s5 = ssub.s32 %s4, 1
    %s6 = smul.addr 4, 255
    %s7 = scalar_lea.vmem %s0, %s6
    %s8 = sshrl.u32 %s5, 1
    %s9 = sor.u32 %s5, %s8
    %s10 = sand.u32 %s9, 85
    %s11 = sshrl.u32 %s10, 1
    %s12 = sor.u32 %s10, %s11
    %s13 = sand.u32 51, %s12
    %s14 = sshrl.u32 %s13, 2
    %s15 = sor.u32 %s13, %s14
    %s16 = sand.u32 15, %s15
    %v17 = vld [vmem:[%s7] sm:%s16]
    %v18 = vunpack.c.l.bf16 %v17
    %v19 = vunpack.c.h.bf16 %v17
    %s20 = scalar_lea.vmem [#allocation1], 2040
    %21 = vst [vmem:[%s20] sm:%s5] %v18
    %s22 = smul.addr 4, 254
    %s23 = scalar_lea.vmem %s0, %s22
    %s24 = sshrl.u32 %s5, 1
    %s25 = sor.u32 %s5, %s24
    %s26 = sand.u32 %s25, 85
    %s27 = sshrl.u32 %s26, 1
    %s28 = sor.u32 %s26, %s27
    %s29 = sand.u32 51, %s28
    %s30 = sshrl.u32 %s29, 2
    %s31 = sor.u32 %s29, %s30
    %s32 = sand.u32 15, %s31
    %v33 = vld [vmem:[%s23] sm:%s32]
    %v34 = vunpack.c.l.bf16 %v33
    %v35 = vunpack.c.h.bf16 %v33
    %s36 = scalar_lea.vmem [#allocation1], 2032
    %37 = vst [vmem:[%s36] sm:%s5] %v34
    %s38 = smul.addr 4, 253
    %s39 = scalar_lea.vmem %s0, %s38
    %s40 = sshrl.u32 %s5, 1
    %s41 = sor.u32 %s5, %s40
    %s42 = sand.u32 %s41, 85
    %s43 = sshrl.u32 %s42, 1
    %s44 = sor.u32 %s42, %s43
    %s45 = sand.u32 51, %s44
    %s46 = sshrl.u32 %s45, 2
    %s47 = sor.u32 %s45, %s46
    %s48 = sand.u32 15, %s47
    %v49 = vld [vmem:[%s39] sm:%s48]
    %v50 = vunpack.c.l.bf16 %v49
    %v51 = vunpack.c.h.bf16 %v49
    %s52 = scalar_lea.vmem [#allocation1], 2024
    %53 = vst [vmem:[%s52] sm:%s5] %v50
    %s54 = smul.addr 4, 252
    %s55 = scalar_lea.vmem %s0, %s54
    %s56 = sshrl.u32 %s5, 1
    %s57 = sor.u32 %s5, %s56
    %s58 = sand.u32 %s57, 85
    %s59 = sshrl.u32 %s58, 1
    %s60 = sor.u32 %s58, %s59
    %s61 = sand.u32 51, %s60
    %s62 = sshrl.u32 %s61, 2
    %s63 = sor.u32 %s61, %s62
    %s64 = sand.u32 15, %s63
    %v65 = vld [vmem:[%s55] sm:%s64]
    %v66 = vunpack.c.l.bf16 %v65
    %v67 = vunpack.c.h.bf16 %v65
    %s68 = scalar_lea.vmem [#allocation1], 2016
    %69 = vst [vmem:[%s68] sm:%s5] %v66
    %s70 = smul.addr 4, 251
    %s71 = scalar_lea.vmem %s0, %s70
    %s72 = sshrl.u32 %s5, 1
    %s73 = sor.u32 %s5, %s72
    %s74 = sand.u32 %s73, 85
    %s75 = sshrl.u32 %s74, 1
    %s76 = sor.u32 %s74, %s75
    %s77 = sand.u32 51, %s76
    %s78 = sshrl.u32 %s77, 2
    %s79 = sor.u32 %s77, %s78
    %s80 = sand.u32 15, %s79
    %v81 = vld [vmem:[%s71] sm:%s80]
    %v82 = vunpack.c.l.bf16 %v81
    %v83 = vunpack.c.h.bf16 %v81
    %s84 = scalar_lea.vmem [#allocation1], 2008
    %85 = vst [vmem:[%s84] sm:%s5] %v82
    %s86 = smul.addr 4, 250
    %s87 = scalar_lea.vmem %s0, %s86
    %s88 = sshrl.u32 %s5, 1
    %s89 = sor.u32 %s5, %s88
    %s90 = sand.u32 %s89, 85
    %s91 = sshrl.u32 %s90, 1
    %s92 = sor.u32 %s90, %s91
    %s93 = sand.u32 51, %s92
    %s94 = sshrl.u32 %s93, 2
    %s95 = sor.u32 %s93, %s94
    %s96 = sand.u32 15, %s95
    %v97 = vld [vmem:[%s87] sm:%s96]
    %v98 = vunpack.c.l.bf16 %v97
    %v99 = vunpack.c.h.bf16 %v97
    %s100 = scalar_lea.vmem [#allocation1], 2000
    %101 = vst [vmem:[%s100] sm:%s5] %v98
    %s102 = smul.addr 4, 249
    %s103 = scalar_lea.vmem %s0, %s102
    %s104 = sshrl.u32 %s5, 1
    %s105 = sor.u32 %s5, %s104
    %s106 = sand.u32 %s105, 85
    %s107 = sshrl.u32 %s106, 1
    %s108 = sor.u32 %s106, %s107
    %s109 = sand.u32 51, %s108
    %s110 = sshrl.u32 %s109, 2
    %s111 = sor.u32 %s109, %s110
    %s112 = sand.u32 15, %s111
    %v113 = vld [vmem:[%s103] sm:%s112]
    %v114 = vunpack.c.l.bf16 %v113
    %v115 = vunpack.c.h.bf16 %v113
    %s116 = scalar_lea.vmem [#allocation1], 1992
    %117 = vst [vmem:[%s116] sm:%s5] %v114
    %s118 = smul.addr 4, 248
    %s119 = scalar_lea.vmem %s0, %s118
    %s120 = sshrl.u32 %s5, 1
    %s121 = sor.u32 %s5, %s120
    %s122 = sand.u32 %s121, 85
    %s123 = sshrl.u32 %s122, 1
    %s124 = sor.u32 %s122, %s123
    %s125 = sand.u32 51, %s124
    %s126 = sshrl.u32 %s125, 2
    %s127 = sor.u32 %s125, %s126
    %s128 = sand.u32 15, %s127
    %v129 = vld [vmem:[%s119] sm:%s128]
    %v130 = vunpack.c.l.bf16 %v129
    %v131 = vunpack.c.h.bf16 %v129
    %s132 = scalar_lea.vmem [#allocation1], 1984
    %133 = vst [vmem:[%s132] sm:%s5] %v130
    %s134 = smul.addr 4, 247
    %s135 = scalar_lea.vmem %s0, %s134
    %s136 = sshrl.u32 %s5, 1
    %s137 = sor.u32 %s5, %s136
    %s138 = sand.u32 %s137, 85
    %s139 = sshrl.u32 %s138, 1
    %s140 = sor.u32 %s138, %s139
    %s141 = sand.u32 51, %s140
    %s142 = sshrl.u32 %s141, 2
    %s143 = sor.u32 %s141, %s142
    %s144 = sand.u32 15, %s143
    %v145 = vld [vmem:[%s135] sm:%s144]
    %v146 = vunpack.c.l.bf16 %v145
    %v147 = vunpack.c.h.bf16 %v145
    %s148 = scalar_lea.vmem [#allocation1], 1976
    %149 = vst [vmem:[%s148] sm:%s5] %v146
    %s150 = smul.addr 4, 246
    %s151 = scalar_lea.vmem %s0, %s150
    %s152 = sshrl.u32 %s5, 1
    %s153 = sor.u32 %s5, %s152
    %s154 = sand.u32 %s153, 85
    %s155 = sshrl.u32 %s154, 1
    %s156 = sor.u32 %s154, %s155
    %s157 = sand.u32 51, %s156
    %s158 = sshrl.u32 %s157, 2
    %s159 = sor.u32 %s157, %s158
    %s160 = sand.u32 15, %s159
    %v161 = vld [vmem:[%s151] sm:%s160]
    %v162 = vunpack.c.l.bf16 %v161
    %v163 = vunpack.c.h.bf16 %v161
    %s164 = scalar_lea.vmem [#allocation1], 1968
    %165 = vst [vmem:[%s164] sm:%s5] %v162
    %s166 = smul.addr 4, 245
    %s167 = scalar_lea.vmem %s0, %s166
    %s168 = sshrl.u32 %s5, 1
    %s169 = sor.u32 %s5, %s168
    %s170 = sand.u32 %s169, 85
    %s171 = sshrl.u32 %s170, 1
    %s172 = sor.u32 %s170, %s171
    %s173 = sand.u32 51, %s172
    %s174 = sshrl.u32 %s173, 2
    %s175 = sor.u32 %s173, %s174
    %s176 = sand.u32 15, %s175
    %v177 = vld [vmem:[%s167] sm:%s176]
    %v178 = vunpack.c.l.bf16 %v177
    %v179 = vunpack.c.h.bf16 %v177
    %s180 = scalar_lea.vmem [#allocation1], 1960
    %181 = vst [vmem:[%s180] sm:%s5] %v178
    %s182 = smul.addr 4, 244
    %s183 = scalar_lea.vmem %s0, %s182
    %s184 = sshrl.u32 %s5, 1
    %s185 = sor.u32 %s5, %s184
    %s186 = sand.u32 %s185, 85
    %s187 = sshrl.u32 %s186, 1
    %s188 = sor.u32 %s186, %s187
    %s189 = sand.u32 51, %s188
    %s190 = sshrl.u32 %s189, 2
    %s191 = sor.u32 %s189, %s190
    %s192 = sand.u32 15, %s191
    %v193 = vld [vmem:[%s183] sm:%s192]
    %v194 = vunpack.c.l.bf16 %v193
    %v195 = vunpack.c.h.bf16 %v193
    %s196 = scalar_lea.vmem [#allocation1], 1952
    %197 = vst [vmem:[%s196] sm:%s5] %v194
    %s198 = smul.addr 4, 243
    %s199 = scalar_lea.vmem %s0, %s198
    %s200 = sshrl.u32 %s5, 1
    %s201 = sor.u32 %s5, %s200
    %s202 = sand.u32 %s201, 85
    %s203 = sshrl.u32 %s202, 1
    %s204 = sor.u32 %s202, %s203
    %s205 = sand.u32 51, %s204
    %s206 = sshrl.u32 %s205, 2
    %s207 = sor.u32 %s205, %s206
    %s208 = sand.u32 15, %s207
    %v209 = vld [vmem:[%s199] sm:%s208]
    %v210 = vunpack.c.l.bf16 %v209
    %v211 = vunpack.c.h.bf16 %v209
    %s212 = scalar_lea.vmem [#allocation1], 1944
    %213 = vst [vmem:[%s212] sm:%s5] %v210
    %s214 = smul.addr 4, 242
    %s215 = scalar_lea.vmem %s0, %s214
    %s216 = sshrl.u32 %s5, 1
    %s217 = sor.u32 %s5, %s216
    %s218 = sand.u32 %s217, 85
    %s219 = sshrl.u32 %s218, 1
    %s220 = sor.u32 %s218, %s219
    %s221 = sand.u32 51, %s220
    %s222 = sshrl.u32 %s221, 2
    %s223 = sor.u32 %s221, %s222
    %s224 = sand.u32 15, %s223
    %v225 = vld [vmem:[%s215] sm:%s224]
    %v226 = vunpack.c.l.bf16 %v225
    %v227 = vunpack.c.h.bf16 %v225
    %s228 = scalar_lea.vmem [#allocation1], 1936
    %229 = vst [vmem:[%s228] sm:%s5] %v226
    %s230 = smul.addr 4, 241
    %s231 = scalar_lea.vmem %s0, %s230
    %s232 = sshrl.u32 %s5, 1
    %s233 = sor.u32 %s5, %s232
    %s234 = sand.u32 %s233, 85
    %s235 = sshrl.u32 %s234, 1
    %s236 = sor.u32 %s234, %s235
    %s237 = sand.u32 51, %s236
    %s238 = sshrl.u32 %s237, 2
    %s239 = sor.u32 %s237, %s238
    %s240 = sand.u32 15, %s239
    %v241 = vld [vmem:[%s231] sm:%s240]
    %v242 = vunpack.c.l.bf16 %v241
    %v243 = vunpack.c.h.bf16 %v241
    %s244 = scalar_lea.vmem [#allocation1], 1928
    %245 = vst [vmem:[%s244] sm:%s5] %v242
    %s246 = smul.addr 4, 240
    %s247 = scalar_lea.vmem %s0, %s246
    %s248 = sshrl.u32 %s5, 1
    %s249 = sor.u32 %s5, %s248
    %s250 = sand.u32 %s249, 85
    %s251 = sshrl.u32 %s250, 1
    %s252 = sor.u32 %s250, %s251
    %s253 = sand.u32 51, %s252
    %s254 = sshrl.u32 %s253, 2
    %s255 = sor.u32 %s253, %s254
    %s256 = sand.u32 15, %s255
    %v257 = vld [vmem:[%s247] sm:%s256]
    %v258 = vunpack.c.l.bf16 %v257
    %v259 = vunpack.c.h.bf16 %v257
    %s260 = scalar_lea.vmem [#allocation1], 1920
    %261 = vst [vmem:[%s260] sm:%s5] %v258
    %s262 = smul.addr 4, 239
    %s263 = scalar_lea.vmem %s0, %s262
    %s264 = sshrl.u32 %s5, 1
    %s265 = sor.u32 %s5, %s264
    %s266 = sand.u32 %s265, 85
    %s267 = sshrl.u32 %s266, 1
    %s268 = sor.u32 %s266, %s267
    %s269 = sand.u32 51, %s268
    %s270 = sshrl.u32 %s269, 2
    %s271 = sor.u32 %s269, %s270
    %s272 = sand.u32 15, %s271
    %v273 = vld [vmem:[%s263] sm:%s272]
    %v274 = vunpack.c.l.bf16 %v273
    %v275 = vunpack.c.h.bf16 %v273
    %s276 = scalar_lea.vmem [#allocation1], 1912
    %277 = vst [vmem:[%s276] sm:%s5] %v274
    %s278 = smul.addr 4, 238
    %s279 = scalar_lea.vmem %s0, %s278
    %s280 = sshrl.u32 %s5, 1
    %s281 = sor.u32 %s5, %s280
    %s282 = sand.u32 %s281, 85
    %s283 = sshrl.u32 %s282, 1
    %s284 = sor.u32 %s282, %s283
    %s285 = sand.u32 51, %s284
    %s286 = sshrl.u32 %s285, 2
    %s287 = sor.u32 %s285, %s286
    %s288 = sand.u32 15, %s287
    %v289 = vld [vmem:[%s279] sm:%s288]
    %v290 = vunpack.c.l.bf16 %v289
    %v291 = vunpack.c.h.bf16 %v289
    %s292 = scalar_lea.vmem [#allocation1], 1904
    %293 = vst [vmem:[%s292] sm:%s5] %v290
    %s294 = smul.addr 4, 237
    %s295 = scalar_lea.vmem %s0, %s294
    %s296 = sshrl.u32 %s5, 1
    %s297 = sor.u32 %s5, %s296
    %s298 = sand.u32 %s297, 85
    %s299 = sshrl.u32 %s298, 1
    %s300 = sor.u32 %s298, %s299
    %s301 = sand.u32 51, %s300
    %s302 = sshrl.u32 %s301, 2
    %s303 = sor.u32 %s301, %s302
    %s304 = sand.u32 15, %s303
    %v305 = vld [vmem:[%s295] sm:%s304]
    %v306 = vunpack.c.l.bf16 %v305
    %v307 = vunpack.c.h.bf16 %v305
    %s308 = scalar_lea.vmem [#allocation1], 1896
    %309 = vst [vmem:[%s308] sm:%s5] %v306
    %s310 = smul.addr 4, 236
    %s311 = scalar_lea.vmem %s0, %s310
    %s312 = sshrl.u32 %s5, 1
    %s313 = sor.u32 %s5, %s312
    %s314 = sand.u32 %s313, 85
    %s315 = sshrl.u32 %s314, 1
    %s316 = sor.u32 %s314, %s315
    %s317 = sand.u32 51, %s316
    %s318 = sshrl.u32 %s317, 2
    %s319 = sor.u32 %s317, %s318
    %s320 = sand.u32 15, %s319
    %v321 = vld [vmem:[%s311] sm:%s320]
    %v322 = vunpack.c.l.bf16 %v321
    %v323 = vunpack.c.h.bf16 %v321
    %s324 = scalar_lea.vmem [#allocation1], 1888
    %325 = vst [vmem:[%s324] sm:%s5] %v322
    %s326 = smul.addr 4, 235
    %s327 = scalar_lea.vmem %s0, %s326
    %s328 = sshrl.u32 %s5, 1
    %s329 = sor.u32 %s5, %s328
    %s330 = sand.u32 %s329, 85
    %s331 = sshrl.u32 %s330, 1
    %s332 = sor.u32 %s330, %s331
    %s333 = sand.u32 51, %s332
    %s334 = sshrl.u32 %s333, 2
    %s335 = sor.u32 %s333, %s334
    %s336 = sand.u32 15, %s335
    %v337 = vld [vmem:[%s327] sm:%s336]
    %v338 = vunpack.c.l.bf16 %v337
    %v339 = vunpack.c.h.bf16 %v337
    %s340 = scalar_lea.vmem [#allocation1], 1880
    %341 = vst [vmem:[%s340] sm:%s5] %v338
    %s342 = smul.addr 4, 234
    %s343 = scalar_lea.vmem %s0, %s342
    %s344 = sshrl.u32 %s5, 1
    %s345 = sor.u32 %s5, %s344
    %s346 = sand.u32 %s345, 85
    %s347 = sshrl.u32 %s346, 1
    %s348 = sor.u32 %s346, %s347
    %s349 = sand.u32 51, %s348
    %s350 = sshrl.u32 %s349, 2
    %s351 = sor.u32 %s349, %s350
    %s352 = sand.u32 15, %s351
    %v353 = vld [vmem:[%s343] sm:%s352]
    %v354 = vunpack.c.l.bf16 %v353
    %v355 = vunpack.c.h.bf16 %v353
    %s356 = scalar_lea.vmem [#allocation1], 1872
    %357 = vst [vmem:[%s356] sm:%s5] %v354
    %s358 = smul.addr 4, 233
    %s359 = scalar_lea.vmem %s0, %s358
    %s360 = sshrl.u32 %s5, 1
    %s361 = sor.u32 %s5, %s360
    %s362 = sand.u32 %s361, 85
    %s363 = sshrl.u32 %s362, 1
    %s364 = sor.u32 %s362, %s363
    %s365 = sand.u32 51, %s364
    %s366 = sshrl.u32 %s365, 2
    %s367 = sor.u32 %s365, %s366
    %s368 = sand.u32 15, %s367
    %v369 = vld [vmem:[%s359] sm:%s368]
    %v370 = vunpack.c.l.bf16 %v369
    %v371 = vunpack.c.h.bf16 %v369
    %s372 = scalar_lea.vmem [#allocation1], 1864
    %373 = vst [vmem:[%s372] sm:%s5] %v370
    %s374 = smul.addr 4, 232
    %s375 = scalar_lea.vmem %s0, %s374
    %s376 = sshrl.u32 %s5, 1
    %s377 = sor.u32 %s5, %s376
    %s378 = sand.u32 %s377, 85
    %s379 = sshrl.u32 %s378, 1
    %s380 = sor.u32 %s378, %s379
    %s381 = sand.u32 51, %s380
    %s382 = sshrl.u32 %s381, 2
    %s383 = sor.u32 %s381, %s382
    %s384 = sand.u32 15, %s383
    %v385 = vld [vmem:[%s375] sm:%s384]
    %v386 = vunpack.c.l.bf16 %v385
    %v387 = vunpack.c.h.bf16 %v385
    %s388 = scalar_lea.vmem [#allocation1], 1856
    %389 = vst [vmem:[%s388] sm:%s5] %v386
    %s390 = smul.addr 4, 231
    %s391 = scalar_lea.vmem %s0, %s390
    %s392 = sshrl.u32 %s5, 1
    %s393 = sor.u32 %s5, %s392
    %s394 = sand.u32 %s393, 85
    %s395 = sshrl.u32 %s394, 1
    %s396 = sor.u32 %s394, %s395
    %s397 = sand.u32 51, %s396
    %s398 = sshrl.u32 %s397, 2
    %s399 = sor.u32 %s397, %s398
    %s400 = sand.u32 15, %s399
    %v401 = vld [vmem:[%s391] sm:%s400]
    %v402 = vunpack.c.l.bf16 %v401
    %v403 = vunpack.c.h.bf16 %v401
    %s404 = scalar_lea.vmem [#allocation1], 1848
    %405 = vst [vmem:[%s404] sm:%s5] %v402
    %s406 = smul.addr 4, 230
    %s407 = scalar_lea.vmem %s0, %s406
    %s408 = sshrl.u32 %s5, 1
    %s409 = sor.u32 %s5, %s408
    %s410 = sand.u32 %s409, 85
    %s411 = sshrl.u32 %s410, 1
    %s412 = sor.u32 %s410, %s411
    %s413 = sand.u32 51, %s412
    %s414 = sshrl.u32 %s413, 2
    %s415 = sor.u32 %s413, %s414
    %s416 = sand.u32 15, %s415
    %v417 = vld [vmem:[%s407] sm:%s416]
    %v418 = vunpack.c.l.bf16 %v417
    %v419 = vunpack.c.h.bf16 %v417
    %s420 = scalar_lea.vmem [#allocation1], 1840
    %421 = vst [vmem:[%s420] sm:%s5] %v418
    %s422 = smul.addr 4, 229
    %s423 = scalar_lea.vmem %s0, %s422
    %s424 = sshrl.u32 %s5, 1
    %s425 = sor.u32 %s5, %s424
    %s426 = sand.u32 %s425, 85
    %s427 = sshrl.u32 %s426, 1
    %s428 = sor.u32 %s426, %s427
    %s429 = sand.u32 51, %s428
    %s430 = sshrl.u32 %s429, 2
    %s431 = sor.u32 %s429, %s430
    %s432 = sand.u32 15, %s431
    %v433 = vld [vmem:[%s423] sm:%s432]
    %v434 = vunpack.c.l.bf16 %v433
    %v435 = vunpack.c.h.bf16 %v433
    %s436 = scalar_lea.vmem [#allocation1], 1832
    %437 = vst [vmem:[%s436] sm:%s5] %v434
    %s438 = smul.addr 4, 228
    %s439 = scalar_lea.vmem %s0, %s438
    %s440 = sshrl.u32 %s5, 1
    %s441 = sor.u32 %s5, %s440
    %s442 = sand.u32 %s441, 85
    %s443 = sshrl.u32 %s442, 1
    %s444 = sor.u32 %s442, %s443
    %s445 = sand.u32 51, %s444
    %s446 = sshrl.u32 %s445, 2
    %s447 = sor.u32 %s445, %s446
    %s448 = sand.u32 15, %s447
    %v449 = vld [vmem:[%s439] sm:%s448]
    %v450 = vunpack.c.l.bf16 %v449
    %v451 = vunpack.c.h.bf16 %v449
    %s452 = scalar_lea.vmem [#allocation1], 1824
    %453 = vst [vmem:[%s452] sm:%s5] %v450
    %s454 = smul.addr 4, 227
    %s455 = scalar_lea.vmem %s0, %s454
    %s456 = sshrl.u32 %s5, 1
    %s457 = sor.u32 %s5, %s456
    %s458 = sand.u32 %s457, 85
    %s459 = sshrl.u32 %s458, 1
    %s460 = sor.u32 %s458, %s459
    %s461 = sand.u32 51, %s460
    %s462 = sshrl.u32 %s461, 2
    %s463 = sor.u32 %s461, %s462
    %s464 = sand.u32 15, %s463
    %v465 = vld [vmem:[%s455] sm:%s464]
    %v466 = vunpack.c.l.bf16 %v465
    %v467 = vunpack.c.h.bf16 %v465
    %s468 = scalar_lea.vmem [#allocation1], 1816
    %469 = vst [vmem:[%s468] sm:%s5] %v466
    %s470 = smul.addr 4, 226
    %s471 = scalar_lea.vmem %s0, %s470
    %s472 = sshrl.u32 %s5, 1
    %s473 = sor.u32 %s5, %s472
    %s474 = sand.u32 %s473, 85
    %s475 = sshrl.u32 %s474, 1
    %s476 = sor.u32 %s474, %s475
    %s477 = sand.u32 51, %s476
    %s478 = sshrl.u32 %s477, 2
    %s479 = sor.u32 %s477, %s478
    %s480 = sand.u32 15, %s479
    %v481 = vld [vmem:[%s471] sm:%s480]
    %v482 = vunpack.c.l.bf16 %v481
    %v483 = vunpack.c.h.bf16 %v481
    %s484 = scalar_lea.vmem [#allocation1], 1808
    %485 = vst [vmem:[%s484] sm:%s5] %v482
    %s486 = smul.addr 4, 225
    %s487 = scalar_lea.vmem %s0, %s486
    %s488 = sshrl.u32 %s5, 1
    %s489 = sor.u32 %s5, %s488
    %s490 = sand.u32 %s489, 85
    %s491 = sshrl.u32 %s490, 1
    %s492 = sor.u32 %s490, %s491
    %s493 = sand.u32 51, %s492
    %s494 = sshrl.u32 %s493, 2
    %s495 = sor.u32 %s493, %s494
    %s496 = sand.u32 15, %s495
    %v497 = vld [vmem:[%s487] sm:%s496]
    %v498 = vunpack.c.l.bf16 %v497
    %v499 = vunpack.c.h.bf16 %v497
    %s500 = scalar_lea.vmem [#allocation1], 1800
    %501 = vst [vmem:[%s500] sm:%s5] %v498
    %s502 = smul.addr 4, 224
    %s503 = scalar_lea.vmem %s0, %s502
    %s504 = sshrl.u32 %s5, 1
    %s505 = sor.u32 %s5, %s504
    %s506 = sand.u32 %s505, 85
    %s507 = sshrl.u32 %s506, 1
    %s508 = sor.u32 %s506, %s507
    %s509 = sand.u32 51, %s508
    %s510 = sshrl.u32 %s509, 2
    %s511 = sor.u32 %s509, %s510
    %s512 = sand.u32 15, %s511
    %v513 = vld [vmem:[%s503] sm:%s512]
    %v514 = vunpack.c.l.bf16 %v513
    %v515 = vunpack.c.h.bf16 %v513
    %s516 = scalar_lea.vmem [#allocation1], 1792
    %517 = vst [vmem:[%s516] sm:%s5] %v514
    %s518 = smul.addr 4, 223
    %s519 = scalar_lea.vmem %s0, %s518
    %s520 = sshrl.u32 %s5, 1
    %s521 = sor.u32 %s5, %s520
    %s522 = sand.u32 %s521, 85
    %s523 = sshrl.u32 %s522, 1
    %s524 = sor.u32 %s522, %s523
    %s525 = sand.u32 51, %s524
    %s526 = sshrl.u32 %s525, 2
    %s527 = sor.u32 %s525, %s526
    %s528 = sand.u32 15, %s527
    %v529 = vld [vmem:[%s519] sm:%s528]
    %v530 = vunpack.c.l.bf16 %v529
    %v531 = vunpack.c.h.bf16 %v529
    %s532 = scalar_lea.vmem [#allocation1], 1784
    %533 = vst [vmem:[%s532] sm:%s5] %v530
    %s534 = smul.addr 4, 222
    %s535 = scalar_lea.vmem %s0, %s534
    %s536 = sshrl.u32 %s5, 1
    %s537 = sor.u32 %s5, %s536
    %s538 = sand.u32 %s537, 85
    %s539 = sshrl.u32 %s538, 1
    %s540 = sor.u32 %s538, %s539
    %s541 = sand.u32 51, %s540
    %s542 = sshrl.u32 %s541, 2
    %s543 = sor.u32 %s541, %s542
    %s544 = sand.u32 15, %s543
    %v545 = vld [vmem:[%s535] sm:%s544]
    %v546 = vunpack.c.l.bf16 %v545
    %v547 = vunpack.c.h.bf16 %v545
    %s548 = scalar_lea.vmem [#allocation1], 1776
    %549 = vst [vmem:[%s548] sm:%s5] %v546
    %s550 = smul.addr 4, 221
    %s551 = scalar_lea.vmem %s0, %s550
    %s552 = sshrl.u32 %s5, 1
    %s553 = sor.u32 %s5, %s552
    %s554 = sand.u32 %s553, 85
    %s555 = sshrl.u32 %s554, 1
    %s556 = sor.u32 %s554, %s555
    %s557 = sand.u32 51, %s556
    %s558 = sshrl.u32 %s557, 2
    %s559 = sor.u32 %s557, %s558
    %s560 = sand.u32 15, %s559
    %v561 = vld [vmem:[%s551] sm:%s560]
    %v562 = vunpack.c.l.bf16 %v561
    %v563 = vunpack.c.h.bf16 %v561
    %s564 = scalar_lea.vmem [#allocation1], 1768
    %565 = vst [vmem:[%s564] sm:%s5] %v562
    %s566 = smul.addr 4, 220
    %s567 = scalar_lea.vmem %s0, %s566
    %s568 = sshrl.u32 %s5, 1
    %s569 = sor.u32 %s5, %s568
    %s570 = sand.u32 %s569, 85
    %s571 = sshrl.u32 %s570, 1
    %s572 = sor.u32 %s570, %s571
    %s573 = sand.u32 51, %s572
    %s574 = sshrl.u32 %s573, 2
    %s575 = sor.u32 %s573, %s574
    %s576 = sand.u32 15, %s575
    %v577 = vld [vmem:[%s567] sm:%s576]
    %v578 = vunpack.c.l.bf16 %v577
    %v579 = vunpack.c.h.bf16 %v577
    %s580 = scalar_lea.vmem [#allocation1], 1760
    %581 = vst [vmem:[%s580] sm:%s5] %v578
    %s582 = smul.addr 4, 219
    %s583 = scalar_lea.vmem %s0, %s582
    %s584 = sshrl.u32 %s5, 1
    %s585 = sor.u32 %s5, %s584
    %s586 = sand.u32 %s585, 85
    %s587 = sshrl.u32 %s586, 1
    %s588 = sor.u32 %s586, %s587
    %s589 = sand.u32 51, %s588
    %s590 = sshrl.u32 %s589, 2
    %s591 = sor.u32 %s589, %s590
    %s592 = sand.u32 15, %s591
    %v593 = vld [vmem:[%s583] sm:%s592]
    %v594 = vunpack.c.l.bf16 %v593
    %v595 = vunpack.c.h.bf16 %v593
    %s596 = scalar_lea.vmem [#allocation1], 1752
    %597 = vst [vmem:[%s596] sm:%s5] %v594
    %s598 = smul.addr 4, 218
    %s599 = scalar_lea.vmem %s0, %s598
    %s600 = sshrl.u32 %s5, 1
    %s601 = sor.u32 %s5, %s600
    %s602 = sand.u32 %s601, 85
    %s603 = sshrl.u32 %s602, 1
    %s604 = sor.u32 %s602, %s603
    %s605 = sand.u32 51, %s604
    %s606 = sshrl.u32 %s605, 2
    %s607 = sor.u32 %s605, %s606
    %s608 = sand.u32 15, %s607
    %v609 = vld [vmem:[%s599] sm:%s608]
    %v610 = vunpack.c.l.bf16 %v609
    %v611 = vunpack.c.h.bf16 %v609
    %s612 = scalar_lea.vmem [#allocation1], 1744
    %613 = vst [vmem:[%s612] sm:%s5] %v610
    %s614 = smul.addr 4, 217
    %s615 = scalar_lea.vmem %s0, %s614
    %s616 = sshrl.u32 %s5, 1
    %s617 = sor.u32 %s5, %s616
    %s618 = sand.u32 %s617, 85
    %s619 = sshrl.u32 %s618, 1
    %s620 = sor.u32 %s618, %s619
    %s621 = sand.u32 51, %s620
    %s622 = sshrl.u32 %s621, 2
    %s623 = sor.u32 %s621, %s622
    %s624 = sand.u32 15, %s623
    %v625 = vld [vmem:[%s615] sm:%s624]
    %v626 = vunpack.c.l.bf16 %v625
    %v627 = vunpack.c.h.bf16 %v625
    %s628 = scalar_lea.vmem [#allocation1], 1736
    %629 = vst [vmem:[%s628] sm:%s5] %v626
    %s630 = smul.addr 4, 216
    %s631 = scalar_lea.vmem %s0, %s630
    %s632 = sshrl.u32 %s5, 1
    %s633 = sor.u32 %s5, %s632
    %s634 = sand.u32 %s633, 85
    %s635 = sshrl.u32 %s634, 1
    %s636 = sor.u32 %s634, %s635
    %s637 = sand.u32 51, %s636
    %s638 = sshrl.u32 %s637, 2
    %s639 = sor.u32 %s637, %s638
    %s640 = sand.u32 15, %s639
    %v641 = vld [vmem:[%s631] sm:%s640]
    %v642 = vunpack.c.l.bf16 %v641
    %v643 = vunpack.c.h.bf16 %v641
    %s644 = scalar_lea.vmem [#allocation1], 1728
    %645 = vst [vmem:[%s644] sm:%s5] %v642
    %s646 = smul.addr 4, 215
    %s647 = scalar_lea.vmem %s0, %s646
    %s648 = sshrl.u32 %s5, 1
    %s649 = sor.u32 %s5, %s648
    %s650 = sand.u32 %s649, 85
    %s651 = sshrl.u32 %s650, 1
    %s652 = sor.u32 %s650, %s651
    %s653 = sand.u32 51, %s652
    %s654 = sshrl.u32 %s653, 2
    %s655 = sor.u32 %s653, %s654
    %s656 = sand.u32 15, %s655
    %v657 = vld [vmem:[%s647] sm:%s656]
    %v658 = vunpack.c.l.bf16 %v657
    %v659 = vunpack.c.h.bf16 %v657
    %s660 = scalar_lea.vmem [#allocation1], 1720
    %661 = vst [vmem:[%s660] sm:%s5] %v658
    %s662 = smul.addr 4, 214
    %s663 = scalar_lea.vmem %s0, %s662
    %s664 = sshrl.u32 %s5, 1
    %s665 = sor.u32 %s5, %s664
    %s666 = sand.u32 %s665, 85
    %s667 = sshrl.u32 %s666, 1
    %s668 = sor.u32 %s666, %s667
    %s669 = sand.u32 51, %s668
    %s670 = sshrl.u32 %s669, 2
    %s671 = sor.u32 %s669, %s670
    %s672 = sand.u32 15, %s671
    %v673 = vld [vmem:[%s663] sm:%s672]
    %v674 = vunpack.c.l.bf16 %v673
    %v675 = vunpack.c.h.bf16 %v673
    %s676 = scalar_lea.vmem [#allocation1], 1712
    %677 = vst [vmem:[%s676] sm:%s5] %v674
    %s678 = smul.addr 4, 213
    %s679 = scalar_lea.vmem %s0, %s678
    %s680 = sshrl.u32 %s5, 1
    %s681 = sor.u32 %s5, %s680
    %s682 = sand.u32 %s681, 85
    %s683 = sshrl.u32 %s682, 1
    %s684 = sor.u32 %s682, %s683
    %s685 = sand.u32 51, %s684
    %s686 = sshrl.u32 %s685, 2
    %s687 = sor.u32 %s685, %s686
    %s688 = sand.u32 15, %s687
    %v689 = vld [vmem:[%s679] sm:%s688]
    %v690 = vunpack.c.l.bf16 %v689
    %v691 = vunpack.c.h.bf16 %v689
    %s692 = scalar_lea.vmem [#allocation1], 1704
    %693 = vst [vmem:[%s692] sm:%s5] %v690
    %s694 = smul.addr 4, 212
    %s695 = scalar_lea.vmem %s0, %s694
    %s696 = sshrl.u32 %s5, 1
    %s697 = sor.u32 %s5, %s696
    %s698 = sand.u32 %s697, 85
    %s699 = sshrl.u32 %s698, 1
    %s700 = sor.u32 %s698, %s699
    %s701 = sand.u32 51, %s700
    %s702 = sshrl.u32 %s701, 2
    %s703 = sor.u32 %s701, %s702
    %s704 = sand.u32 15, %s703
    %v705 = vld [vmem:[%s695] sm:%s704]
    %v706 = vunpack.c.l.bf16 %v705
    %v707 = vunpack.c.h.bf16 %v705
    %s708 = scalar_lea.vmem [#allocation1], 1696
    %709 = vst [vmem:[%s708] sm:%s5] %v706
    %s710 = smul.addr 4, 211
    %s711 = scalar_lea.vmem %s0, %s710
    %s712 = sshrl.u32 %s5, 1
    %s713 = sor.u32 %s5, %s712
    %s714 = sand.u32 %s713, 85
    %s715 = sshrl.u32 %s714, 1
    %s716 = sor.u32 %s714, %s715
    %s717 = sand.u32 51, %s716
    %s718 = sshrl.u32 %s717, 2
    %s719 = sor.u32 %s717, %s718
    %s720 = sand.u32 15, %s719
    %v721 = vld [vmem:[%s711] sm:%s720]
    %v722 = vunpack.c.l.bf16 %v721
    %v723 = vunpack.c.h.bf16 %v721
    %s724 = scalar_lea.vmem [#allocation1], 1688
    %725 = vst [vmem:[%s724] sm:%s5] %v722
    %s726 = smul.addr 4, 210
    %s727 = scalar_lea.vmem %s0, %s726
    %s728 = sshrl.u32 %s5, 1
    %s729 = sor.u32 %s5, %s728
    %s730 = sand.u32 %s729, 85
    %s731 = sshrl.u32 %s730, 1
    %s732 = sor.u32 %s730, %s731
    %s733 = sand.u32 51, %s732
    %s734 = sshrl.u32 %s733, 2
    %s735 = sor.u32 %s733, %s734
    %s736 = sand.u32 15, %s735
    %v737 = vld [vmem:[%s727] sm:%s736]
    %v738 = vunpack.c.l.bf16 %v737
    %v739 = vunpack.c.h.bf16 %v737
    %s740 = scalar_lea.vmem [#allocation1], 1680
    %741 = vst [vmem:[%s740] sm:%s5] %v738
    %s742 = smul.addr 4, 209
    %s743 = scalar_lea.vmem %s0, %s742
    %s744 = sshrl.u32 %s5, 1
    %s745 = sor.u32 %s5, %s744
    %s746 = sand.u32 %s745, 85
    %s747 = sshrl.u32 %s746, 1
    %s748 = sor.u32 %s746, %s747
    %s749 = sand.u32 51, %s748
    %s750 = sshrl.u32 %s749, 2
    %s751 = sor.u32 %s749, %s750
    %s752 = sand.u32 15, %s751
    %v753 = vld [vmem:[%s743] sm:%s752]
    %v754 = vunpack.c.l.bf16 %v753
    %v755 = vunpack.c.h.bf16 %v753
    %s756 = scalar_lea.vmem [#allocation1], 1672
    %757 = vst [vmem:[%s756] sm:%s5] %v754
    %s758 = smul.addr 4, 208
    %s759 = scalar_lea.vmem %s0, %s758
    %s760 = sshrl.u32 %s5, 1
    %s761 = sor.u32 %s5, %s760
    %s762 = sand.u32 %s761, 85
    %s763 = sshrl.u32 %s762, 1
    %s764 = sor.u32 %s762, %s763
    %s765 = sand.u32 51, %s764
    %s766 = sshrl.u32 %s765, 2
    %s767 = sor.u32 %s765, %s766
    %s768 = sand.u32 15, %s767
    %v769 = vld [vmem:[%s759] sm:%s768]
    %v770 = vunpack.c.l.bf16 %v769
    %v771 = vunpack.c.h.bf16 %v769
    %s772 = scalar_lea.vmem [#allocation1], 1664
    %773 = vst [vmem:[%s772] sm:%s5] %v770
    %s774 = smul.addr 4, 207
    %s775 = scalar_lea.vmem %s0, %s774
    %s776 = sshrl.u32 %s5, 1
    %s777 = sor.u32 %s5, %s776
    %s778 = sand.u32 %s777, 85
    %s779 = sshrl.u32 %s778, 1
    %s780 = sor.u32 %s778, %s779
    %s781 = sand.u32 51, %s780
    %s782 = sshrl.u32 %s781, 2
    %s783 = sor.u32 %s781, %s782
    %s784 = sand.u32 15, %s783
    %v785 = vld [vmem:[%s775] sm:%s784]
    %v786 = vunpack.c.l.bf16 %v785
    %v787 = vunpack.c.h.bf16 %v785
    %s788 = scalar_lea.vmem [#allocation1], 1656
    %789 = vst [vmem:[%s788] sm:%s5] %v786
    %s790 = smul.addr 4, 206
    %s791 = scalar_lea.vmem %s0, %s790
    %s792 = sshrl.u32 %s5, 1
    %s793 = sor.u32 %s5, %s792
    %s794 = sand.u32 %s793, 85
    %s795 = sshrl.u32 %s794, 1
    %s796 = sor.u32 %s794, %s795
    %s797 = sand.u32 51, %s796
    %s798 = sshrl.u32 %s797, 2
    %s799 = sor.u32 %s797, %s798
    %s800 = sand.u32 15, %s799
    %v801 = vld [vmem:[%s791] sm:%s800]
    %v802 = vunpack.c.l.bf16 %v801
    %v803 = vunpack.c.h.bf16 %v801
    %s804 = scalar_lea.vmem [#allocation1], 1648
    %805 = vst [vmem:[%s804] sm:%s5] %v802
    %s806 = smul.addr 4, 205
    %s807 = scalar_lea.vmem %s0, %s806
    %s808 = sshrl.u32 %s5, 1
    %s809 = sor.u32 %s5, %s808
    %s810 = sand.u32 %s809, 85
    %s811 = sshrl.u32 %s810, 1
    %s812 = sor.u32 %s810, %s811
    %s813 = sand.u32 51, %s812
    %s814 = sshrl.u32 %s813, 2
    %s815 = sor.u32 %s813, %s814
    %s816 = sand.u32 15, %s815
    %v817 = vld [vmem:[%s807] sm:%s816]
    %v818 = vunpack.c.l.bf16 %v817
    %v819 = vunpack.c.h.bf16 %v817
    %s820 = scalar_lea.vmem [#allocation1], 1640
    %821 = vst [vmem:[%s820] sm:%s5] %v818
    %s822 = smul.addr 4, 204
    %s823 = scalar_lea.vmem %s0, %s822
    %s824 = sshrl.u32 %s5, 1
    %s825 = sor.u32 %s5, %s824
    %s826 = sand.u32 %s825, 85
    %s827 = sshrl.u32 %s826, 1
    %s828 = sor.u32 %s826, %s827
    %s829 = sand.u32 51, %s828
    %s830 = sshrl.u32 %s829, 2
    %s831 = sor.u32 %s829, %s830
    %s832 = sand.u32 15, %s831
    %v833 = vld [vmem:[%s823] sm:%s832]
    %v834 = vunpack.c.l.bf16 %v833
    %v835 = vunpack.c.h.bf16 %v833
    %s836 = scalar_lea.vmem [#allocation1], 1632
    %837 = vst [vmem:[%s836] sm:%s5] %v834
    %s838 = smul.addr 4, 203
    %s839 = scalar_lea.vmem %s0, %s838
    %s840 = sshrl.u32 %s5, 1
    %s841 = sor.u32 %s5, %s840
    %s842 = sand.u32 %s841, 85
    %s843 = sshrl.u32 %s842, 1
    %s844 = sor.u32 %s842, %s843
    %s845 = sand.u32 51, %s844
    %s846 = sshrl.u32 %s845, 2
    %s847 = sor.u32 %s845, %s846
    %s848 = sand.u32 15, %s847
    %v849 = vld [vmem:[%s839] sm:%s848]
    %v850 = vunpack.c.l.bf16 %v849
    %v851 = vunpack.c.h.bf16 %v849
    %s852 = scalar_lea.vmem [#allocation1], 1624
    %853 = vst [vmem:[%s852] sm:%s5] %v850
    %s854 = smul.addr 4, 202
    %s855 = scalar_lea.vmem %s0, %s854
    %s856 = sshrl.u32 %s5, 1
    %s857 = sor.u32 %s5, %s856
    %s858 = sand.u32 %s857, 85
    %s859 = sshrl.u32 %s858, 1
    %s860 = sor.u32 %s858, %s859
    %s861 = sand.u32 51, %s860
    %s862 = sshrl.u32 %s861, 2
    %s863 = sor.u32 %s861, %s862
    %s864 = sand.u32 15, %s863
    %v865 = vld [vmem:[%s855] sm:%s864]
    %v866 = vunpack.c.l.bf16 %v865
    %v867 = vunpack.c.h.bf16 %v865
    %s868 = scalar_lea.vmem [#allocation1], 1616
    %869 = vst [vmem:[%s868] sm:%s5] %v866
    %s870 = smul.addr 4, 201
    %s871 = scalar_lea.vmem %s0, %s870
    %s872 = sshrl.u32 %s5, 1
    %s873 = sor.u32 %s5, %s872
    %s874 = sand.u32 %s873, 85
    %s875 = sshrl.u32 %s874, 1
    %s876 = sor.u32 %s874, %s875
    %s877 = sand.u32 51, %s876
    %s878 = sshrl.u32 %s877, 2
    %s879 = sor.u32 %s877, %s878
    %s880 = sand.u32 15, %s879
    %v881 = vld [vmem:[%s871] sm:%s880]
    %v882 = vunpack.c.l.bf16 %v881
    %v883 = vunpack.c.h.bf16 %v881
    %s884 = scalar_lea.vmem [#allocation1], 1608
    %885 = vst [vmem:[%s884] sm:%s5] %v882
    %s886 = smul.addr 4, 200
    %s887 = scalar_lea.vmem %s0, %s886
    %s888 = sshrl.u32 %s5, 1
    %s889 = sor.u32 %s5, %s888
    %s890 = sand.u32 %s889, 85
    %s891 = sshrl.u32 %s890, 1
    %s892 = sor.u32 %s890, %s891
    %s893 = sand.u32 51, %s892
    %s894 = sshrl.u32 %s893, 2
    %s895 = sor.u32 %s893, %s894
    %s896 = sand.u32 15, %s895
    %v897 = vld [vmem:[%s887] sm:%s896]
    %v898 = vunpack.c.l.bf16 %v897
    %v899 = vunpack.c.h.bf16 %v897
    %s900 = scalar_lea.vmem [#allocation1], 1600
    %901 = vst [vmem:[%s900] sm:%s5] %v898
    %s902 = smul.addr 4, 199
    %s903 = scalar_lea.vmem %s0, %s902
    %s904 = sshrl.u32 %s5, 1
    %s905 = sor.u32 %s5, %s904
    %s906 = sand.u32 %s905, 85
    %s907 = sshrl.u32 %s906, 1
    %s908 = sor.u32 %s906, %s907
    %s909 = sand.u32 51, %s908
    %s910 = sshrl.u32 %s909, 2
    %s911 = sor.u32 %s909, %s910
    %s912 = sand.u32 15, %s911
    %v913 = vld [vmem:[%s903] sm:%s912]
    %v914 = vunpack.c.l.bf16 %v913
    %v915 = vunpack.c.h.bf16 %v913
    %s916 = scalar_lea.vmem [#allocation1], 1592
    %917 = vst [vmem:[%s916] sm:%s5] %v914
    %s918 = smul.addr 4, 198
    %s919 = scalar_lea.vmem %s0, %s918
    %s920 = sshrl.u32 %s5, 1
    %s921 = sor.u32 %s5, %s920
    %s922 = sand.u32 %s921, 85
    %s923 = sshrl.u32 %s922, 1
    %s924 = sor.u32 %s922, %s923
    %s925 = sand.u32 51, %s924
    %s926 = sshrl.u32 %s925, 2
    %s927 = sor.u32 %s925, %s926
    %s928 = sand.u32 15, %s927
    %v929 = vld [vmem:[%s919] sm:%s928]
    %v930 = vunpack.c.l.bf16 %v929
    %v931 = vunpack.c.h.bf16 %v929
    %s932 = scalar_lea.vmem [#allocation1], 1584
    %933 = vst [vmem:[%s932] sm:%s5] %v930
    %s934 = smul.addr 4, 197
    %s935 = scalar_lea.vmem %s0, %s934
    %s936 = sshrl.u32 %s5, 1
    %s937 = sor.u32 %s5, %s936
    %s938 = sand.u32 %s937, 85
    %s939 = sshrl.u32 %s938, 1
    %s940 = sor.u32 %s938, %s939
    %s941 = sand.u32 51, %s940
    %s942 = sshrl.u32 %s941, 2
    %s943 = sor.u32 %s941, %s942
    %s944 = sand.u32 15, %s943
    %v945 = vld [vmem:[%s935] sm:%s944]
    %v946 = vunpack.c.l.bf16 %v945
    %v947 = vunpack.c.h.bf16 %v945
    %s948 = scalar_lea.vmem [#allocation1], 1576
    %949 = vst [vmem:[%s948] sm:%s5] %v946
    %s950 = smul.addr 4, 196
    %s951 = scalar_lea.vmem %s0, %s950
    %s952 = sshrl.u32 %s5, 1
    %s953 = sor.u32 %s5, %s952
    %s954 = sand.u32 %s953, 85
    %s955 = sshrl.u32 %s954, 1
    %s956 = sor.u32 %s954, %s955
    %s957 = sand.u32 51, %s956
    %s958 = sshrl.u32 %s957, 2
    %s959 = sor.u32 %s957, %s958
    %s960 = sand.u32 15, %s959
    %v961 = vld [vmem:[%s951] sm:%s960]
    %v962 = vunpack.c.l.bf16 %v961
    %v963 = vunpack.c.h.bf16 %v961
    %s964 = scalar_lea.vmem [#allocation1], 1568
    %965 = vst [vmem:[%s964] sm:%s5] %v962
    %s966 = smul.addr 4, 195
    %s967 = scalar_lea.vmem %s0, %s966
    %s968 = sshrl.u32 %s5, 1
    %s969 = sor.u32 %s5, %s968
    %s970 = sand.u32 %s969, 85
    %s971 = sshrl.u32 %s970, 1
    %s972 = sor.u32 %s970, %s971
    %s973 = sand.u32 51, %s972
    %s974 = sshrl.u32 %s973, 2
    %s975 = sor.u32 %s973, %s974
    %s976 = sand.u32 15, %s975
    %v977 = vld [vmem:[%s967] sm:%s976]
    %v978 = vunpack.c.l.bf16 %v977
    %v979 = vunpack.c.h.bf16 %v977
    %s980 = scalar_lea.vmem [#allocation1], 1560
    %981 = vst [vmem:[%s980] sm:%s5] %v978
    %s982 = smul.addr 4, 194
    %s983 = scalar_lea.vmem %s0, %s982
    %s984 = sshrl.u32 %s5, 1
    %s985 = sor.u32 %s5, %s984
    %s986 = sand.u32 %s985, 85
    %s987 = sshrl.u32 %s986, 1
    %s988 = sor.u32 %s986, %s987
    %s989 = sand.u32 51, %s988
    %s990 = sshrl.u32 %s989, 2
    %s991 = sor.u32 %s989, %s990
    %s992 = sand.u32 15, %s991
    %v993 = vld [vmem:[%s983] sm:%s992]
    %v994 = vunpack.c.l.bf16 %v993
    %v995 = vunpack.c.h.bf16 %v993
    %s996 = scalar_lea.vmem [#allocation1], 1552
    %997 = vst [vmem:[%s996] sm:%s5] %v994
    %s998 = smul.addr 4, 193
    %s999 = scalar_lea.vmem %s0, %s998
    %s1000 = sshrl.u32 %s5, 1
    %s1001 = sor.u32 %s5, %s1000
    %s1002 = sand.u32 %s1001, 85
    %s1003 = sshrl.u32 %s1002, 1
    %s1004 = sor.u32 %s1002, %s1003
    %s1005 = sand.u32 51, %s1004
    %s1006 = sshrl.u32 %s1005, 2
    %s1007 = sor.u32 %s1005, %s1006
    %s1008 = sand.u32 15, %s1007
    %v1009 = vld [vmem:[%s999] sm:%s1008]
    %v1010 = vunpack.c.l.bf16 %v1009
    %v1011 = vunpack.c.h.bf16 %v1009
    %s1012 = scalar_lea.vmem [#allocation1], 1544
    %1013 = vst [vmem:[%s1012] sm:%s5] %v1010
    %s1014 = smul.addr 4, 192
    %s1015 = scalar_lea.vmem %s0, %s1014
    %s1016 = sshrl.u32 %s5, 1
    %s1017 = sor.u32 %s5, %s1016
    %s1018 = sand.u32 %s1017, 85
    %s1019 = sshrl.u32 %s1018, 1
    %s1020 = sor.u32 %s1018, %s1019
    %s1021 = sand.u32 51, %s1020
    %s1022 = sshrl.u32 %s1021, 2
    %s1023 = sor.u32 %s1021, %s1022
    %s1024 = sand.u32 15, %s1023
    %v1025 = vld [vmem:[%s1015] sm:%s1024]
    %v1026 = vunpack.c.l.bf16 %v1025
    %v1027 = vunpack.c.h.bf16 %v1025
    %s1028 = scalar_lea.vmem [#allocation1], 1536
    %1029 = vst [vmem:[%s1028] sm:%s5] %v1026
    %s1030 = smul.addr 4, 191
    %s1031 = scalar_lea.vmem %s0, %s1030
    %s1032 = sshrl.u32 %s5, 1
    %s1033 = sor.u32 %s5, %s1032
    %s1034 = sand.u32 %s1033, 85
    %s1035 = sshrl.u32 %s1034, 1
    %s1036 = sor.u32 %s1034, %s1035
    %s1037 = sand.u32 51, %s1036
    %s1038 = sshrl.u32 %s1037, 2
    %s1039 = sor.u32 %s1037, %s1038
    %s1040 = sand.u32 15, %s1039
    %v1041 = vld [vmem:[%s1031] sm:%s1040]
    %v1042 = vunpack.c.l.bf16 %v1041
    %v1043 = vunpack.c.h.bf16 %v1041
    %s1044 = scalar_lea.vmem [#allocation1], 1528
    %1045 = vst [vmem:[%s1044] sm:%s5] %v1042
    %s1046 = smul.addr 4, 190
    %s1047 = scalar_lea.vmem %s0, %s1046
    %s1048 = sshrl.u32 %s5, 1
    %s1049 = sor.u32 %s5, %s1048
    %s1050 = sand.u32 %s1049, 85
    %s1051 = sshrl.u32 %s1050, 1
    %s1052 = sor.u32 %s1050, %s1051
    %s1053 = sand.u32 51, %s1052
    %s1054 = sshrl.u32 %s1053, 2
    %s1055 = sor.u32 %s1053, %s1054
    %s1056 = sand.u32 15, %s1055
    %v1057 = vld [vmem:[%s1047] sm:%s1056]
    %v1058 = vunpack.c.l.bf16 %v1057
    %v1059 = vunpack.c.h.bf16 %v1057
    %s1060 = scalar_lea.vmem [#allocation1], 1520
    %1061 = vst [vmem:[%s1060] sm:%s5] %v1058
    %s1062 = smul.addr 4, 189
    %s1063 = scalar_lea.vmem %s0, %s1062
    %s1064 = sshrl.u32 %s5, 1
    %s1065 = sor.u32 %s5, %s1064
    %s1066 = sand.u32 %s1065, 85
    %s1067 = sshrl.u32 %s1066, 1
    %s1068 = sor.u32 %s1066, %s1067
    %s1069 = sand.u32 51, %s1068
    %s1070 = sshrl.u32 %s1069, 2
    %s1071 = sor.u32 %s1069, %s1070
    %s1072 = sand.u32 15, %s1071
    %v1073 = vld [vmem:[%s1063] sm:%s1072]
    %v1074 = vunpack.c.l.bf16 %v1073
    %v1075 = vunpack.c.h.bf16 %v1073
    %s1076 = scalar_lea.vmem [#allocation1], 1512
    %1077 = vst [vmem:[%s1076] sm:%s5] %v1074
    %s1078 = smul.addr 4, 188
    %s1079 = scalar_lea.vmem %s0, %s1078
    %s1080 = sshrl.u32 %s5, 1
    %s1081 = sor.u32 %s5, %s1080
    %s1082 = sand.u32 %s1081, 85
    %s1083 = sshrl.u32 %s1082, 1
    %s1084 = sor.u32 %s1082, %s1083
    %s1085 = sand.u32 51, %s1084
    %s1086 = sshrl.u32 %s1085, 2
    %s1087 = sor.u32 %s1085, %s1086
    %s1088 = sand.u32 15, %s1087
    %v1089 = vld [vmem:[%s1079] sm:%s1088]
    %v1090 = vunpack.c.l.bf16 %v1089
    %v1091 = vunpack.c.h.bf16 %v1089
    %s1092 = scalar_lea.vmem [#allocation1], 1504
    %1093 = vst [vmem:[%s1092] sm:%s5] %v1090
    %s1094 = smul.addr 4, 187
    %s1095 = scalar_lea.vmem %s0, %s1094
    %s1096 = sshrl.u32 %s5, 1
    %s1097 = sor.u32 %s5, %s1096
    %s1098 = sand.u32 %s1097, 85
    %s1099 = sshrl.u32 %s1098, 1
    %s1100 = sor.u32 %s1098, %s1099
    %s1101 = sand.u32 51, %s1100
    %s1102 = sshrl.u32 %s1101, 2
    %s1103 = sor.u32 %s1101, %s1102
    %s1104 = sand.u32 15, %s1103
    %v1105 = vld [vmem:[%s1095] sm:%s1104]
    %v1106 = vunpack.c.l.bf16 %v1105
    %v1107 = vunpack.c.h.bf16 %v1105
    %s1108 = scalar_lea.vmem [#allocation1], 1496
    %1109 = vst [vmem:[%s1108] sm:%s5] %v1106
    %s1110 = smul.addr 4, 186
    %s1111 = scalar_lea.vmem %s0, %s1110
    %s1112 = sshrl.u32 %s5, 1
    %s1113 = sor.u32 %s5, %s1112
    %s1114 = sand.u32 %s1113, 85
    %s1115 = sshrl.u32 %s1114, 1
    %s1116 = sor.u32 %s1114, %s1115
    %s1117 = sand.u32 51, %s1116
    %s1118 = sshrl.u32 %s1117, 2
    %s1119 = sor.u32 %s1117, %s1118
    %s1120 = sand.u32 15, %s1119
    %v1121 = vld [vmem:[%s1111] sm:%s1120]
    %v1122 = vunpack.c.l.bf16 %v1121
    %v1123 = vunpack.c.h.bf16 %v1121
    %s1124 = scalar_lea.vmem [#allocation1], 1488
    %1125 = vst [vmem:[%s1124] sm:%s5] %v1122
    %s1126 = smul.addr 4, 185
    %s1127 = scalar_lea.vmem %s0, %s1126
    %s1128 = sshrl.u32 %s5, 1
    %s1129 = sor.u32 %s5, %s1128
    %s1130 = sand.u32 %s1129, 85
    %s1131 = sshrl.u32 %s1130, 1
    %s1132 = sor.u32 %s1130, %s1131
    %s1133 = sand.u32 51, %s1132
    %s1134 = sshrl.u32 %s1133, 2
    %s1135 = sor.u32 %s1133, %s1134
    %s1136 = sand.u32 15, %s1135
    %v1137 = vld [vmem:[%s1127] sm:%s1136]
    %v1138 = vunpack.c.l.bf16 %v1137
    %v1139 = vunpack.c.h.bf16 %v1137
    %s1140 = scalar_lea.vmem [#allocation1], 1480
    %1141 = vst [vmem:[%s1140] sm:%s5] %v1138
    %s1142 = smul.addr 4, 184
    %s1143 = scalar_lea.vmem %s0, %s1142
    %s1144 = sshrl.u32 %s5, 1
    %s1145 = sor.u32 %s5, %s1144
    %s1146 = sand.u32 %s1145, 85
    %s1147 = sshrl.u32 %s1146, 1
    %s1148 = sor.u32 %s1146, %s1147
    %s1149 = sand.u32 51, %s1148
    %s1150 = sshrl.u32 %s1149, 2
    %s1151 = sor.u32 %s1149, %s1150
    %s1152 = sand.u32 15, %s1151
    %v1153 = vld [vmem:[%s1143] sm:%s1152]
    %v1154 = vunpack.c.l.bf16 %v1153
    %v1155 = vunpack.c.h.bf16 %v1153
    %s1156 = scalar_lea.vmem [#allocation1], 1472
    %1157 = vst [vmem:[%s1156] sm:%s5] %v1154
    %s1158 = smul.addr 4, 183
    %s1159 = scalar_lea.vmem %s0, %s1158
    %s1160 = sshrl.u32 %s5, 1
    %s1161 = sor.u32 %s5, %s1160
    %s1162 = sand.u32 %s1161, 85
    %s1163 = sshrl.u32 %s1162, 1
    %s1164 = sor.u32 %s1162, %s1163
    %s1165 = sand.u32 51, %s1164
    %s1166 = sshrl.u32 %s1165, 2
    %s1167 = sor.u32 %s1165, %s1166
    %s1168 = sand.u32 15, %s1167
    %v1169 = vld [vmem:[%s1159] sm:%s1168]
    %v1170 = vunpack.c.l.bf16 %v1169
    %v1171 = vunpack.c.h.bf16 %v1169
    %s1172 = scalar_lea.vmem [#allocation1], 1464
    %1173 = vst [vmem:[%s1172] sm:%s5] %v1170
    %s1174 = smul.addr 4, 182
    %s1175 = scalar_lea.vmem %s0, %s1174
    %s1176 = sshrl.u32 %s5, 1
    %s1177 = sor.u32 %s5, %s1176
    %s1178 = sand.u32 %s1177, 85
    %s1179 = sshrl.u32 %s1178, 1
    %s1180 = sor.u32 %s1178, %s1179
    %s1181 = sand.u32 51, %s1180
    %s1182 = sshrl.u32 %s1181, 2
    %s1183 = sor.u32 %s1181, %s1182
    %s1184 = sand.u32 15, %s1183
    %v1185 = vld [vmem:[%s1175] sm:%s1184]
    %v1186 = vunpack.c.l.bf16 %v1185
    %v1187 = vunpack.c.h.bf16 %v1185
    %s1188 = scalar_lea.vmem [#allocation1], 1456
    %1189 = vst [vmem:[%s1188] sm:%s5] %v1186
    %s1190 = smul.addr 4, 181
    %s1191 = scalar_lea.vmem %s0, %s1190
    %s1192 = sshrl.u32 %s5, 1
    %s1193 = sor.u32 %s5, %s1192
    %s1194 = sand.u32 %s1193, 85
    %s1195 = sshrl.u32 %s1194, 1
    %s1196 = sor.u32 %s1194, %s1195
    %s1197 = sand.u32 51, %s1196
    %s1198 = sshrl.u32 %s1197, 2
    %s1199 = sor.u32 %s1197, %s1198
    %s1200 = sand.u32 15, %s1199
    %v1201 = vld [vmem:[%s1191] sm:%s1200]
    %v1202 = vunpack.c.l.bf16 %v1201
    %v1203 = vunpack.c.h.bf16 %v1201
    %s1204 = scalar_lea.vmem [#allocation1], 1448
    %1205 = vst [vmem:[%s1204] sm:%s5] %v1202
    %s1206 = smul.addr 4, 180
    %s1207 = scalar_lea.vmem %s0, %s1206
    %s1208 = sshrl.u32 %s5, 1
    %s1209 = sor.u32 %s5, %s1208
    %s1210 = sand.u32 %s1209, 85
    %s1211 = sshrl.u32 %s1210, 1
    %s1212 = sor.u32 %s1210, %s1211
    %s1213 = sand.u32 51, %s1212
    %s1214 = sshrl.u32 %s1213, 2
    %s1215 = sor.u32 %s1213, %s1214
    %s1216 = sand.u32 15, %s1215
    %v1217 = vld [vmem:[%s1207] sm:%s1216]
    %v1218 = vunpack.c.l.bf16 %v1217
    %v1219 = vunpack.c.h.bf16 %v1217
    %s1220 = scalar_lea.vmem [#allocation1], 1440
    %1221 = vst [vmem:[%s1220] sm:%s5] %v1218
    %s1222 = smul.addr 4, 179
    %s1223 = scalar_lea.vmem %s0, %s1222
    %s1224 = sshrl.u32 %s5, 1
    %s1225 = sor.u32 %s5, %s1224
    %s1226 = sand.u32 %s1225, 85
    %s1227 = sshrl.u32 %s1226, 1
    %s1228 = sor.u32 %s1226, %s1227
    %s1229 = sand.u32 51, %s1228
    %s1230 = sshrl.u32 %s1229, 2
    %s1231 = sor.u32 %s1229, %s1230
    %s1232 = sand.u32 15, %s1231
    %v1233 = vld [vmem:[%s1223] sm:%s1232]
    %v1234 = vunpack.c.l.bf16 %v1233
    %v1235 = vunpack.c.h.bf16 %v1233
    %s1236 = scalar_lea.vmem [#allocation1], 1432
    %1237 = vst [vmem:[%s1236] sm:%s5] %v1234
    %s1238 = smul.addr 4, 178
    %s1239 = scalar_lea.vmem %s0, %s1238
    %s1240 = sshrl.u32 %s5, 1
    %s1241 = sor.u32 %s5, %s1240
    %s1242 = sand.u32 %s1241, 85
    %s1243 = sshrl.u32 %s1242, 1
    %s1244 = sor.u32 %s1242, %s1243
    %s1245 = sand.u32 51, %s1244
    %s1246 = sshrl.u32 %s1245, 2
    %s1247 = sor.u32 %s1245, %s1246
    %s1248 = sand.u32 15, %s1247
    %v1249 = vld [vmem:[%s1239] sm:%s1248]
    %v1250 = vunpack.c.l.bf16 %v1249
    %v1251 = vunpack.c.h.bf16 %v1249
    %s1252 = scalar_lea.vmem [#allocation1], 1424
    %1253 = vst [vmem:[%s1252] sm:%s5] %v1250
    %s1254 = smul.addr 4, 177
    %s1255 = scalar_lea.vmem %s0, %s1254
    %s1256 = sshrl.u32 %s5, 1
    %s1257 = sor.u32 %s5, %s1256
    %s1258 = sand.u32 %s1257, 85
    %s1259 = sshrl.u32 %s1258, 1
    %s1260 = sor.u32 %s1258, %s1259
    %s1261 = sand.u32 51, %s1260
    %s1262 = sshrl.u32 %s1261, 2
    %s1263 = sor.u32 %s1261, %s1262
    %s1264 = sand.u32 15, %s1263
    %v1265 = vld [vmem:[%s1255] sm:%s1264]
    %v1266 = vunpack.c.l.bf16 %v1265
    %v1267 = vunpack.c.h.bf16 %v1265
    %s1268 = scalar_lea.vmem [#allocation1], 1416
    %1269 = vst [vmem:[%s1268] sm:%s5] %v1266
    %s1270 = smul.addr 4, 176
    %s1271 = scalar_lea.vmem %s0, %s1270
    %s1272 = sshrl.u32 %s5, 1
    %s1273 = sor.u32 %s5, %s1272
    %s1274 = sand.u32 %s1273, 85
    %s1275 = sshrl.u32 %s1274, 1
    %s1276 = sor.u32 %s1274, %s1275
    %s1277 = sand.u32 51, %s1276
    %s1278 = sshrl.u32 %s1277, 2
    %s1279 = sor.u32 %s1277, %s1278
    %s1280 = sand.u32 15, %s1279
    %v1281 = vld [vmem:[%s1271] sm:%s1280]
    %v1282 = vunpack.c.l.bf16 %v1281
    %v1283 = vunpack.c.h.bf16 %v1281
    %s1284 = scalar_lea.vmem [#allocation1], 1408
    %1285 = vst [vmem:[%s1284] sm:%s5] %v1282
    %s1286 = smul.addr 4, 175
    %s1287 = scalar_lea.vmem %s0, %s1286
    %s1288 = sshrl.u32 %s5, 1
    %s1289 = sor.u32 %s5, %s1288
    %s1290 = sand.u32 %s1289, 85
    %s1291 = sshrl.u32 %s1290, 1
    %s1292 = sor.u32 %s1290, %s1291
    %s1293 = sand.u32 51, %s1292
    %s1294 = sshrl.u32 %s1293, 2
    %s1295 = sor.u32 %s1293, %s1294
    %s1296 = sand.u32 15, %s1295
    %v1297 = vld [vmem:[%s1287] sm:%s1296]
    %v1298 = vunpack.c.l.bf16 %v1297
    %v1299 = vunpack.c.h.bf16 %v1297
    %s1300 = scalar_lea.vmem [#allocation1], 1400
    %1301 = vst [vmem:[%s1300] sm:%s5] %v1298
    %s1302 = smul.addr 4, 174
    %s1303 = scalar_lea.vmem %s0, %s1302
    %s1304 = sshrl.u32 %s5, 1
    %s1305 = sor.u32 %s5, %s1304
    %s1306 = sand.u32 %s1305, 85
    %s1307 = sshrl.u32 %s1306, 1
    %s1308 = sor.u32 %s1306, %s1307
    %s1309 = sand.u32 51, %s1308
    %s1310 = sshrl.u32 %s1309, 2
    %s1311 = sor.u32 %s1309, %s1310
    %s1312 = sand.u32 15, %s1311
    %v1313 = vld [vmem:[%s1303] sm:%s1312]
    %v1314 = vunpack.c.l.bf16 %v1313
    %v1315 = vunpack.c.h.bf16 %v1313
    %s1316 = scalar_lea.vmem [#allocation1], 1392
    %1317 = vst [vmem:[%s1316] sm:%s5] %v1314
    %s1318 = smul.addr 4, 173
    %s1319 = scalar_lea.vmem %s0, %s1318
    %s1320 = sshrl.u32 %s5, 1
    %s1321 = sor.u32 %s5, %s1320
    %s1322 = sand.u32 %s1321, 85
    %s1323 = sshrl.u32 %s1322, 1
    %s1324 = sor.u32 %s1322, %s1323
    %s1325 = sand.u32 51, %s1324
    %s1326 = sshrl.u32 %s1325, 2
    %s1327 = sor.u32 %s1325, %s1326
    %s1328 = sand.u32 15, %s1327
    %v1329 = vld [vmem:[%s1319] sm:%s1328]
    %v1330 = vunpack.c.l.bf16 %v1329
    %v1331 = vunpack.c.h.bf16 %v1329
    %s1332 = scalar_lea.vmem [#allocation1], 1384
    %1333 = vst [vmem:[%s1332] sm:%s5] %v1330
    %s1334 = smul.addr 4, 172
    %s1335 = scalar_lea.vmem %s0, %s1334
    %s1336 = sshrl.u32 %s5, 1
    %s1337 = sor.u32 %s5, %s1336
    %s1338 = sand.u32 %s1337, 85
    %s1339 = sshrl.u32 %s1338, 1
    %s1340 = sor.u32 %s1338, %s1339
    %s1341 = sand.u32 51, %s1340
    %s1342 = sshrl.u32 %s1341, 2
    %s1343 = sor.u32 %s1341, %s1342
    %s1344 = sand.u32 15, %s1343
    %v1345 = vld [vmem:[%s1335] sm:%s1344]
    %v1346 = vunpack.c.l.bf16 %v1345
    %v1347 = vunpack.c.h.bf16 %v1345
    %s1348 = scalar_lea.vmem [#allocation1], 1376
    %1349 = vst [vmem:[%s1348] sm:%s5] %v1346
    %s1350 = smul.addr 4, 171
    %s1351 = scalar_lea.vmem %s0, %s1350
    %s1352 = sshrl.u32 %s5, 1
    %s1353 = sor.u32 %s5, %s1352
    %s1354 = sand.u32 %s1353, 85
    %s1355 = sshrl.u32 %s1354, 1
    %s1356 = sor.u32 %s1354, %s1355
    %s1357 = sand.u32 51, %s1356
    %s1358 = sshrl.u32 %s1357, 2
    %s1359 = sor.u32 %s1357, %s1358
    %s1360 = sand.u32 15, %s1359
    %v1361 = vld [vmem:[%s1351] sm:%s1360]
    %v1362 = vunpack.c.l.bf16 %v1361
    %v1363 = vunpack.c.h.bf16 %v1361
    %s1364 = scalar_lea.vmem [#allocation1], 1368
    %1365 = vst [vmem:[%s1364] sm:%s5] %v1362
    %s1366 = smul.addr 4, 170
    %s1367 = scalar_lea.vmem %s0, %s1366
    %s1368 = sshrl.u32 %s5, 1
    %s1369 = sor.u32 %s5, %s1368
    %s1370 = sand.u32 %s1369, 85
    %s1371 = sshrl.u32 %s1370, 1
    %s1372 = sor.u32 %s1370, %s1371
    %s1373 = sand.u32 51, %s1372
    %s1374 = sshrl.u32 %s1373, 2
    %s1375 = sor.u32 %s1373, %s1374
    %s1376 = sand.u32 15, %s1375
    %v1377 = vld [vmem:[%s1367] sm:%s1376]
    %v1378 = vunpack.c.l.bf16 %v1377
    %v1379 = vunpack.c.h.bf16 %v1377
    %s1380 = scalar_lea.vmem [#allocation1], 1360
    %1381 = vst [vmem:[%s1380] sm:%s5] %v1378
    %s1382 = smul.addr 4, 169
    %s1383 = scalar_lea.vmem %s0, %s1382
    %s1384 = sshrl.u32 %s5, 1
    %s1385 = sor.u32 %s5, %s1384
    %s1386 = sand.u32 %s1385, 85
    %s1387 = sshrl.u32 %s1386, 1
    %s1388 = sor.u32 %s1386, %s1387
    %s1389 = sand.u32 51, %s1388
    %s1390 = sshrl.u32 %s1389, 2
    %s1391 = sor.u32 %s1389, %s1390
    %s1392 = sand.u32 15, %s1391
    %v1393 = vld [vmem:[%s1383] sm:%s1392]
    %v1394 = vunpack.c.l.bf16 %v1393
    %v1395 = vunpack.c.h.bf16 %v1393
    %s1396 = scalar_lea.vmem [#allocation1], 1352
    %1397 = vst [vmem:[%s1396] sm:%s5] %v1394
    %s1398 = smul.addr 4, 168
    %s1399 = scalar_lea.vmem %s0, %s1398
    %s1400 = sshrl.u32 %s5, 1
    %s1401 = sor.u32 %s5, %s1400
    %s1402 = sand.u32 %s1401, 85
    %s1403 = sshrl.u32 %s1402, 1
    %s1404 = sor.u32 %s1402, %s1403
    %s1405 = sand.u32 51, %s1404
    %s1406 = sshrl.u32 %s1405, 2
    %s1407 = sor.u32 %s1405, %s1406
    %s1408 = sand.u32 15, %s1407
    %v1409 = vld [vmem:[%s1399] sm:%s1408]
    %v1410 = vunpack.c.l.bf16 %v1409
    %v1411 = vunpack.c.h.bf16 %v1409
    %s1412 = scalar_lea.vmem [#allocation1], 1344
    %1413 = vst [vmem:[%s1412] sm:%s5] %v1410
    %s1414 = smul.addr 4, 167
    %s1415 = scalar_lea.vmem %s0, %s1414
    %s1416 = sshrl.u32 %s5, 1
    %s1417 = sor.u32 %s5, %s1416
    %s1418 = sand.u32 %s1417, 85
    %s1419 = sshrl.u32 %s1418, 1
    %s1420 = sor.u32 %s1418, %s1419
    %s1421 = sand.u32 51, %s1420
    %s1422 = sshrl.u32 %s1421, 2
    %s1423 = sor.u32 %s1421, %s1422
    %s1424 = sand.u32 15, %s1423
    %v1425 = vld [vmem:[%s1415] sm:%s1424]
    %v1426 = vunpack.c.l.bf16 %v1425
    %v1427 = vunpack.c.h.bf16 %v1425
    %s1428 = scalar_lea.vmem [#allocation1], 1336
    %1429 = vst [vmem:[%s1428] sm:%s5] %v1426
    %s1430 = smul.addr 4, 166
    %s1431 = scalar_lea.vmem %s0, %s1430
    %s1432 = sshrl.u32 %s5, 1
    %s1433 = sor.u32 %s5, %s1432
    %s1434 = sand.u32 %s1433, 85
    %s1435 = sshrl.u32 %s1434, 1
    %s1436 = sor.u32 %s1434, %s1435
    %s1437 = sand.u32 51, %s1436
    %s1438 = sshrl.u32 %s1437, 2
    %s1439 = sor.u32 %s1437, %s1438
    %s1440 = sand.u32 15, %s1439
    %v1441 = vld [vmem:[%s1431] sm:%s1440]
    %v1442 = vunpack.c.l.bf16 %v1441
    %v1443 = vunpack.c.h.bf16 %v1441
    %s1444 = scalar_lea.vmem [#allocation1], 1328
    %1445 = vst [vmem:[%s1444] sm:%s5] %v1442
    %s1446 = smul.addr 4, 165
    %s1447 = scalar_lea.vmem %s0, %s1446
    %s1448 = sshrl.u32 %s5, 1
    %s1449 = sor.u32 %s5, %s1448
    %s1450 = sand.u32 %s1449, 85
    %s1451 = sshrl.u32 %s1450, 1
    %s1452 = sor.u32 %s1450, %s1451
    %s1453 = sand.u32 51, %s1452
    %s1454 = sshrl.u32 %s1453, 2
    %s1455 = sor.u32 %s1453, %s1454
    %s1456 = sand.u32 15, %s1455
    %v1457 = vld [vmem:[%s1447] sm:%s1456]
    %v1458 = vunpack.c.l.bf16 %v1457
    %v1459 = vunpack.c.h.bf16 %v1457
    %s1460 = scalar_lea.vmem [#allocation1], 1320
    %1461 = vst [vmem:[%s1460] sm:%s5] %v1458
    %s1462 = smul.addr 4, 164
    %s1463 = scalar_lea.vmem %s0, %s1462
    %s1464 = sshrl.u32 %s5, 1
    %s1465 = sor.u32 %s5, %s1464
    %s1466 = sand.u32 %s1465, 85
    %s1467 = sshrl.u32 %s1466, 1
    %s1468 = sor.u32 %s1466, %s1467
    %s1469 = sand.u32 51, %s1468
    %s1470 = sshrl.u32 %s1469, 2
    %s1471 = sor.u32 %s1469, %s1470
    %s1472 = sand.u32 15, %s1471
    %v1473 = vld [vmem:[%s1463] sm:%s1472]
    %v1474 = vunpack.c.l.bf16 %v1473
    %v1475 = vunpack.c.h.bf16 %v1473
    %s1476 = scalar_lea.vmem [#allocation1], 1312
    %1477 = vst [vmem:[%s1476] sm:%s5] %v1474
    %s1478 = smul.addr 4, 163
    %s1479 = scalar_lea.vmem %s0, %s1478
    %s1480 = sshrl.u32 %s5, 1
    %s1481 = sor.u32 %s5, %s1480
    %s1482 = sand.u32 %s1481, 85
    %s1483 = sshrl.u32 %s1482, 1
    %s1484 = sor.u32 %s1482, %s1483
    %s1485 = sand.u32 51, %s1484
    %s1486 = sshrl.u32 %s1485, 2
    %s1487 = sor.u32 %s1485, %s1486
    %s1488 = sand.u32 15, %s1487
    %v1489 = vld [vmem:[%s1479] sm:%s1488]
    %v1490 = vunpack.c.l.bf16 %v1489
    %v1491 = vunpack.c.h.bf16 %v1489
    %s1492 = scalar_lea.vmem [#allocation1], 1304
    %1493 = vst [vmem:[%s1492] sm:%s5] %v1490
    %s1494 = smul.addr 4, 162
    %s1495 = scalar_lea.vmem %s0, %s1494
    %s1496 = sshrl.u32 %s5, 1
    %s1497 = sor.u32 %s5, %s1496
    %s1498 = sand.u32 %s1497, 85
    %s1499 = sshrl.u32 %s1498, 1
    %s1500 = sor.u32 %s1498, %s1499
    %s1501 = sand.u32 51, %s1500
    %s1502 = sshrl.u32 %s1501, 2
    %s1503 = sor.u32 %s1501, %s1502
    %s1504 = sand.u32 15, %s1503
    %v1505 = vld [vmem:[%s1495] sm:%s1504]
    %v1506 = vunpack.c.l.bf16 %v1505
    %v1507 = vunpack.c.h.bf16 %v1505
    %s1508 = scalar_lea.vmem [#allocation1], 1296
    %1509 = vst [vmem:[%s1508] sm:%s5] %v1506
    %s1510 = smul.addr 4, 161
    %s1511 = scalar_lea.vmem %s0, %s1510
    %s1512 = sshrl.u32 %s5, 1
    %s1513 = sor.u32 %s5, %s1512
    %s1514 = sand.u32 %s1513, 85
    %s1515 = sshrl.u32 %s1514, 1
    %s1516 = sor.u32 %s1514, %s1515
    %s1517 = sand.u32 51, %s1516
    %s1518 = sshrl.u32 %s1517, 2
    %s1519 = sor.u32 %s1517, %s1518
    %s1520 = sand.u32 15, %s1519
    %v1521 = vld [vmem:[%s1511] sm:%s1520]
    %v1522 = vunpack.c.l.bf16 %v1521
    %v1523 = vunpack.c.h.bf16 %v1521
    %s1524 = scalar_lea.vmem [#allocation1], 1288
    %1525 = vst [vmem:[%s1524] sm:%s5] %v1522
    %s1526 = smul.addr 4, 160
    %s1527 = scalar_lea.vmem %s0, %s1526
    %s1528 = sshrl.u32 %s5, 1
    %s1529 = sor.u32 %s5, %s1528
    %s1530 = sand.u32 %s1529, 85
    %s1531 = sshrl.u32 %s1530, 1
    %s1532 = sor.u32 %s1530, %s1531
    %s1533 = sand.u32 51, %s1532
    %s1534 = sshrl.u32 %s1533, 2
    %s1535 = sor.u32 %s1533, %s1534
    %s1536 = sand.u32 15, %s1535
    %v1537 = vld [vmem:[%s1527] sm:%s1536]
    %v1538 = vunpack.c.l.bf16 %v1537
    %v1539 = vunpack.c.h.bf16 %v1537
    %s1540 = scalar_lea.vmem [#allocation1], 1280
    %1541 = vst [vmem:[%s1540] sm:%s5] %v1538
    %s1542 = smul.addr 4, 159
    %s1543 = scalar_lea.vmem %s0, %s1542
    %s1544 = sshrl.u32 %s5, 1
    %s1545 = sor.u32 %s5, %s1544
    %s1546 = sand.u32 %s1545, 85
    %s1547 = sshrl.u32 %s1546, 1
    %s1548 = sor.u32 %s1546, %s1547
    %s1549 = sand.u32 51, %s1548
    %s1550 = sshrl.u32 %s1549, 2
    %s1551 = sor.u32 %s1549, %s1550
    %s1552 = sand.u32 15, %s1551
    %v1553 = vld [vmem:[%s1543] sm:%s1552]
    %v1554 = vunpack.c.l.bf16 %v1553
    %v1555 = vunpack.c.h.bf16 %v1553
    %s1556 = scalar_lea.vmem [#allocation1], 1272
    %1557 = vst [vmem:[%s1556] sm:%s5] %v1554
    %s1558 = smul.addr 4, 158
    %s1559 = scalar_lea.vmem %s0, %s1558
    %s1560 = sshrl.u32 %s5, 1
    %s1561 = sor.u32 %s5, %s1560
    %s1562 = sand.u32 %s1561, 85
    %s1563 = sshrl.u32 %s1562, 1
    %s1564 = sor.u32 %s1562, %s1563
    %s1565 = sand.u32 51, %s1564
    %s1566 = sshrl.u32 %s1565, 2
    %s1567 = sor.u32 %s1565, %s1566
    %s1568 = sand.u32 15, %s1567
    %v1569 = vld [vmem:[%s1559] sm:%s1568]
    %v1570 = vunpack.c.l.bf16 %v1569
    %v1571 = vunpack.c.h.bf16 %v1569
    %s1572 = scalar_lea.vmem [#allocation1], 1264
    %1573 = vst [vmem:[%s1572] sm:%s5] %v1570
    %s1574 = smul.addr 4, 157
    %s1575 = scalar_lea.vmem %s0, %s1574
    %s1576 = sshrl.u32 %s5, 1
    %s1577 = sor.u32 %s5, %s1576
    %s1578 = sand.u32 %s1577, 85
    %s1579 = sshrl.u32 %s1578, 1
    %s1580 = sor.u32 %s1578, %s1579
    %s1581 = sand.u32 51, %s1580
    %s1582 = sshrl.u32 %s1581, 2
    %s1583 = sor.u32 %s1581, %s1582
    %s1584 = sand.u32 15, %s1583
    %v1585 = vld [vmem:[%s1575] sm:%s1584]
    %v1586 = vunpack.c.l.bf16 %v1585
    %v1587 = vunpack.c.h.bf16 %v1585
    %s1588 = scalar_lea.vmem [#allocation1], 1256
    %1589 = vst [vmem:[%s1588] sm:%s5] %v1586
    %s1590 = smul.addr 4, 156
    %s1591 = scalar_lea.vmem %s0, %s1590
    %s1592 = sshrl.u32 %s5, 1
    %s1593 = sor.u32 %s5, %s1592
    %s1594 = sand.u32 %s1593, 85
    %s1595 = sshrl.u32 %s1594, 1
    %s1596 = sor.u32 %s1594, %s1595
    %s1597 = sand.u32 51, %s1596
    %s1598 = sshrl.u32 %s1597, 2
    %s1599 = sor.u32 %s1597, %s1598
    %s1600 = sand.u32 15, %s1599
    %v1601 = vld [vmem:[%s1591] sm:%s1600]
    %v1602 = vunpack.c.l.bf16 %v1601
    %v1603 = vunpack.c.h.bf16 %v1601
    %s1604 = scalar_lea.vmem [#allocation1], 1248
    %1605 = vst [vmem:[%s1604] sm:%s5] %v1602
    %s1606 = smul.addr 4, 155
    %s1607 = scalar_lea.vmem %s0, %s1606
    %s1608 = sshrl.u32 %s5, 1
    %s1609 = sor.u32 %s5, %s1608
    %s1610 = sand.u32 %s1609, 85
    %s1611 = sshrl.u32 %s1610, 1
    %s1612 = sor.u32 %s1610, %s1611
    %s1613 = sand.u32 51, %s1612
    %s1614 = sshrl.u32 %s1613, 2
    %s1615 = sor.u32 %s1613, %s1614
    %s1616 = sand.u32 15, %s1615
    %v1617 = vld [vmem:[%s1607] sm:%s1616]
    %v1618 = vunpack.c.l.bf16 %v1617
    %v1619 = vunpack.c.h.bf16 %v1617
    %s1620 = scalar_lea.vmem [#allocation1], 1240
    %1621 = vst [vmem:[%s1620] sm:%s5] %v1618
    %s1622 = smul.addr 4, 154
    %s1623 = scalar_lea.vmem %s0, %s1622
    %s1624 = sshrl.u32 %s5, 1
    %s1625 = sor.u32 %s5, %s1624
    %s1626 = sand.u32 %s1625, 85
    %s1627 = sshrl.u32 %s1626, 1
    %s1628 = sor.u32 %s1626, %s1627
    %s1629 = sand.u32 51, %s1628
    %s1630 = sshrl.u32 %s1629, 2
    %s1631 = sor.u32 %s1629, %s1630
    %s1632 = sand.u32 15, %s1631
    %v1633 = vld [vmem:[%s1623] sm:%s1632]
    %v1634 = vunpack.c.l.bf16 %v1633
    %v1635 = vunpack.c.h.bf16 %v1633
    %s1636 = scalar_lea.vmem [#allocation1], 1232
    %1637 = vst [vmem:[%s1636] sm:%s5] %v1634
    %s1638 = smul.addr 4, 153
    %s1639 = scalar_lea.vmem %s0, %s1638
    %s1640 = sshrl.u32 %s5, 1
    %s1641 = sor.u32 %s5, %s1640
    %s1642 = sand.u32 %s1641, 85
    %s1643 = sshrl.u32 %s1642, 1
    %s1644 = sor.u32 %s1642, %s1643
    %s1645 = sand.u32 51, %s1644
    %s1646 = sshrl.u32 %s1645, 2
    %s1647 = sor.u32 %s1645, %s1646
    %s1648 = sand.u32 15, %s1647
    %v1649 = vld [vmem:[%s1639] sm:%s1648]
    %v1650 = vunpack.c.l.bf16 %v1649
    %v1651 = vunpack.c.h.bf16 %v1649
    %s1652 = scalar_lea.vmem [#allocation1], 1224
    %1653 = vst [vmem:[%s1652] sm:%s5] %v1650
    %s1654 = smul.addr 4, 152
    %s1655 = scalar_lea.vmem %s0, %s1654
    %s1656 = sshrl.u32 %s5, 1
    %s1657 = sor.u32 %s5, %s1656
    %s1658 = sand.u32 %s1657, 85
    %s1659 = sshrl.u32 %s1658, 1
    %s1660 = sor.u32 %s1658, %s1659
    %s1661 = sand.u32 51, %s1660
    %s1662 = sshrl.u32 %s1661, 2
    %s1663 = sor.u32 %s1661, %s1662
    %s1664 = sand.u32 15, %s1663
    %v1665 = vld [vmem:[%s1655] sm:%s1664]
    %v1666 = vunpack.c.l.bf16 %v1665
    %v1667 = vunpack.c.h.bf16 %v1665
    %s1668 = scalar_lea.vmem [#allocation1], 1216
    %1669 = vst [vmem:[%s1668] sm:%s5] %v1666
    %s1670 = smul.addr 4, 151
    %s1671 = scalar_lea.vmem %s0, %s1670
    %s1672 = sshrl.u32 %s5, 1
    %s1673 = sor.u32 %s5, %s1672
    %s1674 = sand.u32 %s1673, 85
    %s1675 = sshrl.u32 %s1674, 1
    %s1676 = sor.u32 %s1674, %s1675
    %s1677 = sand.u32 51, %s1676
    %s1678 = sshrl.u32 %s1677, 2
    %s1679 = sor.u32 %s1677, %s1678
    %s1680 = sand.u32 15, %s1679
    %v1681 = vld [vmem:[%s1671] sm:%s1680]
    %v1682 = vunpack.c.l.bf16 %v1681
    %v1683 = vunpack.c.h.bf16 %v1681
    %s1684 = scalar_lea.vmem [#allocation1], 1208
    %1685 = vst [vmem:[%s1684] sm:%s5] %v1682
    %s1686 = smul.addr 4, 150
    %s1687 = scalar_lea.vmem %s0, %s1686
    %s1688 = sshrl.u32 %s5, 1
    %s1689 = sor.u32 %s5, %s1688
    %s1690 = sand.u32 %s1689, 85
    %s1691 = sshrl.u32 %s1690, 1
    %s1692 = sor.u32 %s1690, %s1691
    %s1693 = sand.u32 51, %s1692
    %s1694 = sshrl.u32 %s1693, 2
    %s1695 = sor.u32 %s1693, %s1694
    %s1696 = sand.u32 15, %s1695
    %v1697 = vld [vmem:[%s1687] sm:%s1696]
    %v1698 = vunpack.c.l.bf16 %v1697
    %v1699 = vunpack.c.h.bf16 %v1697
    %s1700 = scalar_lea.vmem [#allocation1], 1200
    %1701 = vst [vmem:[%s1700] sm:%s5] %v1698
    %s1702 = smul.addr 4, 149
    %s1703 = scalar_lea.vmem %s0, %s1702
    %s1704 = sshrl.u32 %s5, 1
    %s1705 = sor.u32 %s5, %s1704
    %s1706 = sand.u32 %s1705, 85
    %s1707 = sshrl.u32 %s1706, 1
    %s1708 = sor.u32 %s1706, %s1707
    %s1709 = sand.u32 51, %s1708
    %s1710 = sshrl.u32 %s1709, 2
    %s1711 = sor.u32 %s1709, %s1710
    %s1712 = sand.u32 15, %s1711
    %v1713 = vld [vmem:[%s1703] sm:%s1712]
    %v1714 = vunpack.c.l.bf16 %v1713
    %v1715 = vunpack.c.h.bf16 %v1713
    %s1716 = scalar_lea.vmem [#allocation1], 1192
    %1717 = vst [vmem:[%s1716] sm:%s5] %v1714
    %s1718 = smul.addr 4, 148
    %s1719 = scalar_lea.vmem %s0, %s1718
    %s1720 = sshrl.u32 %s5, 1
    %s1721 = sor.u32 %s5, %s1720
    %s1722 = sand.u32 %s1721, 85
    %s1723 = sshrl.u32 %s1722, 1
    %s1724 = sor.u32 %s1722, %s1723
    %s1725 = sand.u32 51, %s1724
    %s1726 = sshrl.u32 %s1725, 2
    %s1727 = sor.u32 %s1725, %s1726
    %s1728 = sand.u32 15, %s1727
    %v1729 = vld [vmem:[%s1719] sm:%s1728]
    %v1730 = vunpack.c.l.bf16 %v1729
    %v1731 = vunpack.c.h.bf16 %v1729
    %s1732 = scalar_lea.vmem [#allocation1], 1184
    %1733 = vst [vmem:[%s1732] sm:%s5] %v1730
    %s1734 = smul.addr 4, 147
    %s1735 = scalar_lea.vmem %s0, %s1734
    %s1736 = sshrl.u32 %s5, 1
    %s1737 = sor.u32 %s5, %s1736
    %s1738 = sand.u32 %s1737, 85
    %s1739 = sshrl.u32 %s1738, 1
    %s1740 = sor.u32 %s1738, %s1739
    %s1741 = sand.u32 51, %s1740
    %s1742 = sshrl.u32 %s1741, 2
    %s1743 = sor.u32 %s1741, %s1742
    %s1744 = sand.u32 15, %s1743
    %v1745 = vld [vmem:[%s1735] sm:%s1744]
    %v1746 = vunpack.c.l.bf16 %v1745
    %v1747 = vunpack.c.h.bf16 %v1745
    %s1748 = scalar_lea.vmem [#allocation1], 1176
    %1749 = vst [vmem:[%s1748] sm:%s5] %v1746
    %s1750 = smul.addr 4, 146
    %s1751 = scalar_lea.vmem %s0, %s1750
    %s1752 = sshrl.u32 %s5, 1
    %s1753 = sor.u32 %s5, %s1752
    %s1754 = sand.u32 %s1753, 85
    %s1755 = sshrl.u32 %s1754, 1
    %s1756 = sor.u32 %s1754, %s1755
    %s1757 = sand.u32 51, %s1756
    %s1758 = sshrl.u32 %s1757, 2
    %s1759 = sor.u32 %s1757, %s1758
    %s1760 = sand.u32 15, %s1759
    %v1761 = vld [vmem:[%s1751] sm:%s1760]
    %v1762 = vunpack.c.l.bf16 %v1761
    %v1763 = vunpack.c.h.bf16 %v1761
    %s1764 = scalar_lea.vmem [#allocation1], 1168
    %1765 = vst [vmem:[%s1764] sm:%s5] %v1762
    %s1766 = smul.addr 4, 145
    %s1767 = scalar_lea.vmem %s0, %s1766
    %s1768 = sshrl.u32 %s5, 1
    %s1769 = sor.u32 %s5, %s1768
    %s1770 = sand.u32 %s1769, 85
    %s1771 = sshrl.u32 %s1770, 1
    %s1772 = sor.u32 %s1770, %s1771
    %s1773 = sand.u32 51, %s1772
    %s1774 = sshrl.u32 %s1773, 2
    %s1775 = sor.u32 %s1773, %s1774
    %s1776 = sand.u32 15, %s1775
    %v1777 = vld [vmem:[%s1767] sm:%s1776]
    %v1778 = vunpack.c.l.bf16 %v1777
    %v1779 = vunpack.c.h.bf16 %v1777
    %s1780 = scalar_lea.vmem [#allocation1], 1160
    %1781 = vst [vmem:[%s1780] sm:%s5] %v1778
    %s1782 = smul.addr 4, 144
    %s1783 = scalar_lea.vmem %s0, %s1782
    %s1784 = sshrl.u32 %s5, 1
    %s1785 = sor.u32 %s5, %s1784
    %s1786 = sand.u32 %s1785, 85
    %s1787 = sshrl.u32 %s1786, 1
    %s1788 = sor.u32 %s1786, %s1787
    %s1789 = sand.u32 51, %s1788
    %s1790 = sshrl.u32 %s1789, 2
    %s1791 = sor.u32 %s1789, %s1790
    %s1792 = sand.u32 15, %s1791
    %v1793 = vld [vmem:[%s1783] sm:%s1792]
    %v1794 = vunpack.c.l.bf16 %v1793
    %v1795 = vunpack.c.h.bf16 %v1793
    %s1796 = scalar_lea.vmem [#allocation1], 1152
    %1797 = vst [vmem:[%s1796] sm:%s5] %v1794
    %s1798 = smul.addr 4, 143
    %s1799 = scalar_lea.vmem %s0, %s1798
    %s1800 = sshrl.u32 %s5, 1
    %s1801 = sor.u32 %s5, %s1800
    %s1802 = sand.u32 %s1801, 85
    %s1803 = sshrl.u32 %s1802, 1
    %s1804 = sor.u32 %s1802, %s1803
    %s1805 = sand.u32 51, %s1804
    %s1806 = sshrl.u32 %s1805, 2
    %s1807 = sor.u32 %s1805, %s1806
    %s1808 = sand.u32 15, %s1807
    %v1809 = vld [vmem:[%s1799] sm:%s1808]
    %v1810 = vunpack.c.l.bf16 %v1809
    %v1811 = vunpack.c.h.bf16 %v1809
    %s1812 = scalar_lea.vmem [#allocation1], 1144
    %1813 = vst [vmem:[%s1812] sm:%s5] %v1810
    %s1814 = smul.addr 4, 142
    %s1815 = scalar_lea.vmem %s0, %s1814
    %s1816 = sshrl.u32 %s5, 1
    %s1817 = sor.u32 %s5, %s1816
    %s1818 = sand.u32 %s1817, 85
    %s1819 = sshrl.u32 %s1818, 1
    %s1820 = sor.u32 %s1818, %s1819
    %s1821 = sand.u32 51, %s1820
    %s1822 = sshrl.u32 %s1821, 2
    %s1823 = sor.u32 %s1821, %s1822
    %s1824 = sand.u32 15, %s1823
    %v1825 = vld [vmem:[%s1815] sm:%s1824]
    %v1826 = vunpack.c.l.bf16 %v1825
    %v1827 = vunpack.c.h.bf16 %v1825
    %s1828 = scalar_lea.vmem [#allocation1], 1136
    %1829 = vst [vmem:[%s1828] sm:%s5] %v1826
    %s1830 = smul.addr 4, 141
    %s1831 = scalar_lea.vmem %s0, %s1830
    %s1832 = sshrl.u32 %s5, 1
    %s1833 = sor.u32 %s5, %s1832
    %s1834 = sand.u32 %s1833, 85
    %s1835 = sshrl.u32 %s1834, 1
    %s1836 = sor.u32 %s1834, %s1835
    %s1837 = sand.u32 51, %s1836
    %s1838 = sshrl.u32 %s1837, 2
    %s1839 = sor.u32 %s1837, %s1838
    %s1840 = sand.u32 15, %s1839
    %v1841 = vld [vmem:[%s1831] sm:%s1840]
    %v1842 = vunpack.c.l.bf16 %v1841
    %v1843 = vunpack.c.h.bf16 %v1841
    %s1844 = scalar_lea.vmem [#allocation1], 1128
    %1845 = vst [vmem:[%s1844] sm:%s5] %v1842
    %s1846 = smul.addr 4, 140
    %s1847 = scalar_lea.vmem %s0, %s1846
    %s1848 = sshrl.u32 %s5, 1
    %s1849 = sor.u32 %s5, %s1848
    %s1850 = sand.u32 %s1849, 85
    %s1851 = sshrl.u32 %s1850, 1
    %s1852 = sor.u32 %s1850, %s1851
    %s1853 = sand.u32 51, %s1852
    %s1854 = sshrl.u32 %s1853, 2
    %s1855 = sor.u32 %s1853, %s1854
    %s1856 = sand.u32 15, %s1855
    %v1857 = vld [vmem:[%s1847] sm:%s1856]
    %v1858 = vunpack.c.l.bf16 %v1857
    %v1859 = vunpack.c.h.bf16 %v1857
    %s1860 = scalar_lea.vmem [#allocation1], 1120
    %1861 = vst [vmem:[%s1860] sm:%s5] %v1858
    %s1862 = smul.addr 4, 139
    %s1863 = scalar_lea.vmem %s0, %s1862
    %s1864 = sshrl.u32 %s5, 1
    %s1865 = sor.u32 %s5, %s1864
    %s1866 = sand.u32 %s1865, 85
    %s1867 = sshrl.u32 %s1866, 1
    %s1868 = sor.u32 %s1866, %s1867
    %s1869 = sand.u32 51, %s1868
    %s1870 = sshrl.u32 %s1869, 2
    %s1871 = sor.u32 %s1869, %s1870
    %s1872 = sand.u32 15, %s1871
    %v1873 = vld [vmem:[%s1863] sm:%s1872]
    %v1874 = vunpack.c.l.bf16 %v1873
    %v1875 = vunpack.c.h.bf16 %v1873
    %s1876 = scalar_lea.vmem [#allocation1], 1112
    %1877 = vst [vmem:[%s1876] sm:%s5] %v1874
    %s1878 = smul.addr 4, 138
    %s1879 = scalar_lea.vmem %s0, %s1878
    %s1880 = sshrl.u32 %s5, 1
    %s1881 = sor.u32 %s5, %s1880
    %s1882 = sand.u32 %s1881, 85
    %s1883 = sshrl.u32 %s1882, 1
    %s1884 = sor.u32 %s1882, %s1883
    %s1885 = sand.u32 51, %s1884
    %s1886 = sshrl.u32 %s1885, 2
    %s1887 = sor.u32 %s1885, %s1886
    %s1888 = sand.u32 15, %s1887
    %v1889 = vld [vmem:[%s1879] sm:%s1888]
    %v1890 = vunpack.c.l.bf16 %v1889
    %v1891 = vunpack.c.h.bf16 %v1889
    %s1892 = scalar_lea.vmem [#allocation1], 1104
    %1893 = vst [vmem:[%s1892] sm:%s5] %v1890
    %s1894 = smul.addr 4, 137
    %s1895 = scalar_lea.vmem %s0, %s1894
    %s1896 = sshrl.u32 %s5, 1
    %s1897 = sor.u32 %s5, %s1896
    %s1898 = sand.u32 %s1897, 85
    %s1899 = sshrl.u32 %s1898, 1
    %s1900 = sor.u32 %s1898, %s1899
    %s1901 = sand.u32 51, %s1900
    %s1902 = sshrl.u32 %s1901, 2
    %s1903 = sor.u32 %s1901, %s1902
    %s1904 = sand.u32 15, %s1903
    %v1905 = vld [vmem:[%s1895] sm:%s1904]
    %v1906 = vunpack.c.l.bf16 %v1905
    %v1907 = vunpack.c.h.bf16 %v1905
    %s1908 = scalar_lea.vmem [#allocation1], 1096
    %1909 = vst [vmem:[%s1908] sm:%s5] %v1906
    %s1910 = smul.addr 4, 136
    %s1911 = scalar_lea.vmem %s0, %s1910
    %s1912 = sshrl.u32 %s5, 1
    %s1913 = sor.u32 %s5, %s1912
    %s1914 = sand.u32 %s1913, 85
    %s1915 = sshrl.u32 %s1914, 1
    %s1916 = sor.u32 %s1914, %s1915
    %s1917 = sand.u32 51, %s1916
    %s1918 = sshrl.u32 %s1917, 2
    %s1919 = sor.u32 %s1917, %s1918
    %s1920 = sand.u32 15, %s1919
    %v1921 = vld [vmem:[%s1911] sm:%s1920]
    %v1922 = vunpack.c.l.bf16 %v1921
    %v1923 = vunpack.c.h.bf16 %v1921
    %s1924 = scalar_lea.vmem [#allocation1], 1088
    %1925 = vst [vmem:[%s1924] sm:%s5] %v1922
    %s1926 = smul.addr 4, 135
    %s1927 = scalar_lea.vmem %s0, %s1926
    %s1928 = sshrl.u32 %s5, 1
    %s1929 = sor.u32 %s5, %s1928
    %s1930 = sand.u32 %s1929, 85
    %s1931 = sshrl.u32 %s1930, 1
    %s1932 = sor.u32 %s1930, %s1931
    %s1933 = sand.u32 51, %s1932
    %s1934 = sshrl.u32 %s1933, 2
    %s1935 = sor.u32 %s1933, %s1934
    %s1936 = sand.u32 15, %s1935
    %v1937 = vld [vmem:[%s1927] sm:%s1936]
    %v1938 = vunpack.c.l.bf16 %v1937
    %v1939 = vunpack.c.h.bf16 %v1937
    %s1940 = scalar_lea.vmem [#allocation1], 1080
    %1941 = vst [vmem:[%s1940] sm:%s5] %v1938
    %s1942 = smul.addr 4, 134
    %s1943 = scalar_lea.vmem %s0, %s1942
    %s1944 = sshrl.u32 %s5, 1
    %s1945 = sor.u32 %s5, %s1944
    %s1946 = sand.u32 %s1945, 85
    %s1947 = sshrl.u32 %s1946, 1
    %s1948 = sor.u32 %s1946, %s1947
    %s1949 = sand.u32 51, %s1948
    %s1950 = sshrl.u32 %s1949, 2
    %s1951 = sor.u32 %s1949, %s1950
    %s1952 = sand.u32 15, %s1951
    %v1953 = vld [vmem:[%s1943] sm:%s1952]
    %v1954 = vunpack.c.l.bf16 %v1953
    %v1955 = vunpack.c.h.bf16 %v1953
    %s1956 = scalar_lea.vmem [#allocation1], 1072
    %1957 = vst [vmem:[%s1956] sm:%s5] %v1954
    %s1958 = smul.addr 4, 133
    %s1959 = scalar_lea.vmem %s0, %s1958
    %s1960 = sshrl.u32 %s5, 1
    %s1961 = sor.u32 %s5, %s1960
    %s1962 = sand.u32 %s1961, 85
    %s1963 = sshrl.u32 %s1962, 1
    %s1964 = sor.u32 %s1962, %s1963
    %s1965 = sand.u32 51, %s1964
    %s1966 = sshrl.u32 %s1965, 2
    %s1967 = sor.u32 %s1965, %s1966
    %s1968 = sand.u32 15, %s1967
    %v1969 = vld [vmem:[%s1959] sm:%s1968]
    %v1970 = vunpack.c.l.bf16 %v1969
    %v1971 = vunpack.c.h.bf16 %v1969
    %s1972 = scalar_lea.vmem [#allocation1], 1064
    %1973 = vst [vmem:[%s1972] sm:%s5] %v1970
    %s1974 = smul.addr 4, 132
    %s1975 = scalar_lea.vmem %s0, %s1974
    %s1976 = sshrl.u32 %s5, 1
    %s1977 = sor.u32 %s5, %s1976
    %s1978 = sand.u32 %s1977, 85
    %s1979 = sshrl.u32 %s1978, 1
    %s1980 = sor.u32 %s1978, %s1979
    %s1981 = sand.u32 51, %s1980
    %s1982 = sshrl.u32 %s1981, 2
    %s1983 = sor.u32 %s1981, %s1982
    %s1984 = sand.u32 15, %s1983
    %v1985 = vld [vmem:[%s1975] sm:%s1984]
    %v1986 = vunpack.c.l.bf16 %v1985
    %v1987 = vunpack.c.h.bf16 %v1985
    %s1988 = scalar_lea.vmem [#allocation1], 1056
    %1989 = vst [vmem:[%s1988] sm:%s5] %v1986
    %s1990 = smul.addr 4, 131
    %s1991 = scalar_lea.vmem %s0, %s1990
    %s1992 = sshrl.u32 %s5, 1
    %s1993 = sor.u32 %s5, %s1992
    %s1994 = sand.u32 %s1993, 85
    %s1995 = sshrl.u32 %s1994, 1
    %s1996 = sor.u32 %s1994, %s1995
    %s1997 = sand.u32 51, %s1996
    %s1998 = sshrl.u32 %s1997, 2
    %s1999 = sor.u32 %s1997, %s1998
    %s2000 = sand.u32 15, %s1999
    %v2001 = vld [vmem:[%s1991] sm:%s2000]
    %v2002 = vunpack.c.l.bf16 %v2001
    %v2003 = vunpack.c.h.bf16 %v2001
    %s2004 = scalar_lea.vmem [#allocation1], 1048
    %2005 = vst [vmem:[%s2004] sm:%s5] %v2002
    %s2006 = smul.addr 4, 130
    %s2007 = scalar_lea.vmem %s0, %s2006
    %s2008 = sshrl.u32 %s5, 1
    %s2009 = sor.u32 %s5, %s2008
    %s2010 = sand.u32 %s2009, 85
    %s2011 = sshrl.u32 %s2010, 1
    %s2012 = sor.u32 %s2010, %s2011
    %s2013 = sand.u32 51, %s2012
    %s2014 = sshrl.u32 %s2013, 2
    %s2015 = sor.u32 %s2013, %s2014
    %s2016 = sand.u32 15, %s2015
    %v2017 = vld [vmem:[%s2007] sm:%s2016]
    %v2018 = vunpack.c.l.bf16 %v2017
    %v2019 = vunpack.c.h.bf16 %v2017
    %s2020 = scalar_lea.vmem [#allocation1], 1040
    %2021 = vst [vmem:[%s2020] sm:%s5] %v2018
    %s2022 = smul.addr 4, 129
    %s2023 = scalar_lea.vmem %s0, %s2022
    %s2024 = sshrl.u32 %s5, 1
    %s2025 = sor.u32 %s5, %s2024
    %s2026 = sand.u32 %s2025, 85
    %s2027 = sshrl.u32 %s2026, 1
    %s2028 = sor.u32 %s2026, %s2027
    %s2029 = sand.u32 51, %s2028
    %s2030 = sshrl.u32 %s2029, 2
    %s2031 = sor.u32 %s2029, %s2030
    %s2032 = sand.u32 15, %s2031
    %v2033 = vld [vmem:[%s2023] sm:%s2032]
    %v2034 = vunpack.c.l.bf16 %v2033
    %v2035 = vunpack.c.h.bf16 %v2033
    %s2036 = scalar_lea.vmem [#allocation1], 1032
    %2037 = vst [vmem:[%s2036] sm:%s5] %v2034
    %s2038 = smul.addr 4, 128
    %s2039 = scalar_lea.vmem %s0, %s2038
    %s2040 = sshrl.u32 %s5, 1
    %s2041 = sor.u32 %s5, %s2040
    %s2042 = sand.u32 %s2041, 85
    %s2043 = sshrl.u32 %s2042, 1
    %s2044 = sor.u32 %s2042, %s2043
    %s2045 = sand.u32 51, %s2044
    %s2046 = sshrl.u32 %s2045, 2
    %s2047 = sor.u32 %s2045, %s2046
    %s2048 = sand.u32 15, %s2047
    %v2049 = vld [vmem:[%s2039] sm:%s2048]
    %v2050 = vunpack.c.l.bf16 %v2049
    %v2051 = vunpack.c.h.bf16 %v2049
    %s2052 = scalar_lea.vmem [#allocation1], 1024
    %2053 = vst [vmem:[%s2052] sm:%s5] %v2050
    %s2054 = smul.addr 4, 127
    %s2055 = scalar_lea.vmem %s0, %s2054
    %s2056 = sshrl.u32 %s5, 1
    %s2057 = sor.u32 %s5, %s2056
    %s2058 = sand.u32 %s2057, 85
    %s2059 = sshrl.u32 %s2058, 1
    %s2060 = sor.u32 %s2058, %s2059
    %s2061 = sand.u32 51, %s2060
    %s2062 = sshrl.u32 %s2061, 2
    %s2063 = sor.u32 %s2061, %s2062
    %s2064 = sand.u32 15, %s2063
    %v2065 = vld [vmem:[%s2055] sm:%s2064]
    %v2066 = vunpack.c.l.bf16 %v2065
    %v2067 = vunpack.c.h.bf16 %v2065
    %s2068 = scalar_lea.vmem [#allocation1], 1016
    %2069 = vst [vmem:[%s2068] sm:%s5] %v2066
    %s2070 = smul.addr 4, 126
    %s2071 = scalar_lea.vmem %s0, %s2070
    %s2072 = sshrl.u32 %s5, 1
    %s2073 = sor.u32 %s5, %s2072
    %s2074 = sand.u32 %s2073, 85
    %s2075 = sshrl.u32 %s2074, 1
    %s2076 = sor.u32 %s2074, %s2075
    %s2077 = sand.u32 51, %s2076
    %s2078 = sshrl.u32 %s2077, 2
    %s2079 = sor.u32 %s2077, %s2078
    %s2080 = sand.u32 15, %s2079
    %v2081 = vld [vmem:[%s2071] sm:%s2080]
    %v2082 = vunpack.c.l.bf16 %v2081
    %v2083 = vunpack.c.h.bf16 %v2081
    %s2084 = scalar_lea.vmem [#allocation1], 1008
    %2085 = vst [vmem:[%s2084] sm:%s5] %v2082
    %s2086 = smul.addr 4, 125
    %s2087 = scalar_lea.vmem %s0, %s2086
    %s2088 = sshrl.u32 %s5, 1
    %s2089 = sor.u32 %s5, %s2088
    %s2090 = sand.u32 %s2089, 85
    %s2091 = sshrl.u32 %s2090, 1
    %s2092 = sor.u32 %s2090, %s2091
    %s2093 = sand.u32 51, %s2092
    %s2094 = sshrl.u32 %s2093, 2
    %s2095 = sor.u32 %s2093, %s2094
    %s2096 = sand.u32 15, %s2095
    %v2097 = vld [vmem:[%s2087] sm:%s2096]
    %v2098 = vunpack.c.l.bf16 %v2097
    %v2099 = vunpack.c.h.bf16 %v2097
    %s2100 = scalar_lea.vmem [#allocation1], 1000
    %2101 = vst [vmem:[%s2100] sm:%s5] %v2098
    %s2102 = smul.addr 4, 124
    %s2103 = scalar_lea.vmem %s0, %s2102
    %s2104 = sshrl.u32 %s5, 1
    %s2105 = sor.u32 %s5, %s2104
    %s2106 = sand.u32 %s2105, 85
    %s2107 = sshrl.u32 %s2106, 1
    %s2108 = sor.u32 %s2106, %s2107
    %s2109 = sand.u32 51, %s2108
    %s2110 = sshrl.u32 %s2109, 2
    %s2111 = sor.u32 %s2109, %s2110
    %s2112 = sand.u32 15, %s2111
    %v2113 = vld [vmem:[%s2103] sm:%s2112]
    %v2114 = vunpack.c.l.bf16 %v2113
    %v2115 = vunpack.c.h.bf16 %v2113
    %s2116 = scalar_lea.vmem [#allocation1], 992
    %2117 = vst [vmem:[%s2116] sm:%s5] %v2114
    %s2118 = smul.addr 4, 123
    %s2119 = scalar_lea.vmem %s0, %s2118
    %s2120 = sshrl.u32 %s5, 1
    %s2121 = sor.u32 %s5, %s2120
    %s2122 = sand.u32 %s2121, 85
    %s2123 = sshrl.u32 %s2122, 1
    %s2124 = sor.u32 %s2122, %s2123
    %s2125 = sand.u32 51, %s2124
    %s2126 = sshrl.u32 %s2125, 2
    %s2127 = sor.u32 %s2125, %s2126
    %s2128 = sand.u32 15, %s2127
    %v2129 = vld [vmem:[%s2119] sm:%s2128]
    %v2130 = vunpack.c.l.bf16 %v2129
    %v2131 = vunpack.c.h.bf16 %v2129
    %s2132 = scalar_lea.vmem [#allocation1], 984
    %2133 = vst [vmem:[%s2132] sm:%s5] %v2130
    %s2134 = smul.addr 4, 122
    %s2135 = scalar_lea.vmem %s0, %s2134
    %s2136 = sshrl.u32 %s5, 1
    %s2137 = sor.u32 %s5, %s2136
    %s2138 = sand.u32 %s2137, 85
    %s2139 = sshrl.u32 %s2138, 1
    %s2140 = sor.u32 %s2138, %s2139
    %s2141 = sand.u32 51, %s2140
    %s2142 = sshrl.u32 %s2141, 2
    %s2143 = sor.u32 %s2141, %s2142
    %s2144 = sand.u32 15, %s2143
    %v2145 = vld [vmem:[%s2135] sm:%s2144]
    %v2146 = vunpack.c.l.bf16 %v2145
    %v2147 = vunpack.c.h.bf16 %v2145
    %s2148 = scalar_lea.vmem [#allocation1], 976
    %2149 = vst [vmem:[%s2148] sm:%s5] %v2146
    %s2150 = smul.addr 4, 121
    %s2151 = scalar_lea.vmem %s0, %s2150
    %s2152 = sshrl.u32 %s5, 1
    %s2153 = sor.u32 %s5, %s2152
    %s2154 = sand.u32 %s2153, 85
    %s2155 = sshrl.u32 %s2154, 1
    %s2156 = sor.u32 %s2154, %s2155
    %s2157 = sand.u32 51, %s2156
    %s2158 = sshrl.u32 %s2157, 2
    %s2159 = sor.u32 %s2157, %s2158
    %s2160 = sand.u32 15, %s2159
    %v2161 = vld [vmem:[%s2151] sm:%s2160]
    %v2162 = vunpack.c.l.bf16 %v2161
    %v2163 = vunpack.c.h.bf16 %v2161
    %s2164 = scalar_lea.vmem [#allocation1], 968
    %2165 = vst [vmem:[%s2164] sm:%s5] %v2162
    %s2166 = smul.addr 4, 120
    %s2167 = scalar_lea.vmem %s0, %s2166
    %s2168 = sshrl.u32 %s5, 1
    %s2169 = sor.u32 %s5, %s2168
    %s2170 = sand.u32 %s2169, 85
    %s2171 = sshrl.u32 %s2170, 1
    %s2172 = sor.u32 %s2170, %s2171
    %s2173 = sand.u32 51, %s2172
    %s2174 = sshrl.u32 %s2173, 2
    %s2175 = sor.u32 %s2173, %s2174
    %s2176 = sand.u32 15, %s2175
    %v2177 = vld [vmem:[%s2167] sm:%s2176]
    %v2178 = vunpack.c.l.bf16 %v2177
    %v2179 = vunpack.c.h.bf16 %v2177
    %s2180 = scalar_lea.vmem [#allocation1], 960
    %2181 = vst [vmem:[%s2180] sm:%s5] %v2178
    %s2182 = smul.addr 4, 119
    %s2183 = scalar_lea.vmem %s0, %s2182
    %s2184 = sshrl.u32 %s5, 1
    %s2185 = sor.u32 %s5, %s2184
    %s2186 = sand.u32 %s2185, 85
    %s2187 = sshrl.u32 %s2186, 1
    %s2188 = sor.u32 %s2186, %s2187
    %s2189 = sand.u32 51, %s2188
    %s2190 = sshrl.u32 %s2189, 2
    %s2191 = sor.u32 %s2189, %s2190
    %s2192 = sand.u32 15, %s2191
    %v2193 = vld [vmem:[%s2183] sm:%s2192]
    %v2194 = vunpack.c.l.bf16 %v2193
    %v2195 = vunpack.c.h.bf16 %v2193
    %s2196 = scalar_lea.vmem [#allocation1], 952
    %2197 = vst [vmem:[%s2196] sm:%s5] %v2194
    %s2198 = smul.addr 4, 118
    %s2199 = scalar_lea.vmem %s0, %s2198
    %s2200 = sshrl.u32 %s5, 1
    %s2201 = sor.u32 %s5, %s2200
    %s2202 = sand.u32 %s2201, 85
    %s2203 = sshrl.u32 %s2202, 1
    %s2204 = sor.u32 %s2202, %s2203
    %s2205 = sand.u32 51, %s2204
    %s2206 = sshrl.u32 %s2205, 2
    %s2207 = sor.u32 %s2205, %s2206
    %s2208 = sand.u32 15, %s2207
    %v2209 = vld [vmem:[%s2199] sm:%s2208]
    %v2210 = vunpack.c.l.bf16 %v2209
    %v2211 = vunpack.c.h.bf16 %v2209
    %s2212 = scalar_lea.vmem [#allocation1], 944
    %2213 = vst [vmem:[%s2212] sm:%s5] %v2210
    %s2214 = smul.addr 4, 117
    %s2215 = scalar_lea.vmem %s0, %s2214
    %s2216 = sshrl.u32 %s5, 1
    %s2217 = sor.u32 %s5, %s2216
    %s2218 = sand.u32 %s2217, 85
    %s2219 = sshrl.u32 %s2218, 1
    %s2220 = sor.u32 %s2218, %s2219
    %s2221 = sand.u32 51, %s2220
    %s2222 = sshrl.u32 %s2221, 2
    %s2223 = sor.u32 %s2221, %s2222
    %s2224 = sand.u32 15, %s2223
    %v2225 = vld [vmem:[%s2215] sm:%s2224]
    %v2226 = vunpack.c.l.bf16 %v2225
    %v2227 = vunpack.c.h.bf16 %v2225
    %s2228 = scalar_lea.vmem [#allocation1], 936
    %2229 = vst [vmem:[%s2228] sm:%s5] %v2226
    %s2230 = smul.addr 4, 116
    %s2231 = scalar_lea.vmem %s0, %s2230
    %s2232 = sshrl.u32 %s5, 1
    %s2233 = sor.u32 %s5, %s2232
    %s2234 = sand.u32 %s2233, 85
    %s2235 = sshrl.u32 %s2234, 1
    %s2236 = sor.u32 %s2234, %s2235
    %s2237 = sand.u32 51, %s2236
    %s2238 = sshrl.u32 %s2237, 2
    %s2239 = sor.u32 %s2237, %s2238
    %s2240 = sand.u32 15, %s2239
    %v2241 = vld [vmem:[%s2231] sm:%s2240]
    %v2242 = vunpack.c.l.bf16 %v2241
    %v2243 = vunpack.c.h.bf16 %v2241
    %s2244 = scalar_lea.vmem [#allocation1], 928
    %2245 = vst [vmem:[%s2244] sm:%s5] %v2242
    %s2246 = smul.addr 4, 115
    %s2247 = scalar_lea.vmem %s0, %s2246
    %s2248 = sshrl.u32 %s5, 1
    %s2249 = sor.u32 %s5, %s2248
    %s2250 = sand.u32 %s2249, 85
    %s2251 = sshrl.u32 %s2250, 1
    %s2252 = sor.u32 %s2250, %s2251
    %s2253 = sand.u32 51, %s2252
    %s2254 = sshrl.u32 %s2253, 2
    %s2255 = sor.u32 %s2253, %s2254
    %s2256 = sand.u32 15, %s2255
    %v2257 = vld [vmem:[%s2247] sm:%s2256]
    %v2258 = vunpack.c.l.bf16 %v2257
    %v2259 = vunpack.c.h.bf16 %v2257
    %s2260 = scalar_lea.vmem [#allocation1], 920
    %2261 = vst [vmem:[%s2260] sm:%s5] %v2258
    %s2262 = smul.addr 4, 114
    %s2263 = scalar_lea.vmem %s0, %s2262
    %s2264 = sshrl.u32 %s5, 1
    %s2265 = sor.u32 %s5, %s2264
    %s2266 = sand.u32 %s2265, 85
    %s2267 = sshrl.u32 %s2266, 1
    %s2268 = sor.u32 %s2266, %s2267
    %s2269 = sand.u32 51, %s2268
    %s2270 = sshrl.u32 %s2269, 2
    %s2271 = sor.u32 %s2269, %s2270
    %s2272 = sand.u32 15, %s2271
    %v2273 = vld [vmem:[%s2263] sm:%s2272]
    %v2274 = vunpack.c.l.bf16 %v2273
    %v2275 = vunpack.c.h.bf16 %v2273
    %s2276 = scalar_lea.vmem [#allocation1], 912
    %2277 = vst [vmem:[%s2276] sm:%s5] %v2274
    %s2278 = smul.addr 4, 113
    %s2279 = scalar_lea.vmem %s0, %s2278
    %s2280 = sshrl.u32 %s5, 1
    %s2281 = sor.u32 %s5, %s2280
    %s2282 = sand.u32 %s2281, 85
    %s2283 = sshrl.u32 %s2282, 1
    %s2284 = sor.u32 %s2282, %s2283
    %s2285 = sand.u32 51, %s2284
    %s2286 = sshrl.u32 %s2285, 2
    %s2287 = sor.u32 %s2285, %s2286
    %s2288 = sand.u32 15, %s2287
    %v2289 = vld [vmem:[%s2279] sm:%s2288]
    %v2290 = vunpack.c.l.bf16 %v2289
    %v2291 = vunpack.c.h.bf16 %v2289
    %s2292 = scalar_lea.vmem [#allocation1], 904
    %2293 = vst [vmem:[%s2292] sm:%s5] %v2290
    %s2294 = smul.addr 4, 112
    %s2295 = scalar_lea.vmem %s0, %s2294
    %s2296 = sshrl.u32 %s5, 1
    %s2297 = sor.u32 %s5, %s2296
    %s2298 = sand.u32 %s2297, 85
    %s2299 = sshrl.u32 %s2298, 1
    %s2300 = sor.u32 %s2298, %s2299
    %s2301 = sand.u32 51, %s2300
    %s2302 = sshrl.u32 %s2301, 2
    %s2303 = sor.u32 %s2301, %s2302
    %s2304 = sand.u32 15, %s2303
    %v2305 = vld [vmem:[%s2295] sm:%s2304]
    %v2306 = vunpack.c.l.bf16 %v2305
    %v2307 = vunpack.c.h.bf16 %v2305
    %s2308 = scalar_lea.vmem [#allocation1], 896
    %2309 = vst [vmem:[%s2308] sm:%s5] %v2306
    %s2310 = smul.addr 4, 111
    %s2311 = scalar_lea.vmem %s0, %s2310
    %s2312 = sshrl.u32 %s5, 1
    %s2313 = sor.u32 %s5, %s2312
    %s2314 = sand.u32 %s2313, 85
    %s2315 = sshrl.u32 %s2314, 1
    %s2316 = sor.u32 %s2314, %s2315
    %s2317 = sand.u32 51, %s2316
    %s2318 = sshrl.u32 %s2317, 2
    %s2319 = sor.u32 %s2317, %s2318
    %s2320 = sand.u32 15, %s2319
    %v2321 = vld [vmem:[%s2311] sm:%s2320]
    %v2322 = vunpack.c.l.bf16 %v2321
    %v2323 = vunpack.c.h.bf16 %v2321
    %s2324 = scalar_lea.vmem [#allocation1], 888
    %2325 = vst [vmem:[%s2324] sm:%s5] %v2322
    %s2326 = smul.addr 4, 110
    %s2327 = scalar_lea.vmem %s0, %s2326
    %s2328 = sshrl.u32 %s5, 1
    %s2329 = sor.u32 %s5, %s2328
    %s2330 = sand.u32 %s2329, 85
    %s2331 = sshrl.u32 %s2330, 1
    %s2332 = sor.u32 %s2330, %s2331
    %s2333 = sand.u32 51, %s2332
    %s2334 = sshrl.u32 %s2333, 2
    %s2335 = sor.u32 %s2333, %s2334
    %s2336 = sand.u32 15, %s2335
    %v2337 = vld [vmem:[%s2327] sm:%s2336]
    %v2338 = vunpack.c.l.bf16 %v2337
    %v2339 = vunpack.c.h.bf16 %v2337
    %s2340 = scalar_lea.vmem [#allocation1], 880
    %2341 = vst [vmem:[%s2340] sm:%s5] %v2338
    %s2342 = smul.addr 4, 109
    %s2343 = scalar_lea.vmem %s0, %s2342
    %s2344 = sshrl.u32 %s5, 1
    %s2345 = sor.u32 %s5, %s2344
    %s2346 = sand.u32 %s2345, 85
    %s2347 = sshrl.u32 %s2346, 1
    %s2348 = sor.u32 %s2346, %s2347
    %s2349 = sand.u32 51, %s2348
    %s2350 = sshrl.u32 %s2349, 2
    %s2351 = sor.u32 %s2349, %s2350
    %s2352 = sand.u32 15, %s2351
    %v2353 = vld [vmem:[%s2343] sm:%s2352]
    %v2354 = vunpack.c.l.bf16 %v2353
    %v2355 = vunpack.c.h.bf16 %v2353
    %s2356 = scalar_lea.vmem [#allocation1], 872
    %2357 = vst [vmem:[%s2356] sm:%s5] %v2354
    %s2358 = smul.addr 4, 108
    %s2359 = scalar_lea.vmem %s0, %s2358
    %s2360 = sshrl.u32 %s5, 1
    %s2361 = sor.u32 %s5, %s2360
    %s2362 = sand.u32 %s2361, 85
    %s2363 = sshrl.u32 %s2362, 1
    %s2364 = sor.u32 %s2362, %s2363
    %s2365 = sand.u32 51, %s2364
    %s2366 = sshrl.u32 %s2365, 2
    %s2367 = sor.u32 %s2365, %s2366
    %s2368 = sand.u32 15, %s2367
    %v2369 = vld [vmem:[%s2359] sm:%s2368]
    %v2370 = vunpack.c.l.bf16 %v2369
    %v2371 = vunpack.c.h.bf16 %v2369
    %s2372 = scalar_lea.vmem [#allocation1], 864
    %2373 = vst [vmem:[%s2372] sm:%s5] %v2370
    %s2374 = smul.addr 4, 107
    %s2375 = scalar_lea.vmem %s0, %s2374
    %s2376 = sshrl.u32 %s5, 1
    %s2377 = sor.u32 %s5, %s2376
    %s2378 = sand.u32 %s2377, 85
    %s2379 = sshrl.u32 %s2378, 1
    %s2380 = sor.u32 %s2378, %s2379
    %s2381 = sand.u32 51, %s2380
    %s2382 = sshrl.u32 %s2381, 2
    %s2383 = sor.u32 %s2381, %s2382
    %s2384 = sand.u32 15, %s2383
    %v2385 = vld [vmem:[%s2375] sm:%s2384]
    %v2386 = vunpack.c.l.bf16 %v2385
    %v2387 = vunpack.c.h.bf16 %v2385
    %s2388 = scalar_lea.vmem [#allocation1], 856
    %2389 = vst [vmem:[%s2388] sm:%s5] %v2386
    %s2390 = smul.addr 4, 106
    %s2391 = scalar_lea.vmem %s0, %s2390
    %s2392 = sshrl.u32 %s5, 1
    %s2393 = sor.u32 %s5, %s2392
    %s2394 = sand.u32 %s2393, 85
    %s2395 = sshrl.u32 %s2394, 1
    %s2396 = sor.u32 %s2394, %s2395
    %s2397 = sand.u32 51, %s2396
    %s2398 = sshrl.u32 %s2397, 2
    %s2399 = sor.u32 %s2397, %s2398
    %s2400 = sand.u32 15, %s2399
    %v2401 = vld [vmem:[%s2391] sm:%s2400]
    %v2402 = vunpack.c.l.bf16 %v2401
    %v2403 = vunpack.c.h.bf16 %v2401
    %s2404 = scalar_lea.vmem [#allocation1], 848
    %2405 = vst [vmem:[%s2404] sm:%s5] %v2402
    %s2406 = smul.addr 4, 105
    %s2407 = scalar_lea.vmem %s0, %s2406
    %s2408 = sshrl.u32 %s5, 1
    %s2409 = sor.u32 %s5, %s2408
    %s2410 = sand.u32 %s2409, 85
    %s2411 = sshrl.u32 %s2410, 1
    %s2412 = sor.u32 %s2410, %s2411
    %s2413 = sand.u32 51, %s2412
    %s2414 = sshrl.u32 %s2413, 2
    %s2415 = sor.u32 %s2413, %s2414
    %s2416 = sand.u32 15, %s2415
    %v2417 = vld [vmem:[%s2407] sm:%s2416]
    %v2418 = vunpack.c.l.bf16 %v2417
    %v2419 = vunpack.c.h.bf16 %v2417
    %s2420 = scalar_lea.vmem [#allocation1], 840
    %2421 = vst [vmem:[%s2420] sm:%s5] %v2418
    %s2422 = smul.addr 4, 104
    %s2423 = scalar_lea.vmem %s0, %s2422
    %s2424 = sshrl.u32 %s5, 1
    %s2425 = sor.u32 %s5, %s2424
    %s2426 = sand.u32 %s2425, 85
    %s2427 = sshrl.u32 %s2426, 1
    %s2428 = sor.u32 %s2426, %s2427
    %s2429 = sand.u32 51, %s2428
    %s2430 = sshrl.u32 %s2429, 2
    %s2431 = sor.u32 %s2429, %s2430
    %s2432 = sand.u32 15, %s2431
    %v2433 = vld [vmem:[%s2423] sm:%s2432]
    %v2434 = vunpack.c.l.bf16 %v2433
    %v2435 = vunpack.c.h.bf16 %v2433
    %s2436 = scalar_lea.vmem [#allocation1], 832
    %2437 = vst [vmem:[%s2436] sm:%s5] %v2434
    %s2438 = smul.addr 4, 103
    %s2439 = scalar_lea.vmem %s0, %s2438
    %s2440 = sshrl.u32 %s5, 1
    %s2441 = sor.u32 %s5, %s2440
    %s2442 = sand.u32 %s2441, 85
    %s2443 = sshrl.u32 %s2442, 1
    %s2444 = sor.u32 %s2442, %s2443
    %s2445 = sand.u32 51, %s2444
    %s2446 = sshrl.u32 %s2445, 2
    %s2447 = sor.u32 %s2445, %s2446
    %s2448 = sand.u32 15, %s2447
    %v2449 = vld [vmem:[%s2439] sm:%s2448]
    %v2450 = vunpack.c.l.bf16 %v2449
    %v2451 = vunpack.c.h.bf16 %v2449
    %s2452 = scalar_lea.vmem [#allocation1], 824
    %2453 = vst [vmem:[%s2452] sm:%s5] %v2450
    %s2454 = smul.addr 4, 102
    %s2455 = scalar_lea.vmem %s0, %s2454
    %s2456 = sshrl.u32 %s5, 1
    %s2457 = sor.u32 %s5, %s2456
    %s2458 = sand.u32 %s2457, 85
    %s2459 = sshrl.u32 %s2458, 1
    %s2460 = sor.u32 %s2458, %s2459
    %s2461 = sand.u32 51, %s2460
    %s2462 = sshrl.u32 %s2461, 2
    %s2463 = sor.u32 %s2461, %s2462
    %s2464 = sand.u32 15, %s2463
    %v2465 = vld [vmem:[%s2455] sm:%s2464]
    %v2466 = vunpack.c.l.bf16 %v2465
    %v2467 = vunpack.c.h.bf16 %v2465
    %s2468 = scalar_lea.vmem [#allocation1], 816
    %2469 = vst [vmem:[%s2468] sm:%s5] %v2466
    %s2470 = smul.addr 4, 101
    %s2471 = scalar_lea.vmem %s0, %s2470
    %s2472 = sshrl.u32 %s5, 1
    %s2473 = sor.u32 %s5, %s2472
    %s2474 = sand.u32 %s2473, 85
    %s2475 = sshrl.u32 %s2474, 1
    %s2476 = sor.u32 %s2474, %s2475
    %s2477 = sand.u32 51, %s2476
    %s2478 = sshrl.u32 %s2477, 2
    %s2479 = sor.u32 %s2477, %s2478
    %s2480 = sand.u32 15, %s2479
    %v2481 = vld [vmem:[%s2471] sm:%s2480]
    %v2482 = vunpack.c.l.bf16 %v2481
    %v2483 = vunpack.c.h.bf16 %v2481
    %s2484 = scalar_lea.vmem [#allocation1], 808
    %2485 = vst [vmem:[%s2484] sm:%s5] %v2482
    %s2486 = smul.addr 4, 100
    %s2487 = scalar_lea.vmem %s0, %s2486
    %s2488 = sshrl.u32 %s5, 1
    %s2489 = sor.u32 %s5, %s2488
    %s2490 = sand.u32 %s2489, 85
    %s2491 = sshrl.u32 %s2490, 1
    %s2492 = sor.u32 %s2490, %s2491
    %s2493 = sand.u32 51, %s2492
    %s2494 = sshrl.u32 %s2493, 2
    %s2495 = sor.u32 %s2493, %s2494
    %s2496 = sand.u32 15, %s2495
    %v2497 = vld [vmem:[%s2487] sm:%s2496]
    %v2498 = vunpack.c.l.bf16 %v2497
    %v2499 = vunpack.c.h.bf16 %v2497
    %s2500 = scalar_lea.vmem [#allocation1], 800
    %2501 = vst [vmem:[%s2500] sm:%s5] %v2498
    %s2502 = smul.addr 4, 99
    %s2503 = scalar_lea.vmem %s0, %s2502
    %s2504 = sshrl.u32 %s5, 1
    %s2505 = sor.u32 %s5, %s2504
    %s2506 = sand.u32 %s2505, 85
    %s2507 = sshrl.u32 %s2506, 1
    %s2508 = sor.u32 %s2506, %s2507
    %s2509 = sand.u32 51, %s2508
    %s2510 = sshrl.u32 %s2509, 2
    %s2511 = sor.u32 %s2509, %s2510
    %s2512 = sand.u32 15, %s2511
    %v2513 = vld [vmem:[%s2503] sm:%s2512]
    %v2514 = vunpack.c.l.bf16 %v2513
    %v2515 = vunpack.c.h.bf16 %v2513
    %s2516 = scalar_lea.vmem [#allocation1], 792
    %2517 = vst [vmem:[%s2516] sm:%s5] %v2514
    %s2518 = smul.addr 4, 98
    %s2519 = scalar_lea.vmem %s0, %s2518
    %s2520 = sshrl.u32 %s5, 1
    %s2521 = sor.u32 %s5, %s2520
    %s2522 = sand.u32 %s2521, 85
    %s2523 = sshrl.u32 %s2522, 1
    %s2524 = sor.u32 %s2522, %s2523
    %s2525 = sand.u32 51, %s2524
    %s2526 = sshrl.u32 %s2525, 2
    %s2527 = sor.u32 %s2525, %s2526
    %s2528 = sand.u32 15, %s2527
    %v2529 = vld [vmem:[%s2519] sm:%s2528]
    %v2530 = vunpack.c.l.bf16 %v2529
    %v2531 = vunpack.c.h.bf16 %v2529
    %s2532 = scalar_lea.vmem [#allocation1], 784
    %2533 = vst [vmem:[%s2532] sm:%s5] %v2530
    %s2534 = smul.addr 4, 97
    %s2535 = scalar_lea.vmem %s0, %s2534
    %s2536 = sshrl.u32 %s5, 1
    %s2537 = sor.u32 %s5, %s2536
    %s2538 = sand.u32 %s2537, 85
    %s2539 = sshrl.u32 %s2538, 1
    %s2540 = sor.u32 %s2538, %s2539
    %s2541 = sand.u32 51, %s2540
    %s2542 = sshrl.u32 %s2541, 2
    %s2543 = sor.u32 %s2541, %s2542
    %s2544 = sand.u32 15, %s2543
    %v2545 = vld [vmem:[%s2535] sm:%s2544]
    %v2546 = vunpack.c.l.bf16 %v2545
    %v2547 = vunpack.c.h.bf16 %v2545
    %s2548 = scalar_lea.vmem [#allocation1], 776
    %2549 = vst [vmem:[%s2548] sm:%s5] %v2546
    %s2550 = smul.addr 4, 96
    %s2551 = scalar_lea.vmem %s0, %s2550
    %s2552 = sshrl.u32 %s5, 1
    %s2553 = sor.u32 %s5, %s2552
    %s2554 = sand.u32 %s2553, 85
    %s2555 = sshrl.u32 %s2554, 1
    %s2556 = sor.u32 %s2554, %s2555
    %s2557 = sand.u32 51, %s2556
    %s2558 = sshrl.u32 %s2557, 2
    %s2559 = sor.u32 %s2557, %s2558
    %s2560 = sand.u32 15, %s2559
    %v2561 = vld [vmem:[%s2551] sm:%s2560]
    %v2562 = vunpack.c.l.bf16 %v2561
    %v2563 = vunpack.c.h.bf16 %v2561
    %s2564 = scalar_lea.vmem [#allocation1], 768
    %2565 = vst [vmem:[%s2564] sm:%s5] %v2562
    %s2566 = smul.addr 4, 95
    %s2567 = scalar_lea.vmem %s0, %s2566
    %s2568 = sshrl.u32 %s5, 1
    %s2569 = sor.u32 %s5, %s2568
    %s2570 = sand.u32 %s2569, 85
    %s2571 = sshrl.u32 %s2570, 1
    %s2572 = sor.u32 %s2570, %s2571
    %s2573 = sand.u32 51, %s2572
    %s2574 = sshrl.u32 %s2573, 2
    %s2575 = sor.u32 %s2573, %s2574
    %s2576 = sand.u32 15, %s2575
    %v2577 = vld [vmem:[%s2567] sm:%s2576]
    %v2578 = vunpack.c.l.bf16 %v2577
    %v2579 = vunpack.c.h.bf16 %v2577
    %s2580 = scalar_lea.vmem [#allocation1], 760
    %2581 = vst [vmem:[%s2580] sm:%s5] %v2578
    %s2582 = smul.addr 4, 94
    %s2583 = scalar_lea.vmem %s0, %s2582
    %s2584 = sshrl.u32 %s5, 1
    %s2585 = sor.u32 %s5, %s2584
    %s2586 = sand.u32 %s2585, 85
    %s2587 = sshrl.u32 %s2586, 1
    %s2588 = sor.u32 %s2586, %s2587
    %s2589 = sand.u32 51, %s2588
    %s2590 = sshrl.u32 %s2589, 2
    %s2591 = sor.u32 %s2589, %s2590
    %s2592 = sand.u32 15, %s2591
    %v2593 = vld [vmem:[%s2583] sm:%s2592]
    %v2594 = vunpack.c.l.bf16 %v2593
    %v2595 = vunpack.c.h.bf16 %v2593
    %s2596 = scalar_lea.vmem [#allocation1], 752
    %2597 = vst [vmem:[%s2596] sm:%s5] %v2594
    %s2598 = smul.addr 4, 93
    %s2599 = scalar_lea.vmem %s0, %s2598
    %s2600 = sshrl.u32 %s5, 1
    %s2601 = sor.u32 %s5, %s2600
    %s2602 = sand.u32 %s2601, 85
    %s2603 = sshrl.u32 %s2602, 1
    %s2604 = sor.u32 %s2602, %s2603
    %s2605 = sand.u32 51, %s2604
    %s2606 = sshrl.u32 %s2605, 2
    %s2607 = sor.u32 %s2605, %s2606
    %s2608 = sand.u32 15, %s2607
    %v2609 = vld [vmem:[%s2599] sm:%s2608]
    %v2610 = vunpack.c.l.bf16 %v2609
    %v2611 = vunpack.c.h.bf16 %v2609
    %s2612 = scalar_lea.vmem [#allocation1], 744
    %2613 = vst [vmem:[%s2612] sm:%s5] %v2610
    %s2614 = smul.addr 4, 92
    %s2615 = scalar_lea.vmem %s0, %s2614
    %s2616 = sshrl.u32 %s5, 1
    %s2617 = sor.u32 %s5, %s2616
    %s2618 = sand.u32 %s2617, 85
    %s2619 = sshrl.u32 %s2618, 1
    %s2620 = sor.u32 %s2618, %s2619
    %s2621 = sand.u32 51, %s2620
    %s2622 = sshrl.u32 %s2621, 2
    %s2623 = sor.u32 %s2621, %s2622
    %s2624 = sand.u32 15, %s2623
    %v2625 = vld [vmem:[%s2615] sm:%s2624]
    %v2626 = vunpack.c.l.bf16 %v2625
    %v2627 = vunpack.c.h.bf16 %v2625
    %s2628 = scalar_lea.vmem [#allocation1], 736
    %2629 = vst [vmem:[%s2628] sm:%s5] %v2626
    %s2630 = smul.addr 4, 91
    %s2631 = scalar_lea.vmem %s0, %s2630
    %s2632 = sshrl.u32 %s5, 1
    %s2633 = sor.u32 %s5, %s2632
    %s2634 = sand.u32 %s2633, 85
    %s2635 = sshrl.u32 %s2634, 1
    %s2636 = sor.u32 %s2634, %s2635
    %s2637 = sand.u32 51, %s2636
    %s2638 = sshrl.u32 %s2637, 2
    %s2639 = sor.u32 %s2637, %s2638
    %s2640 = sand.u32 15, %s2639
    %v2641 = vld [vmem:[%s2631] sm:%s2640]
    %v2642 = vunpack.c.l.bf16 %v2641
    %v2643 = vunpack.c.h.bf16 %v2641
    %s2644 = scalar_lea.vmem [#allocation1], 728
    %2645 = vst [vmem:[%s2644] sm:%s5] %v2642
    %s2646 = smul.addr 4, 90
    %s2647 = scalar_lea.vmem %s0, %s2646
    %s2648 = sshrl.u32 %s5, 1
    %s2649 = sor.u32 %s5, %s2648
    %s2650 = sand.u32 %s2649, 85
    %s2651 = sshrl.u32 %s2650, 1
    %s2652 = sor.u32 %s2650, %s2651
    %s2653 = sand.u32 51, %s2652
    %s2654 = sshrl.u32 %s2653, 2
    %s2655 = sor.u32 %s2653, %s2654
    %s2656 = sand.u32 15, %s2655
    %v2657 = vld [vmem:[%s2647] sm:%s2656]
    %v2658 = vunpack.c.l.bf16 %v2657
    %v2659 = vunpack.c.h.bf16 %v2657
    %s2660 = scalar_lea.vmem [#allocation1], 720
    %2661 = vst [vmem:[%s2660] sm:%s5] %v2658
    %s2662 = smul.addr 4, 89
    %s2663 = scalar_lea.vmem %s0, %s2662
    %s2664 = sshrl.u32 %s5, 1
    %s2665 = sor.u32 %s5, %s2664
    %s2666 = sand.u32 %s2665, 85
    %s2667 = sshrl.u32 %s2666, 1
    %s2668 = sor.u32 %s2666, %s2667
    %s2669 = sand.u32 51, %s2668
    %s2670 = sshrl.u32 %s2669, 2
    %s2671 = sor.u32 %s2669, %s2670
    %s2672 = sand.u32 15, %s2671
    %v2673 = vld [vmem:[%s2663] sm:%s2672]
    %v2674 = vunpack.c.l.bf16 %v2673
    %v2675 = vunpack.c.h.bf16 %v2673
    %s2676 = scalar_lea.vmem [#allocation1], 712
    %2677 = vst [vmem:[%s2676] sm:%s5] %v2674
    %s2678 = smul.addr 4, 88
    %s2679 = scalar_lea.vmem %s0, %s2678
    %s2680 = sshrl.u32 %s5, 1
    %s2681 = sor.u32 %s5, %s2680
    %s2682 = sand.u32 %s2681, 85
    %s2683 = sshrl.u32 %s2682, 1
    %s2684 = sor.u32 %s2682, %s2683
    %s2685 = sand.u32 51, %s2684
    %s2686 = sshrl.u32 %s2685, 2
    %s2687 = sor.u32 %s2685, %s2686
    %s2688 = sand.u32 15, %s2687
    %v2689 = vld [vmem:[%s2679] sm:%s2688]
    %v2690 = vunpack.c.l.bf16 %v2689
    %v2691 = vunpack.c.h.bf16 %v2689
    %s2692 = scalar_lea.vmem [#allocation1], 704
    %2693 = vst [vmem:[%s2692] sm:%s5] %v2690
    %s2694 = smul.addr 4, 87
    %s2695 = scalar_lea.vmem %s0, %s2694
    %s2696 = sshrl.u32 %s5, 1
    %s2697 = sor.u32 %s5, %s2696
    %s2698 = sand.u32 %s2697, 85
    %s2699 = sshrl.u32 %s2698, 1
    %s2700 = sor.u32 %s2698, %s2699
    %s2701 = sand.u32 51, %s2700
    %s2702 = sshrl.u32 %s2701, 2
    %s2703 = sor.u32 %s2701, %s2702
    %s2704 = sand.u32 15, %s2703
    %v2705 = vld [vmem:[%s2695] sm:%s2704]
    %v2706 = vunpack.c.l.bf16 %v2705
    %v2707 = vunpack.c.h.bf16 %v2705
    %s2708 = scalar_lea.vmem [#allocation1], 696
    %2709 = vst [vmem:[%s2708] sm:%s5] %v2706
    %s2710 = smul.addr 4, 86
    %s2711 = scalar_lea.vmem %s0, %s2710
    %s2712 = sshrl.u32 %s5, 1
    %s2713 = sor.u32 %s5, %s2712
    %s2714 = sand.u32 %s2713, 85
    %s2715 = sshrl.u32 %s2714, 1
    %s2716 = sor.u32 %s2714, %s2715
    %s2717 = sand.u32 51, %s2716
    %s2718 = sshrl.u32 %s2717, 2
    %s2719 = sor.u32 %s2717, %s2718
    %s2720 = sand.u32 15, %s2719
    %v2721 = vld [vmem:[%s2711] sm:%s2720]
    %v2722 = vunpack.c.l.bf16 %v2721
    %v2723 = vunpack.c.h.bf16 %v2721
    %s2724 = scalar_lea.vmem [#allocation1], 688
    %2725 = vst [vmem:[%s2724] sm:%s5] %v2722
    %s2726 = smul.addr 4, 85
    %s2727 = scalar_lea.vmem %s0, %s2726
    %s2728 = sshrl.u32 %s5, 1
    %s2729 = sor.u32 %s5, %s2728
    %s2730 = sand.u32 %s2729, 85
    %s2731 = sshrl.u32 %s2730, 1
    %s2732 = sor.u32 %s2730, %s2731
    %s2733 = sand.u32 51, %s2732
    %s2734 = sshrl.u32 %s2733, 2
    %s2735 = sor.u32 %s2733, %s2734
    %s2736 = sand.u32 15, %s2735
    %v2737 = vld [vmem:[%s2727] sm:%s2736]
    %v2738 = vunpack.c.l.bf16 %v2737
    %v2739 = vunpack.c.h.bf16 %v2737
    %s2740 = scalar_lea.vmem [#allocation1], 680
    %2741 = vst [vmem:[%s2740] sm:%s5] %v2738
    %s2742 = smul.addr 4, 84
    %s2743 = scalar_lea.vmem %s0, %s2742
    %s2744 = sshrl.u32 %s5, 1
    %s2745 = sor.u32 %s5, %s2744
    %s2746 = sand.u32 %s2745, 85
    %s2747 = sshrl.u32 %s2746, 1
    %s2748 = sor.u32 %s2746, %s2747
    %s2749 = sand.u32 51, %s2748
    %s2750 = sshrl.u32 %s2749, 2
    %s2751 = sor.u32 %s2749, %s2750
    %s2752 = sand.u32 15, %s2751
    %v2753 = vld [vmem:[%s2743] sm:%s2752]
    %v2754 = vunpack.c.l.bf16 %v2753
    %v2755 = vunpack.c.h.bf16 %v2753
    %s2756 = scalar_lea.vmem [#allocation1], 672
    %2757 = vst [vmem:[%s2756] sm:%s5] %v2754
    %s2758 = smul.addr 4, 83
    %s2759 = scalar_lea.vmem %s0, %s2758
    %s2760 = sshrl.u32 %s5, 1
    %s2761 = sor.u32 %s5, %s2760
    %s2762 = sand.u32 %s2761, 85
    %s2763 = sshrl.u32 %s2762, 1
    %s2764 = sor.u32 %s2762, %s2763
    %s2765 = sand.u32 51, %s2764
    %s2766 = sshrl.u32 %s2765, 2
    %s2767 = sor.u32 %s2765, %s2766
    %s2768 = sand.u32 15, %s2767
    %v2769 = vld [vmem:[%s2759] sm:%s2768]
    %v2770 = vunpack.c.l.bf16 %v2769
    %v2771 = vunpack.c.h.bf16 %v2769
    %s2772 = scalar_lea.vmem [#allocation1], 664
    %2773 = vst [vmem:[%s2772] sm:%s5] %v2770
    %s2774 = smul.addr 4, 82
    %s2775 = scalar_lea.vmem %s0, %s2774
    %s2776 = sshrl.u32 %s5, 1
    %s2777 = sor.u32 %s5, %s2776
    %s2778 = sand.u32 %s2777, 85
    %s2779 = sshrl.u32 %s2778, 1
    %s2780 = sor.u32 %s2778, %s2779
    %s2781 = sand.u32 51, %s2780
    %s2782 = sshrl.u32 %s2781, 2
    %s2783 = sor.u32 %s2781, %s2782
    %s2784 = sand.u32 15, %s2783
    %v2785 = vld [vmem:[%s2775] sm:%s2784]
    %v2786 = vunpack.c.l.bf16 %v2785
    %v2787 = vunpack.c.h.bf16 %v2785
    %s2788 = scalar_lea.vmem [#allocation1], 656
    %2789 = vst [vmem:[%s2788] sm:%s5] %v2786
    %s2790 = smul.addr 4, 81
    %s2791 = scalar_lea.vmem %s0, %s2790
    %s2792 = sshrl.u32 %s5, 1
    %s2793 = sor.u32 %s5, %s2792
    %s2794 = sand.u32 %s2793, 85
    %s2795 = sshrl.u32 %s2794, 1
    %s2796 = sor.u32 %s2794, %s2795
    %s2797 = sand.u32 51, %s2796
    %s2798 = sshrl.u32 %s2797, 2
    %s2799 = sor.u32 %s2797, %s2798
    %s2800 = sand.u32 15, %s2799
    %v2801 = vld [vmem:[%s2791] sm:%s2800]
    %v2802 = vunpack.c.l.bf16 %v2801
    %v2803 = vunpack.c.h.bf16 %v2801
    %s2804 = scalar_lea.vmem [#allocation1], 648
    %2805 = vst [vmem:[%s2804] sm:%s5] %v2802
    %s2806 = smul.addr 4, 80
    %s2807 = scalar_lea.vmem %s0, %s2806
    %s2808 = sshrl.u32 %s5, 1
    %s2809 = sor.u32 %s5, %s2808
    %s2810 = sand.u32 %s2809, 85
    %s2811 = sshrl.u32 %s2810, 1
    %s2812 = sor.u32 %s2810, %s2811
    %s2813 = sand.u32 51, %s2812
    %s2814 = sshrl.u32 %s2813, 2
    %s2815 = sor.u32 %s2813, %s2814
    %s2816 = sand.u32 15, %s2815
    %v2817 = vld [vmem:[%s2807] sm:%s2816]
    %v2818 = vunpack.c.l.bf16 %v2817
    %v2819 = vunpack.c.h.bf16 %v2817
    %s2820 = scalar_lea.vmem [#allocation1], 640
    %2821 = vst [vmem:[%s2820] sm:%s5] %v2818
    %s2822 = smul.addr 4, 79
    %s2823 = scalar_lea.vmem %s0, %s2822
    %s2824 = sshrl.u32 %s5, 1
    %s2825 = sor.u32 %s5, %s2824
    %s2826 = sand.u32 %s2825, 85
    %s2827 = sshrl.u32 %s2826, 1
    %s2828 = sor.u32 %s2826, %s2827
    %s2829 = sand.u32 51, %s2828
    %s2830 = sshrl.u32 %s2829, 2
    %s2831 = sor.u32 %s2829, %s2830
    %s2832 = sand.u32 15, %s2831
    %v2833 = vld [vmem:[%s2823] sm:%s2832]
    %v2834 = vunpack.c.l.bf16 %v2833
    %v2835 = vunpack.c.h.bf16 %v2833
    %s2836 = scalar_lea.vmem [#allocation1], 632
    %2837 = vst [vmem:[%s2836] sm:%s5] %v2834
    %s2838 = smul.addr 4, 78
    %s2839 = scalar_lea.vmem %s0, %s2838
    %s2840 = sshrl.u32 %s5, 1
    %s2841 = sor.u32 %s5, %s2840
    %s2842 = sand.u32 %s2841, 85
    %s2843 = sshrl.u32 %s2842, 1
    %s2844 = sor.u32 %s2842, %s2843
    %s2845 = sand.u32 51, %s2844
    %s2846 = sshrl.u32 %s2845, 2
    %s2847 = sor.u32 %s2845, %s2846
    %s2848 = sand.u32 15, %s2847
    %v2849 = vld [vmem:[%s2839] sm:%s2848]
    %v2850 = vunpack.c.l.bf16 %v2849
    %v2851 = vunpack.c.h.bf16 %v2849
    %s2852 = scalar_lea.vmem [#allocation1], 624
    %2853 = vst [vmem:[%s2852] sm:%s5] %v2850
    %s2854 = smul.addr 4, 77
    %s2855 = scalar_lea.vmem %s0, %s2854
    %s2856 = sshrl.u32 %s5, 1
    %s2857 = sor.u32 %s5, %s2856
    %s2858 = sand.u32 %s2857, 85
    %s2859 = sshrl.u32 %s2858, 1
    %s2860 = sor.u32 %s2858, %s2859
    %s2861 = sand.u32 51, %s2860
    %s2862 = sshrl.u32 %s2861, 2
    %s2863 = sor.u32 %s2861, %s2862
    %s2864 = sand.u32 15, %s2863
    %v2865 = vld [vmem:[%s2855] sm:%s2864]
    %v2866 = vunpack.c.l.bf16 %v2865
    %v2867 = vunpack.c.h.bf16 %v2865
    %s2868 = scalar_lea.vmem [#allocation1], 616
    %2869 = vst [vmem:[%s2868] sm:%s5] %v2866
    %s2870 = smul.addr 4, 76
    %s2871 = scalar_lea.vmem %s0, %s2870
    %s2872 = sshrl.u32 %s5, 1
    %s2873 = sor.u32 %s5, %s2872
    %s2874 = sand.u32 %s2873, 85
    %s2875 = sshrl.u32 %s2874, 1
    %s2876 = sor.u32 %s2874, %s2875
    %s2877 = sand.u32 51, %s2876
    %s2878 = sshrl.u32 %s2877, 2
    %s2879 = sor.u32 %s2877, %s2878
    %s2880 = sand.u32 15, %s2879
    %v2881 = vld [vmem:[%s2871] sm:%s2880]
    %v2882 = vunpack.c.l.bf16 %v2881
    %v2883 = vunpack.c.h.bf16 %v2881
    %s2884 = scalar_lea.vmem [#allocation1], 608
    %2885 = vst [vmem:[%s2884] sm:%s5] %v2882
    %s2886 = smul.addr 4, 75
    %s2887 = scalar_lea.vmem %s0, %s2886
    %s2888 = sshrl.u32 %s5, 1
    %s2889 = sor.u32 %s5, %s2888
    %s2890 = sand.u32 %s2889, 85
    %s2891 = sshrl.u32 %s2890, 1
    %s2892 = sor.u32 %s2890, %s2891
    %s2893 = sand.u32 51, %s2892
    %s2894 = sshrl.u32 %s2893, 2
    %s2895 = sor.u32 %s2893, %s2894
    %s2896 = sand.u32 15, %s2895
    %v2897 = vld [vmem:[%s2887] sm:%s2896]
    %v2898 = vunpack.c.l.bf16 %v2897
    %v2899 = vunpack.c.h.bf16 %v2897
    %s2900 = scalar_lea.vmem [#allocation1], 600
    %2901 = vst [vmem:[%s2900] sm:%s5] %v2898
    %s2902 = smul.addr 4, 74
    %s2903 = scalar_lea.vmem %s0, %s2902
    %s2904 = sshrl.u32 %s5, 1
    %s2905 = sor.u32 %s5, %s2904
    %s2906 = sand.u32 %s2905, 85
    %s2907 = sshrl.u32 %s2906, 1
    %s2908 = sor.u32 %s2906, %s2907
    %s2909 = sand.u32 51, %s2908
    %s2910 = sshrl.u32 %s2909, 2
    %s2911 = sor.u32 %s2909, %s2910
    %s2912 = sand.u32 15, %s2911
    %v2913 = vld [vmem:[%s2903] sm:%s2912]
    %v2914 = vunpack.c.l.bf16 %v2913
    %v2915 = vunpack.c.h.bf16 %v2913
    %s2916 = scalar_lea.vmem [#allocation1], 592
    %2917 = vst [vmem:[%s2916] sm:%s5] %v2914
    %s2918 = smul.addr 4, 73
    %s2919 = scalar_lea.vmem %s0, %s2918
    %s2920 = sshrl.u32 %s5, 1
    %s2921 = sor.u32 %s5, %s2920
    %s2922 = sand.u32 %s2921, 85
    %s2923 = sshrl.u32 %s2922, 1
    %s2924 = sor.u32 %s2922, %s2923
    %s2925 = sand.u32 51, %s2924
    %s2926 = sshrl.u32 %s2925, 2
    %s2927 = sor.u32 %s2925, %s2926
    %s2928 = sand.u32 15, %s2927
    %v2929 = vld [vmem:[%s2919] sm:%s2928]
    %v2930 = vunpack.c.l.bf16 %v2929
    %v2931 = vunpack.c.h.bf16 %v2929
    %s2932 = scalar_lea.vmem [#allocation1], 584
    %2933 = vst [vmem:[%s2932] sm:%s5] %v2930
    %s2934 = smul.addr 4, 72
    %s2935 = scalar_lea.vmem %s0, %s2934
    %s2936 = sshrl.u32 %s5, 1
    %s2937 = sor.u32 %s5, %s2936
    %s2938 = sand.u32 %s2937, 85
    %s2939 = sshrl.u32 %s2938, 1
    %s2940 = sor.u32 %s2938, %s2939
    %s2941 = sand.u32 51, %s2940
    %s2942 = sshrl.u32 %s2941, 2
    %s2943 = sor.u32 %s2941, %s2942
    %s2944 = sand.u32 15, %s2943
    %v2945 = vld [vmem:[%s2935] sm:%s2944]
    %v2946 = vunpack.c.l.bf16 %v2945
    %v2947 = vunpack.c.h.bf16 %v2945
    %s2948 = scalar_lea.vmem [#allocation1], 576
    %2949 = vst [vmem:[%s2948] sm:%s5] %v2946
    %s2950 = smul.addr 4, 71
    %s2951 = scalar_lea.vmem %s0, %s2950
    %s2952 = sshrl.u32 %s5, 1
    %s2953 = sor.u32 %s5, %s2952
    %s2954 = sand.u32 %s2953, 85
    %s2955 = sshrl.u32 %s2954, 1
    %s2956 = sor.u32 %s2954, %s2955
    %s2957 = sand.u32 51, %s2956
    %s2958 = sshrl.u32 %s2957, 2
    %s2959 = sor.u32 %s2957, %s2958
    %s2960 = sand.u32 15, %s2959
    %v2961 = vld [vmem:[%s2951] sm:%s2960]
    %v2962 = vunpack.c.l.bf16 %v2961
    %v2963 = vunpack.c.h.bf16 %v2961
    %s2964 = scalar_lea.vmem [#allocation1], 568
    %2965 = vst [vmem:[%s2964] sm:%s5] %v2962
    %s2966 = smul.addr 4, 70
    %s2967 = scalar_lea.vmem %s0, %s2966
    %s2968 = sshrl.u32 %s5, 1
    %s2969 = sor.u32 %s5, %s2968
    %s2970 = sand.u32 %s2969, 85
    %s2971 = sshrl.u32 %s2970, 1
    %s2972 = sor.u32 %s2970, %s2971
    %s2973 = sand.u32 51, %s2972
    %s2974 = sshrl.u32 %s2973, 2
    %s2975 = sor.u32 %s2973, %s2974
    %s2976 = sand.u32 15, %s2975
    %v2977 = vld [vmem:[%s2967] sm:%s2976]
    %v2978 = vunpack.c.l.bf16 %v2977
    %v2979 = vunpack.c.h.bf16 %v2977
    %s2980 = scalar_lea.vmem [#allocation1], 560
    %2981 = vst [vmem:[%s2980] sm:%s5] %v2978
    %s2982 = smul.addr 4, 69
    %s2983 = scalar_lea.vmem %s0, %s2982
    %s2984 = sshrl.u32 %s5, 1
    %s2985 = sor.u32 %s5, %s2984
    %s2986 = sand.u32 %s2985, 85
    %s2987 = sshrl.u32 %s2986, 1
    %s2988 = sor.u32 %s2986, %s2987
    %s2989 = sand.u32 51, %s2988
    %s2990 = sshrl.u32 %s2989, 2
    %s2991 = sor.u32 %s2989, %s2990
    %s2992 = sand.u32 15, %s2991
    %v2993 = vld [vmem:[%s2983] sm:%s2992]
    %v2994 = vunpack.c.l.bf16 %v2993
    %v2995 = vunpack.c.h.bf16 %v2993
    %s2996 = scalar_lea.vmem [#allocation1], 552
    %2997 = vst [vmem:[%s2996] sm:%s5] %v2994
    %s2998 = smul.addr 4, 68
    %s2999 = scalar_lea.vmem %s0, %s2998
    %s3000 = sshrl.u32 %s5, 1
    %s3001 = sor.u32 %s5, %s3000
    %s3002 = sand.u32 %s3001, 85
    %s3003 = sshrl.u32 %s3002, 1
    %s3004 = sor.u32 %s3002, %s3003
    %s3005 = sand.u32 51, %s3004
    %s3006 = sshrl.u32 %s3005, 2
    %s3007 = sor.u32 %s3005, %s3006
    %s3008 = sand.u32 15, %s3007
    %v3009 = vld [vmem:[%s2999] sm:%s3008]
    %v3010 = vunpack.c.l.bf16 %v3009
    %v3011 = vunpack.c.h.bf16 %v3009
    %s3012 = scalar_lea.vmem [#allocation1], 544
    %3013 = vst [vmem:[%s3012] sm:%s5] %v3010
    %s3014 = smul.addr 4, 67
    %s3015 = scalar_lea.vmem %s0, %s3014
    %s3016 = sshrl.u32 %s5, 1
    %s3017 = sor.u32 %s5, %s3016
    %s3018 = sand.u32 %s3017, 85
    %s3019 = sshrl.u32 %s3018, 1
    %s3020 = sor.u32 %s3018, %s3019
    %s3021 = sand.u32 51, %s3020
    %s3022 = sshrl.u32 %s3021, 2
    %s3023 = sor.u32 %s3021, %s3022
    %s3024 = sand.u32 15, %s3023
    %v3025 = vld [vmem:[%s3015] sm:%s3024]
    %v3026 = vunpack.c.l.bf16 %v3025
    %v3027 = vunpack.c.h.bf16 %v3025
    %s3028 = scalar_lea.vmem [#allocation1], 536
    %3029 = vst [vmem:[%s3028] sm:%s5] %v3026
    %s3030 = smul.addr 4, 66
    %s3031 = scalar_lea.vmem %s0, %s3030
    %s3032 = sshrl.u32 %s5, 1
    %s3033 = sor.u32 %s5, %s3032
    %s3034 = sand.u32 %s3033, 85
    %s3035 = sshrl.u32 %s3034, 1
    %s3036 = sor.u32 %s3034, %s3035
    %s3037 = sand.u32 51, %s3036
    %s3038 = sshrl.u32 %s3037, 2
    %s3039 = sor.u32 %s3037, %s3038
    %s3040 = sand.u32 15, %s3039
    %v3041 = vld [vmem:[%s3031] sm:%s3040]
    %v3042 = vunpack.c.l.bf16 %v3041
    %v3043 = vunpack.c.h.bf16 %v3041
    %s3044 = scalar_lea.vmem [#allocation1], 528
    %3045 = vst [vmem:[%s3044] sm:%s5] %v3042
    %s3046 = smul.addr 4, 65
    %s3047 = scalar_lea.vmem %s0, %s3046
    %s3048 = sshrl.u32 %s5, 1
    %s3049 = sor.u32 %s5, %s3048
    %s3050 = sand.u32 %s3049, 85
    %s3051 = sshrl.u32 %s3050, 1
    %s3052 = sor.u32 %s3050, %s3051
    %s3053 = sand.u32 51, %s3052
    %s3054 = sshrl.u32 %s3053, 2
    %s3055 = sor.u32 %s3053, %s3054
    %s3056 = sand.u32 15, %s3055
    %v3057 = vld [vmem:[%s3047] sm:%s3056]
    %v3058 = vunpack.c.l.bf16 %v3057
    %v3059 = vunpack.c.h.bf16 %v3057
    %s3060 = scalar_lea.vmem [#allocation1], 520
    %3061 = vst [vmem:[%s3060] sm:%s5] %v3058
    %s3062 = smul.addr 4, 64
    %s3063 = scalar_lea.vmem %s0, %s3062
    %s3064 = sshrl.u32 %s5, 1
    %s3065 = sor.u32 %s5, %s3064
    %s3066 = sand.u32 %s3065, 85
    %s3067 = sshrl.u32 %s3066, 1
    %s3068 = sor.u32 %s3066, %s3067
    %s3069 = sand.u32 51, %s3068
    %s3070 = sshrl.u32 %s3069, 2
    %s3071 = sor.u32 %s3069, %s3070
    %s3072 = sand.u32 15, %s3071
    %v3073 = vld [vmem:[%s3063] sm:%s3072]
    %v3074 = vunpack.c.l.bf16 %v3073
    %v3075 = vunpack.c.h.bf16 %v3073
    %s3076 = scalar_lea.vmem [#allocation1], 512
    %3077 = vst [vmem:[%s3076] sm:%s5] %v3074
    %s3078 = smul.addr 4, 63
    %s3079 = scalar_lea.vmem %s0, %s3078
    %s3080 = sshrl.u32 %s5, 1
    %s3081 = sor.u32 %s5, %s3080
    %s3082 = sand.u32 %s3081, 85
    %s3083 = sshrl.u32 %s3082, 1
    %s3084 = sor.u32 %s3082, %s3083
    %s3085 = sand.u32 51, %s3084
    %s3086 = sshrl.u32 %s3085, 2
    %s3087 = sor.u32 %s3085, %s3086
    %s3088 = sand.u32 15, %s3087
    %v3089 = vld [vmem:[%s3079] sm:%s3088]
    %v3090 = vunpack.c.l.bf16 %v3089
    %v3091 = vunpack.c.h.bf16 %v3089
    %s3092 = scalar_lea.vmem [#allocation1], 504
    %3093 = vst [vmem:[%s3092] sm:%s5] %v3090
    %s3094 = smul.addr 4, 62
    %s3095 = scalar_lea.vmem %s0, %s3094
    %s3096 = sshrl.u32 %s5, 1
    %s3097 = sor.u32 %s5, %s3096
    %s3098 = sand.u32 %s3097, 85
    %s3099 = sshrl.u32 %s3098, 1
    %s3100 = sor.u32 %s3098, %s3099
    %s3101 = sand.u32 51, %s3100
    %s3102 = sshrl.u32 %s3101, 2
    %s3103 = sor.u32 %s3101, %s3102
    %s3104 = sand.u32 15, %s3103
    %v3105 = vld [vmem:[%s3095] sm:%s3104]
    %v3106 = vunpack.c.l.bf16 %v3105
    %v3107 = vunpack.c.h.bf16 %v3105
    %s3108 = scalar_lea.vmem [#allocation1], 496
    %3109 = vst [vmem:[%s3108] sm:%s5] %v3106
    %s3110 = smul.addr 4, 61
    %s3111 = scalar_lea.vmem %s0, %s3110
    %s3112 = sshrl.u32 %s5, 1
    %s3113 = sor.u32 %s5, %s3112
    %s3114 = sand.u32 %s3113, 85
    %s3115 = sshrl.u32 %s3114, 1
    %s3116 = sor.u32 %s3114, %s3115
    %s3117 = sand.u32 51, %s3116
    %s3118 = sshrl.u32 %s3117, 2
    %s3119 = sor.u32 %s3117, %s3118
    %s3120 = sand.u32 15, %s3119
    %v3121 = vld [vmem:[%s3111] sm:%s3120]
    %v3122 = vunpack.c.l.bf16 %v3121
    %v3123 = vunpack.c.h.bf16 %v3121
    %s3124 = scalar_lea.vmem [#allocation1], 488
    %3125 = vst [vmem:[%s3124] sm:%s5] %v3122
    %s3126 = smul.addr 4, 60
    %s3127 = scalar_lea.vmem %s0, %s3126
    %s3128 = sshrl.u32 %s5, 1
    %s3129 = sor.u32 %s5, %s3128
    %s3130 = sand.u32 %s3129, 85
    %s3131 = sshrl.u32 %s3130, 1
    %s3132 = sor.u32 %s3130, %s3131
    %s3133 = sand.u32 51, %s3132
    %s3134 = sshrl.u32 %s3133, 2
    %s3135 = sor.u32 %s3133, %s3134
    %s3136 = sand.u32 15, %s3135
    %v3137 = vld [vmem:[%s3127] sm:%s3136]
    %v3138 = vunpack.c.l.bf16 %v3137
    %v3139 = vunpack.c.h.bf16 %v3137
    %s3140 = scalar_lea.vmem [#allocation1], 480
    %3141 = vst [vmem:[%s3140] sm:%s5] %v3138
    %s3142 = smul.addr 4, 59
    %s3143 = scalar_lea.vmem %s0, %s3142
    %s3144 = sshrl.u32 %s5, 1
    %s3145 = sor.u32 %s5, %s3144
    %s3146 = sand.u32 %s3145, 85
    %s3147 = sshrl.u32 %s3146, 1
    %s3148 = sor.u32 %s3146, %s3147
    %s3149 = sand.u32 51, %s3148
    %s3150 = sshrl.u32 %s3149, 2
    %s3151 = sor.u32 %s3149, %s3150
    %s3152 = sand.u32 15, %s3151
    %v3153 = vld [vmem:[%s3143] sm:%s3152]
    %v3154 = vunpack.c.l.bf16 %v3153
    %v3155 = vunpack.c.h.bf16 %v3153
    %s3156 = scalar_lea.vmem [#allocation1], 472
    %3157 = vst [vmem:[%s3156] sm:%s5] %v3154
    %s3158 = smul.addr 4, 58
    %s3159 = scalar_lea.vmem %s0, %s3158
    %s3160 = sshrl.u32 %s5, 1
    %s3161 = sor.u32 %s5, %s3160
    %s3162 = sand.u32 %s3161, 85
    %s3163 = sshrl.u32 %s3162, 1
    %s3164 = sor.u32 %s3162, %s3163
    %s3165 = sand.u32 51, %s3164
    %s3166 = sshrl.u32 %s3165, 2
    %s3167 = sor.u32 %s3165, %s3166
    %s3168 = sand.u32 15, %s3167
    %v3169 = vld [vmem:[%s3159] sm:%s3168]
    %v3170 = vunpack.c.l.bf16 %v3169
    %v3171 = vunpack.c.h.bf16 %v3169
    %s3172 = scalar_lea.vmem [#allocation1], 464
    %3173 = vst [vmem:[%s3172] sm:%s5] %v3170
    %s3174 = smul.addr 4, 57
    %s3175 = scalar_lea.vmem %s0, %s3174
    %s3176 = sshrl.u32 %s5, 1
    %s3177 = sor.u32 %s5, %s3176
    %s3178 = sand.u32 %s3177, 85
    %s3179 = sshrl.u32 %s3178, 1
    %s3180 = sor.u32 %s3178, %s3179
    %s3181 = sand.u32 51, %s3180
    %s3182 = sshrl.u32 %s3181, 2
    %s3183 = sor.u32 %s3181, %s3182
    %s3184 = sand.u32 15, %s3183
    %v3185 = vld [vmem:[%s3175] sm:%s3184]
    %v3186 = vunpack.c.l.bf16 %v3185
    %v3187 = vunpack.c.h.bf16 %v3185
    %s3188 = scalar_lea.vmem [#allocation1], 456
    %3189 = vst [vmem:[%s3188] sm:%s5] %v3186
    %s3190 = smul.addr 4, 56
    %s3191 = scalar_lea.vmem %s0, %s3190
    %s3192 = sshrl.u32 %s5, 1
    %s3193 = sor.u32 %s5, %s3192
    %s3194 = sand.u32 %s3193, 85
    %s3195 = sshrl.u32 %s3194, 1
    %s3196 = sor.u32 %s3194, %s3195
    %s3197 = sand.u32 51, %s3196
    %s3198 = sshrl.u32 %s3197, 2
    %s3199 = sor.u32 %s3197, %s3198
    %s3200 = sand.u32 15, %s3199
    %v3201 = vld [vmem:[%s3191] sm:%s3200]
    %v3202 = vunpack.c.l.bf16 %v3201
    %v3203 = vunpack.c.h.bf16 %v3201
    %s3204 = scalar_lea.vmem [#allocation1], 448
    %3205 = vst [vmem:[%s3204] sm:%s5] %v3202
    %s3206 = smul.addr 4, 55
    %s3207 = scalar_lea.vmem %s0, %s3206
    %s3208 = sshrl.u32 %s5, 1
    %s3209 = sor.u32 %s5, %s3208
    %s3210 = sand.u32 %s3209, 85
    %s3211 = sshrl.u32 %s3210, 1
    %s3212 = sor.u32 %s3210, %s3211
    %s3213 = sand.u32 51, %s3212
    %s3214 = sshrl.u32 %s3213, 2
    %s3215 = sor.u32 %s3213, %s3214
    %s3216 = sand.u32 15, %s3215
    %v3217 = vld [vmem:[%s3207] sm:%s3216]
    %v3218 = vunpack.c.l.bf16 %v3217
    %v3219 = vunpack.c.h.bf16 %v3217
    %s3220 = scalar_lea.vmem [#allocation1], 440
    %3221 = vst [vmem:[%s3220] sm:%s5] %v3218
    %s3222 = smul.addr 4, 54
    %s3223 = scalar_lea.vmem %s0, %s3222
    %s3224 = sshrl.u32 %s5, 1
    %s3225 = sor.u32 %s5, %s3224
    %s3226 = sand.u32 %s3225, 85
    %s3227 = sshrl.u32 %s3226, 1
    %s3228 = sor.u32 %s3226, %s3227
    %s3229 = sand.u32 51, %s3228
    %s3230 = sshrl.u32 %s3229, 2
    %s3231 = sor.u32 %s3229, %s3230
    %s3232 = sand.u32 15, %s3231
    %v3233 = vld [vmem:[%s3223] sm:%s3232]
    %v3234 = vunpack.c.l.bf16 %v3233
    %v3235 = vunpack.c.h.bf16 %v3233
    %s3236 = scalar_lea.vmem [#allocation1], 432
    %3237 = vst [vmem:[%s3236] sm:%s5] %v3234
    %s3238 = smul.addr 4, 53
    %s3239 = scalar_lea.vmem %s0, %s3238
    %s3240 = sshrl.u32 %s5, 1
    %s3241 = sor.u32 %s5, %s3240
    %s3242 = sand.u32 %s3241, 85
    %s3243 = sshrl.u32 %s3242, 1
    %s3244 = sor.u32 %s3242, %s3243
    %s3245 = sand.u32 51, %s3244
    %s3246 = sshrl.u32 %s3245, 2
    %s3247 = sor.u32 %s3245, %s3246
    %s3248 = sand.u32 15, %s3247
    %v3249 = vld [vmem:[%s3239] sm:%s3248]
    %v3250 = vunpack.c.l.bf16 %v3249
    %v3251 = vunpack.c.h.bf16 %v3249
    %s3252 = scalar_lea.vmem [#allocation1], 424
    %3253 = vst [vmem:[%s3252] sm:%s5] %v3250
    %s3254 = smul.addr 4, 52
    %s3255 = scalar_lea.vmem %s0, %s3254
    %s3256 = sshrl.u32 %s5, 1
    %s3257 = sor.u32 %s5, %s3256
    %s3258 = sand.u32 %s3257, 85
    %s3259 = sshrl.u32 %s3258, 1
    %s3260 = sor.u32 %s3258, %s3259
    %s3261 = sand.u32 51, %s3260
    %s3262 = sshrl.u32 %s3261, 2
    %s3263 = sor.u32 %s3261, %s3262
    %s3264 = sand.u32 15, %s3263
    %v3265 = vld [vmem:[%s3255] sm:%s3264]
    %v3266 = vunpack.c.l.bf16 %v3265
    %v3267 = vunpack.c.h.bf16 %v3265
    %s3268 = scalar_lea.vmem [#allocation1], 416
    %3269 = vst [vmem:[%s3268] sm:%s5] %v3266
    %s3270 = smul.addr 4, 51
    %s3271 = scalar_lea.vmem %s0, %s3270
    %s3272 = sshrl.u32 %s5, 1
    %s3273 = sor.u32 %s5, %s3272
    %s3274 = sand.u32 %s3273, 85
    %s3275 = sshrl.u32 %s3274, 1
    %s3276 = sor.u32 %s3274, %s3275
    %s3277 = sand.u32 51, %s3276
    %s3278 = sshrl.u32 %s3277, 2
    %s3279 = sor.u32 %s3277, %s3278
    %s3280 = sand.u32 15, %s3279
    %v3281 = vld [vmem:[%s3271] sm:%s3280]
    %v3282 = vunpack.c.l.bf16 %v3281
    %v3283 = vunpack.c.h.bf16 %v3281
    %s3284 = scalar_lea.vmem [#allocation1], 408
    %3285 = vst [vmem:[%s3284] sm:%s5] %v3282
    %s3286 = smul.addr 4, 50
    %s3287 = scalar_lea.vmem %s0, %s3286
    %s3288 = sshrl.u32 %s5, 1
    %s3289 = sor.u32 %s5, %s3288
    %s3290 = sand.u32 %s3289, 85
    %s3291 = sshrl.u32 %s3290, 1
    %s3292 = sor.u32 %s3290, %s3291
    %s3293 = sand.u32 51, %s3292
    %s3294 = sshrl.u32 %s3293, 2
    %s3295 = sor.u32 %s3293, %s3294
    %s3296 = sand.u32 15, %s3295
    %v3297 = vld [vmem:[%s3287] sm:%s3296]
    %v3298 = vunpack.c.l.bf16 %v3297
    %v3299 = vunpack.c.h.bf16 %v3297
    %s3300 = scalar_lea.vmem [#allocation1], 400
    %3301 = vst [vmem:[%s3300] sm:%s5] %v3298
    %s3302 = smul.addr 4, 49
    %s3303 = scalar_lea.vmem %s0, %s3302
    %s3304 = sshrl.u32 %s5, 1
    %s3305 = sor.u32 %s5, %s3304
    %s3306 = sand.u32 %s3305, 85
    %s3307 = sshrl.u32 %s3306, 1
    %s3308 = sor.u32 %s3306, %s3307
    %s3309 = sand.u32 51, %s3308
    %s3310 = sshrl.u32 %s3309, 2
    %s3311 = sor.u32 %s3309, %s3310
    %s3312 = sand.u32 15, %s3311
    %v3313 = vld [vmem:[%s3303] sm:%s3312]
    %v3314 = vunpack.c.l.bf16 %v3313
    %v3315 = vunpack.c.h.bf16 %v3313
    %s3316 = scalar_lea.vmem [#allocation1], 392
    %3317 = vst [vmem:[%s3316] sm:%s5] %v3314
    %s3318 = smul.addr 4, 48
    %s3319 = scalar_lea.vmem %s0, %s3318
    %s3320 = sshrl.u32 %s5, 1
    %s3321 = sor.u32 %s5, %s3320
    %s3322 = sand.u32 %s3321, 85
    %s3323 = sshrl.u32 %s3322, 1
    %s3324 = sor.u32 %s3322, %s3323
    %s3325 = sand.u32 51, %s3324
    %s3326 = sshrl.u32 %s3325, 2
    %s3327 = sor.u32 %s3325, %s3326
    %s3328 = sand.u32 15, %s3327
    %v3329 = vld [vmem:[%s3319] sm:%s3328]
    %v3330 = vunpack.c.l.bf16 %v3329
    %v3331 = vunpack.c.h.bf16 %v3329
    %s3332 = scalar_lea.vmem [#allocation1], 384
    %3333 = vst [vmem:[%s3332] sm:%s5] %v3330
    %s3334 = smul.addr 4, 47
    %s3335 = scalar_lea.vmem %s0, %s3334
    %s3336 = sshrl.u32 %s5, 1
    %s3337 = sor.u32 %s5, %s3336
    %s3338 = sand.u32 %s3337, 85
    %s3339 = sshrl.u32 %s3338, 1
    %s3340 = sor.u32 %s3338, %s3339
    %s3341 = sand.u32 51, %s3340
    %s3342 = sshrl.u32 %s3341, 2
    %s3343 = sor.u32 %s3341, %s3342
    %s3344 = sand.u32 15, %s3343
    %v3345 = vld [vmem:[%s3335] sm:%s3344]
    %v3346 = vunpack.c.l.bf16 %v3345
    %v3347 = vunpack.c.h.bf16 %v3345
    %s3348 = scalar_lea.vmem [#allocation1], 376
    %3349 = vst [vmem:[%s3348] sm:%s5] %v3346
    %s3350 = smul.addr 4, 46
    %s3351 = scalar_lea.vmem %s0, %s3350
    %s3352 = sshrl.u32 %s5, 1
    %s3353 = sor.u32 %s5, %s3352
    %s3354 = sand.u32 %s3353, 85
    %s3355 = sshrl.u32 %s3354, 1
    %s3356 = sor.u32 %s3354, %s3355
    %s3357 = sand.u32 51, %s3356
    %s3358 = sshrl.u32 %s3357, 2
    %s3359 = sor.u32 %s3357, %s3358
    %s3360 = sand.u32 15, %s3359
    %v3361 = vld [vmem:[%s3351] sm:%s3360]
    %v3362 = vunpack.c.l.bf16 %v3361
    %v3363 = vunpack.c.h.bf16 %v3361
    %s3364 = scalar_lea.vmem [#allocation1], 368
    %3365 = vst [vmem:[%s3364] sm:%s5] %v3362
    %s3366 = smul.addr 4, 45
    %s3367 = scalar_lea.vmem %s0, %s3366
    %s3368 = sshrl.u32 %s5, 1
    %s3369 = sor.u32 %s5, %s3368
    %s3370 = sand.u32 %s3369, 85
    %s3371 = sshrl.u32 %s3370, 1
    %s3372 = sor.u32 %s3370, %s3371
    %s3373 = sand.u32 51, %s3372
    %s3374 = sshrl.u32 %s3373, 2
    %s3375 = sor.u32 %s3373, %s3374
    %s3376 = sand.u32 15, %s3375
    %v3377 = vld [vmem:[%s3367] sm:%s3376]
    %v3378 = vunpack.c.l.bf16 %v3377
    %v3379 = vunpack.c.h.bf16 %v3377
    %s3380 = scalar_lea.vmem [#allocation1], 360
    %3381 = vst [vmem:[%s3380] sm:%s5] %v3378
    %s3382 = smul.addr 4, 44
    %s3383 = scalar_lea.vmem %s0, %s3382
    %s3384 = sshrl.u32 %s5, 1
    %s3385 = sor.u32 %s5, %s3384
    %s3386 = sand.u32 %s3385, 85
    %s3387 = sshrl.u32 %s3386, 1
    %s3388 = sor.u32 %s3386, %s3387
    %s3389 = sand.u32 51, %s3388
    %s3390 = sshrl.u32 %s3389, 2
    %s3391 = sor.u32 %s3389, %s3390
    %s3392 = sand.u32 15, %s3391
    %v3393 = vld [vmem:[%s3383] sm:%s3392]
    %v3394 = vunpack.c.l.bf16 %v3393
    %v3395 = vunpack.c.h.bf16 %v3393
    %s3396 = scalar_lea.vmem [#allocation1], 352
    %3397 = vst [vmem:[%s3396] sm:%s5] %v3394
    %s3398 = smul.addr 4, 43
    %s3399 = scalar_lea.vmem %s0, %s3398
    %s3400 = sshrl.u32 %s5, 1
    %s3401 = sor.u32 %s5, %s3400
    %s3402 = sand.u32 %s3401, 85
    %s3403 = sshrl.u32 %s3402, 1
    %s3404 = sor.u32 %s3402, %s3403
    %s3405 = sand.u32 51, %s3404
    %s3406 = sshrl.u32 %s3405, 2
    %s3407 = sor.u32 %s3405, %s3406
    %s3408 = sand.u32 15, %s3407
    %v3409 = vld [vmem:[%s3399] sm:%s3408]
    %v3410 = vunpack.c.l.bf16 %v3409
    %v3411 = vunpack.c.h.bf16 %v3409
    %s3412 = scalar_lea.vmem [#allocation1], 344
    %3413 = vst [vmem:[%s3412] sm:%s5] %v3410
    %s3414 = smul.addr 4, 42
    %s3415 = scalar_lea.vmem %s0, %s3414
    %s3416 = sshrl.u32 %s5, 1
    %s3417 = sor.u32 %s5, %s3416
    %s3418 = sand.u32 %s3417, 85
    %s3419 = sshrl.u32 %s3418, 1
    %s3420 = sor.u32 %s3418, %s3419
    %s3421 = sand.u32 51, %s3420
    %s3422 = sshrl.u32 %s3421, 2
    %s3423 = sor.u32 %s3421, %s3422
    %s3424 = sand.u32 15, %s3423
    %v3425 = vld [vmem:[%s3415] sm:%s3424]
    %v3426 = vunpack.c.l.bf16 %v3425
    %v3427 = vunpack.c.h.bf16 %v3425
    %s3428 = scalar_lea.vmem [#allocation1], 336
    %3429 = vst [vmem:[%s3428] sm:%s5] %v3426
    %s3430 = smul.addr 4, 41
    %s3431 = scalar_lea.vmem %s0, %s3430
    %s3432 = sshrl.u32 %s5, 1
    %s3433 = sor.u32 %s5, %s3432
    %s3434 = sand.u32 %s3433, 85
    %s3435 = sshrl.u32 %s3434, 1
    %s3436 = sor.u32 %s3434, %s3435
    %s3437 = sand.u32 51, %s3436
    %s3438 = sshrl.u32 %s3437, 2
    %s3439 = sor.u32 %s3437, %s3438
    %s3440 = sand.u32 15, %s3439
    %v3441 = vld [vmem:[%s3431] sm:%s3440]
    %v3442 = vunpack.c.l.bf16 %v3441
    %v3443 = vunpack.c.h.bf16 %v3441
    %s3444 = scalar_lea.vmem [#allocation1], 328
    %3445 = vst [vmem:[%s3444] sm:%s5] %v3442
    %s3446 = smul.addr 4, 40
    %s3447 = scalar_lea.vmem %s0, %s3446
    %s3448 = sshrl.u32 %s5, 1
    %s3449 = sor.u32 %s5, %s3448
    %s3450 = sand.u32 %s3449, 85
    %s3451 = sshrl.u32 %s3450, 1
    %s3452 = sor.u32 %s3450, %s3451
    %s3453 = sand.u32 51, %s3452
    %s3454 = sshrl.u32 %s3453, 2
    %s3455 = sor.u32 %s3453, %s3454
    %s3456 = sand.u32 15, %s3455
    %v3457 = vld [vmem:[%s3447] sm:%s3456]
    %v3458 = vunpack.c.l.bf16 %v3457
    %v3459 = vunpack.c.h.bf16 %v3457
    %s3460 = scalar_lea.vmem [#allocation1], 320
    %3461 = vst [vmem:[%s3460] sm:%s5] %v3458
    %s3462 = smul.addr 4, 39
    %s3463 = scalar_lea.vmem %s0, %s3462
    %s3464 = sshrl.u32 %s5, 1
    %s3465 = sor.u32 %s5, %s3464
    %s3466 = sand.u32 %s3465, 85
    %s3467 = sshrl.u32 %s3466, 1
    %s3468 = sor.u32 %s3466, %s3467
    %s3469 = sand.u32 51, %s3468
    %s3470 = sshrl.u32 %s3469, 2
    %s3471 = sor.u32 %s3469, %s3470
    %s3472 = sand.u32 15, %s3471
    %v3473 = vld [vmem:[%s3463] sm:%s3472]
    %v3474 = vunpack.c.l.bf16 %v3473
    %v3475 = vunpack.c.h.bf16 %v3473
    %s3476 = scalar_lea.vmem [#allocation1], 312
    %3477 = vst [vmem:[%s3476] sm:%s5] %v3474
    %s3478 = smul.addr 4, 38
    %s3479 = scalar_lea.vmem %s0, %s3478
    %s3480 = sshrl.u32 %s5, 1
    %s3481 = sor.u32 %s5, %s3480
    %s3482 = sand.u32 %s3481, 85
    %s3483 = sshrl.u32 %s3482, 1
    %s3484 = sor.u32 %s3482, %s3483
    %s3485 = sand.u32 51, %s3484
    %s3486 = sshrl.u32 %s3485, 2
    %s3487 = sor.u32 %s3485, %s3486
    %s3488 = sand.u32 15, %s3487
    %v3489 = vld [vmem:[%s3479] sm:%s3488]
    %v3490 = vunpack.c.l.bf16 %v3489
    %v3491 = vunpack.c.h.bf16 %v3489
    %s3492 = scalar_lea.vmem [#allocation1], 304
    %3493 = vst [vmem:[%s3492] sm:%s5] %v3490
    %s3494 = smul.addr 4, 37
    %s3495 = scalar_lea.vmem %s0, %s3494
    %s3496 = sshrl.u32 %s5, 1
    %s3497 = sor.u32 %s5, %s3496
    %s3498 = sand.u32 %s3497, 85
    %s3499 = sshrl.u32 %s3498, 1
    %s3500 = sor.u32 %s3498, %s3499
    %s3501 = sand.u32 51, %s3500
    %s3502 = sshrl.u32 %s3501, 2
    %s3503 = sor.u32 %s3501, %s3502
    %s3504 = sand.u32 15, %s3503
    %v3505 = vld [vmem:[%s3495] sm:%s3504]
    %v3506 = vunpack.c.l.bf16 %v3505
    %v3507 = vunpack.c.h.bf16 %v3505
    %s3508 = scalar_lea.vmem [#allocation1], 296
    %3509 = vst [vmem:[%s3508] sm:%s5] %v3506
    %s3510 = smul.addr 4, 36
    %s3511 = scalar_lea.vmem %s0, %s3510
    %s3512 = sshrl.u32 %s5, 1
    %s3513 = sor.u32 %s5, %s3512
    %s3514 = sand.u32 %s3513, 85
    %s3515 = sshrl.u32 %s3514, 1
    %s3516 = sor.u32 %s3514, %s3515
    %s3517 = sand.u32 51, %s3516
    %s3518 = sshrl.u32 %s3517, 2
    %s3519 = sor.u32 %s3517, %s3518
    %s3520 = sand.u32 15, %s3519
    %v3521 = vld [vmem:[%s3511] sm:%s3520]
    %v3522 = vunpack.c.l.bf16 %v3521
    %v3523 = vunpack.c.h.bf16 %v3521
    %s3524 = scalar_lea.vmem [#allocation1], 288
    %3525 = vst [vmem:[%s3524] sm:%s5] %v3522
    %s3526 = smul.addr 4, 35
    %s3527 = scalar_lea.vmem %s0, %s3526
    %s3528 = sshrl.u32 %s5, 1
    %s3529 = sor.u32 %s5, %s3528
    %s3530 = sand.u32 %s3529, 85
    %s3531 = sshrl.u32 %s3530, 1
    %s3532 = sor.u32 %s3530, %s3531
    %s3533 = sand.u32 51, %s3532
    %s3534 = sshrl.u32 %s3533, 2
    %s3535 = sor.u32 %s3533, %s3534
    %s3536 = sand.u32 15, %s3535
    %v3537 = vld [vmem:[%s3527] sm:%s3536]
    %v3538 = vunpack.c.l.bf16 %v3537
    %v3539 = vunpack.c.h.bf16 %v3537
    %s3540 = scalar_lea.vmem [#allocation1], 280
    %3541 = vst [vmem:[%s3540] sm:%s5] %v3538
    %s3542 = smul.addr 4, 34
    %s3543 = scalar_lea.vmem %s0, %s3542
    %s3544 = sshrl.u32 %s5, 1
    %s3545 = sor.u32 %s5, %s3544
    %s3546 = sand.u32 %s3545, 85
    %s3547 = sshrl.u32 %s3546, 1
    %s3548 = sor.u32 %s3546, %s3547
    %s3549 = sand.u32 51, %s3548
    %s3550 = sshrl.u32 %s3549, 2
    %s3551 = sor.u32 %s3549, %s3550
    %s3552 = sand.u32 15, %s3551
    %v3553 = vld [vmem:[%s3543] sm:%s3552]
    %v3554 = vunpack.c.l.bf16 %v3553
    %v3555 = vunpack.c.h.bf16 %v3553
    %s3556 = scalar_lea.vmem [#allocation1], 272
    %3557 = vst [vmem:[%s3556] sm:%s5] %v3554
    %s3558 = smul.addr 4, 33
    %s3559 = scalar_lea.vmem %s0, %s3558
    %s3560 = sshrl.u32 %s5, 1
    %s3561 = sor.u32 %s5, %s3560
    %s3562 = sand.u32 %s3561, 85
    %s3563 = sshrl.u32 %s3562, 1
    %s3564 = sor.u32 %s3562, %s3563
    %s3565 = sand.u32 51, %s3564
    %s3566 = sshrl.u32 %s3565, 2
    %s3567 = sor.u32 %s3565, %s3566
    %s3568 = sand.u32 15, %s3567
    %v3569 = vld [vmem:[%s3559] sm:%s3568]
    %v3570 = vunpack.c.l.bf16 %v3569
    %v3571 = vunpack.c.h.bf16 %v3569
    %s3572 = scalar_lea.vmem [#allocation1], 264
    %3573 = vst [vmem:[%s3572] sm:%s5] %v3570
    %s3574 = smul.addr 4, 32
    %s3575 = scalar_lea.vmem %s0, %s3574
    %s3576 = sshrl.u32 %s5, 1
    %s3577 = sor.u32 %s5, %s3576
    %s3578 = sand.u32 %s3577, 85
    %s3579 = sshrl.u32 %s3578, 1
    %s3580 = sor.u32 %s3578, %s3579
    %s3581 = sand.u32 51, %s3580
    %s3582 = sshrl.u32 %s3581, 2
    %s3583 = sor.u32 %s3581, %s3582
    %s3584 = sand.u32 15, %s3583
    %v3585 = vld [vmem:[%s3575] sm:%s3584]
    %v3586 = vunpack.c.l.bf16 %v3585
    %v3587 = vunpack.c.h.bf16 %v3585
    %s3588 = scalar_lea.vmem [#allocation1], 256
    %3589 = vst [vmem:[%s3588] sm:%s5] %v3586
    %s3590 = smul.addr 4, 31
    %s3591 = scalar_lea.vmem %s0, %s3590
    %s3592 = sshrl.u32 %s5, 1
    %s3593 = sor.u32 %s5, %s3592
    %s3594 = sand.u32 %s3593, 85
    %s3595 = sshrl.u32 %s3594, 1
    %s3596 = sor.u32 %s3594, %s3595
    %s3597 = sand.u32 51, %s3596
    %s3598 = sshrl.u32 %s3597, 2
    %s3599 = sor.u32 %s3597, %s3598
    %s3600 = sand.u32 15, %s3599
    %v3601 = vld [vmem:[%s3591] sm:%s3600]
    %v3602 = vunpack.c.l.bf16 %v3601
    %v3603 = vunpack.c.h.bf16 %v3601
    %s3604 = scalar_lea.vmem [#allocation1], 248
    %3605 = vst [vmem:[%s3604] sm:%s5] %v3602
    %s3606 = smul.addr 4, 30
    %s3607 = scalar_lea.vmem %s0, %s3606
    %s3608 = sshrl.u32 %s5, 1
    %s3609 = sor.u32 %s5, %s3608
    %s3610 = sand.u32 %s3609, 85
    %s3611 = sshrl.u32 %s3610, 1
    %s3612 = sor.u32 %s3610, %s3611
    %s3613 = sand.u32 51, %s3612
    %s3614 = sshrl.u32 %s3613, 2
    %s3615 = sor.u32 %s3613, %s3614
    %s3616 = sand.u32 15, %s3615
    %v3617 = vld [vmem:[%s3607] sm:%s3616]
    %v3618 = vunpack.c.l.bf16 %v3617
    %v3619 = vunpack.c.h.bf16 %v3617
    %s3620 = scalar_lea.vmem [#allocation1], 240
    %3621 = vst [vmem:[%s3620] sm:%s5] %v3618
    %s3622 = smul.addr 4, 29
    %s3623 = scalar_lea.vmem %s0, %s3622
    %s3624 = sshrl.u32 %s5, 1
    %s3625 = sor.u32 %s5, %s3624
    %s3626 = sand.u32 %s3625, 85
    %s3627 = sshrl.u32 %s3626, 1
    %s3628 = sor.u32 %s3626, %s3627
    %s3629 = sand.u32 51, %s3628
    %s3630 = sshrl.u32 %s3629, 2
    %s3631 = sor.u32 %s3629, %s3630
    %s3632 = sand.u32 15, %s3631
    %v3633 = vld [vmem:[%s3623] sm:%s3632]
    %v3634 = vunpack.c.l.bf16 %v3633
    %v3635 = vunpack.c.h.bf16 %v3633
    %s3636 = scalar_lea.vmem [#allocation1], 232
    %3637 = vst [vmem:[%s3636] sm:%s5] %v3634
    %s3638 = smul.addr 4, 28
    %s3639 = scalar_lea.vmem %s0, %s3638
    %s3640 = sshrl.u32 %s5, 1
    %s3641 = sor.u32 %s5, %s3640
    %s3642 = sand.u32 %s3641, 85
    %s3643 = sshrl.u32 %s3642, 1
    %s3644 = sor.u32 %s3642, %s3643
    %s3645 = sand.u32 51, %s3644
    %s3646 = sshrl.u32 %s3645, 2
    %s3647 = sor.u32 %s3645, %s3646
    %s3648 = sand.u32 15, %s3647
    %v3649 = vld [vmem:[%s3639] sm:%s3648]
    %v3650 = vunpack.c.l.bf16 %v3649
    %v3651 = vunpack.c.h.bf16 %v3649
    %s3652 = scalar_lea.vmem [#allocation1], 224
    %3653 = vst [vmem:[%s3652] sm:%s5] %v3650
    %s3654 = smul.addr 4, 27
    %s3655 = scalar_lea.vmem %s0, %s3654
    %s3656 = sshrl.u32 %s5, 1
    %s3657 = sor.u32 %s5, %s3656
    %s3658 = sand.u32 %s3657, 85
    %s3659 = sshrl.u32 %s3658, 1
    %s3660 = sor.u32 %s3658, %s3659
    %s3661 = sand.u32 51, %s3660
    %s3662 = sshrl.u32 %s3661, 2
    %s3663 = sor.u32 %s3661, %s3662
    %s3664 = sand.u32 15, %s3663
    %v3665 = vld [vmem:[%s3655] sm:%s3664]
    %v3666 = vunpack.c.l.bf16 %v3665
    %v3667 = vunpack.c.h.bf16 %v3665
    %s3668 = scalar_lea.vmem [#allocation1], 216
    %3669 = vst [vmem:[%s3668] sm:%s5] %v3666
    %s3670 = smul.addr 4, 26
    %s3671 = scalar_lea.vmem %s0, %s3670
    %s3672 = sshrl.u32 %s5, 1
    %s3673 = sor.u32 %s5, %s3672
    %s3674 = sand.u32 %s3673, 85
    %s3675 = sshrl.u32 %s3674, 1
    %s3676 = sor.u32 %s3674, %s3675
    %s3677 = sand.u32 51, %s3676
    %s3678 = sshrl.u32 %s3677, 2
    %s3679 = sor.u32 %s3677, %s3678
    %s3680 = sand.u32 15, %s3679
    %v3681 = vld [vmem:[%s3671] sm:%s3680]
    %v3682 = vunpack.c.l.bf16 %v3681
    %v3683 = vunpack.c.h.bf16 %v3681
    %s3684 = scalar_lea.vmem [#allocation1], 208
    %3685 = vst [vmem:[%s3684] sm:%s5] %v3682
    %s3686 = smul.addr 4, 25
    %s3687 = scalar_lea.vmem %s0, %s3686
    %s3688 = sshrl.u32 %s5, 1
    %s3689 = sor.u32 %s5, %s3688
    %s3690 = sand.u32 %s3689, 85
    %s3691 = sshrl.u32 %s3690, 1
    %s3692 = sor.u32 %s3690, %s3691
    %s3693 = sand.u32 51, %s3692
    %s3694 = sshrl.u32 %s3693, 2
    %s3695 = sor.u32 %s3693, %s3694
    %s3696 = sand.u32 15, %s3695
    %v3697 = vld [vmem:[%s3687] sm:%s3696]
    %v3698 = vunpack.c.l.bf16 %v3697
    %v3699 = vunpack.c.h.bf16 %v3697
    %s3700 = scalar_lea.vmem [#allocation1], 200
    %3701 = vst [vmem:[%s3700] sm:%s5] %v3698
    %s3702 = smul.addr 4, 24
    %s3703 = scalar_lea.vmem %s0, %s3702
    %s3704 = sshrl.u32 %s5, 1
    %s3705 = sor.u32 %s5, %s3704
    %s3706 = sand.u32 %s3705, 85
    %s3707 = sshrl.u32 %s3706, 1
    %s3708 = sor.u32 %s3706, %s3707
    %s3709 = sand.u32 51, %s3708
    %s3710 = sshrl.u32 %s3709, 2
    %s3711 = sor.u32 %s3709, %s3710
    %s3712 = sand.u32 15, %s3711
    %v3713 = vld [vmem:[%s3703] sm:%s3712]
    %v3714 = vunpack.c.l.bf16 %v3713
    %v3715 = vunpack.c.h.bf16 %v3713
    %s3716 = scalar_lea.vmem [#allocation1], 192
    %3717 = vst [vmem:[%s3716] sm:%s5] %v3714
    %s3718 = smul.addr 4, 23
    %s3719 = scalar_lea.vmem %s0, %s3718
    %s3720 = sshrl.u32 %s5, 1
    %s3721 = sor.u32 %s5, %s3720
    %s3722 = sand.u32 %s3721, 85
    %s3723 = sshrl.u32 %s3722, 1
    %s3724 = sor.u32 %s3722, %s3723
    %s3725 = sand.u32 51, %s3724
    %s3726 = sshrl.u32 %s3725, 2
    %s3727 = sor.u32 %s3725, %s3726
    %s3728 = sand.u32 15, %s3727
    %v3729 = vld [vmem:[%s3719] sm:%s3728]
    %v3730 = vunpack.c.l.bf16 %v3729
    %v3731 = vunpack.c.h.bf16 %v3729
    %s3732 = scalar_lea.vmem [#allocation1], 184
    %3733 = vst [vmem:[%s3732] sm:%s5] %v3730
    %s3734 = smul.addr 4, 22
    %s3735 = scalar_lea.vmem %s0, %s3734
    %s3736 = sshrl.u32 %s5, 1
    %s3737 = sor.u32 %s5, %s3736
    %s3738 = sand.u32 %s3737, 85
    %s3739 = sshrl.u32 %s3738, 1
    %s3740 = sor.u32 %s3738, %s3739
    %s3741 = sand.u32 51, %s3740
    %s3742 = sshrl.u32 %s3741, 2
    %s3743 = sor.u32 %s3741, %s3742
    %s3744 = sand.u32 15, %s3743
    %v3745 = vld [vmem:[%s3735] sm:%s3744]
    %v3746 = vunpack.c.l.bf16 %v3745
    %v3747 = vunpack.c.h.bf16 %v3745
    %s3748 = scalar_lea.vmem [#allocation1], 176
    %3749 = vst [vmem:[%s3748] sm:%s5] %v3746
    %s3750 = smul.addr 4, 21
    %s3751 = scalar_lea.vmem %s0, %s3750
    %s3752 = sshrl.u32 %s5, 1
    %s3753 = sor.u32 %s5, %s3752
    %s3754 = sand.u32 %s3753, 85
    %s3755 = sshrl.u32 %s3754, 1
    %s3756 = sor.u32 %s3754, %s3755
    %s3757 = sand.u32 51, %s3756
    %s3758 = sshrl.u32 %s3757, 2
    %s3759 = sor.u32 %s3757, %s3758
    %s3760 = sand.u32 15, %s3759
    %v3761 = vld [vmem:[%s3751] sm:%s3760]
    %v3762 = vunpack.c.l.bf16 %v3761
    %v3763 = vunpack.c.h.bf16 %v3761
    %s3764 = scalar_lea.vmem [#allocation1], 168
    %3765 = vst [vmem:[%s3764] sm:%s5] %v3762
    %s3766 = smul.addr 4, 20
    %s3767 = scalar_lea.vmem %s0, %s3766
    %s3768 = sshrl.u32 %s5, 1
    %s3769 = sor.u32 %s5, %s3768
    %s3770 = sand.u32 %s3769, 85
    %s3771 = sshrl.u32 %s3770, 1
    %s3772 = sor.u32 %s3770, %s3771
    %s3773 = sand.u32 51, %s3772
    %s3774 = sshrl.u32 %s3773, 2
    %s3775 = sor.u32 %s3773, %s3774
    %s3776 = sand.u32 15, %s3775
    %v3777 = vld [vmem:[%s3767] sm:%s3776]
    %v3778 = vunpack.c.l.bf16 %v3777
    %v3779 = vunpack.c.h.bf16 %v3777
    %s3780 = scalar_lea.vmem [#allocation1], 160
    %3781 = vst [vmem:[%s3780] sm:%s5] %v3778
    %s3782 = smul.addr 4, 19
    %s3783 = scalar_lea.vmem %s0, %s3782
    %s3784 = sshrl.u32 %s5, 1
    %s3785 = sor.u32 %s5, %s3784
    %s3786 = sand.u32 %s3785, 85
    %s3787 = sshrl.u32 %s3786, 1
    %s3788 = sor.u32 %s3786, %s3787
    %s3789 = sand.u32 51, %s3788
    %s3790 = sshrl.u32 %s3789, 2
    %s3791 = sor.u32 %s3789, %s3790
    %s3792 = sand.u32 15, %s3791
    %v3793 = vld [vmem:[%s3783] sm:%s3792]
    %v3794 = vunpack.c.l.bf16 %v3793
    %v3795 = vunpack.c.h.bf16 %v3793
    %s3796 = scalar_lea.vmem [#allocation1], 152
    %3797 = vst [vmem:[%s3796] sm:%s5] %v3794
    %s3798 = smul.addr 4, 18
    %s3799 = scalar_lea.vmem %s0, %s3798
    %s3800 = sshrl.u32 %s5, 1
    %s3801 = sor.u32 %s5, %s3800
    %s3802 = sand.u32 %s3801, 85
    %s3803 = sshrl.u32 %s3802, 1
    %s3804 = sor.u32 %s3802, %s3803
    %s3805 = sand.u32 51, %s3804
    %s3806 = sshrl.u32 %s3805, 2
    %s3807 = sor.u32 %s3805, %s3806
    %s3808 = sand.u32 15, %s3807
    %v3809 = vld [vmem:[%s3799] sm:%s3808]
    %v3810 = vunpack.c.l.bf16 %v3809
    %v3811 = vunpack.c.h.bf16 %v3809
    %s3812 = scalar_lea.vmem [#allocation1], 144
    %3813 = vst [vmem:[%s3812] sm:%s5] %v3810
    %s3814 = smul.addr 4, 17
    %s3815 = scalar_lea.vmem %s0, %s3814
    %s3816 = sshrl.u32 %s5, 1
    %s3817 = sor.u32 %s5, %s3816
    %s3818 = sand.u32 %s3817, 85
    %s3819 = sshrl.u32 %s3818, 1
    %s3820 = sor.u32 %s3818, %s3819
    %s3821 = sand.u32 51, %s3820
    %s3822 = sshrl.u32 %s3821, 2
    %s3823 = sor.u32 %s3821, %s3822
    %s3824 = sand.u32 15, %s3823
    %v3825 = vld [vmem:[%s3815] sm:%s3824]
    %v3826 = vunpack.c.l.bf16 %v3825
    %v3827 = vunpack.c.h.bf16 %v3825
    %s3828 = scalar_lea.vmem [#allocation1], 136
    %3829 = vst [vmem:[%s3828] sm:%s5] %v3826
    %s3830 = smul.addr 4, 16
    %s3831 = scalar_lea.vmem %s0, %s3830
    %s3832 = sshrl.u32 %s5, 1
    %s3833 = sor.u32 %s5, %s3832
    %s3834 = sand.u32 %s3833, 85
    %s3835 = sshrl.u32 %s3834, 1
    %s3836 = sor.u32 %s3834, %s3835
    %s3837 = sand.u32 51, %s3836
    %s3838 = sshrl.u32 %s3837, 2
    %s3839 = sor.u32 %s3837, %s3838
    %s3840 = sand.u32 15, %s3839
    %v3841 = vld [vmem:[%s3831] sm:%s3840]
    %v3842 = vunpack.c.l.bf16 %v3841
    %v3843 = vunpack.c.h.bf16 %v3841
    %s3844 = scalar_lea.vmem [#allocation1], 128
    %3845 = vst [vmem:[%s3844] sm:%s5] %v3842
    %s3846 = smul.addr 4, 15
    %s3847 = scalar_lea.vmem %s0, %s3846
    %s3848 = sshrl.u32 %s5, 1
    %s3849 = sor.u32 %s5, %s3848
    %s3850 = sand.u32 %s3849, 85
    %s3851 = sshrl.u32 %s3850, 1
    %s3852 = sor.u32 %s3850, %s3851
    %s3853 = sand.u32 51, %s3852
    %s3854 = sshrl.u32 %s3853, 2
    %s3855 = sor.u32 %s3853, %s3854
    %s3856 = sand.u32 15, %s3855
    %v3857 = vld [vmem:[%s3847] sm:%s3856]
    %v3858 = vunpack.c.l.bf16 %v3857
    %v3859 = vunpack.c.h.bf16 %v3857
    %s3860 = scalar_lea.vmem [#allocation1], 120
    %3861 = vst [vmem:[%s3860] sm:%s5] %v3858
    %s3862 = smul.addr 4, 14
    %s3863 = scalar_lea.vmem %s0, %s3862
    %s3864 = sshrl.u32 %s5, 1
    %s3865 = sor.u32 %s5, %s3864
    %s3866 = sand.u32 %s3865, 85
    %s3867 = sshrl.u32 %s3866, 1
    %s3868 = sor.u32 %s3866, %s3867
    %s3869 = sand.u32 51, %s3868
    %s3870 = sshrl.u32 %s3869, 2
    %s3871 = sor.u32 %s3869, %s3870
    %s3872 = sand.u32 15, %s3871
    %v3873 = vld [vmem:[%s3863] sm:%s3872]
    %v3874 = vunpack.c.l.bf16 %v3873
    %v3875 = vunpack.c.h.bf16 %v3873
    %s3876 = scalar_lea.vmem [#allocation1], 112
    %3877 = vst [vmem:[%s3876] sm:%s5] %v3874
    %s3878 = smul.addr 4, 13
    %s3879 = scalar_lea.vmem %s0, %s3878
    %s3880 = sshrl.u32 %s5, 1
    %s3881 = sor.u32 %s5, %s3880
    %s3882 = sand.u32 %s3881, 85
    %s3883 = sshrl.u32 %s3882, 1
    %s3884 = sor.u32 %s3882, %s3883
    %s3885 = sand.u32 51, %s3884
    %s3886 = sshrl.u32 %s3885, 2
    %s3887 = sor.u32 %s3885, %s3886
    %s3888 = sand.u32 15, %s3887
    %v3889 = vld [vmem:[%s3879] sm:%s3888]
    %v3890 = vunpack.c.l.bf16 %v3889
    %v3891 = vunpack.c.h.bf16 %v3889
    %s3892 = scalar_lea.vmem [#allocation1], 104
    %3893 = vst [vmem:[%s3892] sm:%s5] %v3890
    %s3894 = smul.addr 4, 12
    %s3895 = scalar_lea.vmem %s0, %s3894
    %s3896 = sshrl.u32 %s5, 1
    %s3897 = sor.u32 %s5, %s3896
    %s3898 = sand.u32 %s3897, 85
    %s3899 = sshrl.u32 %s3898, 1
    %s3900 = sor.u32 %s3898, %s3899
    %s3901 = sand.u32 51, %s3900
    %s3902 = sshrl.u32 %s3901, 2
    %s3903 = sor.u32 %s3901, %s3902
    %s3904 = sand.u32 15, %s3903
    %v3905 = vld [vmem:[%s3895] sm:%s3904]
    %v3906 = vunpack.c.l.bf16 %v3905
    %v3907 = vunpack.c.h.bf16 %v3905
    %s3908 = scalar_lea.vmem [#allocation1], 96
    %3909 = vst [vmem:[%s3908] sm:%s5] %v3906
    %s3910 = smul.addr 4, 11
    %s3911 = scalar_lea.vmem %s0, %s3910
    %s3912 = sshrl.u32 %s5, 1
    %s3913 = sor.u32 %s5, %s3912
    %s3914 = sand.u32 %s3913, 85
    %s3915 = sshrl.u32 %s3914, 1
    %s3916 = sor.u32 %s3914, %s3915
    %s3917 = sand.u32 51, %s3916
    %s3918 = sshrl.u32 %s3917, 2
    %s3919 = sor.u32 %s3917, %s3918
    %s3920 = sand.u32 15, %s3919
    %v3921 = vld [vmem:[%s3911] sm:%s3920]
    %v3922 = vunpack.c.l.bf16 %v3921
    %v3923 = vunpack.c.h.bf16 %v3921
    %s3924 = scalar_lea.vmem [#allocation1], 88
    %3925 = vst [vmem:[%s3924] sm:%s5] %v3922
    %s3926 = smul.addr 4, 10
    %s3927 = scalar_lea.vmem %s0, %s3926
    %s3928 = sshrl.u32 %s5, 1
    %s3929 = sor.u32 %s5, %s3928
    %s3930 = sand.u32 %s3929, 85
    %s3931 = sshrl.u32 %s3930, 1
    %s3932 = sor.u32 %s3930, %s3931
    %s3933 = sand.u32 51, %s3932
    %s3934 = sshrl.u32 %s3933, 2
    %s3935 = sor.u32 %s3933, %s3934
    %s3936 = sand.u32 15, %s3935
    %v3937 = vld [vmem:[%s3927] sm:%s3936]
    %v3938 = vunpack.c.l.bf16 %v3937
    %v3939 = vunpack.c.h.bf16 %v3937
    %s3940 = scalar_lea.vmem [#allocation1], 80
    %3941 = vst [vmem:[%s3940] sm:%s5] %v3938
    %s3942 = smul.addr 4, 9
    %s3943 = scalar_lea.vmem %s0, %s3942
    %s3944 = sshrl.u32 %s5, 1
    %s3945 = sor.u32 %s5, %s3944
    %s3946 = sand.u32 %s3945, 85
    %s3947 = sshrl.u32 %s3946, 1
    %s3948 = sor.u32 %s3946, %s3947
    %s3949 = sand.u32 51, %s3948
    %s3950 = sshrl.u32 %s3949, 2
    %s3951 = sor.u32 %s3949, %s3950
    %s3952 = sand.u32 15, %s3951
    %v3953 = vld [vmem:[%s3943] sm:%s3952]
    %v3954 = vunpack.c.l.bf16 %v3953
    %v3955 = vunpack.c.h.bf16 %v3953
    %s3956 = scalar_lea.vmem [#allocation1], 72
    %3957 = vst [vmem:[%s3956] sm:%s5] %v3954
    %s3958 = smul.addr 4, 8
    %s3959 = scalar_lea.vmem %s0, %s3958
    %s3960 = sshrl.u32 %s5, 1
    %s3961 = sor.u32 %s5, %s3960
    %s3962 = sand.u32 %s3961, 85
    %s3963 = sshrl.u32 %s3962, 1
    %s3964 = sor.u32 %s3962, %s3963
    %s3965 = sand.u32 51, %s3964
    %s3966 = sshrl.u32 %s3965, 2
    %s3967 = sor.u32 %s3965, %s3966
    %s3968 = sand.u32 15, %s3967
    %v3969 = vld [vmem:[%s3959] sm:%s3968]
    %v3970 = vunpack.c.l.bf16 %v3969
    %v3971 = vunpack.c.h.bf16 %v3969
    %s3972 = scalar_lea.vmem [#allocation1], 64
    %3973 = vst [vmem:[%s3972] sm:%s5] %v3970
    %s3974 = smul.addr 4, 7
    %s3975 = scalar_lea.vmem %s0, %s3974
    %s3976 = sshrl.u32 %s5, 1
    %s3977 = sor.u32 %s5, %s3976
    %s3978 = sand.u32 %s3977, 85
    %s3979 = sshrl.u32 %s3978, 1
    %s3980 = sor.u32 %s3978, %s3979
    %s3981 = sand.u32 51, %s3980
    %s3982 = sshrl.u32 %s3981, 2
    %s3983 = sor.u32 %s3981, %s3982
    %s3984 = sand.u32 15, %s3983
    %v3985 = vld [vmem:[%s3975] sm:%s3984]
    %v3986 = vunpack.c.l.bf16 %v3985
    %v3987 = vunpack.c.h.bf16 %v3985
    %s3988 = scalar_lea.vmem [#allocation1], 56
    %3989 = vst [vmem:[%s3988] sm:%s5] %v3986
    %s3990 = smul.addr 4, 6
    %s3991 = scalar_lea.vmem %s0, %s3990
    %s3992 = sshrl.u32 %s5, 1
    %s3993 = sor.u32 %s5, %s3992
    %s3994 = sand.u32 %s3993, 85
    %s3995 = sshrl.u32 %s3994, 1
    %s3996 = sor.u32 %s3994, %s3995
    %s3997 = sand.u32 51, %s3996
    %s3998 = sshrl.u32 %s3997, 2
    %s3999 = sor.u32 %s3997, %s3998
    %s4000 = sand.u32 15, %s3999
    %v4001 = vld [vmem:[%s3991] sm:%s4000]
    %v4002 = vunpack.c.l.bf16 %v4001
    %v4003 = vunpack.c.h.bf16 %v4001
    %s4004 = scalar_lea.vmem [#allocation1], 48
    %4005 = vst [vmem:[%s4004] sm:%s5] %v4002
    %s4006 = smul.addr 4, 5
    %s4007 = scalar_lea.vmem %s0, %s4006
    %s4008 = sshrl.u32 %s5, 1
    %s4009 = sor.u32 %s5, %s4008
    %s4010 = sand.u32 %s4009, 85
    %s4011 = sshrl.u32 %s4010, 1
    %s4012 = sor.u32 %s4010, %s4011
    %s4013 = sand.u32 51, %s4012
    %s4014 = sshrl.u32 %s4013, 2
    %s4015 = sor.u32 %s4013, %s4014
    %s4016 = sand.u32 15, %s4015
    %v4017 = vld [vmem:[%s4007] sm:%s4016]
    %v4018 = vunpack.c.l.bf16 %v4017
    %v4019 = vunpack.c.h.bf16 %v4017
    %s4020 = scalar_lea.vmem [#allocation1], 40
    %4021 = vst [vmem:[%s4020] sm:%s5] %v4018
    %s4022 = smul.addr 4, 4
    %s4023 = scalar_lea.vmem %s0, %s4022
    %s4024 = sshrl.u32 %s5, 1
    %s4025 = sor.u32 %s5, %s4024
    %s4026 = sand.u32 %s4025, 85
    %s4027 = sshrl.u32 %s4026, 1
    %s4028 = sor.u32 %s4026, %s4027
    %s4029 = sand.u32 51, %s4028
    %s4030 = sshrl.u32 %s4029, 2
    %s4031 = sor.u32 %s4029, %s4030
    %s4032 = sand.u32 15, %s4031
    %v4033 = vld [vmem:[%s4023] sm:%s4032]
    %v4034 = vunpack.c.l.bf16 %v4033
    %v4035 = vunpack.c.h.bf16 %v4033
    %s4036 = scalar_lea.vmem [#allocation1], 32
    %4037 = vst [vmem:[%s4036] sm:%s5] %v4034
    %s4038 = smul.addr 4, 3
    %s4039 = scalar_lea.vmem %s0, %s4038
    %s4040 = sshrl.u32 %s5, 1
    %s4041 = sor.u32 %s5, %s4040
    %s4042 = sand.u32 %s4041, 85
    %s4043 = sshrl.u32 %s4042, 1
    %s4044 = sor.u32 %s4042, %s4043
    %s4045 = sand.u32 51, %s4044
    %s4046 = sshrl.u32 %s4045, 2
    %s4047 = sor.u32 %s4045, %s4046
    %s4048 = sand.u32 15, %s4047
    %v4049 = vld [vmem:[%s4039] sm:%s4048]
    %v4050 = vunpack.c.l.bf16 %v4049
    %v4051 = vunpack.c.h.bf16 %v4049
    %s4052 = scalar_lea.vmem [#allocation1], 24
    %4053 = vst [vmem:[%s4052] sm:%s5] %v4050
    %s4054 = smul.addr 4, 2
    %s4055 = scalar_lea.vmem %s0, %s4054
    %s4056 = sshrl.u32 %s5, 1
    %s4057 = sor.u32 %s5, %s4056
    %s4058 = sand.u32 %s4057, 85
    %s4059 = sshrl.u32 %s4058, 1
    %s4060 = sor.u32 %s4058, %s4059
    %s4061 = sand.u32 51, %s4060
    %s4062 = sshrl.u32 %s4061, 2
    %s4063 = sor.u32 %s4061, %s4062
    %s4064 = sand.u32 15, %s4063
    %v4065 = vld [vmem:[%s4055] sm:%s4064]
    %v4066 = vunpack.c.l.bf16 %v4065
    %v4067 = vunpack.c.h.bf16 %v4065
    %s4068 = scalar_lea.vmem [#allocation1], 16
    %4069 = vst [vmem:[%s4068] sm:%s5] %v4066
    %s4070 = scalar_lea.vmem %s0, 4
    %s4071 = sshrl.u32 %s5, 1
    %s4072 = sor.u32 %s5, %s4071
    %s4073 = sand.u32 %s4072, 85
    %s4074 = sshrl.u32 %s4073, 1
    %s4075 = sor.u32 %s4073, %s4074
    %s4076 = sand.u32 51, %s4075
    %s4077 = sshrl.u32 %s4076, 2
    %s4078 = sor.u32 %s4076, %s4077
    %s4079 = sand.u32 15, %s4078
    %v4080 = vld [vmem:[%s4070] sm:%s4079]
    %v4081 = vunpack.c.l.bf16 %v4080
    %v4082 = vunpack.c.h.bf16 %v4080
    %s4083 = scalar_lea.vmem [#allocation1], 8
    %4084 = vst [vmem:[%s4083] sm:%s5] %v4081
    %s4085 = sshrl.u32 %s5, 1
    %s4086 = sor.u32 %s5, %s4085
    %s4087 = sand.u32 %s4086, 85
    %s4088 = sshrl.u32 %s4087, 1
    %s4089 = sor.u32 %s4087, %s4088
    %s4090 = sand.u32 51, %s4089
    %s4091 = sshrl.u32 %s4090, 2
    %s4092 = sor.u32 %s4090, %s4091
    %s4093 = sand.u32 15, %s4092
    %v4094 = vld [vmem:[%s0] sm:%s4093]
    %v4095 = vunpack.c.l.bf16 %v4094
    %v4096 = vunpack.c.h.bf16 %v4094
    %4097 = vst [vmem:[#allocation1] sm:%s5] %v4095
    %s4098 = smov 3
    %v4099 = vld [vmem:[#allocation1] ss:$16 sm:%s4098]
    %s4100 = smov 12
    %v4101 = vld [vmem:[#allocation1] ss:$16 sm:%s4100]
    %vm4102 = vcmask 1043458
    %v4103 = vsel %vm4102, %v4101, %v4099
    %s4104 = smov 48
    %v4105 = vld [vmem:[#allocation1] ss:$16 sm:%s4104]
    %vm4106 = vcmask 1045508
    %v4107 = vsel %vm4106, %v4105, %v4103
    %s4108 = smov 192
    %v4109 = vld [vmem:[#allocation1] ss:$16 sm:%s4108]
    %vm4110 = vcmask 1047558
    %v4111 = vsel %vm4110, %v4109, %v4107
    %vm4112 = vcmask 64512
    %4113 = vst.msk [vmem:[#allocation0] sm:$0xff] %vm4112, %v4111
    %s4114 = scalar_lea.vmem [#allocation1], 128
    %s4115 = smov 3
    %v4116 = vld [vmem:[%s4114] ss:$16 sm:%s4115]
    %s4117 = scalar_lea.vmem [#allocation1], 128
    %s4118 = smov 12
    %v4119 = vld [vmem:[%s4117] ss:$16 sm:%s4118]
    %vm4120 = vcmask 1043458
    %v4121 = vsel %vm4120, %v4119, %v4116
    %s4122 = scalar_lea.vmem [#allocation1], 128
    %s4123 = smov 48
    %v4124 = vld [vmem:[%s4122] ss:$16 sm:%s4123]
    %vm4125 = vcmask 1045508
    %v4126 = vsel %vm4125, %v4124, %v4121
    %s4127 = scalar_lea.vmem [#allocation1], 128
    %s4128 = smov 192
    %v4129 = vld [vmem:[%s4127] ss:$16 sm:%s4128]
    %vm4130 = vcmask 1047558
    %v4131 = vsel %vm4130, %v4129, %v4126
    %vm4132 = vcmask 64512
    %s4133 = scalar_lea.vmem [#allocation0], 8
    %4134 = vst.msk [vmem:[%s4133] sm:$0xff] %vm4132, %v4131
    %s4135 = scalar_lea.vmem [#allocation1], 256
    %s4136 = smov 3
    %v4137 = vld [vmem:[%s4135] ss:$16 sm:%s4136]
    %s4138 = scalar_lea.vmem [#allocation1], 256
    %s4139 = smov 12
    %v4140 = vld [vmem:[%s4138] ss:$16 sm:%s4139]
    %vm4141 = vcmask 1043458
    %v4142 = vsel %vm4141, %v4140, %v4137
    %s4143 = scalar_lea.vmem [#allocation1], 256
    %s4144 = smov 48
    %v4145 = vld [vmem:[%s4143] ss:$16 sm:%s4144]
    %vm4146 = vcmask 1045508
    %v4147 = vsel %vm4146, %v4145, %v4142
    %s4148 = scalar_lea.vmem [#allocation1], 256
    %s4149 = smov 192
    %v4150 = vld [vmem:[%s4148] ss:$16 sm:%s4149]
    %vm4151 = vcmask 1047558
    %v4152 = vsel %vm4151, %v4150, %v4147
    %vm4153 = vcmask 64512
    %s4154 = scalar_lea.vmem [#allocation0], 16
    %4155 = vst.msk [vmem:[%s4154] sm:$0xff] %vm4153, %v4152
    %s4156 = scalar_lea.vmem [#allocation1], 384
    %s4157 = smov 3
    %v4158 = vld [vmem:[%s4156] ss:$16 sm:%s4157]
    %s4159 = scalar_lea.vmem [#allocation1], 384
    %s4160 = smov 12
    %v4161 = vld [vmem:[%s4159] ss:$16 sm:%s4160]
    %vm4162 = vcmask 1043458
    %v4163 = vsel %vm4162, %v4161, %v4158
    %s4164 = scalar_lea.vmem [#allocation1], 384
    %s4165 = smov 48
    %v4166 = vld [vmem:[%s4164] ss:$16 sm:%s4165]
    %vm4167 = vcmask 1045508
    %v4168 = vsel %vm4167, %v4166, %v4163
    %s4169 = scalar_lea.vmem [#allocation1], 384
    %s4170 = smov 192
    %v4171 = vld [vmem:[%s4169] ss:$16 sm:%s4170]
    %vm4172 = vcmask 1047558
    %v4173 = vsel %vm4172, %v4171, %v4168
    %vm4174 = vcmask 64512
    %s4175 = scalar_lea.vmem [#allocation0], 24
    %4176 = vst.msk [vmem:[%s4175] sm:$0xff] %vm4174, %v4173
    %s4177 = scalar_lea.vmem [#allocation1], 512
    %s4178 = smov 3
    %v4179 = vld [vmem:[%s4177] ss:$16 sm:%s4178]
    %s4180 = scalar_lea.vmem [#allocation1], 512
    %s4181 = smov 12
    %v4182 = vld [vmem:[%s4180] ss:$16 sm:%s4181]
    %vm4183 = vcmask 1043458
    %v4184 = vsel %vm4183, %v4182, %v4179
    %s4185 = scalar_lea.vmem [#allocation1], 512
    %s4186 = smov 48
    %v4187 = vld [vmem:[%s4185] ss:$16 sm:%s4186]
    %vm4188 = vcmask 1045508
    %v4189 = vsel %vm4188, %v4187, %v4184
    %s4190 = scalar_lea.vmem [#allocation1], 512
    %s4191 = smov 192
    %v4192 = vld [vmem:[%s4190] ss:$16 sm:%s4191]
    %vm4193 = vcmask 1047558
    %v4194 = vsel %vm4193, %v4192, %v4189
    %vm4195 = vcmask 64512
    %s4196 = scalar_lea.vmem [#allocation0], 32
    %4197 = vst.msk [vmem:[%s4196] sm:$0xff] %vm4195, %v4194
    %s4198 = scalar_lea.vmem [#allocation1], 640
    %s4199 = smov 3
    %v4200 = vld [vmem:[%s4198] ss:$16 sm:%s4199]
    %s4201 = scalar_lea.vmem [#allocation1], 640
    %s4202 = smov 12
    %v4203 = vld [vmem:[%s4201] ss:$16 sm:%s4202]
    %vm4204 = vcmask 1043458
    %v4205 = vsel %vm4204, %v4203, %v4200
    %s4206 = scalar_lea.vmem [#allocation1], 640
    %s4207 = smov 48
    %v4208 = vld [vmem:[%s4206] ss:$16 sm:%s4207]
    %vm4209 = vcmask 1045508
    %v4210 = vsel %vm4209, %v4208, %v4205
    %s4211 = scalar_lea.vmem [#allocation1], 640
    %s4212 = smov 192
    %v4213 = vld [vmem:[%s4211] ss:$16 sm:%s4212]
    %vm4214 = vcmask 1047558
    %v4215 = vsel %vm4214, %v4213, %v4210
    %vm4216 = vcmask 64512
    %s4217 = scalar_lea.vmem [#allocation0], 40
    %4218 = vst.msk [vmem:[%s4217] sm:$0xff] %vm4216, %v4215
    %s4219 = scalar_lea.vmem [#allocation1], 768
    %s4220 = smov 3
    %v4221 = vld [vmem:[%s4219] ss:$16 sm:%s4220]
    %s4222 = scalar_lea.vmem [#allocation1], 768
    %s4223 = smov 12
    %v4224 = vld [vmem:[%s4222] ss:$16 sm:%s4223]
    %vm4225 = vcmask 1043458
    %v4226 = vsel %vm4225, %v4224, %v4221
    %s4227 = scalar_lea.vmem [#allocation1], 768
    %s4228 = smov 48
    %v4229 = vld [vmem:[%s4227] ss:$16 sm:%s4228]
    %vm4230 = vcmask 1045508
    %v4231 = vsel %vm4230, %v4229, %v4226
    %s4232 = scalar_lea.vmem [#allocation1], 768
    %s4233 = smov 192
    %v4234 = vld [vmem:[%s4232] ss:$16 sm:%s4233]
    %vm4235 = vcmask 1047558
    %v4236 = vsel %vm4235, %v4234, %v4231
    %vm4237 = vcmask 64512
    %s4238 = scalar_lea.vmem [#allocation0], 48
    %4239 = vst.msk [vmem:[%s4238] sm:$0xff] %vm4237, %v4236
    %s4240 = scalar_lea.vmem [#allocation1], 896
    %s4241 = smov 3
    %v4242 = vld [vmem:[%s4240] ss:$16 sm:%s4241]
    %s4243 = scalar_lea.vmem [#allocation1], 896
    %s4244 = smov 12
    %v4245 = vld [vmem:[%s4243] ss:$16 sm:%s4244]
    %vm4246 = vcmask 1043458
    %v4247 = vsel %vm4246, %v4245, %v4242
    %s4248 = scalar_lea.vmem [#allocation1], 896
    %s4249 = smov 48
    %v4250 = vld [vmem:[%s4248] ss:$16 sm:%s4249]
    %vm4251 = vcmask 1045508
    %v4252 = vsel %vm4251, %v4250, %v4247
    %s4253 = scalar_lea.vmem [#allocation1], 896
    %s4254 = smov 192
    %v4255 = vld [vmem:[%s4253] ss:$16 sm:%s4254]
    %vm4256 = vcmask 1047558
    %v4257 = vsel %vm4256, %v4255, %v4252
    %vm4258 = vcmask 64512
    %s4259 = scalar_lea.vmem [#allocation0], 56
    %4260 = vst.msk [vmem:[%s4259] sm:$0xff] %vm4258, %v4257
    %s4261 = scalar_lea.vmem [#allocation1], 1024
    %s4262 = smov 3
    %v4263 = vld [vmem:[%s4261] ss:$16 sm:%s4262]
    %s4264 = scalar_lea.vmem [#allocation1], 1024
    %s4265 = smov 12
    %v4266 = vld [vmem:[%s4264] ss:$16 sm:%s4265]
    %vm4267 = vcmask 1043458
    %v4268 = vsel %vm4267, %v4266, %v4263
    %s4269 = scalar_lea.vmem [#allocation1], 1024
    %s4270 = smov 48
    %v4271 = vld [vmem:[%s4269] ss:$16 sm:%s4270]
    %vm4272 = vcmask 1045508
    %v4273 = vsel %vm4272, %v4271, %v4268
    %s4274 = scalar_lea.vmem [#allocation1], 1024
    %s4275 = smov 192
    %v4276 = vld [vmem:[%s4274] ss:$16 sm:%s4275]
    %vm4277 = vcmask 1047558
    %v4278 = vsel %vm4277, %v4276, %v4273
    %vm4279 = vcmask 64512
    %s4280 = scalar_lea.vmem [#allocation0], 64
    %4281 = vst.msk [vmem:[%s4280] sm:$0xff] %vm4279, %v4278
    %s4282 = scalar_lea.vmem [#allocation1], 1152
    %s4283 = smov 3
    %v4284 = vld [vmem:[%s4282] ss:$16 sm:%s4283]
    %s4285 = scalar_lea.vmem [#allocation1], 1152
    %s4286 = smov 12
    %v4287 = vld [vmem:[%s4285] ss:$16 sm:%s4286]
    %vm4288 = vcmask 1043458
    %v4289 = vsel %vm4288, %v4287, %v4284
    %s4290 = scalar_lea.vmem [#allocation1], 1152
    %s4291 = smov 48
    %v4292 = vld [vmem:[%s4290] ss:$16 sm:%s4291]
    %vm4293 = vcmask 1045508
    %v4294 = vsel %vm4293, %v4292, %v4289
    %s4295 = scalar_lea.vmem [#allocation1], 1152
    %s4296 = smov 192
    %v4297 = vld [vmem:[%s4295] ss:$16 sm:%s4296]
    %vm4298 = vcmask 1047558
    %v4299 = vsel %vm4298, %v4297, %v4294
    %vm4300 = vcmask 64512
    %s4301 = scalar_lea.vmem [#allocation0], 72
    %4302 = vst.msk [vmem:[%s4301] sm:$0xff] %vm4300, %v4299
    %s4303 = scalar_lea.vmem [#allocation1], 1280
    %s4304 = smov 3
    %v4305 = vld [vmem:[%s4303] ss:$16 sm:%s4304]
    %s4306 = scalar_lea.vmem [#allocation1], 1280
    %s4307 = smov 12
    %v4308 = vld [vmem:[%s4306] ss:$16 sm:%s4307]
    %vm4309 = vcmask 1043458
    %v4310 = vsel %vm4309, %v4308, %v4305
    %s4311 = scalar_lea.vmem [#allocation1], 1280
    %s4312 = smov 48
    %v4313 = vld [vmem:[%s4311] ss:$16 sm:%s4312]
    %vm4314 = vcmask 1045508
    %v4315 = vsel %vm4314, %v4313, %v4310
    %s4316 = scalar_lea.vmem [#allocation1], 1280
    %s4317 = smov 192
    %v4318 = vld [vmem:[%s4316] ss:$16 sm:%s4317]
    %vm4319 = vcmask 1047558
    %v4320 = vsel %vm4319, %v4318, %v4315
    %vm4321 = vcmask 64512
    %s4322 = scalar_lea.vmem [#allocation0], 80
    %4323 = vst.msk [vmem:[%s4322] sm:$0xff] %vm4321, %v4320
    %s4324 = scalar_lea.vmem [#allocation1], 1408
    %s4325 = smov 3
    %v4326 = vld [vmem:[%s4324] ss:$16 sm:%s4325]
    %s4327 = scalar_lea.vmem [#allocation1], 1408
    %s4328 = smov 12
    %v4329 = vld [vmem:[%s4327] ss:$16 sm:%s4328]
    %vm4330 = vcmask 1043458
    %v4331 = vsel %vm4330, %v4329, %v4326
    %s4332 = scalar_lea.vmem [#allocation1], 1408
    %s4333 = smov 48
    %v4334 = vld [vmem:[%s4332] ss:$16 sm:%s4333]
    %vm4335 = vcmask 1045508
    %v4336 = vsel %vm4335, %v4334, %v4331
    %s4337 = scalar_lea.vmem [#allocation1], 1408
    %s4338 = smov 192
    %v4339 = vld [vmem:[%s4337] ss:$16 sm:%s4338]
    %vm4340 = vcmask 1047558
    %v4341 = vsel %vm4340, %v4339, %v4336
    %vm4342 = vcmask 64512
    %s4343 = scalar_lea.vmem [#allocation0], 88
    %4344 = vst.msk [vmem:[%s4343] sm:$0xff] %vm4342, %v4341
    %s4345 = scalar_lea.vmem [#allocation1], 1536
    %s4346 = smov 3
    %v4347 = vld [vmem:[%s4345] ss:$16 sm:%s4346]
    %s4348 = scalar_lea.vmem [#allocation1], 1536
    %s4349 = smov 12
    %v4350 = vld [vmem:[%s4348] ss:$16 sm:%s4349]
    %vm4351 = vcmask 1043458
    %v4352 = vsel %vm4351, %v4350, %v4347
    %s4353 = scalar_lea.vmem [#allocation1], 1536
    %s4354 = smov 48
    %v4355 = vld [vmem:[%s4353] ss:$16 sm:%s4354]
    %vm4356 = vcmask 1045508
    %v4357 = vsel %vm4356, %v4355, %v4352
    %s4358 = scalar_lea.vmem [#allocation1], 1536
    %s4359 = smov 192
    %v4360 = vld [vmem:[%s4358] ss:$16 sm:%s4359]
    %vm4361 = vcmask 1047558
    %v4362 = vsel %vm4361, %v4360, %v4357
    %vm4363 = vcmask 64512
    %s4364 = scalar_lea.vmem [#allocation0], 96
    %4365 = vst.msk [vmem:[%s4364] sm:$0xff] %vm4363, %v4362
    %s4366 = scalar_lea.vmem [#allocation1], 1664
    %s4367 = smov 3
    %v4368 = vld [vmem:[%s4366] ss:$16 sm:%s4367]
    %s4369 = scalar_lea.vmem [#allocation1], 1664
    %s4370 = smov 12
    %v4371 = vld [vmem:[%s4369] ss:$16 sm:%s4370]
    %vm4372 = vcmask 1043458
    %v4373 = vsel %vm4372, %v4371, %v4368
    %s4374 = scalar_lea.vmem [#allocation1], 1664
    %s4375 = smov 48
    %v4376 = vld [vmem:[%s4374] ss:$16 sm:%s4375]
    %vm4377 = vcmask 1045508
    %v4378 = vsel %vm4377, %v4376, %v4373
    %s4379 = scalar_lea.vmem [#allocation1], 1664
    %s4380 = smov 192
    %v4381 = vld [vmem:[%s4379] ss:$16 sm:%s4380]
    %vm4382 = vcmask 1047558
    %v4383 = vsel %vm4382, %v4381, %v4378
    %vm4384 = vcmask 64512
    %s4385 = scalar_lea.vmem [#allocation0], 104
    %4386 = vst.msk [vmem:[%s4385] sm:$0xff] %vm4384, %v4383
    %s4387 = scalar_lea.vmem [#allocation1], 1792
    %s4388 = smov 3
    %v4389 = vld [vmem:[%s4387] ss:$16 sm:%s4388]
    %s4390 = scalar_lea.vmem [#allocation1], 1792
    %s4391 = smov 12
    %v4392 = vld [vmem:[%s4390] ss:$16 sm:%s4391]
    %vm4393 = vcmask 1043458
    %v4394 = vsel %vm4393, %v4392, %v4389
    %s4395 = scalar_lea.vmem [#allocation1], 1792
    %s4396 = smov 48
    %v4397 = vld [vmem:[%s4395] ss:$16 sm:%s4396]
    %vm4398 = vcmask 1045508
    %v4399 = vsel %vm4398, %v4397, %v4394
    %s4400 = scalar_lea.vmem [#allocation1], 1792
    %s4401 = smov 192
    %v4402 = vld [vmem:[%s4400] ss:$16 sm:%s4401]
    %vm4403 = vcmask 1047558
    %v4404 = vsel %vm4403, %v4402, %v4399
    %vm4405 = vcmask 64512
    %s4406 = scalar_lea.vmem [#allocation0], 112
    %4407 = vst.msk [vmem:[%s4406] sm:$0xff] %vm4405, %v4404
    %s4408 = scalar_lea.vmem [#allocation1], 1920
    %s4409 = smov 3
    %v4410 = vld [vmem:[%s4408] ss:$16 sm:%s4409]
    %s4411 = scalar_lea.vmem [#allocation1], 1920
    %s4412 = smov 12
    %v4413 = vld [vmem:[%s4411] ss:$16 sm:%s4412]
    %vm4414 = vcmask 1043458
    %v4415 = vsel %vm4414, %v4413, %v4410
    %s4416 = scalar_lea.vmem [#allocation1], 1920
    %s4417 = smov 48
    %v4418 = vld [vmem:[%s4416] ss:$16 sm:%s4417]
    %vm4419 = vcmask 1045508
    %v4420 = vsel %vm4419, %v4418, %v4415
    %s4421 = scalar_lea.vmem [#allocation1], 1920
    %s4422 = smov 192
    %v4423 = vld [vmem:[%s4421] ss:$16 sm:%s4422]
    %vm4424 = vcmask 1047558
    %v4425 = vsel %vm4424, %v4423, %v4420
    %vm4426 = vcmask 64512
    %s4427 = scalar_lea.vmem [#allocation0], 120
    %4428 = vst.msk [vmem:[%s4427] sm:$0xff] %vm4426, %v4425
    %s4429 = scalar_lea.vmem [#allocation1], 15
    %s4430 = smov 3
    %v4431 = vld [vmem:[%s4429] ss:$16 sm:%s4430]
    %s4432 = scalar_lea.vmem [#allocation1], 15
    %s4433 = smov 12
    %v4434 = vld [vmem:[%s4432] ss:$16 sm:%s4433]
    %vm4435 = vcmask 1043458
    %v4436 = vsel %vm4435, %v4434, %v4431
    %s4437 = scalar_lea.vmem [#allocation1], 15
    %s4438 = smov 48
    %v4439 = vld [vmem:[%s4437] ss:$16 sm:%s4438]
    %vm4440 = vcmask 1045508
    %v4441 = vsel %vm4440, %v4439, %v4436
    %s4442 = scalar_lea.vmem [#allocation1], 15
    %s4443 = smov 192
    %v4444 = vld [vmem:[%s4442] ss:$16 sm:%s4443]
    %vm4445 = vcmask 1047558
    %v4446 = vsel %vm4445, %v4444, %v4441
    %4447 = vrot.lane.b32.xlu0 %v4446, 120
    %v4448 = vpop.permute.xlu0 %4447
    %vm4449 = vcmask 1048512
    %4450 = vst.msk [vmem:[#allocation0] sm:$0xff] %vm4449, %v4448
    %s4451 = scalar_lea.vmem [#allocation1], 527
    %s4452 = smov 3
    %v4453 = vld [vmem:[%s4451] ss:$16 sm:%s4452]
    %s4454 = scalar_lea.vmem [#allocation1], 527
    %s4455 = smov 12
    %v4456 = vld [vmem:[%s4454] ss:$16 sm:%s4455]
    %vm4457 = vcmask 1043458
    %v4458 = vsel %vm4457, %v4456, %v4453
    %s4459 = scalar_lea.vmem [#allocation1], 527
    %s4460 = smov 48
    %v4461 = vld [vmem:[%s4459] ss:$16 sm:%s4460]
    %vm4462 = vcmask 1045508
    %v4463 = vsel %vm4462, %v4461, %v4458
    %s4464 = scalar_lea.vmem [#allocation1], 527
    %s4465 = smov 192
    %v4466 = vld [vmem:[%s4464] ss:$16 sm:%s4465]
    %vm4467 = vcmask 1047558
    %v4468 = vsel %vm4467, %v4466, %v4463
    %4469 = vrot.lane.b32.xlu0 %v4468, 120
    %v4470 = vpop.permute.xlu0 %4469
    %vm4471 = vcmask 1048512
    %s4472 = scalar_lea.vmem [#allocation0], 32
    %4473 = vst.msk [vmem:[%s4472] sm:$0xff] %vm4471, %v4470
    %s4474 = scalar_lea.vmem [#allocation1], 1039
    %s4475 = smov 3
    %v4476 = vld [vmem:[%s4474] ss:$16 sm:%s4475]
    %s4477 = scalar_lea.vmem [#allocation1], 1039
    %s4478 = smov 12
    %v4479 = vld [vmem:[%s4477] ss:$16 sm:%s4478]
    %vm4480 = vcmask 1043458
    %v4481 = vsel %vm4480, %v4479, %v4476
    %s4482 = scalar_lea.vmem [#allocation1], 1039
    %s4483 = smov 48
    %v4484 = vld [vmem:[%s4482] ss:$16 sm:%s4483]
    %vm4485 = vcmask 1045508
    %v4486 = vsel %vm4485, %v4484, %v4481
    %s4487 = scalar_lea.vmem [#allocation1], 1039
    %s4488 = smov 192
    %v4489 = vld [vmem:[%s4487] ss:$16 sm:%s4488]
    %vm4490 = vcmask 1047558
    %v4491 = vsel %vm4490, %v4489, %v4486
    %4492 = vrot.lane.b32.xlu0 %v4491, 120
    %v4493 = vpop.permute.xlu0 %4492
    %vm4494 = vcmask 1048512
    %s4495 = scalar_lea.vmem [#allocation0], 64
    %4496 = vst.msk [vmem:[%s4495] sm:$0xff] %vm4494, %v4493
    %s4497 = scalar_lea.vmem [#allocation1], 1551
    %s4498 = smov 3
    %v4499 = vld [vmem:[%s4497] ss:$16 sm:%s4498]
    %s4500 = scalar_lea.vmem [#allocation1], 1551
    %s4501 = smov 12
    %v4502 = vld [vmem:[%s4500] ss:$16 sm:%s4501]
    %vm4503 = vcmask 1043458
    %v4504 = vsel %vm4503, %v4502, %v4499
    %s4505 = scalar_lea.vmem [#allocation1], 1551
    %s4506 = smov 48
    %v4507 = vld [vmem:[%s4505] ss:$16 sm:%s4506]
    %vm4508 = vcmask 1045508
    %v4509 = vsel %vm4508, %v4507, %v4504
    %s4510 = scalar_lea.vmem [#allocation1], 1551
    %s4511 = smov 192
    %v4512 = vld [vmem:[%s4510] ss:$16 sm:%s4511]
    %vm4513 = vcmask 1047558
    %v4514 = vsel %vm4513, %v4512, %v4509
    %4515 = vrot.lane.b32.xlu0 %v4514, 120
    %v4516 = vpop.permute.xlu0 %4515
    %vm4517 = vcmask 1048512
    %s4518 = scalar_lea.vmem [#allocation0], 96
    %4519 = vst.msk [vmem:[%s4518] sm:$0xff] %vm4517, %v4516
    %s4520 = scalar_lea.vmem [#allocation1], 143
    %s4521 = smov 3
    %v4522 = vld [vmem:[%s4520] ss:$16 sm:%s4521]
    %s4523 = scalar_lea.vmem [#allocation1], 143
    %s4524 = smov 12
    %v4525 = vld [vmem:[%s4523] ss:$16 sm:%s4524]
    %vm4526 = vcmask 1043458
    %v4527 = vsel %vm4526, %v4525, %v4522
    %s4528 = scalar_lea.vmem [#allocation1], 143
    %s4529 = smov 48
    %v4530 = vld [vmem:[%s4528] ss:$16 sm:%s4529]
    %vm4531 = vcmask 1045508
    %v4532 = vsel %vm4531, %v4530, %v4527
    %s4533 = scalar_lea.vmem [#allocation1], 143
    %s4534 = smov 192
    %v4535 = vld [vmem:[%s4533] ss:$16 sm:%s4534]
    %vm4536 = vcmask 1047558
    %v4537 = vsel %vm4536, %v4535, %v4532
    %4538 = vrot.lane.b32.xlu0 %v4537, 120
    %v4539 = vpop.permute.xlu0 %4538
    %vm4540 = vcmask 1048512
    %s4541 = scalar_lea.vmem [#allocation0], 8
    %4542 = vst.msk [vmem:[%s4541] sm:$0xff] %vm4540, %v4539
    %s4543 = scalar_lea.vmem [#allocation1], 655
    %s4544 = smov 3
    %v4545 = vld [vmem:[%s4543] ss:$16 sm:%s4544]
    %s4546 = scalar_lea.vmem [#allocation1], 655
    %s4547 = smov 12
    %v4548 = vld [vmem:[%s4546] ss:$16 sm:%s4547]
    %vm4549 = vcmask 1043458
    %v4550 = vsel %vm4549, %v4548, %v4545
    %s4551 = scalar_lea.vmem [#allocation1], 655
    %s4552 = smov 48
    %v4553 = vld [vmem:[%s4551] ss:$16 sm:%s4552]
    %vm4554 = vcmask 1045508
    %v4555 = vsel %vm4554, %v4553, %v4550
    %s4556 = scalar_lea.vmem [#allocation1], 655
    %s4557 = smov 192
    %v4558 = vld [vmem:[%s4556] ss:$16 sm:%s4557]
    %vm4559 = vcmask 1047558
    %v4560 = vsel %vm4559, %v4558, %v4555
    %4561 = vrot.lane.b32.xlu0 %v4560, 120
    %v4562 = vpop.permute.xlu0 %4561
    %vm4563 = vcmask 1048512
    %s4564 = scalar_lea.vmem [#allocation0], 40
    %4565 = vst.msk [vmem:[%s4564] sm:$0xff] %vm4563, %v4562
    %s4566 = scalar_lea.vmem [#allocation1], 1167
    %s4567 = smov 3
    %v4568 = vld [vmem:[%s4566] ss:$16 sm:%s4567]
    %s4569 = scalar_lea.vmem [#allocation1], 1167
    %s4570 = smov 12
    %v4571 = vld [vmem:[%s4569] ss:$16 sm:%s4570]
    %vm4572 = vcmask 1043458
    %v4573 = vsel %vm4572, %v4571, %v4568
    %s4574 = scalar_lea.vmem [#allocation1], 1167
    %s4575 = smov 48
    %v4576 = vld [vmem:[%s4574] ss:$16 sm:%s4575]
    %vm4577 = vcmask 1045508
    %v4578 = vsel %vm4577, %v4576, %v4573
    %s4579 = scalar_lea.vmem [#allocation1], 1167
    %s4580 = smov 192
    %v4581 = vld [vmem:[%s4579] ss:$16 sm:%s4580]
    %vm4582 = vcmask 1047558
    %v4583 = vsel %vm4582, %v4581, %v4578
    %4584 = vrot.lane.b32.xlu0 %v4583, 120
    %v4585 = vpop.permute.xlu0 %4584
    %vm4586 = vcmask 1048512
    %s4587 = scalar_lea.vmem [#allocation0], 72
    %4588 = vst.msk [vmem:[%s4587] sm:$0xff] %vm4586, %v4585
    %s4589 = scalar_lea.vmem [#allocation1], 1679
    %s4590 = smov 3
    %v4591 = vld [vmem:[%s4589] ss:$16 sm:%s4590]
    %s4592 = scalar_lea.vmem [#allocation1], 1679
    %s4593 = smov 12
    %v4594 = vld [vmem:[%s4592] ss:$16 sm:%s4593]
    %vm4595 = vcmask 1043458
    %v4596 = vsel %vm4595, %v4594, %v4591
    %s4597 = scalar_lea.vmem [#allocation1], 1679
    %s4598 = smov 48
    %v4599 = vld [vmem:[%s4597] ss:$16 sm:%s4598]
    %vm4600 = vcmask 1045508
    %v4601 = vsel %vm4600, %v4599, %v4596
    %s4602 = scalar_lea.vmem [#allocation1], 1679
    %s4603 = smov 192
    %v4604 = vld [vmem:[%s4602] ss:$16 sm:%s4603]
    %vm4605 = vcmask 1047558
    %v4606 = vsel %vm4605, %v4604, %v4601
    %4607 = vrot.lane.b32.xlu0 %v4606, 120
    %v4608 = vpop.permute.xlu0 %4607
    %vm4609 = vcmask 1048512
    %s4610 = scalar_lea.vmem [#allocation0], 104
    %4611 = vst.msk [vmem:[%s4610] sm:$0xff] %vm4609, %v4608
    %s4612 = scalar_lea.vmem [#allocation1], 271
    %s4613 = smov 3
    %v4614 = vld [vmem:[%s4612] ss:$16 sm:%s4613]
    %s4615 = scalar_lea.vmem [#allocation1], 271
    %s4616 = smov 12
    %v4617 = vld [vmem:[%s4615] ss:$16 sm:%s4616]
    %vm4618 = vcmask 1043458
    %v4619 = vsel %vm4618, %v4617, %v4614
    %s4620 = scalar_lea.vmem [#allocation1], 271
    %s4621 = smov 48
    %v4622 = vld [vmem:[%s4620] ss:$16 sm:%s4621]
    %vm4623 = vcmask 1045508
    %v4624 = vsel %vm4623, %v4622, %v4619
    %s4625 = scalar_lea.vmem [#allocation1], 271
    %s4626 = smov 192
    %v4627 = vld [vmem:[%s4625] ss:$16 sm:%s4626]
    %vm4628 = vcmask 1047558
    %v4629 = vsel %vm4628, %v4627, %v4624
    %4630 = vrot.lane.b32.xlu0 %v4629, 120
    %v4631 = vpop.permute.xlu0 %4630
    %vm4632 = vcmask 1048512
    %s4633 = scalar_lea.vmem [#allocation0], 16
    %4634 = vst.msk [vmem:[%s4633] sm:$0xff] %vm4632, %v4631
    %s4635 = scalar_lea.vmem [#allocation1], 783
    %s4636 = smov 3
    %v4637 = vld [vmem:[%s4635] ss:$16 sm:%s4636]
    %s4638 = scalar_lea.vmem [#allocation1], 783
    %s4639 = smov 12
    %v4640 = vld [vmem:[%s4638] ss:$16 sm:%s4639]
    %vm4641 = vcmask 1043458
    %v4642 = vsel %vm4641, %v4640, %v4637
    %s4643 = scalar_lea.vmem [#allocation1], 783
    %s4644 = smov 48
    %v4645 = vld [vmem:[%s4643] ss:$16 sm:%s4644]
    %vm4646 = vcmask 1045508
    %v4647 = vsel %vm4646, %v4645, %v4642
    %s4648 = scalar_lea.vmem [#allocation1], 783
    %s4649 = smov 192
    %v4650 = vld [vmem:[%s4648] ss:$16 sm:%s4649]
    %vm4651 = vcmask 1047558
    %v4652 = vsel %vm4651, %v4650, %v4647
    %4653 = vrot.lane.b32.xlu0 %v4652, 120
    %v4654 = vpop.permute.xlu0 %4653
    %vm4655 = vcmask 1048512
    %s4656 = scalar_lea.vmem [#allocation0], 48
    %4657 = vst.msk [vmem:[%s4656] sm:$0xff] %vm4655, %v4654
    %s4658 = scalar_lea.vmem [#allocation1], 1295
    %s4659 = smov 3
    %v4660 = vld [vmem:[%s4658] ss:$16 sm:%s4659]
    %s4661 = scalar_lea.vmem [#allocation1], 1295
    %s4662 = smov 12
    %v4663 = vld [vmem:[%s4661] ss:$16 sm:%s4662]
    %vm4664 = vcmask 1043458
    %v4665 = vsel %vm4664, %v4663, %v4660
    %s4666 = scalar_lea.vmem [#allocation1], 1295
    %s4667 = smov 48
    %v4668 = vld [vmem:[%s4666] ss:$16 sm:%s4667]
    %vm4669 = vcmask 1045508
    %v4670 = vsel %vm4669, %v4668, %v4665
    %s4671 = scalar_lea.vmem [#allocation1], 1295
    %s4672 = smov 192
    %v4673 = vld [vmem:[%s4671] ss:$16 sm:%s4672]
    %vm4674 = vcmask 1047558
    %v4675 = vsel %vm4674, %v4673, %v4670
    %4676 = vrot.lane.b32.xlu0 %v4675, 120
    %v4677 = vpop.permute.xlu0 %4676
    %vm4678 = vcmask 1048512
    %s4679 = scalar_lea.vmem [#allocation0], 80
    %4680 = vst.msk [vmem:[%s4679] sm:$0xff] %vm4678, %v4677
    %s4681 = scalar_lea.vmem [#allocation1], 1807
    %s4682 = smov 3
    %v4683 = vld [vmem:[%s4681] ss:$16 sm:%s4682]
    %s4684 = scalar_lea.vmem [#allocation1], 1807
    %s4685 = smov 12
    %v4686 = vld [vmem:[%s4684] ss:$16 sm:%s4685]
    %vm4687 = vcmask 1043458
    %v4688 = vsel %vm4687, %v4686, %v4683
    %s4689 = scalar_lea.vmem [#allocation1], 1807
    %s4690 = smov 48
    %v4691 = vld [vmem:[%s4689] ss:$16 sm:%s4690]
    %vm4692 = vcmask 1045508
    %v4693 = vsel %vm4692, %v4691, %v4688
    %s4694 = scalar_lea.vmem [#allocation1], 1807
    %s4695 = smov 192
    %v4696 = vld [vmem:[%s4694] ss:$16 sm:%s4695]
    %vm4697 = vcmask 1047558
    %v4698 = vsel %vm4697, %v4696, %v4693
    %4699 = vrot.lane.b32.xlu0 %v4698, 120
    %v4700 = vpop.permute.xlu0 %4699
    %vm4701 = vcmask 1048512
    %s4702 = scalar_lea.vmem [#allocation0], 112
    %4703 = vst.msk [vmem:[%s4702] sm:$0xff] %vm4701, %v4700
    %s4704 = scalar_lea.vmem [#allocation1], 399
    %s4705 = smov 3
    %v4706 = vld [vmem:[%s4704] ss:$16 sm:%s4705]
    %s4707 = scalar_lea.vmem [#allocation1], 399
    %s4708 = smov 12
    %v4709 = vld [vmem:[%s4707] ss:$16 sm:%s4708]
    %vm4710 = vcmask 1043458
    %v4711 = vsel %vm4710, %v4709, %v4706
    %s4712 = scalar_lea.vmem [#allocation1], 399
    %s4713 = smov 48
    %v4714 = vld [vmem:[%s4712] ss:$16 sm:%s4713]
    %vm4715 = vcmask 1045508
    %v4716 = vsel %vm4715, %v4714, %v4711
    %s4717 = scalar_lea.vmem [#allocation1], 399
    %s4718 = smov 192
    %v4719 = vld [vmem:[%s4717] ss:$16 sm:%s4718]
    %vm4720 = vcmask 1047558
    %v4721 = vsel %vm4720, %v4719, %v4716
    %4722 = vrot.lane.b32.xlu0 %v4721, 120
    %v4723 = vpop.permute.xlu0 %4722
    %vm4724 = vcmask 1048512
    %s4725 = scalar_lea.vmem [#allocation0], 24
    %4726 = vst.msk [vmem:[%s4725] sm:$0xff] %vm4724, %v4723
    %s4727 = scalar_lea.vmem [#allocation1], 911
    %s4728 = smov 3
    %v4729 = vld [vmem:[%s4727] ss:$16 sm:%s4728]
    %s4730 = scalar_lea.vmem [#allocation1], 911
    %s4731 = smov 12
    %v4732 = vld [vmem:[%s4730] ss:$16 sm:%s4731]
    %vm4733 = vcmask 1043458
    %v4734 = vsel %vm4733, %v4732, %v4729
    %s4735 = scalar_lea.vmem [#allocation1], 911
    %s4736 = smov 48
    %v4737 = vld [vmem:[%s4735] ss:$16 sm:%s4736]
    %vm4738 = vcmask 1045508
    %v4739 = vsel %vm4738, %v4737, %v4734
    %s4740 = scalar_lea.vmem [#allocation1], 911
    %s4741 = smov 192
    %v4742 = vld [vmem:[%s4740] ss:$16 sm:%s4741]
    %vm4743 = vcmask 1047558
    %v4744 = vsel %vm4743, %v4742, %v4739
    %4745 = vrot.lane.b32.xlu0 %v4744, 120
    %v4746 = vpop.permute.xlu0 %4745
    %vm4747 = vcmask 1048512
    %s4748 = scalar_lea.vmem [#allocation0], 56
    %4749 = vst.msk [vmem:[%s4748] sm:$0xff] %vm4747, %v4746
    %s4750 = scalar_lea.vmem [#allocation1], 1423
    %s4751 = smov 3
    %v4752 = vld [vmem:[%s4750] ss:$16 sm:%s4751]
    %s4753 = scalar_lea.vmem [#allocation1], 1423
    %s4754 = smov 12
    %v4755 = vld [vmem:[%s4753] ss:$16 sm:%s4754]
    %vm4756 = vcmask 1043458
    %v4757 = vsel %vm4756, %v4755, %v4752
    %s4758 = scalar_lea.vmem [#allocation1], 1423
    %s4759 = smov 48
    %v4760 = vld [vmem:[%s4758] ss:$16 sm:%s4759]
    %vm4761 = vcmask 1045508
    %v4762 = vsel %vm4761, %v4760, %v4757
    %s4763 = scalar_lea.vmem [#allocation1], 1423
    %s4764 = smov 192
    %v4765 = vld [vmem:[%s4763] ss:$16 sm:%s4764]
    %vm4766 = vcmask 1047558
    %v4767 = vsel %vm4766, %v4765, %v4762
    %4768 = vrot.lane.b32.xlu0 %v4767, 120
    %v4769 = vpop.permute.xlu0 %4768
    %vm4770 = vcmask 1048512
    %s4771 = scalar_lea.vmem [#allocation0], 88
    %4772 = vst.msk [vmem:[%s4771] sm:$0xff] %vm4770, %v4769
    %s4773 = scalar_lea.vmem [#allocation1], 1935
    %s4774 = smov 3
    %v4775 = vld [vmem:[%s4773] ss:$16 sm:%s4774]
    %s4776 = scalar_lea.vmem [#allocation1], 1935
    %s4777 = smov 12
    %v4778 = vld [vmem:[%s4776] ss:$16 sm:%s4777]
    %vm4779 = vcmask 1043458
    %v4780 = vsel %vm4779, %v4778, %v4775
    %s4781 = scalar_lea.vmem [#allocation1], 1935
    %s4782 = smov 48
    %v4783 = vld [vmem:[%s4781] ss:$16 sm:%s4782]
    %vm4784 = vcmask 1045508
    %v4785 = vsel %vm4784, %v4783, %v4780
    %s4786 = scalar_lea.vmem [#allocation1], 1935
    %s4787 = smov 192
    %v4788 = vld [vmem:[%s4786] ss:$16 sm:%s4787]
    %vm4789 = vcmask 1047558
    %v4790 = vsel %vm4789, %v4788, %v4785
    %4791 = vrot.lane.b32.xlu0 %v4790, 120
    %v4792 = vpop.permute.xlu0 %4791
    %vm4793 = vcmask 1048512
    %s4794 = scalar_lea.vmem [#allocation0], 120
    %4795 = vst.msk [vmem:[%s4794] sm:$0xff] %vm4793, %v4792
    %s4796 = scalar_lea.vmem [#allocation1], 14
    %s4797 = smov 3
    %v4798 = vld [vmem:[%s4796] ss:$16 sm:%s4797]
    %s4799 = scalar_lea.vmem [#allocation1], 14
    %s4800 = smov 12
    %v4801 = vld [vmem:[%s4799] ss:$16 sm:%s4800]
    %vm4802 = vcmask 1043458
    %v4803 = vsel %vm4802, %v4801, %v4798
    %s4804 = scalar_lea.vmem [#allocation1], 14
    %s4805 = smov 48
    %v4806 = vld [vmem:[%s4804] ss:$16 sm:%s4805]
    %vm4807 = vcmask 1045508
    %v4808 = vsel %vm4807, %v4806, %v4803
    %s4809 = scalar_lea.vmem [#allocation1], 14
    %s4810 = smov 192
    %v4811 = vld [vmem:[%s4809] ss:$16 sm:%s4810]
    %vm4812 = vcmask 1047558
    %v4813 = vsel %vm4812, %v4811, %v4808
    %4814 = vrot.lane.b32.xlu0 %v4813, 112
    %v4815 = vpop.permute.xlu0 %4814
    %vm4816 = vcmask 982912
    %4817 = vst.msk [vmem:[#allocation0] sm:$0xff] %vm4816, %v4815
    %s4818 = scalar_lea.vmem [#allocation1], 526
    %s4819 = smov 3
    %v4820 = vld [vmem:[%s4818] ss:$16 sm:%s4819]
    %s4821 = scalar_lea.vmem [#allocation1], 526
    %s4822 = smov 12
    %v4823 = vld [vmem:[%s4821] ss:$16 sm:%s4822]
    %vm4824 = vcmask 1043458
    %v4825 = vsel %vm4824, %v4823, %v4820
    %s4826 = scalar_lea.vmem [#allocation1], 526
    %s4827 = smov 48
    %v4828 = vld [vmem:[%s4826] ss:$16 sm:%s4827]
    %vm4829 = vcmask 1045508
    %v4830 = vsel %vm4829, %v4828, %v4825
    %s4831 = scalar_lea.vmem [#allocation1], 526
    %s4832 = smov 192
    %v4833 = vld [vmem:[%s4831] ss:$16 sm:%s4832]
    %vm4834 = vcmask 1047558
    %v4835 = vsel %vm4834, %v4833, %v4830
    %4836 = vrot.lane.b32.xlu0 %v4835, 112
    %v4837 = vpop.permute.xlu0 %4836
    %vm4838 = vcmask 982912
    %s4839 = scalar_lea.vmem [#allocation0], 32
    %4840 = vst.msk [vmem:[%s4839] sm:$0xff] %vm4838, %v4837
    %s4841 = scalar_lea.vmem [#allocation1], 1038
    %s4842 = smov 3
    %v4843 = vld [vmem:[%s4841] ss:$16 sm:%s4842]
    %s4844 = scalar_lea.vmem [#allocation1], 1038
    %s4845 = smov 12
    %v4846 = vld [vmem:[%s4844] ss:$16 sm:%s4845]
    %vm4847 = vcmask 1043458
    %v4848 = vsel %vm4847, %v4846, %v4843
    %s4849 = scalar_lea.vmem [#allocation1], 1038
    %s4850 = smov 48
    %v4851 = vld [vmem:[%s4849] ss:$16 sm:%s4850]
    %vm4852 = vcmask 1045508
    %v4853 = vsel %vm4852, %v4851, %v4848
    %s4854 = scalar_lea.vmem [#allocation1], 1038
    %s4855 = smov 192
    %v4856 = vld [vmem:[%s4854] ss:$16 sm:%s4855]
    %vm4857 = vcmask 1047558
    %v4858 = vsel %vm4857, %v4856, %v4853
    %4859 = vrot.lane.b32.xlu0 %v4858, 112
    %v4860 = vpop.permute.xlu0 %4859
    %vm4861 = vcmask 982912
    %s4862 = scalar_lea.vmem [#allocation0], 64
    %4863 = vst.msk [vmem:[%s4862] sm:$0xff] %vm4861, %v4860
    %s4864 = scalar_lea.vmem [#allocation1], 1550
    %s4865 = smov 3
    %v4866 = vld [vmem:[%s4864] ss:$16 sm:%s4865]
    %s4867 = scalar_lea.vmem [#allocation1], 1550
    %s4868 = smov 12
    %v4869 = vld [vmem:[%s4867] ss:$16 sm:%s4868]
    %vm4870 = vcmask 1043458
    %v4871 = vsel %vm4870, %v4869, %v4866
    %s4872 = scalar_lea.vmem [#allocation1], 1550
    %s4873 = smov 48
    %v4874 = vld [vmem:[%s4872] ss:$16 sm:%s4873]
    %vm4875 = vcmask 1045508
    %v4876 = vsel %vm4875, %v4874, %v4871
    %s4877 = scalar_lea.vmem [#allocation1], 1550
    %s4878 = smov 192
    %v4879 = vld [vmem:[%s4877] ss:$16 sm:%s4878]
    %vm4880 = vcmask 1047558
    %v4881 = vsel %vm4880, %v4879, %v4876
    %4882 = vrot.lane.b32.xlu0 %v4881, 112
    %v4883 = vpop.permute.xlu0 %4882
    %vm4884 = vcmask 982912
    %s4885 = scalar_lea.vmem [#allocation0], 96
    %4886 = vst.msk [vmem:[%s4885] sm:$0xff] %vm4884, %v4883
    %s4887 = scalar_lea.vmem [#allocation1], 142
    %s4888 = smov 3
    %v4889 = vld [vmem:[%s4887] ss:$16 sm:%s4888]
    %s4890 = scalar_lea.vmem [#allocation1], 142
    %s4891 = smov 12
    %v4892 = vld [vmem:[%s4890] ss:$16 sm:%s4891]
    %vm4893 = vcmask 1043458
    %v4894 = vsel %vm4893, %v4892, %v4889
    %s4895 = scalar_lea.vmem [#allocation1], 142
    %s4896 = smov 48
    %v4897 = vld [vmem:[%s4895] ss:$16 sm:%s4896]
    %vm4898 = vcmask 1045508
    %v4899 = vsel %vm4898, %v4897, %v4894
    %s4900 = scalar_lea.vmem [#allocation1], 142
    %s4901 = smov 192
    %v4902 = vld [vmem:[%s4900] ss:$16 sm:%s4901]
    %vm4903 = vcmask 1047558
    %v4904 = vsel %vm4903, %v4902, %v4899
    %4905 = vrot.lane.b32.xlu0 %v4904, 112
    %v4906 = vpop.permute.xlu0 %4905
    %vm4907 = vcmask 982912
    %s4908 = scalar_lea.vmem [#allocation0], 8
    %4909 = vst.msk [vmem:[%s4908] sm:$0xff] %vm4907, %v4906
    %s4910 = scalar_lea.vmem [#allocation1], 654
    %s4911 = smov 3
    %v4912 = vld [vmem:[%s4910] ss:$16 sm:%s4911]
    %s4913 = scalar_lea.vmem [#allocation1], 654
    %s4914 = smov 12
    %v4915 = vld [vmem:[%s4913] ss:$16 sm:%s4914]
    %vm4916 = vcmask 1043458
    %v4917 = vsel %vm4916, %v4915, %v4912
    %s4918 = scalar_lea.vmem [#allocation1], 654
    %s4919 = smov 48
    %v4920 = vld [vmem:[%s4918] ss:$16 sm:%s4919]
    %vm4921 = vcmask 1045508
    %v4922 = vsel %vm4921, %v4920, %v4917
    %s4923 = scalar_lea.vmem [#allocation1], 654
    %s4924 = smov 192
    %v4925 = vld [vmem:[%s4923] ss:$16 sm:%s4924]
    %vm4926 = vcmask 1047558
    %v4927 = vsel %vm4926, %v4925, %v4922
    %4928 = vrot.lane.b32.xlu0 %v4927, 112
    %v4929 = vpop.permute.xlu0 %4928
    %vm4930 = vcmask 982912
    %s4931 = scalar_lea.vmem [#allocation0], 40
    %4932 = vst.msk [vmem:[%s4931] sm:$0xff] %vm4930, %v4929
    %s4933 = scalar_lea.vmem [#allocation1], 1166
    %s4934 = smov 3
    %v4935 = vld [vmem:[%s4933] ss:$16 sm:%s4934]
    %s4936 = scalar_lea.vmem [#allocation1], 1166
    %s4937 = smov 12
    %v4938 = vld [vmem:[%s4936] ss:$16 sm:%s4937]
    %vm4939 = vcmask 1043458
    %v4940 = vsel %vm4939, %v4938, %v4935
    %s4941 = scalar_lea.vmem [#allocation1], 1166
    %s4942 = smov 48
    %v4943 = vld [vmem:[%s4941] ss:$16 sm:%s4942]
    %vm4944 = vcmask 1045508
    %v4945 = vsel %vm4944, %v4943, %v4940
    %s4946 = scalar_lea.vmem [#allocation1], 1166
    %s4947 = smov 192
    %v4948 = vld [vmem:[%s4946] ss:$16 sm:%s4947]
    %vm4949 = vcmask 1047558
    %v4950 = vsel %vm4949, %v4948, %v4945
    %4951 = vrot.lane.b32.xlu0 %v4950, 112
    %v4952 = vpop.permute.xlu0 %4951
    %vm4953 = vcmask 982912
    %s4954 = scalar_lea.vmem [#allocation0], 72
    %4955 = vst.msk [vmem:[%s4954] sm:$0xff] %vm4953, %v4952
    %s4956 = scalar_lea.vmem [#allocation1], 1678
    %s4957 = smov 3
    %v4958 = vld [vmem:[%s4956] ss:$16 sm:%s4957]
    %s4959 = scalar_lea.vmem [#allocation1], 1678
    %s4960 = smov 12
    %v4961 = vld [vmem:[%s4959] ss:$16 sm:%s4960]
    %vm4962 = vcmask 1043458
    %v4963 = vsel %vm4962, %v4961, %v4958
    %s4964 = scalar_lea.vmem [#allocation1], 1678
    %s4965 = smov 48
    %v4966 = vld [vmem:[%s4964] ss:$16 sm:%s4965]
    %vm4967 = vcmask 1045508
    %v4968 = vsel %vm4967, %v4966, %v4963
    %s4969 = scalar_lea.vmem [#allocation1], 1678
    %s4970 = smov 192
    %v4971 = vld [vmem:[%s4969] ss:$16 sm:%s4970]
    %vm4972 = vcmask 1047558
    %v4973 = vsel %vm4972, %v4971, %v4968
    %4974 = vrot.lane.b32.xlu0 %v4973, 112
    %v4975 = vpop.permute.xlu0 %4974
    %vm4976 = vcmask 982912
    %s4977 = scalar_lea.vmem [#allocation0], 104
    %4978 = vst.msk [vmem:[%s4977] sm:$0xff] %vm4976, %v4975
    %s4979 = scalar_lea.vmem [#allocation1], 270
    %s4980 = smov 3
    %v4981 = vld [vmem:[%s4979] ss:$16 sm:%s4980]
    %s4982 = scalar_lea.vmem [#allocation1], 270
    %s4983 = smov 12
    %v4984 = vld [vmem:[%s4982] ss:$16 sm:%s4983]
    %vm4985 = vcmask 1043458
    %v4986 = vsel %vm4985, %v4984, %v4981
    %s4987 = scalar_lea.vmem [#allocation1], 270
    %s4988 = smov 48
    %v4989 = vld [vmem:[%s4987] ss:$16 sm:%s4988]
    %vm4990 = vcmask 1045508
    %v4991 = vsel %vm4990, %v4989, %v4986
    %s4992 = scalar_lea.vmem [#allocation1], 270
    %s4993 = smov 192
    %v4994 = vld [vmem:[%s4992] ss:$16 sm:%s4993]
    %vm4995 = vcmask 1047558
    %v4996 = vsel %vm4995, %v4994, %v4991
    %4997 = vrot.lane.b32.xlu0 %v4996, 112
    %v4998 = vpop.permute.xlu0 %4997
    %vm4999 = vcmask 982912
    %s5000 = scalar_lea.vmem [#allocation0], 16
    %5001 = vst.msk [vmem:[%s5000] sm:$0xff] %vm4999, %v4998
    %s5002 = scalar_lea.vmem [#allocation1], 782
    %s5003 = smov 3
    %v5004 = vld [vmem:[%s5002] ss:$16 sm:%s5003]
    %s5005 = scalar_lea.vmem [#allocation1], 782
    %s5006 = smov 12
    %v5007 = vld [vmem:[%s5005] ss:$16 sm:%s5006]
    %vm5008 = vcmask 1043458
    %v5009 = vsel %vm5008, %v5007, %v5004
    %s5010 = scalar_lea.vmem [#allocation1], 782
    %s5011 = smov 48
    %v5012 = vld [vmem:[%s5010] ss:$16 sm:%s5011]
    %vm5013 = vcmask 1045508
    %v5014 = vsel %vm5013, %v5012, %v5009
    %s5015 = scalar_lea.vmem [#allocation1], 782
    %s5016 = smov 192
    %v5017 = vld [vmem:[%s5015] ss:$16 sm:%s5016]
    %vm5018 = vcmask 1047558
    %v5019 = vsel %vm5018, %v5017, %v5014
    %5020 = vrot.lane.b32.xlu0 %v5019, 112
    %v5021 = vpop.permute.xlu0 %5020
    %vm5022 = vcmask 982912
    %s5023 = scalar_lea.vmem [#allocation0], 48
    %5024 = vst.msk [vmem:[%s5023] sm:$0xff] %vm5022, %v5021
    %s5025 = scalar_lea.vmem [#allocation1], 1294
    %s5026 = smov 3
    %v5027 = vld [vmem:[%s5025] ss:$16 sm:%s5026]
    %s5028 = scalar_lea.vmem [#allocation1], 1294
    %s5029 = smov 12
    %v5030 = vld [vmem:[%s5028] ss:$16 sm:%s5029]
    %vm5031 = vcmask 1043458
    %v5032 = vsel %vm5031, %v5030, %v5027
    %s5033 = scalar_lea.vmem [#allocation1], 1294
    %s5034 = smov 48
    %v5035 = vld [vmem:[%s5033] ss:$16 sm:%s5034]
    %vm5036 = vcmask 1045508
    %v5037 = vsel %vm5036, %v5035, %v5032
    %s5038 = scalar_lea.vmem [#allocation1], 1294
    %s5039 = smov 192
    %v5040 = vld [vmem:[%s5038] ss:$16 sm:%s5039]
    %vm5041 = vcmask 1047558
    %v5042 = vsel %vm5041, %v5040, %v5037
    %5043 = vrot.lane.b32.xlu0 %v5042, 112
    %v5044 = vpop.permute.xlu0 %5043
    %vm5045 = vcmask 982912
    %s5046 = scalar_lea.vmem [#allocation0], 80
    %5047 = vst.msk [vmem:[%s5046] sm:$0xff] %vm5045, %v5044
    %s5048 = scalar_lea.vmem [#allocation1], 1806
    %s5049 = smov 3
    %v5050 = vld [vmem:[%s5048] ss:$16 sm:%s5049]
    %s5051 = scalar_lea.vmem [#allocation1], 1806
    %s5052 = smov 12
    %v5053 = vld [vmem:[%s5051] ss:$16 sm:%s5052]
    %vm5054 = vcmask 1043458
    %v5055 = vsel %vm5054, %v5053, %v5050
    %s5056 = scalar_lea.vmem [#allocation1], 1806
    %s5057 = smov 48
    %v5058 = vld [vmem:[%s5056] ss:$16 sm:%s5057]
    %vm5059 = vcmask 1045508
    %v5060 = vsel %vm5059, %v5058, %v5055
    %s5061 = scalar_lea.vmem [#allocation1], 1806
    %s5062 = smov 192
    %v5063 = vld [vmem:[%s5061] ss:$16 sm:%s5062]
    %vm5064 = vcmask 1047558
    %v5065 = vsel %vm5064, %v5063, %v5060
    %5066 = vrot.lane.b32.xlu0 %v5065, 112
    %v5067 = vpop.permute.xlu0 %5066
    %vm5068 = vcmask 982912
    %s5069 = scalar_lea.vmem [#allocation0], 112
    %5070 = vst.msk [vmem:[%s5069] sm:$0xff] %vm5068, %v5067
    %s5071 = scalar_lea.vmem [#allocation1], 398
    %s5072 = smov 3
    %v5073 = vld [vmem:[%s5071] ss:$16 sm:%s5072]
    %s5074 = scalar_lea.vmem [#allocation1], 398
    %s5075 = smov 12
    %v5076 = vld [vmem:[%s5074] ss:$16 sm:%s5075]
    %vm5077 = vcmask 1043458
    %v5078 = vsel %vm5077, %v5076, %v5073
    %s5079 = scalar_lea.vmem [#allocation1], 398
    %s5080 = smov 48
    %v5081 = vld [vmem:[%s5079] ss:$16 sm:%s5080]
    %vm5082 = vcmask 1045508
    %v5083 = vsel %vm5082, %v5081, %v5078
    %s5084 = scalar_lea.vmem [#allocation1], 398
    %s5085 = smov 192
    %v5086 = vld [vmem:[%s5084] ss:$16 sm:%s5085]
    %vm5087 = vcmask 1047558
    %v5088 = vsel %vm5087, %v5086, %v5083
    %5089 = vrot.lane.b32.xlu0 %v5088, 112
    %v5090 = vpop.permute.xlu0 %5089
    %vm5091 = vcmask 982912
    %s5092 = scalar_lea.vmem [#allocation0], 24
    %5093 = vst.msk [vmem:[%s5092] sm:$0xff] %vm5091, %v5090
    %s5094 = scalar_lea.vmem [#allocation1], 910
    %s5095 = smov 3
    %v5096 = vld [vmem:[%s5094] ss:$16 sm:%s5095]
    %s5097 = scalar_lea.vmem [#allocation1], 910
    %s5098 = smov 12
    %v5099 = vld [vmem:[%s5097] ss:$16 sm:%s5098]
    %vm5100 = vcmask 1043458
    %v5101 = vsel %vm5100, %v5099, %v5096
    %s5102 = scalar_lea.vmem [#allocation1], 910
    %s5103 = smov 48
    %v5104 = vld [vmem:[%s5102] ss:$16 sm:%s5103]
    %vm5105 = vcmask 1045508
    %v5106 = vsel %vm5105, %v5104, %v5101
    %s5107 = scalar_lea.vmem [#allocation1], 910
    %s5108 = smov 192
    %v5109 = vld [vmem:[%s5107] ss:$16 sm:%s5108]
    %vm5110 = vcmask 1047558
    %v5111 = vsel %vm5110, %v5109, %v5106
    %5112 = vrot.lane.b32.xlu0 %v5111, 112
    %v5113 = vpop.permute.xlu0 %5112
    %vm5114 = vcmask 982912
    %s5115 = scalar_lea.vmem [#allocation0], 56
    %5116 = vst.msk [vmem:[%s5115] sm:$0xff] %vm5114, %v5113
    %s5117 = scalar_lea.vmem [#allocation1], 1422
    %s5118 = smov 3
    %v5119 = vld [vmem:[%s5117] ss:$16 sm:%s5118]
    %s5120 = scalar_lea.vmem [#allocation1], 1422
    %s5121 = smov 12
    %v5122 = vld [vmem:[%s5120] ss:$16 sm:%s5121]
    %vm5123 = vcmask 1043458
    %v5124 = vsel %vm5123, %v5122, %v5119
    %s5125 = scalar_lea.vmem [#allocation1], 1422
    %s5126 = smov 48
    %v5127 = vld [vmem:[%s5125] ss:$16 sm:%s5126]
    %vm5128 = vcmask 1045508
    %v5129 = vsel %vm5128, %v5127, %v5124
    %s5130 = scalar_lea.vmem [#allocation1], 1422
    %s5131 = smov 192
    %v5132 = vld [vmem:[%s5130] ss:$16 sm:%s5131]
    %vm5133 = vcmask 1047558
    %v5134 = vsel %vm5133, %v5132, %v5129
    %5135 = vrot.lane.b32.xlu0 %v5134, 112
    %v5136 = vpop.permute.xlu0 %5135
    %vm5137 = vcmask 982912
    %s5138 = scalar_lea.vmem [#allocation0], 88
    %5139 = vst.msk [vmem:[%s5138] sm:$0xff] %vm5137, %v5136
    %s5140 = scalar_lea.vmem [#allocation1], 1934
    %s5141 = smov 3
    %v5142 = vld [vmem:[%s5140] ss:$16 sm:%s5141]
    %s5143 = scalar_lea.vmem [#allocation1], 1934
    %s5144 = smov 12
    %v5145 = vld [vmem:[%s5143] ss:$16 sm:%s5144]
    %vm5146 = vcmask 1043458
    %v5147 = vsel %vm5146, %v5145, %v5142
    %s5148 = scalar_lea.vmem [#allocation1], 1934
    %s5149 = smov 48
    %v5150 = vld [vmem:[%s5148] ss:$16 sm:%s5149]
    %vm5151 = vcmask 1045508
    %v5152 = vsel %vm5151, %v5150, %v5147
    %s5153 = scalar_lea.vmem [#allocation1], 1934
    %s5154 = smov 192
    %v5155 = vld [vmem:[%s5153] ss:$16 sm:%s5154]
    %vm5156 = vcmask 1047558
    %v5157 = vsel %vm5156, %v5155, %v5152
    %5158 = vrot.lane.b32.xlu0 %v5157, 112
    %v5159 = vpop.permute.xlu0 %5158
    %vm5160 = vcmask 982912
    %s5161 = scalar_lea.vmem [#allocation0], 120
    %5162 = vst.msk [vmem:[%s5161] sm:$0xff] %vm5160, %v5159
    %s5163 = scalar_lea.vmem [#allocation1], 13
    %s5164 = smov 3
    %v5165 = vld [vmem:[%s5163] ss:$16 sm:%s5164]
    %s5166 = scalar_lea.vmem [#allocation1], 13
    %s5167 = smov 12
    %v5168 = vld [vmem:[%s5166] ss:$16 sm:%s5167]
    %vm5169 = vcmask 1043458
    %v5170 = vsel %vm5169, %v5168, %v5165
    %s5171 = scalar_lea.vmem [#allocation1], 13
    %s5172 = smov 48
    %v5173 = vld [vmem:[%s5171] ss:$16 sm:%s5172]
    %vm5174 = vcmask 1045508
    %v5175 = vsel %vm5174, %v5173, %v5170
    %s5176 = scalar_lea.vmem [#allocation1], 13
    %s5177 = smov 192
    %v5178 = vld [vmem:[%s5176] ss:$16 sm:%s5177]
    %vm5179 = vcmask 1047558
    %v5180 = vsel %vm5179, %v5178, %v5175
    %5181 = vrot.lane.b32.xlu0 %v5180, 104
    %v5182 = vpop.permute.xlu0 %5181
    %vm5183 = vcmask 917312
    %5184 = vst.msk [vmem:[#allocation0] sm:$0xff] %vm5183, %v5182
    %s5185 = scalar_lea.vmem [#allocation1], 525
    %s5186 = smov 3
    %v5187 = vld [vmem:[%s5185] ss:$16 sm:%s5186]
    %s5188 = scalar_lea.vmem [#allocation1], 525
    %s5189 = smov 12
    %v5190 = vld [vmem:[%s5188] ss:$16 sm:%s5189]
    %vm5191 = vcmask 1043458
    %v5192 = vsel %vm5191, %v5190, %v5187
    %s5193 = scalar_lea.vmem [#allocation1], 525
    %s5194 = smov 48
    %v5195 = vld [vmem:[%s5193] ss:$16 sm:%s5194]
    %vm5196 = vcmask 1045508
    %v5197 = vsel %vm5196, %v5195, %v5192
    %s5198 = scalar_lea.vmem [#allocation1], 525
    %s5199 = smov 192
    %v5200 = vld [vmem:[%s5198] ss:$16 sm:%s5199]
    %vm5201 = vcmask 1047558
    %v5202 = vsel %vm5201, %v5200, %v5197
    %5203 = vrot.lane.b32.xlu0 %v5202, 104
    %v5204 = vpop.permute.xlu0 %5203
    %vm5205 = vcmask 917312
    %s5206 = scalar_lea.vmem [#allocation0], 32
    %5207 = vst.msk [vmem:[%s5206] sm:$0xff] %vm5205, %v5204
    %s5208 = scalar_lea.vmem [#allocation1], 1037
    %s5209 = smov 3
    %v5210 = vld [vmem:[%s5208] ss:$16 sm:%s5209]
    %s5211 = scalar_lea.vmem [#allocation1], 1037
    %s5212 = smov 12
    %v5213 = vld [vmem:[%s5211] ss:$16 sm:%s5212]
    %vm5214 = vcmask 1043458
    %v5215 = vsel %vm5214, %v5213, %v5210
    %s5216 = scalar_lea.vmem [#allocation1], 1037
    %s5217 = smov 48
    %v5218 = vld [vmem:[%s5216] ss:$16 sm:%s5217]
    %vm5219 = vcmask 1045508
    %v5220 = vsel %vm5219, %v5218, %v5215
    %s5221 = scalar_lea.vmem [#allocation1], 1037
    %s5222 = smov 192
    %v5223 = vld [vmem:[%s5221] ss:$16 sm:%s5222]
    %vm5224 = vcmask 1047558
    %v5225 = vsel %vm5224, %v5223, %v5220
    %5226 = vrot.lane.b32.xlu0 %v5225, 104
    %v5227 = vpop.permute.xlu0 %5226
    %vm5228 = vcmask 917312
    %s5229 = scalar_lea.vmem [#allocation0], 64
    %5230 = vst.msk [vmem:[%s5229] sm:$0xff] %vm5228, %v5227
    %s5231 = scalar_lea.vmem [#allocation1], 1549
    %s5232 = smov 3
    %v5233 = vld [vmem:[%s5231] ss:$16 sm:%s5232]
    %s5234 = scalar_lea.vmem [#allocation1], 1549
    %s5235 = smov 12
    %v5236 = vld [vmem:[%s5234] ss:$16 sm:%s5235]
    %vm5237 = vcmask 1043458
    %v5238 = vsel %vm5237, %v5236, %v5233
    %s5239 = scalar_lea.vmem [#allocation1], 1549
    %s5240 = smov 48
    %v5241 = vld [vmem:[%s5239] ss:$16 sm:%s5240]
    %vm5242 = vcmask 1045508
    %v5243 = vsel %vm5242, %v5241, %v5238
    %s5244 = scalar_lea.vmem [#allocation1], 1549
    %s5245 = smov 192
    %v5246 = vld [vmem:[%s5244] ss:$16 sm:%s5245]
    %vm5247 = vcmask 1047558
    %v5248 = vsel %vm5247, %v5246, %v5243
    %5249 = vrot.lane.b32.xlu0 %v5248, 104
    %v5250 = vpop.permute.xlu0 %5249
    %vm5251 = vcmask 917312
    %s5252 = scalar_lea.vmem [#allocation0], 96
    %5253 = vst.msk [vmem:[%s5252] sm:$0xff] %vm5251, %v5250
    %s5254 = scalar_lea.vmem [#allocation1], 141
    %s5255 = smov 3
    %v5256 = vld [vmem:[%s5254] ss:$16 sm:%s5255]
    %s5257 = scalar_lea.vmem [#allocation1], 141
    %s5258 = smov 12
    %v5259 = vld [vmem:[%s5257] ss:$16 sm:%s5258]
    %vm5260 = vcmask 1043458
    %v5261 = vsel %vm5260, %v5259, %v5256
    %s5262 = scalar_lea.vmem [#allocation1], 141
    %s5263 = smov 48
    %v5264 = vld [vmem:[%s5262] ss:$16 sm:%s5263]
    %vm5265 = vcmask 1045508
    %v5266 = vsel %vm5265, %v5264, %v5261
    %s5267 = scalar_lea.vmem [#allocation1], 141
    %s5268 = smov 192
    %v5269 = vld [vmem:[%s5267] ss:$16 sm:%s5268]
    %vm5270 = vcmask 1047558
    %v5271 = vsel %vm5270, %v5269, %v5266
    %5272 = vrot.lane.b32.xlu0 %v5271, 104
    %v5273 = vpop.permute.xlu0 %5272
    %vm5274 = vcmask 917312
    %s5275 = scalar_lea.vmem [#allocation0], 8
    %5276 = vst.msk [vmem:[%s5275] sm:$0xff] %vm5274, %v5273
    %s5277 = scalar_lea.vmem [#allocation1], 653
    %s5278 = smov 3
    %v5279 = vld [vmem:[%s5277] ss:$16 sm:%s5278]
    %s5280 = scalar_lea.vmem [#allocation1], 653
    %s5281 = smov 12
    %v5282 = vld [vmem:[%s5280] ss:$16 sm:%s5281]
    %vm5283 = vcmask 1043458
    %v5284 = vsel %vm5283, %v5282, %v5279
    %s5285 = scalar_lea.vmem [#allocation1], 653
    %s5286 = smov 48
    %v5287 = vld [vmem:[%s5285] ss:$16 sm:%s5286]
    %vm5288 = vcmask 1045508
    %v5289 = vsel %vm5288, %v5287, %v5284
    %s5290 = scalar_lea.vmem [#allocation1], 653
    %s5291 = smov 192
    %v5292 = vld [vmem:[%s5290] ss:$16 sm:%s5291]
    %vm5293 = vcmask 1047558
    %v5294 = vsel %vm5293, %v5292, %v5289
    %5295 = vrot.lane.b32.xlu0 %v5294, 104
    %v5296 = vpop.permute.xlu0 %5295
    %vm5297 = vcmask 917312
    %s5298 = scalar_lea.vmem [#allocation0], 40
    %5299 = vst.msk [vmem:[%s5298] sm:$0xff] %vm5297, %v5296
    %s5300 = scalar_lea.vmem [#allocation1], 1165
    %s5301 = smov 3
    %v5302 = vld [vmem:[%s5300] ss:$16 sm:%s5301]
    %s5303 = scalar_lea.vmem [#allocation1], 1165
    %s5304 = smov 12
    %v5305 = vld [vmem:[%s5303] ss:$16 sm:%s5304]
    %vm5306 = vcmask 1043458
    %v5307 = vsel %vm5306, %v5305, %v5302
    %s5308 = scalar_lea.vmem [#allocation1], 1165
    %s5309 = smov 48
    %v5310 = vld [vmem:[%s5308] ss:$16 sm:%s5309]
    %vm5311 = vcmask 1045508
    %v5312 = vsel %vm5311, %v5310, %v5307
    %s5313 = scalar_lea.vmem [#allocation1], 1165
    %s5314 = smov 192
    %v5315 = vld [vmem:[%s5313] ss:$16 sm:%s5314]
    %vm5316 = vcmask 1047558
    %v5317 = vsel %vm5316, %v5315, %v5312
    %5318 = vrot.lane.b32.xlu0 %v5317, 104
    %v5319 = vpop.permute.xlu0 %5318
    %vm5320 = vcmask 917312
    %s5321 = scalar_lea.vmem [#allocation0], 72
    %5322 = vst.msk [vmem:[%s5321] sm:$0xff] %vm5320, %v5319
    %s5323 = scalar_lea.vmem [#allocation1], 1677
    %s5324 = smov 3
    %v5325 = vld [vmem:[%s5323] ss:$16 sm:%s5324]
    %s5326 = scalar_lea.vmem [#allocation1], 1677
    %s5327 = smov 12
    %v5328 = vld [vmem:[%s5326] ss:$16 sm:%s5327]
    %vm5329 = vcmask 1043458
    %v5330 = vsel %vm5329, %v5328, %v5325
    %s5331 = scalar_lea.vmem [#allocation1], 1677
    %s5332 = smov 48
    %v5333 = vld [vmem:[%s5331] ss:$16 sm:%s5332]
    %vm5334 = vcmask 1045508
    %v5335 = vsel %vm5334, %v5333, %v5330
    %s5336 = scalar_lea.vmem [#allocation1], 1677
    %s5337 = smov 192
    %v5338 = vld [vmem:[%s5336] ss:$16 sm:%s5337]
    %vm5339 = vcmask 1047558
    %v5340 = vsel %vm5339, %v5338, %v5335
    %5341 = vrot.lane.b32.xlu0 %v5340, 104
    %v5342 = vpop.permute.xlu0 %5341
    %vm5343 = vcmask 917312
    %s5344 = scalar_lea.vmem [#allocation0], 104
    %5345 = vst.msk [vmem:[%s5344] sm:$0xff] %vm5343, %v5342
    %s5346 = scalar_lea.vmem [#allocation1], 269
    %s5347 = smov 3
    %v5348 = vld [vmem:[%s5346] ss:$16 sm:%s5347]
    %s5349 = scalar_lea.vmem [#allocation1], 269
    %s5350 = smov 12
    %v5351 = vld [vmem:[%s5349] ss:$16 sm:%s5350]
    %vm5352 = vcmask 1043458
    %v5353 = vsel %vm5352, %v5351, %v5348
    %s5354 = scalar_lea.vmem [#allocation1], 269
    %s5355 = smov 48
    %v5356 = vld [vmem:[%s5354] ss:$16 sm:%s5355]
    %vm5357 = vcmask 1045508
    %v5358 = vsel %vm5357, %v5356, %v5353
    %s5359 = scalar_lea.vmem [#allocation1], 269
    %s5360 = smov 192
    %v5361 = vld [vmem:[%s5359] ss:$16 sm:%s5360]
    %vm5362 = vcmask 1047558
    %v5363 = vsel %vm5362, %v5361, %v5358
    %5364 = vrot.lane.b32.xlu0 %v5363, 104
    %v5365 = vpop.permute.xlu0 %5364
    %vm5366 = vcmask 917312
    %s5367 = scalar_lea.vmem [#allocation0], 16
    %5368 = vst.msk [vmem:[%s5367] sm:$0xff] %vm5366, %v5365
    %s5369 = scalar_lea.vmem [#allocation1], 781
    %s5370 = smov 3
    %v5371 = vld [vmem:[%s5369] ss:$16 sm:%s5370]
    %s5372 = scalar_lea.vmem [#allocation1], 781
    %s5373 = smov 12
    %v5374 = vld [vmem:[%s5372] ss:$16 sm:%s5373]
    %vm5375 = vcmask 1043458
    %v5376 = vsel %vm5375, %v5374, %v5371
    %s5377 = scalar_lea.vmem [#allocation1], 781
    %s5378 = smov 48
    %v5379 = vld [vmem:[%s5377] ss:$16 sm:%s5378]
    %vm5380 = vcmask 1045508
    %v5381 = vsel %vm5380, %v5379, %v5376
    %s5382 = scalar_lea.vmem [#allocation1], 781
    %s5383 = smov 192
    %v5384 = vld [vmem:[%s5382] ss:$16 sm:%s5383]
    %vm5385 = vcmask 1047558
    %v5386 = vsel %vm5385, %v5384, %v5381
    %5387 = vrot.lane.b32.xlu0 %v5386, 104
    %v5388 = vpop.permute.xlu0 %5387
    %vm5389 = vcmask 917312
    %s5390 = scalar_lea.vmem [#allocation0], 48
    %5391 = vst.msk [vmem:[%s5390] sm:$0xff] %vm5389, %v5388
    %s5392 = scalar_lea.vmem [#allocation1], 1293
    %s5393 = smov 3
    %v5394 = vld [vmem:[%s5392] ss:$16 sm:%s5393]
    %s5395 = scalar_lea.vmem [#allocation1], 1293
    %s5396 = smov 12
    %v5397 = vld [vmem:[%s5395] ss:$16 sm:%s5396]
    %vm5398 = vcmask 1043458
    %v5399 = vsel %vm5398, %v5397, %v5394
    %s5400 = scalar_lea.vmem [#allocation1], 1293
    %s5401 = smov 48
    %v5402 = vld [vmem:[%s5400] ss:$16 sm:%s5401]
    %vm5403 = vcmask 1045508
    %v5404 = vsel %vm5403, %v5402, %v5399
    %s5405 = scalar_lea.vmem [#allocation1], 1293
    %s5406 = smov 192
    %v5407 = vld [vmem:[%s5405] ss:$16 sm:%s5406]
    %vm5408 = vcmask 1047558
    %v5409 = vsel %vm5408, %v5407, %v5404
    %5410 = vrot.lane.b32.xlu0 %v5409, 104
    %v5411 = vpop.permute.xlu0 %5410
    %vm5412 = vcmask 917312
    %s5413 = scalar_lea.vmem [#allocation0], 80
    %5414 = vst.msk [vmem:[%s5413] sm:$0xff] %vm5412, %v5411
    %s5415 = scalar_lea.vmem [#allocation1], 1805
    %s5416 = smov 3
    %v5417 = vld [vmem:[%s5415] ss:$16 sm:%s5416]
    %s5418 = scalar_lea.vmem [#allocation1], 1805
    %s5419 = smov 12
    %v5420 = vld [vmem:[%s5418] ss:$16 sm:%s5419]
    %vm5421 = vcmask 1043458
    %v5422 = vsel %vm5421, %v5420, %v5417
    %s5423 = scalar_lea.vmem [#allocation1], 1805
    %s5424 = smov 48
    %v5425 = vld [vmem:[%s5423] ss:$16 sm:%s5424]
    %vm5426 = vcmask 1045508
    %v5427 = vsel %vm5426, %v5425, %v5422
    %s5428 = scalar_lea.vmem [#allocation1], 1805
    %s5429 = smov 192
    %v5430 = vld [vmem:[%s5428] ss:$16 sm:%s5429]
    %vm5431 = vcmask 1047558
    %v5432 = vsel %vm5431, %v5430, %v5427
    %5433 = vrot.lane.b32.xlu0 %v5432, 104
    %v5434 = vpop.permute.xlu0 %5433
    %vm5435 = vcmask 917312
    %s5436 = scalar_lea.vmem [#allocation0], 112
    %5437 = vst.msk [vmem:[%s5436] sm:$0xff] %vm5435, %v5434
    %s5438 = scalar_lea.vmem [#allocation1], 397
    %s5439 = smov 3
    %v5440 = vld [vmem:[%s5438] ss:$16 sm:%s5439]
    %s5441 = scalar_lea.vmem [#allocation1], 397
    %s5442 = smov 12
    %v5443 = vld [vmem:[%s5441] ss:$16 sm:%s5442]
    %vm5444 = vcmask 1043458
    %v5445 = vsel %vm5444, %v5443, %v5440
    %s5446 = scalar_lea.vmem [#allocation1], 397
    %s5447 = smov 48
    %v5448 = vld [vmem:[%s5446] ss:$16 sm:%s5447]
    %vm5449 = vcmask 1045508
    %v5450 = vsel %vm5449, %v5448, %v5445
    %s5451 = scalar_lea.vmem [#allocation1], 397
    %s5452 = smov 192
    %v5453 = vld [vmem:[%s5451] ss:$16 sm:%s5452]
    %vm5454 = vcmask 1047558
    %v5455 = vsel %vm5454, %v5453, %v5450
    %5456 = vrot.lane.b32.xlu0 %v5455, 104
    %v5457 = vpop.permute.xlu0 %5456
    %vm5458 = vcmask 917312
    %s5459 = scalar_lea.vmem [#allocation0], 24
    %5460 = vst.msk [vmem:[%s5459] sm:$0xff] %vm5458, %v5457
    %s5461 = scalar_lea.vmem [#allocation1], 909
    %s5462 = smov 3
    %v5463 = vld [vmem:[%s5461] ss:$16 sm:%s5462]
    %s5464 = scalar_lea.vmem [#allocation1], 909
    %s5465 = smov 12
    %v5466 = vld [vmem:[%s5464] ss:$16 sm:%s5465]
    %vm5467 = vcmask 1043458
    %v5468 = vsel %vm5467, %v5466, %v5463
    %s5469 = scalar_lea.vmem [#allocation1], 909
    %s5470 = smov 48
    %v5471 = vld [vmem:[%s5469] ss:$16 sm:%s5470]
    %vm5472 = vcmask 1045508
    %v5473 = vsel %vm5472, %v5471, %v5468
    %s5474 = scalar_lea.vmem [#allocation1], 909
    %s5475 = smov 192
    %v5476 = vld [vmem:[%s5474] ss:$16 sm:%s5475]
    %vm5477 = vcmask 1047558
    %v5478 = vsel %vm5477, %v5476, %v5473
    %5479 = vrot.lane.b32.xlu0 %v5478, 104
    %v5480 = vpop.permute.xlu0 %5479
    %vm5481 = vcmask 917312
    %s5482 = scalar_lea.vmem [#allocation0], 56
    %5483 = vst.msk [vmem:[%s5482] sm:$0xff] %vm5481, %v5480
    %s5484 = scalar_lea.vmem [#allocation1], 1421
    %s5485 = smov 3
    %v5486 = vld [vmem:[%s5484] ss:$16 sm:%s5485]
    %s5487 = scalar_lea.vmem [#allocation1], 1421
    %s5488 = smov 12
    %v5489 = vld [vmem:[%s5487] ss:$16 sm:%s5488]
    %vm5490 = vcmask 1043458
    %v5491 = vsel %vm5490, %v5489, %v5486
    %s5492 = scalar_lea.vmem [#allocation1], 1421
    %s5493 = smov 48
    %v5494 = vld [vmem:[%s5492] ss:$16 sm:%s5493]
    %vm5495 = vcmask 1045508
    %v5496 = vsel %vm5495, %v5494, %v5491
    %s5497 = scalar_lea.vmem [#allocation1], 1421
    %s5498 = smov 192
    %v5499 = vld [vmem:[%s5497] ss:$16 sm:%s5498]
    %vm5500 = vcmask 1047558
    %v5501 = vsel %vm5500, %v5499, %v5496
    %5502 = vrot.lane.b32.xlu0 %v5501, 104
    %v5503 = vpop.permute.xlu0 %5502
    %vm5504 = vcmask 917312
    %s5505 = scalar_lea.vmem [#allocation0], 88
    %5506 = vst.msk [vmem:[%s5505] sm:$0xff] %vm5504, %v5503
    %s5507 = scalar_lea.vmem [#allocation1], 1933
    %s5508 = smov 3
    %v5509 = vld [vmem:[%s5507] ss:$16 sm:%s5508]
    %s5510 = scalar_lea.vmem [#allocation1], 1933
    %s5511 = smov 12
    %v5512 = vld [vmem:[%s5510] ss:$16 sm:%s5511]
    %vm5513 = vcmask 1043458
    %v5514 = vsel %vm5513, %v5512, %v5509
    %s5515 = scalar_lea.vmem [#allocation1], 1933
    %s5516 = smov 48
    %v5517 = vld [vmem:[%s5515] ss:$16 sm:%s5516]
    %vm5518 = vcmask 1045508
    %v5519 = vsel %vm5518, %v5517, %v5514
    %s5520 = scalar_lea.vmem [#allocation1], 1933
    %s5521 = smov 192
    %v5522 = vld [vmem:[%s5520] ss:$16 sm:%s5521]
    %vm5523 = vcmask 1047558
    %v5524 = vsel %vm5523, %v5522, %v5519
    %5525 = vrot.lane.b32.xlu0 %v5524, 104
    %v5526 = vpop.permute.xlu0 %5525
    %vm5527 = vcmask 917312
    %s5528 = scalar_lea.vmem [#allocation0], 120
    %5529 = vst.msk [vmem:[%s5528] sm:$0xff] %vm5527, %v5526
    %s5530 = scalar_lea.vmem [#allocation1], 12
    %s5531 = smov 3
    %v5532 = vld [vmem:[%s5530] ss:$16 sm:%s5531]
    %s5533 = scalar_lea.vmem [#allocation1], 12
    %s5534 = smov 12
    %v5535 = vld [vmem:[%s5533] ss:$16 sm:%s5534]
    %vm5536 = vcmask 1043458
    %v5537 = vsel %vm5536, %v5535, %v5532
    %s5538 = scalar_lea.vmem [#allocation1], 12
    %s5539 = smov 48
    %v5540 = vld [vmem:[%s5538] ss:$16 sm:%s5539]
    %vm5541 = vcmask 1045508
    %v5542 = vsel %vm5541, %v5540, %v5537
    %s5543 = scalar_lea.vmem [#allocation1], 12
    %s5544 = smov 192
    %v5545 = vld [vmem:[%s5543] ss:$16 sm:%s5544]
    %vm5546 = vcmask 1047558
    %v5547 = vsel %vm5546, %v5545, %v5542
    %5548 = vrot.lane.b32.xlu0 %v5547, 96
    %v5549 = vpop.permute.xlu0 %5548
    %vm5550 = vcmask 851712
    %5551 = vst.msk [vmem:[#allocation0] sm:$0xff] %vm5550, %v5549
    %s5552 = scalar_lea.vmem [#allocation1], 524
    %s5553 = smov 3
    %v5554 = vld [vmem:[%s5552] ss:$16 sm:%s5553]
    %s5555 = scalar_lea.vmem [#allocation1], 524
    %s5556 = smov 12
    %v5557 = vld [vmem:[%s5555] ss:$16 sm:%s5556]
    %vm5558 = vcmask 1043458
    %v5559 = vsel %vm5558, %v5557, %v5554
    %s5560 = scalar_lea.vmem [#allocation1], 524
    %s5561 = smov 48
    %v5562 = vld [vmem:[%s5560] ss:$16 sm:%s5561]
    %vm5563 = vcmask 1045508
    %v5564 = vsel %vm5563, %v5562, %v5559
    %s5565 = scalar_lea.vmem [#allocation1], 524
    %s5566 = smov 192
    %v5567 = vld [vmem:[%s5565] ss:$16 sm:%s5566]
    %vm5568 = vcmask 1047558
    %v5569 = vsel %vm5568, %v5567, %v5564
    %5570 = vrot.lane.b32.xlu0 %v5569, 96
    %v5571 = vpop.permute.xlu0 %5570
    %vm5572 = vcmask 851712
    %s5573 = scalar_lea.vmem [#allocation0], 32
    %5574 = vst.msk [vmem:[%s5573] sm:$0xff] %vm5572, %v5571
    %s5575 = scalar_lea.vmem [#allocation1], 1036
    %s5576 = smov 3
    %v5577 = vld [vmem:[%s5575] ss:$16 sm:%s5576]
    %s5578 = scalar_lea.vmem [#allocation1], 1036
    %s5579 = smov 12
    %v5580 = vld [vmem:[%s5578] ss:$16 sm:%s5579]
    %vm5581 = vcmask 1043458
    %v5582 = vsel %vm5581, %v5580, %v5577
    %s5583 = scalar_lea.vmem [#allocation1], 1036
    %s5584 = smov 48
    %v5585 = vld [vmem:[%s5583] ss:$16 sm:%s5584]
    %vm5586 = vcmask 1045508
    %v5587 = vsel %vm5586, %v5585, %v5582
    %s5588 = scalar_lea.vmem [#allocation1], 1036
    %s5589 = smov 192
    %v5590 = vld [vmem:[%s5588] ss:$16 sm:%s5589]
    %vm5591 = vcmask 1047558
    %v5592 = vsel %vm5591, %v5590, %v5587
    %5593 = vrot.lane.b32.xlu0 %v5592, 96
    %v5594 = vpop.permute.xlu0 %5593
    %vm5595 = vcmask 851712
    %s5596 = scalar_lea.vmem [#allocation0], 64
    %5597 = vst.msk [vmem:[%s5596] sm:$0xff] %vm5595, %v5594
    %s5598 = scalar_lea.vmem [#allocation1], 1548
    %s5599 = smov 3
    %v5600 = vld [vmem:[%s5598] ss:$16 sm:%s5599]
    %s5601 = scalar_lea.vmem [#allocation1], 1548
    %s5602 = smov 12
    %v5603 = vld [vmem:[%s5601] ss:$16 sm:%s5602]
    %vm5604 = vcmask 1043458
    %v5605 = vsel %vm5604, %v5603, %v5600
    %s5606 = scalar_lea.vmem [#allocation1], 1548
    %s5607 = smov 48
    %v5608 = vld [vmem:[%s5606] ss:$16 sm:%s5607]
    %vm5609 = vcmask 1045508
    %v5610 = vsel %vm5609, %v5608, %v5605
    %s5611 = scalar_lea.vmem [#allocation1], 1548
    %s5612 = smov 192
    %v5613 = vld [vmem:[%s5611] ss:$16 sm:%s5612]
    %vm5614 = vcmask 1047558
    %v5615 = vsel %vm5614, %v5613, %v5610
    %5616 = vrot.lane.b32.xlu0 %v5615, 96
    %v5617 = vpop.permute.xlu0 %5616
    %vm5618 = vcmask 851712
    %s5619 = scalar_lea.vmem [#allocation0], 96
    %5620 = vst.msk [vmem:[%s5619] sm:$0xff] %vm5618, %v5617
    %s5621 = scalar_lea.vmem [#allocation1], 140
    %s5622 = smov 3
    %v5623 = vld [vmem:[%s5621] ss:$16 sm:%s5622]
    %s5624 = scalar_lea.vmem [#allocation1], 140
    %s5625 = smov 12
    %v5626 = vld [vmem:[%s5624] ss:$16 sm:%s5625]
    %vm5627 = vcmask 1043458
    %v5628 = vsel %vm5627, %v5626, %v5623
    %s5629 = scalar_lea.vmem [#allocation1], 140
    %s5630 = smov 48
    %v5631 = vld [vmem:[%s5629] ss:$16 sm:%s5630]
    %vm5632 = vcmask 1045508
    %v5633 = vsel %vm5632, %v5631, %v5628
    %s5634 = scalar_lea.vmem [#allocation1], 140
    %s5635 = smov 192
    %v5636 = vld [vmem:[%s5634] ss:$16 sm:%s5635]
    %vm5637 = vcmask 1047558
    %v5638 = vsel %vm5637, %v5636, %v5633
    %5639 = vrot.lane.b32.xlu0 %v5638, 96
    %v5640 = vpop.permute.xlu0 %5639
    %vm5641 = vcmask 851712
    %s5642 = scalar_lea.vmem [#allocation0], 8
    %5643 = vst.msk [vmem:[%s5642] sm:$0xff] %vm5641, %v5640
    %s5644 = scalar_lea.vmem [#allocation1], 652
    %s5645 = smov 3
    %v5646 = vld [vmem:[%s5644] ss:$16 sm:%s5645]
    %s5647 = scalar_lea.vmem [#allocation1], 652
    %s5648 = smov 12
    %v5649 = vld [vmem:[%s5647] ss:$16 sm:%s5648]
    %vm5650 = vcmask 1043458
    %v5651 = vsel %vm5650, %v5649, %v5646
    %s5652 = scalar_lea.vmem [#allocation1], 652
    %s5653 = smov 48
    %v5654 = vld [vmem:[%s5652] ss:$16 sm:%s5653]
    %vm5655 = vcmask 1045508
    %v5656 = vsel %vm5655, %v5654, %v5651
    %s5657 = scalar_lea.vmem [#allocation1], 652
    %s5658 = smov 192
    %v5659 = vld [vmem:[%s5657] ss:$16 sm:%s5658]
    %vm5660 = vcmask 1047558
    %v5661 = vsel %vm5660, %v5659, %v5656
    %5662 = vrot.lane.b32.xlu0 %v5661, 96
    %v5663 = vpop.permute.xlu0 %5662
    %vm5664 = vcmask 851712
    %s5665 = scalar_lea.vmem [#allocation0], 40
    %5666 = vst.msk [vmem:[%s5665] sm:$0xff] %vm5664, %v5663
    %s5667 = scalar_lea.vmem [#allocation1], 1164
    %s5668 = smov 3
    %v5669 = vld [vmem:[%s5667] ss:$16 sm:%s5668]
    %s5670 = scalar_lea.vmem [#allocation1], 1164
    %s5671 = smov 12
    %v5672 = vld [vmem:[%s5670] ss:$16 sm:%s5671]
    %vm5673 = vcmask 1043458
    %v5674 = vsel %vm5673, %v5672, %v5669
    %s5675 = scalar_lea.vmem [#allocation1], 1164
    %s5676 = smov 48
    %v5677 = vld [vmem:[%s5675] ss:$16 sm:%s5676]
    %vm5678 = vcmask 1045508
    %v5679 = vsel %vm5678, %v5677, %v5674
    %s5680 = scalar_lea.vmem [#allocation1], 1164
    %s5681 = smov 192
    %v5682 = vld [vmem:[%s5680] ss:$16 sm:%s5681]
    %vm5683 = vcmask 1047558
    %v5684 = vsel %vm5683, %v5682, %v5679
    %5685 = vrot.lane.b32.xlu0 %v5684, 96
    %v5686 = vpop.permute.xlu0 %5685
    %vm5687 = vcmask 851712
    %s5688 = scalar_lea.vmem [#allocation0], 72
    %5689 = vst.msk [vmem:[%s5688] sm:$0xff] %vm5687, %v5686
    %s5690 = scalar_lea.vmem [#allocation1], 1676
    %s5691 = smov 3
    %v5692 = vld [vmem:[%s5690] ss:$16 sm:%s5691]
    %s5693 = scalar_lea.vmem [#allocation1], 1676
    %s5694 = smov 12
    %v5695 = vld [vmem:[%s5693] ss:$16 sm:%s5694]
    %vm5696 = vcmask 1043458
    %v5697 = vsel %vm5696, %v5695, %v5692
    %s5698 = scalar_lea.vmem [#allocation1], 1676
    %s5699 = smov 48
    %v5700 = vld [vmem:[%s5698] ss:$16 sm:%s5699]
    %vm5701 = vcmask 1045508
    %v5702 = vsel %vm5701, %v5700, %v5697
    %s5703 = scalar_lea.vmem [#allocation1], 1676
    %s5704 = smov 192
    %v5705 = vld [vmem:[%s5703] ss:$16 sm:%s5704]
    %vm5706 = vcmask 1047558
    %v5707 = vsel %vm5706, %v5705, %v5702
    %5708 = vrot.lane.b32.xlu0 %v5707, 96
    %v5709 = vpop.permute.xlu0 %5708
    %vm5710 = vcmask 851712
    %s5711 = scalar_lea.vmem [#allocation0], 104
    %5712 = vst.msk [vmem:[%s5711] sm:$0xff] %vm5710, %v5709
    %s5713 = scalar_lea.vmem [#allocation1], 268
    %s5714 = smov 3
    %v5715 = vld [vmem:[%s5713] ss:$16 sm:%s5714]
    %s5716 = scalar_lea.vmem [#allocation1], 268
    %s5717 = smov 12
    %v5718 = vld [vmem:[%s5716] ss:$16 sm:%s5717]
    %vm5719 = vcmask 1043458
    %v5720 = vsel %vm5719, %v5718, %v5715
    %s5721 = scalar_lea.vmem [#allocation1], 268
    %s5722 = smov 48
    %v5723 = vld [vmem:[%s5721] ss:$16 sm:%s5722]
    %vm5724 = vcmask 1045508
    %v5725 = vsel %vm5724, %v5723, %v5720
    %s5726 = scalar_lea.vmem [#allocation1], 268
    %s5727 = smov 192
    %v5728 = vld [vmem:[%s5726] ss:$16 sm:%s5727]
    %vm5729 = vcmask 1047558
    %v5730 = vsel %vm5729, %v5728, %v5725
    %5731 = vrot.lane.b32.xlu0 %v5730, 96
    %v5732 = vpop.permute.xlu0 %5731
    %vm5733 = vcmask 851712
    %s5734 = scalar_lea.vmem [#allocation0], 16
    %5735 = vst.msk [vmem:[%s5734] sm:$0xff] %vm5733, %v5732
    %s5736 = scalar_lea.vmem [#allocation1], 780
    %s5737 = smov 3
    %v5738 = vld [vmem:[%s5736] ss:$16 sm:%s5737]
    %s5739 = scalar_lea.vmem [#allocation1], 780
    %s5740 = smov 12
    %v5741 = vld [vmem:[%s5739] ss:$16 sm:%s5740]
    %vm5742 = vcmask 1043458
    %v5743 = vsel %vm5742, %v5741, %v5738
    %s5744 = scalar_lea.vmem [#allocation1], 780
    %s5745 = smov 48
    %v5746 = vld [vmem:[%s5744] ss:$16 sm:%s5745]
    %vm5747 = vcmask 1045508
    %v5748 = vsel %vm5747, %v5746, %v5743
    %s5749 = scalar_lea.vmem [#allocation1], 780
    %s5750 = smov 192
    %v5751 = vld [vmem:[%s5749] ss:$16 sm:%s5750]
    %vm5752 = vcmask 1047558
    %v5753 = vsel %vm5752, %v5751, %v5748
    %5754 = vrot.lane.b32.xlu0 %v5753, 96
    %v5755 = vpop.permute.xlu0 %5754
    %vm5756 = vcmask 851712
    %s5757 = scalar_lea.vmem [#allocation0], 48
    %5758 = vst.msk [vmem:[%s5757] sm:$0xff] %vm5756, %v5755
    %s5759 = scalar_lea.vmem [#allocation1], 1292
    %s5760 = smov 3
    %v5761 = vld [vmem:[%s5759] ss:$16 sm:%s5760]
    %s5762 = scalar_lea.vmem [#allocation1], 1292
    %s5763 = smov 12
    %v5764 = vld [vmem:[%s5762] ss:$16 sm:%s5763]
    %vm5765 = vcmask 1043458
    %v5766 = vsel %vm5765, %v5764, %v5761
    %s5767 = scalar_lea.vmem [#allocation1], 1292
    %s5768 = smov 48
    %v5769 = vld [vmem:[%s5767] ss:$16 sm:%s5768]
    %vm5770 = vcmask 1045508
    %v5771 = vsel %vm5770, %v5769, %v5766
    %s5772 = scalar_lea.vmem [#allocation1], 1292
    %s5773 = smov 192
    %v5774 = vld [vmem:[%s5772] ss:$16 sm:%s5773]
    %vm5775 = vcmask 1047558
    %v5776 = vsel %vm5775, %v5774, %v5771
    %5777 = vrot.lane.b32.xlu0 %v5776, 96
    %v5778 = vpop.permute.xlu0 %5777
    %vm5779 = vcmask 851712
    %s5780 = scalar_lea.vmem [#allocation0], 80
    %5781 = vst.msk [vmem:[%s5780] sm:$0xff] %vm5779, %v5778
    %s5782 = scalar_lea.vmem [#allocation1], 1804
    %s5783 = smov 3
    %v5784 = vld [vmem:[%s5782] ss:$16 sm:%s5783]
    %s5785 = scalar_lea.vmem [#allocation1], 1804
    %s5786 = smov 12
    %v5787 = vld [vmem:[%s5785] ss:$16 sm:%s5786]
    %vm5788 = vcmask 1043458
    %v5789 = vsel %vm5788, %v5787, %v5784
    %s5790 = scalar_lea.vmem [#allocation1], 1804
    %s5791 = smov 48
    %v5792 = vld [vmem:[%s5790] ss:$16 sm:%s5791]
    %vm5793 = vcmask 1045508
    %v5794 = vsel %vm5793, %v5792, %v5789
    %s5795 = scalar_lea.vmem [#allocation1], 1804
    %s5796 = smov 192
    %v5797 = vld [vmem:[%s5795] ss:$16 sm:%s5796]
    %vm5798 = vcmask 1047558
    %v5799 = vsel %vm5798, %v5797, %v5794
    %5800 = vrot.lane.b32.xlu0 %v5799, 96
    %v5801 = vpop.permute.xlu0 %5800
    %vm5802 = vcmask 851712
    %s5803 = scalar_lea.vmem [#allocation0], 112
    %5804 = vst.msk [vmem:[%s5803] sm:$0xff] %vm5802, %v5801
    %s5805 = scalar_lea.vmem [#allocation1], 396
    %s5806 = smov 3
    %v5807 = vld [vmem:[%s5805] ss:$16 sm:%s5806]
    %s5808 = scalar_lea.vmem [#allocation1], 396
    %s5809 = smov 12
    %v5810 = vld [vmem:[%s5808] ss:$16 sm:%s5809]
    %vm5811 = vcmask 1043458
    %v5812 = vsel %vm5811, %v5810, %v5807
    %s5813 = scalar_lea.vmem [#allocation1], 396
    %s5814 = smov 48
    %v5815 = vld [vmem:[%s5813] ss:$16 sm:%s5814]
    %vm5816 = vcmask 1045508
    %v5817 = vsel %vm5816, %v5815, %v5812
    %s5818 = scalar_lea.vmem [#allocation1], 396
    %s5819 = smov 192
    %v5820 = vld [vmem:[%s5818] ss:$16 sm:%s5819]
    %vm5821 = vcmask 1047558
    %v5822 = vsel %vm5821, %v5820, %v5817
    %5823 = vrot.lane.b32.xlu0 %v5822, 96
    %v5824 = vpop.permute.xlu0 %5823
    %vm5825 = vcmask 851712
    %s5826 = scalar_lea.vmem [#allocation0], 24
    %5827 = vst.msk [vmem:[%s5826] sm:$0xff] %vm5825, %v5824
    %s5828 = scalar_lea.vmem [#allocation1], 908
    %s5829 = smov 3
    %v5830 = vld [vmem:[%s5828] ss:$16 sm:%s5829]
    %s5831 = scalar_lea.vmem [#allocation1], 908
    %s5832 = smov 12
    %v5833 = vld [vmem:[%s5831] ss:$16 sm:%s5832]
    %vm5834 = vcmask 1043458
    %v5835 = vsel %vm5834, %v5833, %v5830
    %s5836 = scalar_lea.vmem [#allocation1], 908
    %s5837 = smov 48
    %v5838 = vld [vmem:[%s5836] ss:$16 sm:%s5837]
    %vm5839 = vcmask 1045508
    %v5840 = vsel %vm5839, %v5838, %v5835
    %s5841 = scalar_lea.vmem [#allocation1], 908
    %s5842 = smov 192
    %v5843 = vld [vmem:[%s5841] ss:$16 sm:%s5842]
    %vm5844 = vcmask 1047558
    %v5845 = vsel %vm5844, %v5843, %v5840
    %5846 = vrot.lane.b32.xlu0 %v5845, 96
    %v5847 = vpop.permute.xlu0 %5846
    %vm5848 = vcmask 851712
    %s5849 = scalar_lea.vmem [#allocation0], 56
    %5850 = vst.msk [vmem:[%s5849] sm:$0xff] %vm5848, %v5847
    %s5851 = scalar_lea.vmem [#allocation1], 1420
    %s5852 = smov 3
    %v5853 = vld [vmem:[%s5851] ss:$16 sm:%s5852]
    %s5854 = scalar_lea.vmem [#allocation1], 1420
    %s5855 = smov 12
    %v5856 = vld [vmem:[%s5854] ss:$16 sm:%s5855]
    %vm5857 = vcmask 1043458
    %v5858 = vsel %vm5857, %v5856, %v5853
    %s5859 = scalar_lea.vmem [#allocation1], 1420
    %s5860 = smov 48
    %v5861 = vld [vmem:[%s5859] ss:$16 sm:%s5860]
    %vm5862 = vcmask 1045508
    %v5863 = vsel %vm5862, %v5861, %v5858
    %s5864 = scalar_lea.vmem [#allocation1], 1420
    %s5865 = smov 192
    %v5866 = vld [vmem:[%s5864] ss:$16 sm:%s5865]
    %vm5867 = vcmask 1047558
    %v5868 = vsel %vm5867, %v5866, %v5863
    %5869 = vrot.lane.b32.xlu0 %v5868, 96
    %v5870 = vpop.permute.xlu0 %5869
    %vm5871 = vcmask 851712
    %s5872 = scalar_lea.vmem [#allocation0], 88
    %5873 = vst.msk [vmem:[%s5872] sm:$0xff] %vm5871, %v5870
    %s5874 = scalar_lea.vmem [#allocation1], 1932
    %s5875 = smov 3
    %v5876 = vld [vmem:[%s5874] ss:$16 sm:%s5875]
    %s5877 = scalar_lea.vmem [#allocation1], 1932
    %s5878 = smov 12
    %v5879 = vld [vmem:[%s5877] ss:$16 sm:%s5878]
    %vm5880 = vcmask 1043458
    %v5881 = vsel %vm5880, %v5879, %v5876
    %s5882 = scalar_lea.vmem [#allocation1], 1932
    %s5883 = smov 48
    %v5884 = vld [vmem:[%s5882] ss:$16 sm:%s5883]
    %vm5885 = vcmask 1045508
    %v5886 = vsel %vm5885, %v5884, %v5881
    %s5887 = scalar_lea.vmem [#allocation1], 1932
    %s5888 = smov 192
    %v5889 = vld [vmem:[%s5887] ss:$16 sm:%s5888]
    %vm5890 = vcmask 1047558
    %v5891 = vsel %vm5890, %v5889, %v5886
    %5892 = vrot.lane.b32.xlu0 %v5891, 96
    %v5893 = vpop.permute.xlu0 %5892
    %vm5894 = vcmask 851712
    %s5895 = scalar_lea.vmem [#allocation0], 120
    %5896 = vst.msk [vmem:[%s5895] sm:$0xff] %vm5894, %v5893
    %s5897 = scalar_lea.vmem [#allocation1], 11
    %s5898 = smov 3
    %v5899 = vld [vmem:[%s5897] ss:$16 sm:%s5898]
    %s5900 = scalar_lea.vmem [#allocation1], 11
    %s5901 = smov 12
    %v5902 = vld [vmem:[%s5900] ss:$16 sm:%s5901]
    %vm5903 = vcmask 1043458
    %v5904 = vsel %vm5903, %v5902, %v5899
    %s5905 = scalar_lea.vmem [#allocation1], 11
    %s5906 = smov 48
    %v5907 = vld [vmem:[%s5905] ss:$16 sm:%s5906]
    %vm5908 = vcmask 1045508
    %v5909 = vsel %vm5908, %v5907, %v5904
    %s5910 = scalar_lea.vmem [#allocation1], 11
    %s5911 = smov 192
    %v5912 = vld [vmem:[%s5910] ss:$16 sm:%s5911]
    %vm5913 = vcmask 1047558
    %v5914 = vsel %vm5913, %v5912, %v5909
    %5915 = vrot.lane.b32.xlu0 %v5914, 88
    %v5916 = vpop.permute.xlu0 %5915
    %vm5917 = vcmask 786112
    %5918 = vst.msk [vmem:[#allocation0] sm:$0xff] %vm5917, %v5916
    %s5919 = scalar_lea.vmem [#allocation1], 523
    %s5920 = smov 3
    %v5921 = vld [vmem:[%s5919] ss:$16 sm:%s5920]
    %s5922 = scalar_lea.vmem [#allocation1], 523
    %s5923 = smov 12
    %v5924 = vld [vmem:[%s5922] ss:$16 sm:%s5923]
    %vm5925 = vcmask 1043458
    %v5926 = vsel %vm5925, %v5924, %v5921
    %s5927 = scalar_lea.vmem [#allocation1], 523
    %s5928 = smov 48
    %v5929 = vld [vmem:[%s5927] ss:$16 sm:%s5928]
    %vm5930 = vcmask 1045508
    %v5931 = vsel %vm5930, %v5929, %v5926
    %s5932 = scalar_lea.vmem [#allocation1], 523
    %s5933 = smov 192
    %v5934 = vld [vmem:[%s5932] ss:$16 sm:%s5933]
    %vm5935 = vcmask 1047558
    %v5936 = vsel %vm5935, %v5934, %v5931
    %5937 = vrot.lane.b32.xlu0 %v5936, 88
    %v5938 = vpop.permute.xlu0 %5937
    %vm5939 = vcmask 786112
    %s5940 = scalar_lea.vmem [#allocation0], 32
    %5941 = vst.msk [vmem:[%s5940] sm:$0xff] %vm5939, %v5938
    %s5942 = scalar_lea.vmem [#allocation1], 1035
    %s5943 = smov 3
    %v5944 = vld [vmem:[%s5942] ss:$16 sm:%s5943]
    %s5945 = scalar_lea.vmem [#allocation1], 1035
    %s5946 = smov 12
    %v5947 = vld [vmem:[%s5945] ss:$16 sm:%s5946]
    %vm5948 = vcmask 1043458
    %v5949 = vsel %vm5948, %v5947, %v5944
    %s5950 = scalar_lea.vmem [#allocation1], 1035
    %s5951 = smov 48
    %v5952 = vld [vmem:[%s5950] ss:$16 sm:%s5951]
    %vm5953 = vcmask 1045508
    %v5954 = vsel %vm5953, %v5952, %v5949
    %s5955 = scalar_lea.vmem [#allocation1], 1035
    %s5956 = smov 192
    %v5957 = vld [vmem:[%s5955] ss:$16 sm:%s5956]
    %vm5958 = vcmask 1047558
    %v5959 = vsel %vm5958, %v5957, %v5954
    %5960 = vrot.lane.b32.xlu0 %v5959, 88
    %v5961 = vpop.permute.xlu0 %5960
    %vm5962 = vcmask 786112
    %s5963 = scalar_lea.vmem [#allocation0], 64
    %5964 = vst.msk [vmem:[%s5963] sm:$0xff] %vm5962, %v5961
    %s5965 = scalar_lea.vmem [#allocation1], 1547
    %s5966 = smov 3
    %v5967 = vld [vmem:[%s5965] ss:$16 sm:%s5966]
    %s5968 = scalar_lea.vmem [#allocation1], 1547
    %s5969 = smov 12
    %v5970 = vld [vmem:[%s5968] ss:$16 sm:%s5969]
    %vm5971 = vcmask 1043458
    %v5972 = vsel %vm5971, %v5970, %v5967
    %s5973 = scalar_lea.vmem [#allocation1], 1547
    %s5974 = smov 48
    %v5975 = vld [vmem:[%s5973] ss:$16 sm:%s5974]
    %vm5976 = vcmask 1045508
    %v5977 = vsel %vm5976, %v5975, %v5972
    %s5978 = scalar_lea.vmem [#allocation1], 1547
    %s5979 = smov 192
    %v5980 = vld [vmem:[%s5978] ss:$16 sm:%s5979]
    %vm5981 = vcmask 1047558
    %v5982 = vsel %vm5981, %v5980, %v5977
    %5983 = vrot.lane.b32.xlu0 %v5982, 88
    %v5984 = vpop.permute.xlu0 %5983
    %vm5985 = vcmask 786112
    %s5986 = scalar_lea.vmem [#allocation0], 96
    %5987 = vst.msk [vmem:[%s5986] sm:$0xff] %vm5985, %v5984
    %s5988 = scalar_lea.vmem [#allocation1], 139
    %s5989 = smov 3
    %v5990 = vld [vmem:[%s5988] ss:$16 sm:%s5989]
    %s5991 = scalar_lea.vmem [#allocation1], 139
    %s5992 = smov 12
    %v5993 = vld [vmem:[%s5991] ss:$16 sm:%s5992]
    %vm5994 = vcmask 1043458
    %v5995 = vsel %vm5994, %v5993, %v5990
    %s5996 = scalar_lea.vmem [#allocation1], 139
    %s5997 = smov 48
    %v5998 = vld [vmem:[%s5996] ss:$16 sm:%s5997]
    %vm5999 = vcmask 1045508
    %v6000 = vsel %vm5999, %v5998, %v5995
    %s6001 = scalar_lea.vmem [#allocation1], 139
    %s6002 = smov 192
    %v6003 = vld [vmem:[%s6001] ss:$16 sm:%s6002]
    %vm6004 = vcmask 1047558
    %v6005 = vsel %vm6004, %v6003, %v6000
    %6006 = vrot.lane.b32.xlu0 %v6005, 88
    %v6007 = vpop.permute.xlu0 %6006
    %vm6008 = vcmask 786112
    %s6009 = scalar_lea.vmem [#allocation0], 8
    %6010 = vst.msk [vmem:[%s6009] sm:$0xff] %vm6008, %v6007
    %s6011 = scalar_lea.vmem [#allocation1], 651
    %s6012 = smov 3
    %v6013 = vld [vmem:[%s6011] ss:$16 sm:%s6012]
    %s6014 = scalar_lea.vmem [#allocation1], 651
    %s6015 = smov 12
    %v6016 = vld [vmem:[%s6014] ss:$16 sm:%s6015]
    %vm6017 = vcmask 1043458
    %v6018 = vsel %vm6017, %v6016, %v6013
    %s6019 = scalar_lea.vmem [#allocation1], 651
    %s6020 = smov 48
    %v6021 = vld [vmem:[%s6019] ss:$16 sm:%s6020]
    %vm6022 = vcmask 1045508
    %v6023 = vsel %vm6022, %v6021, %v6018
    %s6024 = scalar_lea.vmem [#allocation1], 651
    %s6025 = smov 192
    %v6026 = vld [vmem:[%s6024] ss:$16 sm:%s6025]
    %vm6027 = vcmask 1047558
    %v6028 = vsel %vm6027, %v6026, %v6023
    %6029 = vrot.lane.b32.xlu0 %v6028, 88
    %v6030 = vpop.permute.xlu0 %6029
    %vm6031 = vcmask 786112
    %s6032 = scalar_lea.vmem [#allocation0], 40
    %6033 = vst.msk [vmem:[%s6032] sm:$0xff] %vm6031, %v6030
    %s6034 = scalar_lea.vmem [#allocation1], 1163
    %s6035 = smov 3
    %v6036 = vld [vmem:[%s6034] ss:$16 sm:%s6035]
    %s6037 = scalar_lea.vmem [#allocation1], 1163
    %s6038 = smov 12
    %v6039 = vld [vmem:[%s6037] ss:$16 sm:%s6038]
    %vm6040 = vcmask 1043458
    %v6041 = vsel %vm6040, %v6039, %v6036
    %s6042 = scalar_lea.vmem [#allocation1], 1163
    %s6043 = smov 48
    %v6044 = vld [vmem:[%s6042] ss:$16 sm:%s6043]
    %vm6045 = vcmask 1045508
    %v6046 = vsel %vm6045, %v6044, %v6041
    %s6047 = scalar_lea.vmem [#allocation1], 1163
    %s6048 = smov 192
    %v6049 = vld [vmem:[%s6047] ss:$16 sm:%s6048]
    %vm6050 = vcmask 1047558
    %v6051 = vsel %vm6050, %v6049, %v6046
    %6052 = vrot.lane.b32.xlu0 %v6051, 88
    %v6053 = vpop.permute.xlu0 %6052
    %vm6054 = vcmask 786112
    %s6055 = scalar_lea.vmem [#allocation0], 72
    %6056 = vst.msk [vmem:[%s6055] sm:$0xff] %vm6054, %v6053
    %s6057 = scalar_lea.vmem [#allocation1], 1675
    %s6058 = smov 3
    %v6059 = vld [vmem:[%s6057] ss:$16 sm:%s6058]
    %s6060 = scalar_lea.vmem [#allocation1], 1675
    %s6061 = smov 12
    %v6062 = vld [vmem:[%s6060] ss:$16 sm:%s6061]
    %vm6063 = vcmask 1043458
    %v6064 = vsel %vm6063, %v6062, %v6059
    %s6065 = scalar_lea.vmem [#allocation1], 1675
    %s6066 = smov 48
    %v6067 = vld [vmem:[%s6065] ss:$16 sm:%s6066]
    %vm6068 = vcmask 1045508
    %v6069 = vsel %vm6068, %v6067, %v6064
    %s6070 = scalar_lea.vmem [#allocation1], 1675
    %s6071 = smov 192
    %v6072 = vld [vmem:[%s6070] ss:$16 sm:%s6071]
    %vm6073 = vcmask 1047558
    %v6074 = vsel %vm6073, %v6072, %v6069
    %6075 = vrot.lane.b32.xlu0 %v6074, 88
    %v6076 = vpop.permute.xlu0 %6075
    %vm6077 = vcmask 786112
    %s6078 = scalar_lea.vmem [#allocation0], 104
    %6079 = vst.msk [vmem:[%s6078] sm:$0xff] %vm6077, %v6076
    %s6080 = scalar_lea.vmem [#allocation1], 267
    %s6081 = smov 3
    %v6082 = vld [vmem:[%s6080] ss:$16 sm:%s6081]
    %s6083 = scalar_lea.vmem [#allocation1], 267
    %s6084 = smov 12
    %v6085 = vld [vmem:[%s6083] ss:$16 sm:%s6084]
    %vm6086 = vcmask 1043458
    %v6087 = vsel %vm6086, %v6085, %v6082
    %s6088 = scalar_lea.vmem [#allocation1], 267
    %s6089 = smov 48
    %v6090 = vld [vmem:[%s6088] ss:$16 sm:%s6089]
    %vm6091 = vcmask 1045508
    %v6092 = vsel %vm6091, %v6090, %v6087
    %s6093 = scalar_lea.vmem [#allocation1], 267
    %s6094 = smov 192
    %v6095 = vld [vmem:[%s6093] ss:$16 sm:%s6094]
    %vm6096 = vcmask 1047558
    %v6097 = vsel %vm6096, %v6095, %v6092
    %6098 = vrot.lane.b32.xlu0 %v6097, 88
    %v6099 = vpop.permute.xlu0 %6098
    %vm6100 = vcmask 786112
    %s6101 = scalar_lea.vmem [#allocation0], 16
    %6102 = vst.msk [vmem:[%s6101] sm:$0xff] %vm6100, %v6099
    %s6103 = scalar_lea.vmem [#allocation1], 779
    %s6104 = smov 3
    %v6105 = vld [vmem:[%s6103] ss:$16 sm:%s6104]
    %s6106 = scalar_lea.vmem [#allocation1], 779
    %s6107 = smov 12
    %v6108 = vld [vmem:[%s6106] ss:$16 sm:%s6107]
    %vm6109 = vcmask 1043458
    %v6110 = vsel %vm6109, %v6108, %v6105
    %s6111 = scalar_lea.vmem [#allocation1], 779
    %s6112 = smov 48
    %v6113 = vld [vmem:[%s6111] ss:$16 sm:%s6112]
    %vm6114 = vcmask 1045508
    %v6115 = vsel %vm6114, %v6113, %v6110
    %s6116 = scalar_lea.vmem [#allocation1], 779
    %s6117 = smov 192
    %v6118 = vld [vmem:[%s6116] ss:$16 sm:%s6117]
    %vm6119 = vcmask 1047558
    %v6120 = vsel %vm6119, %v6118, %v6115
    %6121 = vrot.lane.b32.xlu0 %v6120, 88
    %v6122 = vpop.permute.xlu0 %6121
    %vm6123 = vcmask 786112
    %s6124 = scalar_lea.vmem [#allocation0], 48
    %6125 = vst.msk [vmem:[%s6124] sm:$0xff] %vm6123, %v6122
    %s6126 = scalar_lea.vmem [#allocation1], 1291
    %s6127 = smov 3
    %v6128 = vld [vmem:[%s6126] ss:$16 sm:%s6127]
    %s6129 = scalar_lea.vmem [#allocation1], 1291
    %s6130 = smov 12
    %v6131 = vld [vmem:[%s6129] ss:$16 sm:%s6130]
    %vm6132 = vcmask 1043458
    %v6133 = vsel %vm6132, %v6131, %v6128
    %s6134 = scalar_lea.vmem [#allocation1], 1291
    %s6135 = smov 48
    %v6136 = vld [vmem:[%s6134] ss:$16 sm:%s6135]
    %vm6137 = vcmask 1045508
    %v6138 = vsel %vm6137, %v6136, %v6133
    %s6139 = scalar_lea.vmem [#allocation1], 1291
    %s6140 = smov 192
    %v6141 = vld [vmem:[%s6139] ss:$16 sm:%s6140]
    %vm6142 = vcmask 1047558
    %v6143 = vsel %vm6142, %v6141, %v6138
    %6144 = vrot.lane.b32.xlu0 %v6143, 88
    %v6145 = vpop.permute.xlu0 %6144
    %vm6146 = vcmask 786112
    %s6147 = scalar_lea.vmem [#allocation0], 80
    %6148 = vst.msk [vmem:[%s6147] sm:$0xff] %vm6146, %v6145
    %s6149 = scalar_lea.vmem [#allocation1], 1803
    %s6150 = smov 3
    %v6151 = vld [vmem:[%s6149] ss:$16 sm:%s6150]
    %s6152 = scalar_lea.vmem [#allocation1], 1803
    %s6153 = smov 12
    %v6154 = vld [vmem:[%s6152] ss:$16 sm:%s6153]
    %vm6155 = vcmask 1043458
    %v6156 = vsel %vm6155, %v6154, %v6151
    %s6157 = scalar_lea.vmem [#allocation1], 1803
    %s6158 = smov 48
    %v6159 = vld [vmem:[%s6157] ss:$16 sm:%s6158]
    %vm6160 = vcmask 1045508
    %v6161 = vsel %vm6160, %v6159, %v6156
    %s6162 = scalar_lea.vmem [#allocation1], 1803
    %s6163 = smov 192
    %v6164 = vld [vmem:[%s6162] ss:$16 sm:%s6163]
    %vm6165 = vcmask 1047558
    %v6166 = vsel %vm6165, %v6164, %v6161
    %6167 = vrot.lane.b32.xlu0 %v6166, 88
    %v6168 = vpop.permute.xlu0 %6167
    %vm6169 = vcmask 786112
    %s6170 = scalar_lea.vmem [#allocation0], 112
    %6171 = vst.msk [vmem:[%s6170] sm:$0xff] %vm6169, %v6168
    %s6172 = scalar_lea.vmem [#allocation1], 395
    %s6173 = smov 3
    %v6174 = vld [vmem:[%s6172] ss:$16 sm:%s6173]
    %s6175 = scalar_lea.vmem [#allocation1], 395
    %s6176 = smov 12
    %v6177 = vld [vmem:[%s6175] ss:$16 sm:%s6176]
    %vm6178 = vcmask 1043458
    %v6179 = vsel %vm6178, %v6177, %v6174
    %s6180 = scalar_lea.vmem [#allocation1], 395
    %s6181 = smov 48
    %v6182 = vld [vmem:[%s6180] ss:$16 sm:%s6181]
    %vm6183 = vcmask 1045508
    %v6184 = vsel %vm6183, %v6182, %v6179
    %s6185 = scalar_lea.vmem [#allocation1], 395
    %s6186 = smov 192
    %v6187 = vld [vmem:[%s6185] ss:$16 sm:%s6186]
    %vm6188 = vcmask 1047558
    %v6189 = vsel %vm6188, %v6187, %v6184
    %6190 = vrot.lane.b32.xlu0 %v6189, 88
    %v6191 = vpop.permute.xlu0 %6190
    %vm6192 = vcmask 786112
    %s6193 = scalar_lea.vmem [#allocation0], 24
    %6194 = vst.msk [vmem:[%s6193] sm:$0xff] %vm6192, %v6191
    %s6195 = scalar_lea.vmem [#allocation1], 907
    %s6196 = smov 3
    %v6197 = vld [vmem:[%s6195] ss:$16 sm:%s6196]
    %s6198 = scalar_lea.vmem [#allocation1], 907
    %s6199 = smov 12
    %v6200 = vld [vmem:[%s6198] ss:$16 sm:%s6199]
    %vm6201 = vcmask 1043458
    %v6202 = vsel %vm6201, %v6200, %v6197
    %s6203 = scalar_lea.vmem [#allocation1], 907
    %s6204 = smov 48
    %v6205 = vld [vmem:[%s6203] ss:$16 sm:%s6204]
    %vm6206 = vcmask 1045508
    %v6207 = vsel %vm6206, %v6205, %v6202
    %s6208 = scalar_lea.vmem [#allocation1], 907
    %s6209 = smov 192
    %v6210 = vld [vmem:[%s6208] ss:$16 sm:%s6209]
    %vm6211 = vcmask 1047558
    %v6212 = vsel %vm6211, %v6210, %v6207
    %6213 = vrot.lane.b32.xlu0 %v6212, 88
    %v6214 = vpop.permute.xlu0 %6213
    %vm6215 = vcmask 786112
    %s6216 = scalar_lea.vmem [#allocation0], 56
    %6217 = vst.msk [vmem:[%s6216] sm:$0xff] %vm6215, %v6214
    %s6218 = scalar_lea.vmem [#allocation1], 1419
    %s6219 = smov 3
    %v6220 = vld [vmem:[%s6218] ss:$16 sm:%s6219]
    %s6221 = scalar_lea.vmem [#allocation1], 1419
    %s6222 = smov 12
    %v6223 = vld [vmem:[%s6221] ss:$16 sm:%s6222]
    %vm6224 = vcmask 1043458
    %v6225 = vsel %vm6224, %v6223, %v6220
    %s6226 = scalar_lea.vmem [#allocation1], 1419
    %s6227 = smov 48
    %v6228 = vld [vmem:[%s6226] ss:$16 sm:%s6227]
    %vm6229 = vcmask 1045508
    %v6230 = vsel %vm6229, %v6228, %v6225
    %s6231 = scalar_lea.vmem [#allocation1], 1419
    %s6232 = smov 192
    %v6233 = vld [vmem:[%s6231] ss:$16 sm:%s6232]
    %vm6234 = vcmask 1047558
    %v6235 = vsel %vm6234, %v6233, %v6230
    %6236 = vrot.lane.b32.xlu0 %v6235, 88
    %v6237 = vpop.permute.xlu0 %6236
    %vm6238 = vcmask 786112
    %s6239 = scalar_lea.vmem [#allocation0], 88
    %6240 = vst.msk [vmem:[%s6239] sm:$0xff] %vm6238, %v6237
    %s6241 = scalar_lea.vmem [#allocation1], 1931
    %s6242 = smov 3
    %v6243 = vld [vmem:[%s6241] ss:$16 sm:%s6242]
    %s6244 = scalar_lea.vmem [#allocation1], 1931
    %s6245 = smov 12
    %v6246 = vld [vmem:[%s6244] ss:$16 sm:%s6245]
    %vm6247 = vcmask 1043458
    %v6248 = vsel %vm6247, %v6246, %v6243
    %s6249 = scalar_lea.vmem [#allocation1], 1931
    %s6250 = smov 48
    %v6251 = vld [vmem:[%s6249] ss:$16 sm:%s6250]
    %vm6252 = vcmask 1045508
    %v6253 = vsel %vm6252, %v6251, %v6248
    %s6254 = scalar_lea.vmem [#allocation1], 1931
    %s6255 = smov 192
    %v6256 = vld [vmem:[%s6254] ss:$16 sm:%s6255]
    %vm6257 = vcmask 1047558
    %v6258 = vsel %vm6257, %v6256, %v6253
    %6259 = vrot.lane.b32.xlu0 %v6258, 88
    %v6260 = vpop.permute.xlu0 %6259
    %vm6261 = vcmask 786112
    %s6262 = scalar_lea.vmem [#allocation0], 120
    %6263 = vst.msk [vmem:[%s6262] sm:$0xff] %vm6261, %v6260
    %s6264 = scalar_lea.vmem [#allocation1], 10
    %s6265 = smov 3
    %v6266 = vld [vmem:[%s6264] ss:$16 sm:%s6265]
    %s6267 = scalar_lea.vmem [#allocation1], 10
    %s6268 = smov 12
    %v6269 = vld [vmem:[%s6267] ss:$16 sm:%s6268]
    %vm6270 = vcmask 1043458
    %v6271 = vsel %vm6270, %v6269, %v6266
    %s6272 = scalar_lea.vmem [#allocation1], 10
    %s6273 = smov 48
    %v6274 = vld [vmem:[%s6272] ss:$16 sm:%s6273]
    %vm6275 = vcmask 1045508
    %v6276 = vsel %vm6275, %v6274, %v6271
    %s6277 = scalar_lea.vmem [#allocation1], 10
    %s6278 = smov 192
    %v6279 = vld [vmem:[%s6277] ss:$16 sm:%s6278]
    %vm6280 = vcmask 1047558
    %v6281 = vsel %vm6280, %v6279, %v6276
    %6282 = vrot.lane.b32.xlu0 %v6281, 80
    %v6283 = vpop.permute.xlu0 %6282
    %vm6284 = vcmask 720512
    %6285 = vst.msk [vmem:[#allocation0] sm:$0xff] %vm6284, %v6283
    %s6286 = scalar_lea.vmem [#allocation1], 522
    %s6287 = smov 3
    %v6288 = vld [vmem:[%s6286] ss:$16 sm:%s6287]
    %s6289 = scalar_lea.vmem [#allocation1], 522
    %s6290 = smov 12
    %v6291 = vld [vmem:[%s6289] ss:$16 sm:%s6290]
    %vm6292 = vcmask 1043458
    %v6293 = vsel %vm6292, %v6291, %v6288
    %s6294 = scalar_lea.vmem [#allocation1], 522
    %s6295 = smov 48
    %v6296 = vld [vmem:[%s6294] ss:$16 sm:%s6295]
    %vm6297 = vcmask 1045508
    %v6298 = vsel %vm6297, %v6296, %v6293
    %s6299 = scalar_lea.vmem [#allocation1], 522
    %s6300 = smov 192
    %v6301 = vld [vmem:[%s6299] ss:$16 sm:%s6300]
    %vm6302 = vcmask 1047558
    %v6303 = vsel %vm6302, %v6301, %v6298
    %6304 = vrot.lane.b32.xlu0 %v6303, 80
    %v6305 = vpop.permute.xlu0 %6304
    %vm6306 = vcmask 720512
    %s6307 = scalar_lea.vmem [#allocation0], 32
    %6308 = vst.msk [vmem:[%s6307] sm:$0xff] %vm6306, %v6305
    %s6309 = scalar_lea.vmem [#allocation1], 1034
    %s6310 = smov 3
    %v6311 = vld [vmem:[%s6309] ss:$16 sm:%s6310]
    %s6312 = scalar_lea.vmem [#allocation1], 1034
    %s6313 = smov 12
    %v6314 = vld [vmem:[%s6312] ss:$16 sm:%s6313]
    %vm6315 = vcmask 1043458
    %v6316 = vsel %vm6315, %v6314, %v6311
    %s6317 = scalar_lea.vmem [#allocation1], 1034
    %s6318 = smov 48
    %v6319 = vld [vmem:[%s6317] ss:$16 sm:%s6318]
    %vm6320 = vcmask 1045508
    %v6321 = vsel %vm6320, %v6319, %v6316
    %s6322 = scalar_lea.vmem [#allocation1], 1034
    %s6323 = smov 192
    %v6324 = vld [vmem:[%s6322] ss:$16 sm:%s6323]
    %vm6325 = vcmask 1047558
    %v6326 = vsel %vm6325, %v6324, %v6321
    %6327 = vrot.lane.b32.xlu0 %v6326, 80
    %v6328 = vpop.permute.xlu0 %6327
    %vm6329 = vcmask 720512
    %s6330 = scalar_lea.vmem [#allocation0], 64
    %6331 = vst.msk [vmem:[%s6330] sm:$0xff] %vm6329, %v6328
    %s6332 = scalar_lea.vmem [#allocation1], 1546
    %s6333 = smov 3
    %v6334 = vld [vmem:[%s6332] ss:$16 sm:%s6333]
    %s6335 = scalar_lea.vmem [#allocation1], 1546
    %s6336 = smov 12
    %v6337 = vld [vmem:[%s6335] ss:$16 sm:%s6336]
    %vm6338 = vcmask 1043458
    %v6339 = vsel %vm6338, %v6337, %v6334
    %s6340 = scalar_lea.vmem [#allocation1], 1546
    %s6341 = smov 48
    %v6342 = vld [vmem:[%s6340] ss:$16 sm:%s6341]
    %vm6343 = vcmask 1045508
    %v6344 = vsel %vm6343, %v6342, %v6339
    %s6345 = scalar_lea.vmem [#allocation1], 1546
    %s6346 = smov 192
    %v6347 = vld [vmem:[%s6345] ss:$16 sm:%s6346]
    %vm6348 = vcmask 1047558
    %v6349 = vsel %vm6348, %v6347, %v6344
    %6350 = vrot.lane.b32.xlu0 %v6349, 80
    %v6351 = vpop.permute.xlu0 %6350
    %vm6352 = vcmask 720512
    %s6353 = scalar_lea.vmem [#allocation0], 96
    %6354 = vst.msk [vmem:[%s6353] sm:$0xff] %vm6352, %v6351
    %s6355 = scalar_lea.vmem [#allocation1], 138
    %s6356 = smov 3
    %v6357 = vld [vmem:[%s6355] ss:$16 sm:%s6356]
    %s6358 = scalar_lea.vmem [#allocation1], 138
    %s6359 = smov 12
    %v6360 = vld [vmem:[%s6358] ss:$16 sm:%s6359]
    %vm6361 = vcmask 1043458
    %v6362 = vsel %vm6361, %v6360, %v6357
    %s6363 = scalar_lea.vmem [#allocation1], 138
    %s6364 = smov 48
    %v6365 = vld [vmem:[%s6363] ss:$16 sm:%s6364]
    %vm6366 = vcmask 1045508
    %v6367 = vsel %vm6366, %v6365, %v6362
    %s6368 = scalar_lea.vmem [#allocation1], 138
    %s6369 = smov 192
    %v6370 = vld [vmem:[%s6368] ss:$16 sm:%s6369]
    %vm6371 = vcmask 1047558
    %v6372 = vsel %vm6371, %v6370, %v6367
    %6373 = vrot.lane.b32.xlu0 %v6372, 80
    %v6374 = vpop.permute.xlu0 %6373
    %vm6375 = vcmask 720512
    %s6376 = scalar_lea.vmem [#allocation0], 8
    %6377 = vst.msk [vmem:[%s6376] sm:$0xff] %vm6375, %v6374
    %s6378 = scalar_lea.vmem [#allocation1], 650
    %s6379 = smov 3
    %v6380 = vld [vmem:[%s6378] ss:$16 sm:%s6379]
    %s6381 = scalar_lea.vmem [#allocation1], 650
    %s6382 = smov 12
    %v6383 = vld [vmem:[%s6381] ss:$16 sm:%s6382]
    %vm6384 = vcmask 1043458
    %v6385 = vsel %vm6384, %v6383, %v6380
    %s6386 = scalar_lea.vmem [#allocation1], 650
    %s6387 = smov 48
    %v6388 = vld [vmem:[%s6386] ss:$16 sm:%s6387]
    %vm6389 = vcmask 1045508
    %v6390 = vsel %vm6389, %v6388, %v6385
    %s6391 = scalar_lea.vmem [#allocation1], 650
    %s6392 = smov 192
    %v6393 = vld [vmem:[%s6391] ss:$16 sm:%s6392]
    %vm6394 = vcmask 1047558
    %v6395 = vsel %vm6394, %v6393, %v6390
    %6396 = vrot.lane.b32.xlu0 %v6395, 80
    %v6397 = vpop.permute.xlu0 %6396
    %vm6398 = vcmask 720512
    %s6399 = scalar_lea.vmem [#allocation0], 40
    %6400 = vst.msk [vmem:[%s6399] sm:$0xff] %vm6398, %v6397
    %s6401 = scalar_lea.vmem [#allocation1], 1162
    %s6402 = smov 3
    %v6403 = vld [vmem:[%s6401] ss:$16 sm:%s6402]
    %s6404 = scalar_lea.vmem [#allocation1], 1162
    %s6405 = smov 12
    %v6406 = vld [vmem:[%s6404] ss:$16 sm:%s6405]
    %vm6407 = vcmask 1043458
    %v6408 = vsel %vm6407, %v6406, %v6403
    %s6409 = scalar_lea.vmem [#allocation1], 1162
    %s6410 = smov 48
    %v6411 = vld [vmem:[%s6409] ss:$16 sm:%s6410]
    %vm6412 = vcmask 1045508
    %v6413 = vsel %vm6412, %v6411, %v6408
    %s6414 = scalar_lea.vmem [#allocation1], 1162
    %s6415 = smov 192
    %v6416 = vld [vmem:[%s6414] ss:$16 sm:%s6415]
    %vm6417 = vcmask 1047558
    %v6418 = vsel %vm6417, %v6416, %v6413
    %6419 = vrot.lane.b32.xlu0 %v6418, 80
    %v6420 = vpop.permute.xlu0 %6419
    %vm6421 = vcmask 720512
    %s6422 = scalar_lea.vmem [#allocation0], 72
    %6423 = vst.msk [vmem:[%s6422] sm:$0xff] %vm6421, %v6420
    %s6424 = scalar_lea.vmem [#allocation1], 1674
    %s6425 = smov 3
    %v6426 = vld [vmem:[%s6424] ss:$16 sm:%s6425]
    %s6427 = scalar_lea.vmem [#allocation1], 1674
    %s6428 = smov 12
    %v6429 = vld [vmem:[%s6427] ss:$16 sm:%s6428]
    %vm6430 = vcmask 1043458
    %v6431 = vsel %vm6430, %v6429, %v6426
    %s6432 = scalar_lea.vmem [#allocation1], 1674
    %s6433 = smov 48
    %v6434 = vld [vmem:[%s6432] ss:$16 sm:%s6433]
    %vm6435 = vcmask 1045508
    %v6436 = vsel %vm6435, %v6434, %v6431
    %s6437 = scalar_lea.vmem [#allocation1], 1674
    %s6438 = smov 192
    %v6439 = vld [vmem:[%s6437] ss:$16 sm:%s6438]
    %vm6440 = vcmask 1047558
    %v6441 = vsel %vm6440, %v6439, %v6436
    %6442 = vrot.lane.b32.xlu0 %v6441, 80
    %v6443 = vpop.permute.xlu0 %6442
    %vm6444 = vcmask 720512
    %s6445 = scalar_lea.vmem [#allocation0], 104
    %6446 = vst.msk [vmem:[%s6445] sm:$0xff] %vm6444, %v6443
    %s6447 = scalar_lea.vmem [#allocation1], 266
    %s6448 = smov 3
    %v6449 = vld [vmem:[%s6447] ss:$16 sm:%s6448]
    %s6450 = scalar_lea.vmem [#allocation1], 266
    %s6451 = smov 12
    %v6452 = vld [vmem:[%s6450] ss:$16 sm:%s6451]
    %vm6453 = vcmask 1043458
    %v6454 = vsel %vm6453, %v6452, %v6449
    %s6455 = scalar_lea.vmem [#allocation1], 266
    %s6456 = smov 48
    %v6457 = vld [vmem:[%s6455] ss:$16 sm:%s6456]
    %vm6458 = vcmask 1045508
    %v6459 = vsel %vm6458, %v6457, %v6454
    %s6460 = scalar_lea.vmem [#allocation1], 266
    %s6461 = smov 192
    %v6462 = vld [vmem:[%s6460] ss:$16 sm:%s6461]
    %vm6463 = vcmask 1047558
    %v6464 = vsel %vm6463, %v6462, %v6459
    %6465 = vrot.lane.b32.xlu0 %v6464, 80
    %v6466 = vpop.permute.xlu0 %6465
    %vm6467 = vcmask 720512
    %s6468 = scalar_lea.vmem [#allocation0], 16
    %6469 = vst.msk [vmem:[%s6468] sm:$0xff] %vm6467, %v6466
    %s6470 = scalar_lea.vmem [#allocation1], 778
    %s6471 = smov 3
    %v6472 = vld [vmem:[%s6470] ss:$16 sm:%s6471]
    %s6473 = scalar_lea.vmem [#allocation1], 778
    %s6474 = smov 12
    %v6475 = vld [vmem:[%s6473] ss:$16 sm:%s6474]
    %vm6476 = vcmask 1043458
    %v6477 = vsel %vm6476, %v6475, %v6472
    %s6478 = scalar_lea.vmem [#allocation1], 778
    %s6479 = smov 48
    %v6480 = vld [vmem:[%s6478] ss:$16 sm:%s6479]
    %vm6481 = vcmask 1045508
    %v6482 = vsel %vm6481, %v6480, %v6477
    %s6483 = scalar_lea.vmem [#allocation1], 778
    %s6484 = smov 192
    %v6485 = vld [vmem:[%s6483] ss:$16 sm:%s6484]
    %vm6486 = vcmask 1047558
    %v6487 = vsel %vm6486, %v6485, %v6482
    %6488 = vrot.lane.b32.xlu0 %v6487, 80
    %v6489 = vpop.permute.xlu0 %6488
    %vm6490 = vcmask 720512
    %s6491 = scalar_lea.vmem [#allocation0], 48
    %6492 = vst.msk [vmem:[%s6491] sm:$0xff] %vm6490, %v6489
    %s6493 = scalar_lea.vmem [#allocation1], 1290
    %s6494 = smov 3
    %v6495 = vld [vmem:[%s6493] ss:$16 sm:%s6494]
    %s6496 = scalar_lea.vmem [#allocation1], 1290
    %s6497 = smov 12
    %v6498 = vld [vmem:[%s6496] ss:$16 sm:%s6497]
    %vm6499 = vcmask 1043458
    %v6500 = vsel %vm6499, %v6498, %v6495
    %s6501 = scalar_lea.vmem [#allocation1], 1290
    %s6502 = smov 48
    %v6503 = vld [vmem:[%s6501] ss:$16 sm:%s6502]
    %vm6504 = vcmask 1045508
    %v6505 = vsel %vm6504, %v6503, %v6500
    %s6506 = scalar_lea.vmem [#allocation1], 1290
    %s6507 = smov 192
    %v6508 = vld [vmem:[%s6506] ss:$16 sm:%s6507]
    %vm6509 = vcmask 1047558
    %v6510 = vsel %vm6509, %v6508, %v6505
    %6511 = vrot.lane.b32.xlu0 %v6510, 80
    %v6512 = vpop.permute.xlu0 %6511
    %vm6513 = vcmask 720512
    %s6514 = scalar_lea.vmem [#allocation0], 80
    %6515 = vst.msk [vmem:[%s6514] sm:$0xff] %vm6513, %v6512
    %s6516 = scalar_lea.vmem [#allocation1], 1802
    %s6517 = smov 3
    %v6518 = vld [vmem:[%s6516] ss:$16 sm:%s6517]
    %s6519 = scalar_lea.vmem [#allocation1], 1802
    %s6520 = smov 12
    %v6521 = vld [vmem:[%s6519] ss:$16 sm:%s6520]
    %vm6522 = vcmask 1043458
    %v6523 = vsel %vm6522, %v6521, %v6518
    %s6524 = scalar_lea.vmem [#allocation1], 1802
    %s6525 = smov 48
    %v6526 = vld [vmem:[%s6524] ss:$16 sm:%s6525]
    %vm6527 = vcmask 1045508
    %v6528 = vsel %vm6527, %v6526, %v6523
    %s6529 = scalar_lea.vmem [#allocation1], 1802
    %s6530 = smov 192
    %v6531 = vld [vmem:[%s6529] ss:$16 sm:%s6530]
    %vm6532 = vcmask 1047558
    %v6533 = vsel %vm6532, %v6531, %v6528
    %6534 = vrot.lane.b32.xlu0 %v6533, 80
    %v6535 = vpop.permute.xlu0 %6534
    %vm6536 = vcmask 720512
    %s6537 = scalar_lea.vmem [#allocation0], 112
    %6538 = vst.msk [vmem:[%s6537] sm:$0xff] %vm6536, %v6535
    %s6539 = scalar_lea.vmem [#allocation1], 394
    %s6540 = smov 3
    %v6541 = vld [vmem:[%s6539] ss:$16 sm:%s6540]
    %s6542 = scalar_lea.vmem [#allocation1], 394
    %s6543 = smov 12
    %v6544 = vld [vmem:[%s6542] ss:$16 sm:%s6543]
    %vm6545 = vcmask 1043458
    %v6546 = vsel %vm6545, %v6544, %v6541
    %s6547 = scalar_lea.vmem [#allocation1], 394
    %s6548 = smov 48
    %v6549 = vld [vmem:[%s6547] ss:$16 sm:%s6548]
    %vm6550 = vcmask 1045508
    %v6551 = vsel %vm6550, %v6549, %v6546
    %s6552 = scalar_lea.vmem [#allocation1], 394
    %s6553 = smov 192
    %v6554 = vld [vmem:[%s6552] ss:$16 sm:%s6553]
    %vm6555 = vcmask 1047558
    %v6556 = vsel %vm6555, %v6554, %v6551
    %6557 = vrot.lane.b32.xlu0 %v6556, 80
    %v6558 = vpop.permute.xlu0 %6557
    %vm6559 = vcmask 720512
    %s6560 = scalar_lea.vmem [#allocation0], 24
    %6561 = vst.msk [vmem:[%s6560] sm:$0xff] %vm6559, %v6558
    %s6562 = scalar_lea.vmem [#allocation1], 906
    %s6563 = smov 3
    %v6564 = vld [vmem:[%s6562] ss:$16 sm:%s6563]
    %s6565 = scalar_lea.vmem [#allocation1], 906
    %s6566 = smov 12
    %v6567 = vld [vmem:[%s6565] ss:$16 sm:%s6566]
    %vm6568 = vcmask 1043458
    %v6569 = vsel %vm6568, %v6567, %v6564
    %s6570 = scalar_lea.vmem [#allocation1], 906
    %s6571 = smov 48
    %v6572 = vld [vmem:[%s6570] ss:$16 sm:%s6571]
    %vm6573 = vcmask 1045508
    %v6574 = vsel %vm6573, %v6572, %v6569
    %s6575 = scalar_lea.vmem [#allocation1], 906
    %s6576 = smov 192
    %v6577 = vld [vmem:[%s6575] ss:$16 sm:%s6576]
    %vm6578 = vcmask 1047558
    %v6579 = vsel %vm6578, %v6577, %v6574
    %6580 = vrot.lane.b32.xlu0 %v6579, 80
    %v6581 = vpop.permute.xlu0 %6580
    %vm6582 = vcmask 720512
    %s6583 = scalar_lea.vmem [#allocation0], 56
    %6584 = vst.msk [vmem:[%s6583] sm:$0xff] %vm6582, %v6581
    %s6585 = scalar_lea.vmem [#allocation1], 1418
    %s6586 = smov 3
    %v6587 = vld [vmem:[%s6585] ss:$16 sm:%s6586]
    %s6588 = scalar_lea.vmem [#allocation1], 1418
    %s6589 = smov 12
    %v6590 = vld [vmem:[%s6588] ss:$16 sm:%s6589]
    %vm6591 = vcmask 1043458
    %v6592 = vsel %vm6591, %v6590, %v6587
    %s6593 = scalar_lea.vmem [#allocation1], 1418
    %s6594 = smov 48
    %v6595 = vld [vmem:[%s6593] ss:$16 sm:%s6594]
    %vm6596 = vcmask 1045508
    %v6597 = vsel %vm6596, %v6595, %v6592
    %s6598 = scalar_lea.vmem [#allocation1], 1418
    %s6599 = smov 192
    %v6600 = vld [vmem:[%s6598] ss:$16 sm:%s6599]
    %vm6601 = vcmask 1047558
    %v6602 = vsel %vm6601, %v6600, %v6597
    %6603 = vrot.lane.b32.xlu0 %v6602, 80
    %v6604 = vpop.permute.xlu0 %6603
    %vm6605 = vcmask 720512
    %s6606 = scalar_lea.vmem [#allocation0], 88
    %6607 = vst.msk [vmem:[%s6606] sm:$0xff] %vm6605, %v6604
    %s6608 = scalar_lea.vmem [#allocation1], 1930
    %s6609 = smov 3
    %v6610 = vld [vmem:[%s6608] ss:$16 sm:%s6609]
    %s6611 = scalar_lea.vmem [#allocation1], 1930
    %s6612 = smov 12
    %v6613 = vld [vmem:[%s6611] ss:$16 sm:%s6612]
    %vm6614 = vcmask 1043458
    %v6615 = vsel %vm6614, %v6613, %v6610
    %s6616 = scalar_lea.vmem [#allocation1], 1930
    %s6617 = smov 48
    %v6618 = vld [vmem:[%s6616] ss:$16 sm:%s6617]
    %vm6619 = vcmask 1045508
    %v6620 = vsel %vm6619, %v6618, %v6615
    %s6621 = scalar_lea.vmem [#allocation1], 1930
    %s6622 = smov 192
    %v6623 = vld [vmem:[%s6621] ss:$16 sm:%s6622]
    %vm6624 = vcmask 1047558
    %v6625 = vsel %vm6624, %v6623, %v6620
    %6626 = vrot.lane.b32.xlu0 %v6625, 80
    %v6627 = vpop.permute.xlu0 %6626
    %vm6628 = vcmask 720512
    %s6629 = scalar_lea.vmem [#allocation0], 120
    %6630 = vst.msk [vmem:[%s6629] sm:$0xff] %vm6628, %v6627
    %s6631 = scalar_lea.vmem [#allocation1], 9
    %s6632 = smov 3
    %v6633 = vld [vmem:[%s6631] ss:$16 sm:%s6632]
    %s6634 = scalar_lea.vmem [#allocation1], 9
    %s6635 = smov 12
    %v6636 = vld [vmem:[%s6634] ss:$16 sm:%s6635]
    %vm6637 = vcmask 1043458
    %v6638 = vsel %vm6637, %v6636, %v6633
    %s6639 = scalar_lea.vmem [#allocation1], 9
    %s6640 = smov 48
    %v6641 = vld [vmem:[%s6639] ss:$16 sm:%s6640]
    %vm6642 = vcmask 1045508
    %v6643 = vsel %vm6642, %v6641, %v6638
    %s6644 = scalar_lea.vmem [#allocation1], 9
    %s6645 = smov 192
    %v6646 = vld [vmem:[%s6644] ss:$16 sm:%s6645]
    %vm6647 = vcmask 1047558
    %v6648 = vsel %vm6647, %v6646, %v6643
    %6649 = vrot.lane.b32.xlu0 %v6648, 72
    %v6650 = vpop.permute.xlu0 %6649
    %vm6651 = vcmask 654912
    %6652 = vst.msk [vmem:[#allocation0] sm:$0xff] %vm6651, %v6650
    %s6653 = scalar_lea.vmem [#allocation1], 521
    %s6654 = smov 3
    %v6655 = vld [vmem:[%s6653] ss:$16 sm:%s6654]
    %s6656 = scalar_lea.vmem [#allocation1], 521
    %s6657 = smov 12
    %v6658 = vld [vmem:[%s6656] ss:$16 sm:%s6657]
    %vm6659 = vcmask 1043458
    %v6660 = vsel %vm6659, %v6658, %v6655
    %s6661 = scalar_lea.vmem [#allocation1], 521
    %s6662 = smov 48
    %v6663 = vld [vmem:[%s6661] ss:$16 sm:%s6662]
    %vm6664 = vcmask 1045508
    %v6665 = vsel %vm6664, %v6663, %v6660
    %s6666 = scalar_lea.vmem [#allocation1], 521
    %s6667 = smov 192
    %v6668 = vld [vmem:[%s6666] ss:$16 sm:%s6667]
    %vm6669 = vcmask 1047558
    %v6670 = vsel %vm6669, %v6668, %v6665
    %6671 = vrot.lane.b32.xlu0 %v6670, 72
    %v6672 = vpop.permute.xlu0 %6671
    %vm6673 = vcmask 654912
    %s6674 = scalar_lea.vmem [#allocation0], 32
    %6675 = vst.msk [vmem:[%s6674] sm:$0xff] %vm6673, %v6672
    %s6676 = scalar_lea.vmem [#allocation1], 1033
    %s6677 = smov 3
    %v6678 = vld [vmem:[%s6676] ss:$16 sm:%s6677]
    %s6679 = scalar_lea.vmem [#allocation1], 1033
    %s6680 = smov 12
    %v6681 = vld [vmem:[%s6679] ss:$16 sm:%s6680]
    %vm6682 = vcmask 1043458
    %v6683 = vsel %vm6682, %v6681, %v6678
    %s6684 = scalar_lea.vmem [#allocation1], 1033
    %s6685 = smov 48
    %v6686 = vld [vmem:[%s6684] ss:$16 sm:%s6685]
    %vm6687 = vcmask 1045508
    %v6688 = vsel %vm6687, %v6686, %v6683
    %s6689 = scalar_lea.vmem [#allocation1], 1033
    %s6690 = smov 192
    %v6691 = vld [vmem:[%s6689] ss:$16 sm:%s6690]
    %vm6692 = vcmask 1047558
    %v6693 = vsel %vm6692, %v6691, %v6688
    %6694 = vrot.lane.b32.xlu0 %v6693, 72
    %v6695 = vpop.permute.xlu0 %6694
    %vm6696 = vcmask 654912
    %s6697 = scalar_lea.vmem [#allocation0], 64
    %6698 = vst.msk [vmem:[%s6697] sm:$0xff] %vm6696, %v6695
    %s6699 = scalar_lea.vmem [#allocation1], 1545
    %s6700 = smov 3
    %v6701 = vld [vmem:[%s6699] ss:$16 sm:%s6700]
    %s6702 = scalar_lea.vmem [#allocation1], 1545
    %s6703 = smov 12
    %v6704 = vld [vmem:[%s6702] ss:$16 sm:%s6703]
    %vm6705 = vcmask 1043458
    %v6706 = vsel %vm6705, %v6704, %v6701
    %s6707 = scalar_lea.vmem [#allocation1], 1545
    %s6708 = smov 48
    %v6709 = vld [vmem:[%s6707] ss:$16 sm:%s6708]
    %vm6710 = vcmask 1045508
    %v6711 = vsel %vm6710, %v6709, %v6706
    %s6712 = scalar_lea.vmem [#allocation1], 1545
    %s6713 = smov 192
    %v6714 = vld [vmem:[%s6712] ss:$16 sm:%s6713]
    %vm6715 = vcmask 1047558
    %v6716 = vsel %vm6715, %v6714, %v6711
    %6717 = vrot.lane.b32.xlu0 %v6716, 72
    %v6718 = vpop.permute.xlu0 %6717
    %vm6719 = vcmask 654912
    %s6720 = scalar_lea.vmem [#allocation0], 96
    %6721 = vst.msk [vmem:[%s6720] sm:$0xff] %vm6719, %v6718
    %s6722 = scalar_lea.vmem [#allocation1], 137
    %s6723 = smov 3
    %v6724 = vld [vmem:[%s6722] ss:$16 sm:%s6723]
    %s6725 = scalar_lea.vmem [#allocation1], 137
    %s6726 = smov 12
    %v6727 = vld [vmem:[%s6725] ss:$16 sm:%s6726]
    %vm6728 = vcmask 1043458
    %v6729 = vsel %vm6728, %v6727, %v6724
    %s6730 = scalar_lea.vmem [#allocation1], 137
    %s6731 = smov 48
    %v6732 = vld [vmem:[%s6730] ss:$16 sm:%s6731]
    %vm6733 = vcmask 1045508
    %v6734 = vsel %vm6733, %v6732, %v6729
    %s6735 = scalar_lea.vmem [#allocation1], 137
    %s6736 = smov 192
    %v6737 = vld [vmem:[%s6735] ss:$16 sm:%s6736]
    %vm6738 = vcmask 1047558
    %v6739 = vsel %vm6738, %v6737, %v6734
    %6740 = vrot.lane.b32.xlu0 %v6739, 72
    %v6741 = vpop.permute.xlu0 %6740
    %vm6742 = vcmask 654912
    %s6743 = scalar_lea.vmem [#allocation0], 8
    %6744 = vst.msk [vmem:[%s6743] sm:$0xff] %vm6742, %v6741
    %s6745 = scalar_lea.vmem [#allocation1], 649
    %s6746 = smov 3
    %v6747 = vld [vmem:[%s6745] ss:$16 sm:%s6746]
    %s6748 = scalar_lea.vmem [#allocation1], 649
    %s6749 = smov 12
    %v6750 = vld [vmem:[%s6748] ss:$16 sm:%s6749]
    %vm6751 = vcmask 1043458
    %v6752 = vsel %vm6751, %v6750, %v6747
    %s6753 = scalar_lea.vmem [#allocation1], 649
    %s6754 = smov 48
    %v6755 = vld [vmem:[%s6753] ss:$16 sm:%s6754]
    %vm6756 = vcmask 1045508
    %v6757 = vsel %vm6756, %v6755, %v6752
    %s6758 = scalar_lea.vmem [#allocation1], 649
    %s6759 = smov 192
    %v6760 = vld [vmem:[%s6758] ss:$16 sm:%s6759]
    %vm6761 = vcmask 1047558
    %v6762 = vsel %vm6761, %v6760, %v6757
    %6763 = vrot.lane.b32.xlu0 %v6762, 72
    %v6764 = vpop.permute.xlu0 %6763
    %vm6765 = vcmask 654912
    %s6766 = scalar_lea.vmem [#allocation0], 40
    %6767 = vst.msk [vmem:[%s6766] sm:$0xff] %vm6765, %v6764
    %s6768 = scalar_lea.vmem [#allocation1], 1161
    %s6769 = smov 3
    %v6770 = vld [vmem:[%s6768] ss:$16 sm:%s6769]
    %s6771 = scalar_lea.vmem [#allocation1], 1161
    %s6772 = smov 12
    %v6773 = vld [vmem:[%s6771] ss:$16 sm:%s6772]
    %vm6774 = vcmask 1043458
    %v6775 = vsel %vm6774, %v6773, %v6770
    %s6776 = scalar_lea.vmem [#allocation1], 1161
    %s6777 = smov 48
    %v6778 = vld [vmem:[%s6776] ss:$16 sm:%s6777]
    %vm6779 = vcmask 1045508
    %v6780 = vsel %vm6779, %v6778, %v6775
    %s6781 = scalar_lea.vmem [#allocation1], 1161
    %s6782 = smov 192
    %v6783 = vld [vmem:[%s6781] ss:$16 sm:%s6782]
    %vm6784 = vcmask 1047558
    %v6785 = vsel %vm6784, %v6783, %v6780
    %6786 = vrot.lane.b32.xlu0 %v6785, 72
    %v6787 = vpop.permute.xlu0 %6786
    %vm6788 = vcmask 654912
    %s6789 = scalar_lea.vmem [#allocation0], 72
    %6790 = vst.msk [vmem:[%s6789] sm:$0xff] %vm6788, %v6787
    %s6791 = scalar_lea.vmem [#allocation1], 1673
    %s6792 = smov 3
    %v6793 = vld [vmem:[%s6791] ss:$16 sm:%s6792]
    %s6794 = scalar_lea.vmem [#allocation1], 1673
    %s6795 = smov 12
    %v6796 = vld [vmem:[%s6794] ss:$16 sm:%s6795]
    %vm6797 = vcmask 1043458
    %v6798 = vsel %vm6797, %v6796, %v6793
    %s6799 = scalar_lea.vmem [#allocation1], 1673
    %s6800 = smov 48
    %v6801 = vld [vmem:[%s6799] ss:$16 sm:%s6800]
    %vm6802 = vcmask 1045508
    %v6803 = vsel %vm6802, %v6801, %v6798
    %s6804 = scalar_lea.vmem [#allocation1], 1673
    %s6805 = smov 192
    %v6806 = vld [vmem:[%s6804] ss:$16 sm:%s6805]
    %vm6807 = vcmask 1047558
    %v6808 = vsel %vm6807, %v6806, %v6803
    %6809 = vrot.lane.b32.xlu0 %v6808, 72
    %v6810 = vpop.permute.xlu0 %6809
    %vm6811 = vcmask 654912
    %s6812 = scalar_lea.vmem [#allocation0], 104
    %6813 = vst.msk [vmem:[%s6812] sm:$0xff] %vm6811, %v6810
    %s6814 = scalar_lea.vmem [#allocation1], 265
    %s6815 = smov 3
    %v6816 = vld [vmem:[%s6814] ss:$16 sm:%s6815]
    %s6817 = scalar_lea.vmem [#allocation1], 265
    %s6818 = smov 12
    %v6819 = vld [vmem:[%s6817] ss:$16 sm:%s6818]
    %vm6820 = vcmask 1043458
    %v6821 = vsel %vm6820, %v6819, %v6816
    %s6822 = scalar_lea.vmem [#allocation1], 265
    %s6823 = smov 48
    %v6824 = vld [vmem:[%s6822] ss:$16 sm:%s6823]
    %vm6825 = vcmask 1045508
    %v6826 = vsel %vm6825, %v6824, %v6821
    %s6827 = scalar_lea.vmem [#allocation1], 265
    %s6828 = smov 192
    %v6829 = vld [vmem:[%s6827] ss:$16 sm:%s6828]
    %vm6830 = vcmask 1047558
    %v6831 = vsel %vm6830, %v6829, %v6826
    %6832 = vrot.lane.b32.xlu0 %v6831, 72
    %v6833 = vpop.permute.xlu0 %6832
    %vm6834 = vcmask 654912
    %s6835 = scalar_lea.vmem [#allocation0], 16
    %6836 = vst.msk [vmem:[%s6835] sm:$0xff] %vm6834, %v6833
    %s6837 = scalar_lea.vmem [#allocation1], 777
    %s6838 = smov 3
    %v6839 = vld [vmem:[%s6837] ss:$16 sm:%s6838]
    %s6840 = scalar_lea.vmem [#allocation1], 777
    %s6841 = smov 12
    %v6842 = vld [vmem:[%s6840] ss:$16 sm:%s6841]
    %vm6843 = vcmask 1043458
    %v6844 = vsel %vm6843, %v6842, %v6839
    %s6845 = scalar_lea.vmem [#allocation1], 777
    %s6846 = smov 48
    %v6847 = vld [vmem:[%s6845] ss:$16 sm:%s6846]
    %vm6848 = vcmask 1045508
    %v6849 = vsel %vm6848, %v6847, %v6844
    %s6850 = scalar_lea.vmem [#allocation1], 777
    %s6851 = smov 192
    %v6852 = vld [vmem:[%s6850] ss:$16 sm:%s6851]
    %vm6853 = vcmask 1047558
    %v6854 = vsel %vm6853, %v6852, %v6849
    %6855 = vrot.lane.b32.xlu0 %v6854, 72
    %v6856 = vpop.permute.xlu0 %6855
    %vm6857 = vcmask 654912
    %s6858 = scalar_lea.vmem [#allocation0], 48
    %6859 = vst.msk [vmem:[%s6858] sm:$0xff] %vm6857, %v6856
    %s6860 = scalar_lea.vmem [#allocation1], 1289
    %s6861 = smov 3
    %v6862 = vld [vmem:[%s6860] ss:$16 sm:%s6861]
    %s6863 = scalar_lea.vmem [#allocation1], 1289
    %s6864 = smov 12
    %v6865 = vld [vmem:[%s6863] ss:$16 sm:%s6864]
    %vm6866 = vcmask 1043458
    %v6867 = vsel %vm6866, %v6865, %v6862
    %s6868 = scalar_lea.vmem [#allocation1], 1289
    %s6869 = smov 48
    %v6870 = vld [vmem:[%s6868] ss:$16 sm:%s6869]
    %vm6871 = vcmask 1045508
    %v6872 = vsel %vm6871, %v6870, %v6867
    %s6873 = scalar_lea.vmem [#allocation1], 1289
    %s6874 = smov 192
    %v6875 = vld [vmem:[%s6873] ss:$16 sm:%s6874]
    %vm6876 = vcmask 1047558
    %v6877 = vsel %vm6876, %v6875, %v6872
    %6878 = vrot.lane.b32.xlu0 %v6877, 72
    %v6879 = vpop.permute.xlu0 %6878
    %vm6880 = vcmask 654912
    %s6881 = scalar_lea.vmem [#allocation0], 80
    %6882 = vst.msk [vmem:[%s6881] sm:$0xff] %vm6880, %v6879
    %s6883 = scalar_lea.vmem [#allocation1], 1801
    %s6884 = smov 3
    %v6885 = vld [vmem:[%s6883] ss:$16 sm:%s6884]
    %s6886 = scalar_lea.vmem [#allocation1], 1801
    %s6887 = smov 12
    %v6888 = vld [vmem:[%s6886] ss:$16 sm:%s6887]
    %vm6889 = vcmask 1043458
    %v6890 = vsel %vm6889, %v6888, %v6885
    %s6891 = scalar_lea.vmem [#allocation1], 1801
    %s6892 = smov 48
    %v6893 = vld [vmem:[%s6891] ss:$16 sm:%s6892]
    %vm6894 = vcmask 1045508
    %v6895 = vsel %vm6894, %v6893, %v6890
    %s6896 = scalar_lea.vmem [#allocation1], 1801
    %s6897 = smov 192
    %v6898 = vld [vmem:[%s6896] ss:$16 sm:%s6897]
    %vm6899 = vcmask 1047558
    %v6900 = vsel %vm6899, %v6898, %v6895
    %6901 = vrot.lane.b32.xlu0 %v6900, 72
    %v6902 = vpop.permute.xlu0 %6901
    %vm6903 = vcmask 654912
    %s6904 = scalar_lea.vmem [#allocation0], 112
    %6905 = vst.msk [vmem:[%s6904] sm:$0xff] %vm6903, %v6902
    %s6906 = scalar_lea.vmem [#allocation1], 393
    %s6907 = smov 3
    %v6908 = vld [vmem:[%s6906] ss:$16 sm:%s6907]
    %s6909 = scalar_lea.vmem [#allocation1], 393
    %s6910 = smov 12
    %v6911 = vld [vmem:[%s6909] ss:$16 sm:%s6910]
    %vm6912 = vcmask 1043458
    %v6913 = vsel %vm6912, %v6911, %v6908
    %s6914 = scalar_lea.vmem [#allocation1], 393
    %s6915 = smov 48
    %v6916 = vld [vmem:[%s6914] ss:$16 sm:%s6915]
    %vm6917 = vcmask 1045508
    %v6918 = vsel %vm6917, %v6916, %v6913
    %s6919 = scalar_lea.vmem [#allocation1], 393
    %s6920 = smov 192
    %v6921 = vld [vmem:[%s6919] ss:$16 sm:%s6920]
    %vm6922 = vcmask 1047558
    %v6923 = vsel %vm6922, %v6921, %v6918
    %6924 = vrot.lane.b32.xlu0 %v6923, 72
    %v6925 = vpop.permute.xlu0 %6924
    %vm6926 = vcmask 654912
    %s6927 = scalar_lea.vmem [#allocation0], 24
    %6928 = vst.msk [vmem:[%s6927] sm:$0xff] %vm6926, %v6925
    %s6929 = scalar_lea.vmem [#allocation1], 905
    %s6930 = smov 3
    %v6931 = vld [vmem:[%s6929] ss:$16 sm:%s6930]
    %s6932 = scalar_lea.vmem [#allocation1], 905
    %s6933 = smov 12
    %v6934 = vld [vmem:[%s6932] ss:$16 sm:%s6933]
    %vm6935 = vcmask 1043458
    %v6936 = vsel %vm6935, %v6934, %v6931
    %s6937 = scalar_lea.vmem [#allocation1], 905
    %s6938 = smov 48
    %v6939 = vld [vmem:[%s6937] ss:$16 sm:%s6938]
    %vm6940 = vcmask 1045508
    %v6941 = vsel %vm6940, %v6939, %v6936
    %s6942 = scalar_lea.vmem [#allocation1], 905
    %s6943 = smov 192
    %v6944 = vld [vmem:[%s6942] ss:$16 sm:%s6943]
    %vm6945 = vcmask 1047558
    %v6946 = vsel %vm6945, %v6944, %v6941
    %6947 = vrot.lane.b32.xlu0 %v6946, 72
    %v6948 = vpop.permute.xlu0 %6947
    %vm6949 = vcmask 654912
    %s6950 = scalar_lea.vmem [#allocation0], 56
    %6951 = vst.msk [vmem:[%s6950] sm:$0xff] %vm6949, %v6948
    %s6952 = scalar_lea.vmem [#allocation1], 1417
    %s6953 = smov 3
    %v6954 = vld [vmem:[%s6952] ss:$16 sm:%s6953]
    %s6955 = scalar_lea.vmem [#allocation1], 1417
    %s6956 = smov 12
    %v6957 = vld [vmem:[%s6955] ss:$16 sm:%s6956]
    %vm6958 = vcmask 1043458
    %v6959 = vsel %vm6958, %v6957, %v6954
    %s6960 = scalar_lea.vmem [#allocation1], 1417
    %s6961 = smov 48
    %v6962 = vld [vmem:[%s6960] ss:$16 sm:%s6961]
    %vm6963 = vcmask 1045508
    %v6964 = vsel %vm6963, %v6962, %v6959
    %s6965 = scalar_lea.vmem [#allocation1], 1417
    %s6966 = smov 192
    %v6967 = vld [vmem:[%s6965] ss:$16 sm:%s6966]
    %vm6968 = vcmask 1047558
    %v6969 = vsel %vm6968, %v6967, %v6964
    %6970 = vrot.lane.b32.xlu0 %v6969, 72
    %v6971 = vpop.permute.xlu0 %6970
    %vm6972 = vcmask 654912
    %s6973 = scalar_lea.vmem [#allocation0], 88
    %6974 = vst.msk [vmem:[%s6973] sm:$0xff] %vm6972, %v6971
    %s6975 = scalar_lea.vmem [#allocation1], 1929
    %s6976 = smov 3
    %v6977 = vld [vmem:[%s6975] ss:$16 sm:%s6976]
    %s6978 = scalar_lea.vmem [#allocation1], 1929
    %s6979 = smov 12
    %v6980 = vld [vmem:[%s6978] ss:$16 sm:%s6979]
    %vm6981 = vcmask 1043458
    %v6982 = vsel %vm6981, %v6980, %v6977
    %s6983 = scalar_lea.vmem [#allocation1], 1929
    %s6984 = smov 48
    %v6985 = vld [vmem:[%s6983] ss:$16 sm:%s6984]
    %vm6986 = vcmask 1045508
    %v6987 = vsel %vm6986, %v6985, %v6982
    %s6988 = scalar_lea.vmem [#allocation1], 1929
    %s6989 = smov 192
    %v6990 = vld [vmem:[%s6988] ss:$16 sm:%s6989]
    %vm6991 = vcmask 1047558
    %v6992 = vsel %vm6991, %v6990, %v6987
    %6993 = vrot.lane.b32.xlu0 %v6992, 72
    %v6994 = vpop.permute.xlu0 %6993
    %vm6995 = vcmask 654912
    %s6996 = scalar_lea.vmem [#allocation0], 120
    %6997 = vst.msk [vmem:[%s6996] sm:$0xff] %vm6995, %v6994
    %s6998 = scalar_lea.vmem [#allocation1], 8
    %s6999 = smov 3
    %v7000 = vld [vmem:[%s6998] ss:$16 sm:%s6999]
    %s7001 = scalar_lea.vmem [#allocation1], 8
    %s7002 = smov 12
    %v7003 = vld [vmem:[%s7001] ss:$16 sm:%s7002]
    %vm7004 = vcmask 1043458
    %v7005 = vsel %vm7004, %v7003, %v7000
    %s7006 = scalar_lea.vmem [#allocation1], 8
    %s7007 = smov 48
    %v7008 = vld [vmem:[%s7006] ss:$16 sm:%s7007]
    %vm7009 = vcmask 1045508
    %v7010 = vsel %vm7009, %v7008, %v7005
    %s7011 = scalar_lea.vmem [#allocation1], 8
    %s7012 = smov 192
    %v7013 = vld [vmem:[%s7011] ss:$16 sm:%s7012]
    %vm7014 = vcmask 1047558
    %v7015 = vsel %vm7014, %v7013, %v7010
    %7016 = vrot.lane.b32.xlu0 %v7015, 64
    %v7017 = vpop.permute.xlu0 %7016
    %vm7018 = vcmask 589312
    %7019 = vst.msk [vmem:[#allocation0] sm:$0xff] %vm7018, %v7017
    %s7020 = scalar_lea.vmem [#allocation1], 520
    %s7021 = smov 3
    %v7022 = vld [vmem:[%s7020] ss:$16 sm:%s7021]
    %s7023 = scalar_lea.vmem [#allocation1], 520
    %s7024 = smov 12
    %v7025 = vld [vmem:[%s7023] ss:$16 sm:%s7024]
    %vm7026 = vcmask 1043458
    %v7027 = vsel %vm7026, %v7025, %v7022
    %s7028 = scalar_lea.vmem [#allocation1], 520
    %s7029 = smov 48
    %v7030 = vld [vmem:[%s7028] ss:$16 sm:%s7029]
    %vm7031 = vcmask 1045508
    %v7032 = vsel %vm7031, %v7030, %v7027
    %s7033 = scalar_lea.vmem [#allocation1], 520
    %s7034 = smov 192
    %v7035 = vld [vmem:[%s7033] ss:$16 sm:%s7034]
    %vm7036 = vcmask 1047558
    %v7037 = vsel %vm7036, %v7035, %v7032
    %7038 = vrot.lane.b32.xlu0 %v7037, 64
    %v7039 = vpop.permute.xlu0 %7038
    %vm7040 = vcmask 589312
    %s7041 = scalar_lea.vmem [#allocation0], 32
    %7042 = vst.msk [vmem:[%s7041] sm:$0xff] %vm7040, %v7039
    %s7043 = scalar_lea.vmem [#allocation1], 1032
    %s7044 = smov 3
    %v7045 = vld [vmem:[%s7043] ss:$16 sm:%s7044]
    %s7046 = scalar_lea.vmem [#allocation1], 1032
    %s7047 = smov 12
    %v7048 = vld [vmem:[%s7046] ss:$16 sm:%s7047]
    %vm7049 = vcmask 1043458
    %v7050 = vsel %vm7049, %v7048, %v7045
    %s7051 = scalar_lea.vmem [#allocation1], 1032
    %s7052 = smov 48
    %v7053 = vld [vmem:[%s7051] ss:$16 sm:%s7052]
    %vm7054 = vcmask 1045508
    %v7055 = vsel %vm7054, %v7053, %v7050
    %s7056 = scalar_lea.vmem [#allocation1], 1032
    %s7057 = smov 192
    %v7058 = vld [vmem:[%s7056] ss:$16 sm:%s7057]
    %vm7059 = vcmask 1047558
    %v7060 = vsel %vm7059, %v7058, %v7055
    %7061 = vrot.lane.b32.xlu0 %v7060, 64
    %v7062 = vpop.permute.xlu0 %7061
    %vm7063 = vcmask 589312
    %s7064 = scalar_lea.vmem [#allocation0], 64
    %7065 = vst.msk [vmem:[%s7064] sm:$0xff] %vm7063, %v7062
    %s7066 = scalar_lea.vmem [#allocation1], 1544
    %s7067 = smov 3
    %v7068 = vld [vmem:[%s7066] ss:$16 sm:%s7067]
    %s7069 = scalar_lea.vmem [#allocation1], 1544
    %s7070 = smov 12
    %v7071 = vld [vmem:[%s7069] ss:$16 sm:%s7070]
    %vm7072 = vcmask 1043458
    %v7073 = vsel %vm7072, %v7071, %v7068
    %s7074 = scalar_lea.vmem [#allocation1], 1544
    %s7075 = smov 48
    %v7076 = vld [vmem:[%s7074] ss:$16 sm:%s7075]
    %vm7077 = vcmask 1045508
    %v7078 = vsel %vm7077, %v7076, %v7073
    %s7079 = scalar_lea.vmem [#allocation1], 1544
    %s7080 = smov 192
    %v7081 = vld [vmem:[%s7079] ss:$16 sm:%s7080]
    %vm7082 = vcmask 1047558
    %v7083 = vsel %vm7082, %v7081, %v7078
    %7084 = vrot.lane.b32.xlu0 %v7083, 64
    %v7085 = vpop.permute.xlu0 %7084
    %vm7086 = vcmask 589312
    %s7087 = scalar_lea.vmem [#allocation0], 96
    %7088 = vst.msk [vmem:[%s7087] sm:$0xff] %vm7086, %v7085
    %s7089 = scalar_lea.vmem [#allocation1], 136
    %s7090 = smov 3
    %v7091 = vld [vmem:[%s7089] ss:$16 sm:%s7090]
    %s7092 = scalar_lea.vmem [#allocation1], 136
    %s7093 = smov 12
    %v7094 = vld [vmem:[%s7092] ss:$16 sm:%s7093]
    %vm7095 = vcmask 1043458
    %v7096 = vsel %vm7095, %v7094, %v7091
    %s7097 = scalar_lea.vmem [#allocation1], 136
    %s7098 = smov 48
    %v7099 = vld [vmem:[%s7097] ss:$16 sm:%s7098]
    %vm7100 = vcmask 1045508
    %v7101 = vsel %vm7100, %v7099, %v7096
    %s7102 = scalar_lea.vmem [#allocation1], 136
    %s7103 = smov 192
    %v7104 = vld [vmem:[%s7102] ss:$16 sm:%s7103]
    %vm7105 = vcmask 1047558
    %v7106 = vsel %vm7105, %v7104, %v7101
    %7107 = vrot.lane.b32.xlu0 %v7106, 64
    %v7108 = vpop.permute.xlu0 %7107
    %vm7109 = vcmask 589312
    %s7110 = scalar_lea.vmem [#allocation0], 8
    %7111 = vst.msk [vmem:[%s7110] sm:$0xff] %vm7109, %v7108
    %s7112 = scalar_lea.vmem [#allocation1], 648
    %s7113 = smov 3
    %v7114 = vld [vmem:[%s7112] ss:$16 sm:%s7113]
    %s7115 = scalar_lea.vmem [#allocation1], 648
    %s7116 = smov 12
    %v7117 = vld [vmem:[%s7115] ss:$16 sm:%s7116]
    %vm7118 = vcmask 1043458
    %v7119 = vsel %vm7118, %v7117, %v7114
    %s7120 = scalar_lea.vmem [#allocation1], 648
    %s7121 = smov 48
    %v7122 = vld [vmem:[%s7120] ss:$16 sm:%s7121]
    %vm7123 = vcmask 1045508
    %v7124 = vsel %vm7123, %v7122, %v7119
    %s7125 = scalar_lea.vmem [#allocation1], 648
    %s7126 = smov 192
    %v7127 = vld [vmem:[%s7125] ss:$16 sm:%s7126]
    %vm7128 = vcmask 1047558
    %v7129 = vsel %vm7128, %v7127, %v7124
    %7130 = vrot.lane.b32.xlu0 %v7129, 64
    %v7131 = vpop.permute.xlu0 %7130
    %vm7132 = vcmask 589312
    %s7133 = scalar_lea.vmem [#allocation0], 40
    %7134 = vst.msk [vmem:[%s7133] sm:$0xff] %vm7132, %v7131
    %s7135 = scalar_lea.vmem [#allocation1], 1160
    %s7136 = smov 3
    %v7137 = vld [vmem:[%s7135] ss:$16 sm:%s7136]
    %s7138 = scalar_lea.vmem [#allocation1], 1160
    %s7139 = smov 12
    %v7140 = vld [vmem:[%s7138] ss:$16 sm:%s7139]
    %vm7141 = vcmask 1043458
    %v7142 = vsel %vm7141, %v7140, %v7137
    %s7143 = scalar_lea.vmem [#allocation1], 1160
    %s7144 = smov 48
    %v7145 = vld [vmem:[%s7143] ss:$16 sm:%s7144]
    %vm7146 = vcmask 1045508
    %v7147 = vsel %vm7146, %v7145, %v7142
    %s7148 = scalar_lea.vmem [#allocation1], 1160
    %s7149 = smov 192
    %v7150 = vld [vmem:[%s7148] ss:$16 sm:%s7149]
    %vm7151 = vcmask 1047558
    %v7152 = vsel %vm7151, %v7150, %v7147
    %7153 = vrot.lane.b32.xlu0 %v7152, 64
    %v7154 = vpop.permute.xlu0 %7153
    %vm7155 = vcmask 589312
    %s7156 = scalar_lea.vmem [#allocation0], 72
    %7157 = vst.msk [vmem:[%s7156] sm:$0xff] %vm7155, %v7154
    %s7158 = scalar_lea.vmem [#allocation1], 1672
    %s7159 = smov 3
    %v7160 = vld [vmem:[%s7158] ss:$16 sm:%s7159]
    %s7161 = scalar_lea.vmem [#allocation1], 1672
    %s7162 = smov 12
    %v7163 = vld [vmem:[%s7161] ss:$16 sm:%s7162]
    %vm7164 = vcmask 1043458
    %v7165 = vsel %vm7164, %v7163, %v7160
    %s7166 = scalar_lea.vmem [#allocation1], 1672
    %s7167 = smov 48
    %v7168 = vld [vmem:[%s7166] ss:$16 sm:%s7167]
    %vm7169 = vcmask 1045508
    %v7170 = vsel %vm7169, %v7168, %v7165
    %s7171 = scalar_lea.vmem [#allocation1], 1672
    %s7172 = smov 192
    %v7173 = vld [vmem:[%s7171] ss:$16 sm:%s7172]
    %vm7174 = vcmask 1047558
    %v7175 = vsel %vm7174, %v7173, %v7170
    %7176 = vrot.lane.b32.xlu0 %v7175, 64
    %v7177 = vpop.permute.xlu0 %7176
    %vm7178 = vcmask 589312
    %s7179 = scalar_lea.vmem [#allocation0], 104
    %7180 = vst.msk [vmem:[%s7179] sm:$0xff] %vm7178, %v7177
    %s7181 = scalar_lea.vmem [#allocation1], 264
    %s7182 = smov 3
    %v7183 = vld [vmem:[%s7181] ss:$16 sm:%s7182]
    %s7184 = scalar_lea.vmem [#allocation1], 264
    %s7185 = smov 12
    %v7186 = vld [vmem:[%s7184] ss:$16 sm:%s7185]
    %vm7187 = vcmask 1043458
    %v7188 = vsel %vm7187, %v7186, %v7183
    %s7189 = scalar_lea.vmem [#allocation1], 264
    %s7190 = smov 48
    %v7191 = vld [vmem:[%s7189] ss:$16 sm:%s7190]
    %vm7192 = vcmask 1045508
    %v7193 = vsel %vm7192, %v7191, %v7188
    %s7194 = scalar_lea.vmem [#allocation1], 264
    %s7195 = smov 192
    %v7196 = vld [vmem:[%s7194] ss:$16 sm:%s7195]
    %vm7197 = vcmask 1047558
    %v7198 = vsel %vm7197, %v7196, %v7193
    %7199 = vrot.lane.b32.xlu0 %v7198, 64
    %v7200 = vpop.permute.xlu0 %7199
    %vm7201 = vcmask 589312
    %s7202 = scalar_lea.vmem [#allocation0], 16
    %7203 = vst.msk [vmem:[%s7202] sm:$0xff] %vm7201, %v7200
    %s7204 = scalar_lea.vmem [#allocation1], 776
    %s7205 = smov 3
    %v7206 = vld [vmem:[%s7204] ss:$16 sm:%s7205]
    %s7207 = scalar_lea.vmem [#allocation1], 776
    %s7208 = smov 12
    %v7209 = vld [vmem:[%s7207] ss:$16 sm:%s7208]
    %vm7210 = vcmask 1043458
    %v7211 = vsel %vm7210, %v7209, %v7206
    %s7212 = scalar_lea.vmem [#allocation1], 776
    %s7213 = smov 48
    %v7214 = vld [vmem:[%s7212] ss:$16 sm:%s7213]
    %vm7215 = vcmask 1045508
    %v7216 = vsel %vm7215, %v7214, %v7211
    %s7217 = scalar_lea.vmem [#allocation1], 776
    %s7218 = smov 192
    %v7219 = vld [vmem:[%s7217] ss:$16 sm:%s7218]
    %vm7220 = vcmask 1047558
    %v7221 = vsel %vm7220, %v7219, %v7216
    %7222 = vrot.lane.b32.xlu0 %v7221, 64
    %v7223 = vpop.permute.xlu0 %7222
    %vm7224 = vcmask 589312
    %s7225 = scalar_lea.vmem [#allocation0], 48
    %7226 = vst.msk [vmem:[%s7225] sm:$0xff] %vm7224, %v7223
    %s7227 = scalar_lea.vmem [#allocation1], 1288
    %s7228 = smov 3
    %v7229 = vld [vmem:[%s7227] ss:$16 sm:%s7228]
    %s7230 = scalar_lea.vmem [#allocation1], 1288
    %s7231 = smov 12
    %v7232 = vld [vmem:[%s7230] ss:$16 sm:%s7231]
    %vm7233 = vcmask 1043458
    %v7234 = vsel %vm7233, %v7232, %v7229
    %s7235 = scalar_lea.vmem [#allocation1], 1288
    %s7236 = smov 48
    %v7237 = vld [vmem:[%s7235] ss:$16 sm:%s7236]
    %vm7238 = vcmask 1045508
    %v7239 = vsel %vm7238, %v7237, %v7234
    %s7240 = scalar_lea.vmem [#allocation1], 1288
    %s7241 = smov 192
    %v7242 = vld [vmem:[%s7240] ss:$16 sm:%s7241]
    %vm7243 = vcmask 1047558
    %v7244 = vsel %vm7243, %v7242, %v7239
    %7245 = vrot.lane.b32.xlu0 %v7244, 64
    %v7246 = vpop.permute.xlu0 %7245
    %vm7247 = vcmask 589312
    %s7248 = scalar_lea.vmem [#allocation0], 80
    %7249 = vst.msk [vmem:[%s7248] sm:$0xff] %vm7247, %v7246
    %s7250 = scalar_lea.vmem [#allocation1], 1800
    %s7251 = smov 3
    %v7252 = vld [vmem:[%s7250] ss:$16 sm:%s7251]
    %s7253 = scalar_lea.vmem [#allocation1], 1800
    %s7254 = smov 12
    %v7255 = vld [vmem:[%s7253] ss:$16 sm:%s7254]
    %vm7256 = vcmask 1043458
    %v7257 = vsel %vm7256, %v7255, %v7252
    %s7258 = scalar_lea.vmem [#allocation1], 1800
    %s7259 = smov 48
    %v7260 = vld [vmem:[%s7258] ss:$16 sm:%s7259]
    %vm7261 = vcmask 1045508
    %v7262 = vsel %vm7261, %v7260, %v7257
    %s7263 = scalar_lea.vmem [#allocation1], 1800
    %s7264 = smov 192
    %v7265 = vld [vmem:[%s7263] ss:$16 sm:%s7264]
    %vm7266 = vcmask 1047558
    %v7267 = vsel %vm7266, %v7265, %v7262
    %7268 = vrot.lane.b32.xlu0 %v7267, 64
    %v7269 = vpop.permute.xlu0 %7268
    %vm7270 = vcmask 589312
    %s7271 = scalar_lea.vmem [#allocation0], 112
    %7272 = vst.msk [vmem:[%s7271] sm:$0xff] %vm7270, %v7269
    %s7273 = scalar_lea.vmem [#allocation1], 392
    %s7274 = smov 3
    %v7275 = vld [vmem:[%s7273] ss:$16 sm:%s7274]
    %s7276 = scalar_lea.vmem [#allocation1], 392
    %s7277 = smov 12
    %v7278 = vld [vmem:[%s7276] ss:$16 sm:%s7277]
    %vm7279 = vcmask 1043458
    %v7280 = vsel %vm7279, %v7278, %v7275
    %s7281 = scalar_lea.vmem [#allocation1], 392
    %s7282 = smov 48
    %v7283 = vld [vmem:[%s7281] ss:$16 sm:%s7282]
    %vm7284 = vcmask 1045508
    %v7285 = vsel %vm7284, %v7283, %v7280
    %s7286 = scalar_lea.vmem [#allocation1], 392
    %s7287 = smov 192
    %v7288 = vld [vmem:[%s7286] ss:$16 sm:%s7287]
    %vm7289 = vcmask 1047558
    %v7290 = vsel %vm7289, %v7288, %v7285
    %7291 = vrot.lane.b32.xlu0 %v7290, 64
    %v7292 = vpop.permute.xlu0 %7291
    %vm7293 = vcmask 589312
    %s7294 = scalar_lea.vmem [#allocation0], 24
    %7295 = vst.msk [vmem:[%s7294] sm:$0xff] %vm7293, %v7292
    %s7296 = scalar_lea.vmem [#allocation1], 904
    %s7297 = smov 3
    %v7298 = vld [vmem:[%s7296] ss:$16 sm:%s7297]
    %s7299 = scalar_lea.vmem [#allocation1], 904
    %s7300 = smov 12
    %v7301 = vld [vmem:[%s7299] ss:$16 sm:%s7300]
    %vm7302 = vcmask 1043458
    %v7303 = vsel %vm7302, %v7301, %v7298
    %s7304 = scalar_lea.vmem [#allocation1], 904
    %s7305 = smov 48
    %v7306 = vld [vmem:[%s7304] ss:$16 sm:%s7305]
    %vm7307 = vcmask 1045508
    %v7308 = vsel %vm7307, %v7306, %v7303
    %s7309 = scalar_lea.vmem [#allocation1], 904
    %s7310 = smov 192
    %v7311 = vld [vmem:[%s7309] ss:$16 sm:%s7310]
    %vm7312 = vcmask 1047558
    %v7313 = vsel %vm7312, %v7311, %v7308
    %7314 = vrot.lane.b32.xlu0 %v7313, 64
    %v7315 = vpop.permute.xlu0 %7314
    %vm7316 = vcmask 589312
    %s7317 = scalar_lea.vmem [#allocation0], 56
    %7318 = vst.msk [vmem:[%s7317] sm:$0xff] %vm7316, %v7315
    %s7319 = scalar_lea.vmem [#allocation1], 1416
    %s7320 = smov 3
    %v7321 = vld [vmem:[%s7319] ss:$16 sm:%s7320]
    %s7322 = scalar_lea.vmem [#allocation1], 1416
    %s7323 = smov 12
    %v7324 = vld [vmem:[%s7322] ss:$16 sm:%s7323]
    %vm7325 = vcmask 1043458
    %v7326 = vsel %vm7325, %v7324, %v7321
    %s7327 = scalar_lea.vmem [#allocation1], 1416
    %s7328 = smov 48
    %v7329 = vld [vmem:[%s7327] ss:$16 sm:%s7328]
    %vm7330 = vcmask 1045508
    %v7331 = vsel %vm7330, %v7329, %v7326
    %s7332 = scalar_lea.vmem [#allocation1], 1416
    %s7333 = smov 192
    %v7334 = vld [vmem:[%s7332] ss:$16 sm:%s7333]
    %vm7335 = vcmask 1047558
    %v7336 = vsel %vm7335, %v7334, %v7331
    %7337 = vrot.lane.b32.xlu0 %v7336, 64
    %v7338 = vpop.permute.xlu0 %7337
    %vm7339 = vcmask 589312
    %s7340 = scalar_lea.vmem [#allocation0], 88
    %7341 = vst.msk [vmem:[%s7340] sm:$0xff] %vm7339, %v7338
    %s7342 = scalar_lea.vmem [#allocation1], 1928
    %s7343 = smov 3
    %v7344 = vld [vmem:[%s7342] ss:$16 sm:%s7343]
    %s7345 = scalar_lea.vmem [#allocation1], 1928
    %s7346 = smov 12
    %v7347 = vld [vmem:[%s7345] ss:$16 sm:%s7346]
    %vm7348 = vcmask 1043458
    %v7349 = vsel %vm7348, %v7347, %v7344
    %s7350 = scalar_lea.vmem [#allocation1], 1928
    %s7351 = smov 48
    %v7352 = vld [vmem:[%s7350] ss:$16 sm:%s7351]
    %vm7353 = vcmask 1045508
    %v7354 = vsel %vm7353, %v7352, %v7349
    %s7355 = scalar_lea.vmem [#allocation1], 1928
    %s7356 = smov 192
    %v7357 = vld [vmem:[%s7355] ss:$16 sm:%s7356]
    %vm7358 = vcmask 1047558
    %v7359 = vsel %vm7358, %v7357, %v7354
    %7360 = vrot.lane.b32.xlu0 %v7359, 64
    %v7361 = vpop.permute.xlu0 %7360
    %vm7362 = vcmask 589312
    %s7363 = scalar_lea.vmem [#allocation0], 120
    %7364 = vst.msk [vmem:[%s7363] sm:$0xff] %vm7362, %v7361
    %s7365 = scalar_lea.vmem [#allocation1], 7
    %s7366 = smov 3
    %v7367 = vld [vmem:[%s7365] ss:$16 sm:%s7366]
    %s7368 = scalar_lea.vmem [#allocation1], 7
    %s7369 = smov 12
    %v7370 = vld [vmem:[%s7368] ss:$16 sm:%s7369]
    %vm7371 = vcmask 1043458
    %v7372 = vsel %vm7371, %v7370, %v7367
    %s7373 = scalar_lea.vmem [#allocation1], 7
    %s7374 = smov 48
    %v7375 = vld [vmem:[%s7373] ss:$16 sm:%s7374]
    %vm7376 = vcmask 1045508
    %v7377 = vsel %vm7376, %v7375, %v7372
    %s7378 = scalar_lea.vmem [#allocation1], 7
    %s7379 = smov 192
    %v7380 = vld [vmem:[%s7378] ss:$16 sm:%s7379]
    %vm7381 = vcmask 1047558
    %v7382 = vsel %vm7381, %v7380, %v7377
    %7383 = vrot.lane.b32.xlu0 %v7382, 56
    %v7384 = vpop.permute.xlu0 %7383
    %vm7385 = vcmask 523712
    %7386 = vst.msk [vmem:[#allocation0] sm:$0xff] %vm7385, %v7384
    %s7387 = scalar_lea.vmem [#allocation1], 519
    %s7388 = smov 3
    %v7389 = vld [vmem:[%s7387] ss:$16 sm:%s7388]
    %s7390 = scalar_lea.vmem [#allocation1], 519
    %s7391 = smov 12
    %v7392 = vld [vmem:[%s7390] ss:$16 sm:%s7391]
    %vm7393 = vcmask 1043458
    %v7394 = vsel %vm7393, %v7392, %v7389
    %s7395 = scalar_lea.vmem [#allocation1], 519
    %s7396 = smov 48
    %v7397 = vld [vmem:[%s7395] ss:$16 sm:%s7396]
    %vm7398 = vcmask 1045508
    %v7399 = vsel %vm7398, %v7397, %v7394
    %s7400 = scalar_lea.vmem [#allocation1], 519
    %s7401 = smov 192
    %v7402 = vld [vmem:[%s7400] ss:$16 sm:%s7401]
    %vm7403 = vcmask 1047558
    %v7404 = vsel %vm7403, %v7402, %v7399
    %7405 = vrot.lane.b32.xlu0 %v7404, 56
    %v7406 = vpop.permute.xlu0 %7405
    %vm7407 = vcmask 523712
    %s7408 = scalar_lea.vmem [#allocation0], 32
    %7409 = vst.msk [vmem:[%s7408] sm:$0xff] %vm7407, %v7406
    %s7410 = scalar_lea.vmem [#allocation1], 1031
    %s7411 = smov 3
    %v7412 = vld [vmem:[%s7410] ss:$16 sm:%s7411]
    %s7413 = scalar_lea.vmem [#allocation1], 1031
    %s7414 = smov 12
    %v7415 = vld [vmem:[%s7413] ss:$16 sm:%s7414]
    %vm7416 = vcmask 1043458
    %v7417 = vsel %vm7416, %v7415, %v7412
    %s7418 = scalar_lea.vmem [#allocation1], 1031
    %s7419 = smov 48
    %v7420 = vld [vmem:[%s7418] ss:$16 sm:%s7419]
    %vm7421 = vcmask 1045508
    %v7422 = vsel %vm7421, %v7420, %v7417
    %s7423 = scalar_lea.vmem [#allocation1], 1031
    %s7424 = smov 192
    %v7425 = vld [vmem:[%s7423] ss:$16 sm:%s7424]
    %vm7426 = vcmask 1047558
    %v7427 = vsel %vm7426, %v7425, %v7422
    %7428 = vrot.lane.b32.xlu0 %v7427, 56
    %v7429 = vpop.permute.xlu0 %7428
    %vm7430 = vcmask 523712
    %s7431 = scalar_lea.vmem [#allocation0], 64
    %7432 = vst.msk [vmem:[%s7431] sm:$0xff] %vm7430, %v7429
    %s7433 = scalar_lea.vmem [#allocation1], 1543
    %s7434 = smov 3
    %v7435 = vld [vmem:[%s7433] ss:$16 sm:%s7434]
    %s7436 = scalar_lea.vmem [#allocation1], 1543
    %s7437 = smov 12
    %v7438 = vld [vmem:[%s7436] ss:$16 sm:%s7437]
    %vm7439 = vcmask 1043458
    %v7440 = vsel %vm7439, %v7438, %v7435
    %s7441 = scalar_lea.vmem [#allocation1], 1543
    %s7442 = smov 48
    %v7443 = vld [vmem:[%s7441] ss:$16 sm:%s7442]
    %vm7444 = vcmask 1045508
    %v7445 = vsel %vm7444, %v7443, %v7440
    %s7446 = scalar_lea.vmem [#allocation1], 1543
    %s7447 = smov 192
    %v7448 = vld [vmem:[%s7446] ss:$16 sm:%s7447]
    %vm7449 = vcmask 1047558
    %v7450 = vsel %vm7449, %v7448, %v7445
    %7451 = vrot.lane.b32.xlu0 %v7450, 56
    %v7452 = vpop.permute.xlu0 %7451
    %vm7453 = vcmask 523712
    %s7454 = scalar_lea.vmem [#allocation0], 96
    %7455 = vst.msk [vmem:[%s7454] sm:$0xff] %vm7453, %v7452
    %s7456 = scalar_lea.vmem [#allocation1], 135
    %s7457 = smov 3
    %v7458 = vld [vmem:[%s7456] ss:$16 sm:%s7457]
    %s7459 = scalar_lea.vmem [#allocation1], 135
    %s7460 = smov 12
    %v7461 = vld [vmem:[%s7459] ss:$16 sm:%s7460]
    %vm7462 = vcmask 1043458
    %v7463 = vsel %vm7462, %v7461, %v7458
    %s7464 = scalar_lea.vmem [#allocation1], 135
    %s7465 = smov 48
    %v7466 = vld [vmem:[%s7464] ss:$16 sm:%s7465]
    %vm7467 = vcmask 1045508
    %v7468 = vsel %vm7467, %v7466, %v7463
    %s7469 = scalar_lea.vmem [#allocation1], 135
    %s7470 = smov 192
    %v7471 = vld [vmem:[%s7469] ss:$16 sm:%s7470]
    %vm7472 = vcmask 1047558
    %v7473 = vsel %vm7472, %v7471, %v7468
    %7474 = vrot.lane.b32.xlu0 %v7473, 56
    %v7475 = vpop.permute.xlu0 %7474
    %vm7476 = vcmask 523712
    %s7477 = scalar_lea.vmem [#allocation0], 8
    %7478 = vst.msk [vmem:[%s7477] sm:$0xff] %vm7476, %v7475
    %s7479 = scalar_lea.vmem [#allocation1], 647
    %s7480 = smov 3
    %v7481 = vld [vmem:[%s7479] ss:$16 sm:%s7480]
    %s7482 = scalar_lea.vmem [#allocation1], 647
    %s7483 = smov 12
    %v7484 = vld [vmem:[%s7482] ss:$16 sm:%s7483]
    %vm7485 = vcmask 1043458
    %v7486 = vsel %vm7485, %v7484, %v7481
    %s7487 = scalar_lea.vmem [#allocation1], 647
    %s7488 = smov 48
    %v7489 = vld [vmem:[%s7487] ss:$16 sm:%s7488]
    %vm7490 = vcmask 1045508
    %v7491 = vsel %vm7490, %v7489, %v7486
    %s7492 = scalar_lea.vmem [#allocation1], 647
    %s7493 = smov 192
    %v7494 = vld [vmem:[%s7492] ss:$16 sm:%s7493]
    %vm7495 = vcmask 1047558
    %v7496 = vsel %vm7495, %v7494, %v7491
    %7497 = vrot.lane.b32.xlu0 %v7496, 56
    %v7498 = vpop.permute.xlu0 %7497
    %vm7499 = vcmask 523712
    %s7500 = scalar_lea.vmem [#allocation0], 40
    %7501 = vst.msk [vmem:[%s7500] sm:$0xff] %vm7499, %v7498
    %s7502 = scalar_lea.vmem [#allocation1], 1159
    %s7503 = smov 3
    %v7504 = vld [vmem:[%s7502] ss:$16 sm:%s7503]
    %s7505 = scalar_lea.vmem [#allocation1], 1159
    %s7506 = smov 12
    %v7507 = vld [vmem:[%s7505] ss:$16 sm:%s7506]
    %vm7508 = vcmask 1043458
    %v7509 = vsel %vm7508, %v7507, %v7504
    %s7510 = scalar_lea.vmem [#allocation1], 1159
    %s7511 = smov 48
    %v7512 = vld [vmem:[%s7510] ss:$16 sm:%s7511]
    %vm7513 = vcmask 1045508
    %v7514 = vsel %vm7513, %v7512, %v7509
    %s7515 = scalar_lea.vmem [#allocation1], 1159
    %s7516 = smov 192
    %v7517 = vld [vmem:[%s7515] ss:$16 sm:%s7516]
    %vm7518 = vcmask 1047558
    %v7519 = vsel %vm7518, %v7517, %v7514
    %7520 = vrot.lane.b32.xlu0 %v7519, 56
    %v7521 = vpop.permute.xlu0 %7520
    %vm7522 = vcmask 523712
    %s7523 = scalar_lea.vmem [#allocation0], 72
    %7524 = vst.msk [vmem:[%s7523] sm:$0xff] %vm7522, %v7521
    %s7525 = scalar_lea.vmem [#allocation1], 1671
    %s7526 = smov 3
    %v7527 = vld [vmem:[%s7525] ss:$16 sm:%s7526]
    %s7528 = scalar_lea.vmem [#allocation1], 1671
    %s7529 = smov 12
    %v7530 = vld [vmem:[%s7528] ss:$16 sm:%s7529]
    %vm7531 = vcmask 1043458
    %v7532 = vsel %vm7531, %v7530, %v7527
    %s7533 = scalar_lea.vmem [#allocation1], 1671
    %s7534 = smov 48
    %v7535 = vld [vmem:[%s7533] ss:$16 sm:%s7534]
    %vm7536 = vcmask 1045508
    %v7537 = vsel %vm7536, %v7535, %v7532
    %s7538 = scalar_lea.vmem [#allocation1], 1671
    %s7539 = smov 192
    %v7540 = vld [vmem:[%s7538] ss:$16 sm:%s7539]
    %vm7541 = vcmask 1047558
    %v7542 = vsel %vm7541, %v7540, %v7537
    %7543 = vrot.lane.b32.xlu0 %v7542, 56
    %v7544 = vpop.permute.xlu0 %7543
    %vm7545 = vcmask 523712
    %s7546 = scalar_lea.vmem [#allocation0], 104
    %7547 = vst.msk [vmem:[%s7546] sm:$0xff] %vm7545, %v7544
    %s7548 = scalar_lea.vmem [#allocation1], 263
    %s7549 = smov 3
    %v7550 = vld [vmem:[%s7548] ss:$16 sm:%s7549]
    %s7551 = scalar_lea.vmem [#allocation1], 263
    %s7552 = smov 12
    %v7553 = vld [vmem:[%s7551] ss:$16 sm:%s7552]
    %vm7554 = vcmask 1043458
    %v7555 = vsel %vm7554, %v7553, %v7550
    %s7556 = scalar_lea.vmem [#allocation1], 263
    %s7557 = smov 48
    %v7558 = vld [vmem:[%s7556] ss:$16 sm:%s7557]
    %vm7559 = vcmask 1045508
    %v7560 = vsel %vm7559, %v7558, %v7555
    %s7561 = scalar_lea.vmem [#allocation1], 263
    %s7562 = smov 192
    %v7563 = vld [vmem:[%s7561] ss:$16 sm:%s7562]
    %vm7564 = vcmask 1047558
    %v7565 = vsel %vm7564, %v7563, %v7560
    %7566 = vrot.lane.b32.xlu0 %v7565, 56
    %v7567 = vpop.permute.xlu0 %7566
    %vm7568 = vcmask 523712
    %s7569 = scalar_lea.vmem [#allocation0], 16
    %7570 = vst.msk [vmem:[%s7569] sm:$0xff] %vm7568, %v7567
    %s7571 = scalar_lea.vmem [#allocation1], 775
    %s7572 = smov 3
    %v7573 = vld [vmem:[%s7571] ss:$16 sm:%s7572]
    %s7574 = scalar_lea.vmem [#allocation1], 775
    %s7575 = smov 12
    %v7576 = vld [vmem:[%s7574] ss:$16 sm:%s7575]
    %vm7577 = vcmask 1043458
    %v7578 = vsel %vm7577, %v7576, %v7573
    %s7579 = scalar_lea.vmem [#allocation1], 775
    %s7580 = smov 48
    %v7581 = vld [vmem:[%s7579] ss:$16 sm:%s7580]
    %vm7582 = vcmask 1045508
    %v7583 = vsel %vm7582, %v7581, %v7578
    %s7584 = scalar_lea.vmem [#allocation1], 775
    %s7585 = smov 192
    %v7586 = vld [vmem:[%s7584] ss:$16 sm:%s7585]
    %vm7587 = vcmask 1047558
    %v7588 = vsel %vm7587, %v7586, %v7583
    %7589 = vrot.lane.b32.xlu0 %v7588, 56
    %v7590 = vpop.permute.xlu0 %7589
    %vm7591 = vcmask 523712
    %s7592 = scalar_lea.vmem [#allocation0], 48
    %7593 = vst.msk [vmem:[%s7592] sm:$0xff] %vm7591, %v7590
    %s7594 = scalar_lea.vmem [#allocation1], 1287
    %s7595 = smov 3
    %v7596 = vld [vmem:[%s7594] ss:$16 sm:%s7595]
    %s7597 = scalar_lea.vmem [#allocation1], 1287
    %s7598 = smov 12
    %v7599 = vld [vmem:[%s7597] ss:$16 sm:%s7598]
    %vm7600 = vcmask 1043458
    %v7601 = vsel %vm7600, %v7599, %v7596
    %s7602 = scalar_lea.vmem [#allocation1], 1287
    %s7603 = smov 48
    %v7604 = vld [vmem:[%s7602] ss:$16 sm:%s7603]
    %vm7605 = vcmask 1045508
    %v7606 = vsel %vm7605, %v7604, %v7601
    %s7607 = scalar_lea.vmem [#allocation1], 1287
    %s7608 = smov 192
    %v7609 = vld [vmem:[%s7607] ss:$16 sm:%s7608]
    %vm7610 = vcmask 1047558
    %v7611 = vsel %vm7610, %v7609, %v7606
    %7612 = vrot.lane.b32.xlu0 %v7611, 56
    %v7613 = vpop.permute.xlu0 %7612
    %vm7614 = vcmask 523712
    %s7615 = scalar_lea.vmem [#allocation0], 80
    %7616 = vst.msk [vmem:[%s7615] sm:$0xff] %vm7614, %v7613
    %s7617 = scalar_lea.vmem [#allocation1], 1799
    %s7618 = smov 3
    %v7619 = vld [vmem:[%s7617] ss:$16 sm:%s7618]
    %s7620 = scalar_lea.vmem [#allocation1], 1799
    %s7621 = smov 12
    %v7622 = vld [vmem:[%s7620] ss:$16 sm:%s7621]
    %vm7623 = vcmask 1043458
    %v7624 = vsel %vm7623, %v7622, %v7619
    %s7625 = scalar_lea.vmem [#allocation1], 1799
    %s7626 = smov 48
    %v7627 = vld [vmem:[%s7625] ss:$16 sm:%s7626]
    %vm7628 = vcmask 1045508
    %v7629 = vsel %vm7628, %v7627, %v7624
    %s7630 = scalar_lea.vmem [#allocation1], 1799
    %s7631 = smov 192
    %v7632 = vld [vmem:[%s7630] ss:$16 sm:%s7631]
    %vm7633 = vcmask 1047558
    %v7634 = vsel %vm7633, %v7632, %v7629
    %7635 = vrot.lane.b32.xlu0 %v7634, 56
    %v7636 = vpop.permute.xlu0 %7635
    %vm7637 = vcmask 523712
    %s7638 = scalar_lea.vmem [#allocation0], 112
    %7639 = vst.msk [vmem:[%s7638] sm:$0xff] %vm7637, %v7636
    %s7640 = scalar_lea.vmem [#allocation1], 391
    %s7641 = smov 3
    %v7642 = vld [vmem:[%s7640] ss:$16 sm:%s7641]
    %s7643 = scalar_lea.vmem [#allocation1], 391
    %s7644 = smov 12
    %v7645 = vld [vmem:[%s7643] ss:$16 sm:%s7644]
    %vm7646 = vcmask 1043458
    %v7647 = vsel %vm7646, %v7645, %v7642
    %s7648 = scalar_lea.vmem [#allocation1], 391
    %s7649 = smov 48
    %v7650 = vld [vmem:[%s7648] ss:$16 sm:%s7649]
    %vm7651 = vcmask 1045508
    %v7652 = vsel %vm7651, %v7650, %v7647
    %s7653 = scalar_lea.vmem [#allocation1], 391
    %s7654 = smov 192
    %v7655 = vld [vmem:[%s7653] ss:$16 sm:%s7654]
    %vm7656 = vcmask 1047558
    %v7657 = vsel %vm7656, %v7655, %v7652
    %7658 = vrot.lane.b32.xlu0 %v7657, 56
    %v7659 = vpop.permute.xlu0 %7658
    %vm7660 = vcmask 523712
    %s7661 = scalar_lea.vmem [#allocation0], 24
    %7662 = vst.msk [vmem:[%s7661] sm:$0xff] %vm7660, %v7659
    %s7663 = scalar_lea.vmem [#allocation1], 903
    %s7664 = smov 3
    %v7665 = vld [vmem:[%s7663] ss:$16 sm:%s7664]
    %s7666 = scalar_lea.vmem [#allocation1], 903
    %s7667 = smov 12
    %v7668 = vld [vmem:[%s7666] ss:$16 sm:%s7667]
    %vm7669 = vcmask 1043458
    %v7670 = vsel %vm7669, %v7668, %v7665
    %s7671 = scalar_lea.vmem [#allocation1], 903
    %s7672 = smov 48
    %v7673 = vld [vmem:[%s7671] ss:$16 sm:%s7672]
    %vm7674 = vcmask 1045508
    %v7675 = vsel %vm7674, %v7673, %v7670
    %s7676 = scalar_lea.vmem [#allocation1], 903
    %s7677 = smov 192
    %v7678 = vld [vmem:[%s7676] ss:$16 sm:%s7677]
    %vm7679 = vcmask 1047558
    %v7680 = vsel %vm7679, %v7678, %v7675
    %7681 = vrot.lane.b32.xlu0 %v7680, 56
    %v7682 = vpop.permute.xlu0 %7681
    %vm7683 = vcmask 523712
    %s7684 = scalar_lea.vmem [#allocation0], 56
    %7685 = vst.msk [vmem:[%s7684] sm:$0xff] %vm7683, %v7682
    %s7686 = scalar_lea.vmem [#allocation1], 1415
    %s7687 = smov 3
    %v7688 = vld [vmem:[%s7686] ss:$16 sm:%s7687]
    %s7689 = scalar_lea.vmem [#allocation1], 1415
    %s7690 = smov 12
    %v7691 = vld [vmem:[%s7689] ss:$16 sm:%s7690]
    %vm7692 = vcmask 1043458
    %v7693 = vsel %vm7692, %v7691, %v7688
    %s7694 = scalar_lea.vmem [#allocation1], 1415
    %s7695 = smov 48
    %v7696 = vld [vmem:[%s7694] ss:$16 sm:%s7695]
    %vm7697 = vcmask 1045508
    %v7698 = vsel %vm7697, %v7696, %v7693
    %s7699 = scalar_lea.vmem [#allocation1], 1415
    %s7700 = smov 192
    %v7701 = vld [vmem:[%s7699] ss:$16 sm:%s7700]
    %vm7702 = vcmask 1047558
    %v7703 = vsel %vm7702, %v7701, %v7698
    %7704 = vrot.lane.b32.xlu0 %v7703, 56
    %v7705 = vpop.permute.xlu0 %7704
    %vm7706 = vcmask 523712
    %s7707 = scalar_lea.vmem [#allocation0], 88
    %7708 = vst.msk [vmem:[%s7707] sm:$0xff] %vm7706, %v7705
    %s7709 = scalar_lea.vmem [#allocation1], 1927
    %s7710 = smov 3
    %v7711 = vld [vmem:[%s7709] ss:$16 sm:%s7710]
    %s7712 = scalar_lea.vmem [#allocation1], 1927
    %s7713 = smov 12
    %v7714 = vld [vmem:[%s7712] ss:$16 sm:%s7713]
    %vm7715 = vcmask 1043458
    %v7716 = vsel %vm7715, %v7714, %v7711
    %s7717 = scalar_lea.vmem [#allocation1], 1927
    %s7718 = smov 48
    %v7719 = vld [vmem:[%s7717] ss:$16 sm:%s7718]
    %vm7720 = vcmask 1045508
    %v7721 = vsel %vm7720, %v7719, %v7716
    %s7722 = scalar_lea.vmem [#allocation1], 1927
    %s7723 = smov 192
    %v7724 = vld [vmem:[%s7722] ss:$16 sm:%s7723]
    %vm7725 = vcmask 1047558
    %v7726 = vsel %vm7725, %v7724, %v7721
    %7727 = vrot.lane.b32.xlu0 %v7726, 56
    %v7728 = vpop.permute.xlu0 %7727
    %vm7729 = vcmask 523712
    %s7730 = scalar_lea.vmem [#allocation0], 120
    %7731 = vst.msk [vmem:[%s7730] sm:$0xff] %vm7729, %v7728
    %s7732 = scalar_lea.vmem [#allocation1], 6
    %s7733 = smov 3
    %v7734 = vld [vmem:[%s7732] ss:$16 sm:%s7733]
    %s7735 = scalar_lea.vmem [#allocation1], 6
    %s7736 = smov 12
    %v7737 = vld [vmem:[%s7735] ss:$16 sm:%s7736]
    %vm7738 = vcmask 1043458
    %v7739 = vsel %vm7738, %v7737, %v7734
    %s7740 = scalar_lea.vmem [#allocation1], 6
    %s7741 = smov 48
    %v7742 = vld [vmem:[%s7740] ss:$16 sm:%s7741]
    %vm7743 = vcmask 1045508
    %v7744 = vsel %vm7743, %v7742, %v7739
    %s7745 = scalar_lea.vmem [#allocation1], 6
    %s7746 = smov 192
    %v7747 = vld [vmem:[%s7745] ss:$16 sm:%s7746]
    %vm7748 = vcmask 1047558
    %v7749 = vsel %vm7748, %v7747, %v7744
    %7750 = vrot.lane.b32.xlu0 %v7749, 48
    %v7751 = vpop.permute.xlu0 %7750
    %vm7752 = vcmask 458112
    %7753 = vst.msk [vmem:[#allocation0] sm:$0xff] %vm7752, %v7751
    %s7754 = scalar_lea.vmem [#allocation1], 518
    %s7755 = smov 3
    %v7756 = vld [vmem:[%s7754] ss:$16 sm:%s7755]
    %s7757 = scalar_lea.vmem [#allocation1], 518
    %s7758 = smov 12
    %v7759 = vld [vmem:[%s7757] ss:$16 sm:%s7758]
    %vm7760 = vcmask 1043458
    %v7761 = vsel %vm7760, %v7759, %v7756
    %s7762 = scalar_lea.vmem [#allocation1], 518
    %s7763 = smov 48
    %v7764 = vld [vmem:[%s7762] ss:$16 sm:%s7763]
    %vm7765 = vcmask 1045508
    %v7766 = vsel %vm7765, %v7764, %v7761
    %s7767 = scalar_lea.vmem [#allocation1], 518
    %s7768 = smov 192
    %v7769 = vld [vmem:[%s7767] ss:$16 sm:%s7768]
    %vm7770 = vcmask 1047558
    %v7771 = vsel %vm7770, %v7769, %v7766
    %7772 = vrot.lane.b32.xlu0 %v7771, 48
    %v7773 = vpop.permute.xlu0 %7772
    %vm7774 = vcmask 458112
    %s7775 = scalar_lea.vmem [#allocation0], 32
    %7776 = vst.msk [vmem:[%s7775] sm:$0xff] %vm7774, %v7773
    %s7777 = scalar_lea.vmem [#allocation1], 1030
    %s7778 = smov 3
    %v7779 = vld [vmem:[%s7777] ss:$16 sm:%s7778]
    %s7780 = scalar_lea.vmem [#allocation1], 1030
    %s7781 = smov 12
    %v7782 = vld [vmem:[%s7780] ss:$16 sm:%s7781]
    %vm7783 = vcmask 1043458
    %v7784 = vsel %vm7783, %v7782, %v7779
    %s7785 = scalar_lea.vmem [#allocation1], 1030
    %s7786 = smov 48
    %v7787 = vld [vmem:[%s7785] ss:$16 sm:%s7786]
    %vm7788 = vcmask 1045508
    %v7789 = vsel %vm7788, %v7787, %v7784
    %s7790 = scalar_lea.vmem [#allocation1], 1030
    %s7791 = smov 192
    %v7792 = vld [vmem:[%s7790] ss:$16 sm:%s7791]
    %vm7793 = vcmask 1047558
    %v7794 = vsel %vm7793, %v7792, %v7789
    %7795 = vrot.lane.b32.xlu0 %v7794, 48
    %v7796 = vpop.permute.xlu0 %7795
    %vm7797 = vcmask 458112
    %s7798 = scalar_lea.vmem [#allocation0], 64
    %7799 = vst.msk [vmem:[%s7798] sm:$0xff] %vm7797, %v7796
    %s7800 = scalar_lea.vmem [#allocation1], 1542
    %s7801 = smov 3
    %v7802 = vld [vmem:[%s7800] ss:$16 sm:%s7801]
    %s7803 = scalar_lea.vmem [#allocation1], 1542
    %s7804 = smov 12
    %v7805 = vld [vmem:[%s7803] ss:$16 sm:%s7804]
    %vm7806 = vcmask 1043458
    %v7807 = vsel %vm7806, %v7805, %v7802
    %s7808 = scalar_lea.vmem [#allocation1], 1542
    %s7809 = smov 48
    %v7810 = vld [vmem:[%s7808] ss:$16 sm:%s7809]
    %vm7811 = vcmask 1045508
    %v7812 = vsel %vm7811, %v7810, %v7807
    %s7813 = scalar_lea.vmem [#allocation1], 1542
    %s7814 = smov 192
    %v7815 = vld [vmem:[%s7813] ss:$16 sm:%s7814]
    %vm7816 = vcmask 1047558
    %v7817 = vsel %vm7816, %v7815, %v7812
    %7818 = vrot.lane.b32.xlu0 %v7817, 48
    %v7819 = vpop.permute.xlu0 %7818
    %vm7820 = vcmask 458112
    %s7821 = scalar_lea.vmem [#allocation0], 96
    %7822 = vst.msk [vmem:[%s7821] sm:$0xff] %vm7820, %v7819
    %s7823 = scalar_lea.vmem [#allocation1], 134
    %s7824 = smov 3
    %v7825 = vld [vmem:[%s7823] ss:$16 sm:%s7824]
    %s7826 = scalar_lea.vmem [#allocation1], 134
    %s7827 = smov 12
    %v7828 = vld [vmem:[%s7826] ss:$16 sm:%s7827]
    %vm7829 = vcmask 1043458
    %v7830 = vsel %vm7829, %v7828, %v7825
    %s7831 = scalar_lea.vmem [#allocation1], 134
    %s7832 = smov 48
    %v7833 = vld [vmem:[%s7831] ss:$16 sm:%s7832]
    %vm7834 = vcmask 1045508
    %v7835 = vsel %vm7834, %v7833, %v7830
    %s7836 = scalar_lea.vmem [#allocation1], 134
    %s7837 = smov 192
    %v7838 = vld [vmem:[%s7836] ss:$16 sm:%s7837]
    %vm7839 = vcmask 1047558
    %v7840 = vsel %vm7839, %v7838, %v7835
    %7841 = vrot.lane.b32.xlu0 %v7840, 48
    %v7842 = vpop.permute.xlu0 %7841
    %vm7843 = vcmask 458112
    %s7844 = scalar_lea.vmem [#allocation0], 8
    %7845 = vst.msk [vmem:[%s7844] sm:$0xff] %vm7843, %v7842
    %s7846 = scalar_lea.vmem [#allocation1], 646
    %s7847 = smov 3
    %v7848 = vld [vmem:[%s7846] ss:$16 sm:%s7847]
    %s7849 = scalar_lea.vmem [#allocation1], 646
    %s7850 = smov 12
    %v7851 = vld [vmem:[%s7849] ss:$16 sm:%s7850]
    %vm7852 = vcmask 1043458
    %v7853 = vsel %vm7852, %v7851, %v7848
    %s7854 = scalar_lea.vmem [#allocation1], 646
    %s7855 = smov 48
    %v7856 = vld [vmem:[%s7854] ss:$16 sm:%s7855]
    %vm7857 = vcmask 1045508
    %v7858 = vsel %vm7857, %v7856, %v7853
    %s7859 = scalar_lea.vmem [#allocation1], 646
    %s7860 = smov 192
    %v7861 = vld [vmem:[%s7859] ss:$16 sm:%s7860]
    %vm7862 = vcmask 1047558
    %v7863 = vsel %vm7862, %v7861, %v7858
    %7864 = vrot.lane.b32.xlu0 %v7863, 48
    %v7865 = vpop.permute.xlu0 %7864
    %vm7866 = vcmask 458112
    %s7867 = scalar_lea.vmem [#allocation0], 40
    %7868 = vst.msk [vmem:[%s7867] sm:$0xff] %vm7866, %v7865
    %s7869 = scalar_lea.vmem [#allocation1], 1158
    %s7870 = smov 3
    %v7871 = vld [vmem:[%s7869] ss:$16 sm:%s7870]
    %s7872 = scalar_lea.vmem [#allocation1], 1158
    %s7873 = smov 12
    %v7874 = vld [vmem:[%s7872] ss:$16 sm:%s7873]
    %vm7875 = vcmask 1043458
    %v7876 = vsel %vm7875, %v7874, %v7871
    %s7877 = scalar_lea.vmem [#allocation1], 1158
    %s7878 = smov 48
    %v7879 = vld [vmem:[%s7877] ss:$16 sm:%s7878]
    %vm7880 = vcmask 1045508
    %v7881 = vsel %vm7880, %v7879, %v7876
    %s7882 = scalar_lea.vmem [#allocation1], 1158
    %s7883 = smov 192
    %v7884 = vld [vmem:[%s7882] ss:$16 sm:%s7883]
    %vm7885 = vcmask 1047558
    %v7886 = vsel %vm7885, %v7884, %v7881
    %7887 = vrot.lane.b32.xlu0 %v7886, 48
    %v7888 = vpop.permute.xlu0 %7887
    %vm7889 = vcmask 458112
    %s7890 = scalar_lea.vmem [#allocation0], 72
    %7891 = vst.msk [vmem:[%s7890] sm:$0xff] %vm7889, %v7888
    %s7892 = scalar_lea.vmem [#allocation1], 1670
    %s7893 = smov 3
    %v7894 = vld [vmem:[%s7892] ss:$16 sm:%s7893]
    %s7895 = scalar_lea.vmem [#allocation1], 1670
    %s7896 = smov 12
    %v7897 = vld [vmem:[%s7895] ss:$16 sm:%s7896]
    %vm7898 = vcmask 1043458
    %v7899 = vsel %vm7898, %v7897, %v7894
    %s7900 = scalar_lea.vmem [#allocation1], 1670
    %s7901 = smov 48
    %v7902 = vld [vmem:[%s7900] ss:$16 sm:%s7901]
    %vm7903 = vcmask 1045508
    %v7904 = vsel %vm7903, %v7902, %v7899
    %s7905 = scalar_lea.vmem [#allocation1], 1670
    %s7906 = smov 192
    %v7907 = vld [vmem:[%s7905] ss:$16 sm:%s7906]
    %vm7908 = vcmask 1047558
    %v7909 = vsel %vm7908, %v7907, %v7904
    %7910 = vrot.lane.b32.xlu0 %v7909, 48
    %v7911 = vpop.permute.xlu0 %7910
    %vm7912 = vcmask 458112
    %s7913 = scalar_lea.vmem [#allocation0], 104
    %7914 = vst.msk [vmem:[%s7913] sm:$0xff] %vm7912, %v7911
    %s7915 = scalar_lea.vmem [#allocation1], 262
    %s7916 = smov 3
    %v7917 = vld [vmem:[%s7915] ss:$16 sm:%s7916]
    %s7918 = scalar_lea.vmem [#allocation1], 262
    %s7919 = smov 12
    %v7920 = vld [vmem:[%s7918] ss:$16 sm:%s7919]
    %vm7921 = vcmask 1043458
    %v7922 = vsel %vm7921, %v7920, %v7917
    %s7923 = scalar_lea.vmem [#allocation1], 262
    %s7924 = smov 48
    %v7925 = vld [vmem:[%s7923] ss:$16 sm:%s7924]
    %vm7926 = vcmask 1045508
    %v7927 = vsel %vm7926, %v7925, %v7922
    %s7928 = scalar_lea.vmem [#allocation1], 262
    %s7929 = smov 192
    %v7930 = vld [vmem:[%s7928] ss:$16 sm:%s7929]
    %vm7931 = vcmask 1047558
    %v7932 = vsel %vm7931, %v7930, %v7927
    %7933 = vrot.lane.b32.xlu0 %v7932, 48
    %v7934 = vpop.permute.xlu0 %7933
    %vm7935 = vcmask 458112
    %s7936 = scalar_lea.vmem [#allocation0], 16
    %7937 = vst.msk [vmem:[%s7936] sm:$0xff] %vm7935, %v7934
    %s7938 = scalar_lea.vmem [#allocation1], 774
    %s7939 = smov 3
    %v7940 = vld [vmem:[%s7938] ss:$16 sm:%s7939]
    %s7941 = scalar_lea.vmem [#allocation1], 774
    %s7942 = smov 12
    %v7943 = vld [vmem:[%s7941] ss:$16 sm:%s7942]
    %vm7944 = vcmask 1043458
    %v7945 = vsel %vm7944, %v7943, %v7940
    %s7946 = scalar_lea.vmem [#allocation1], 774
    %s7947 = smov 48
    %v7948 = vld [vmem:[%s7946] ss:$16 sm:%s7947]
    %vm7949 = vcmask 1045508
    %v7950 = vsel %vm7949, %v7948, %v7945
    %s7951 = scalar_lea.vmem [#allocation1], 774
    %s7952 = smov 192
    %v7953 = vld [vmem:[%s7951] ss:$16 sm:%s7952]
    %vm7954 = vcmask 1047558
    %v7955 = vsel %vm7954, %v7953, %v7950
    %7956 = vrot.lane.b32.xlu0 %v7955, 48
    %v7957 = vpop.permute.xlu0 %7956
    %vm7958 = vcmask 458112
    %s7959 = scalar_lea.vmem [#allocation0], 48
    %7960 = vst.msk [vmem:[%s7959] sm:$0xff] %vm7958, %v7957
    %s7961 = scalar_lea.vmem [#allocation1], 1286
    %s7962 = smov 3
    %v7963 = vld [vmem:[%s7961] ss:$16 sm:%s7962]
    %s7964 = scalar_lea.vmem [#allocation1], 1286
    %s7965 = smov 12
    %v7966 = vld [vmem:[%s7964] ss:$16 sm:%s7965]
    %vm7967 = vcmask 1043458
    %v7968 = vsel %vm7967, %v7966, %v7963
    %s7969 = scalar_lea.vmem [#allocation1], 1286
    %s7970 = smov 48
    %v7971 = vld [vmem:[%s7969] ss:$16 sm:%s7970]
    %vm7972 = vcmask 1045508
    %v7973 = vsel %vm7972, %v7971, %v7968
    %s7974 = scalar_lea.vmem [#allocation1], 1286
    %s7975 = smov 192
    %v7976 = vld [vmem:[%s7974] ss:$16 sm:%s7975]
    %vm7977 = vcmask 1047558
    %v7978 = vsel %vm7977, %v7976, %v7973
    %7979 = vrot.lane.b32.xlu0 %v7978, 48
    %v7980 = vpop.permute.xlu0 %7979
    %vm7981 = vcmask 458112
    %s7982 = scalar_lea.vmem [#allocation0], 80
    %7983 = vst.msk [vmem:[%s7982] sm:$0xff] %vm7981, %v7980
    %s7984 = scalar_lea.vmem [#allocation1], 1798
    %s7985 = smov 3
    %v7986 = vld [vmem:[%s7984] ss:$16 sm:%s7985]
    %s7987 = scalar_lea.vmem [#allocation1], 1798
    %s7988 = smov 12
    %v7989 = vld [vmem:[%s7987] ss:$16 sm:%s7988]
    %vm7990 = vcmask 1043458
    %v7991 = vsel %vm7990, %v7989, %v7986
    %s7992 = scalar_lea.vmem [#allocation1], 1798
    %s7993 = smov 48
    %v7994 = vld [vmem:[%s7992] ss:$16 sm:%s7993]
    %vm7995 = vcmask 1045508
    %v7996 = vsel %vm7995, %v7994, %v7991
    %s7997 = scalar_lea.vmem [#allocation1], 1798
    %s7998 = smov 192
    %v7999 = vld [vmem:[%s7997] ss:$16 sm:%s7998]
    %vm8000 = vcmask 1047558
    %v8001 = vsel %vm8000, %v7999, %v7996
    %8002 = vrot.lane.b32.xlu0 %v8001, 48
    %v8003 = vpop.permute.xlu0 %8002
    %vm8004 = vcmask 458112
    %s8005 = scalar_lea.vmem [#allocation0], 112
    %8006 = vst.msk [vmem:[%s8005] sm:$0xff] %vm8004, %v8003
    %s8007 = scalar_lea.vmem [#allocation1], 390
    %s8008 = smov 3
    %v8009 = vld [vmem:[%s8007] ss:$16 sm:%s8008]
    %s8010 = scalar_lea.vmem [#allocation1], 390
    %s8011 = smov 12
    %v8012 = vld [vmem:[%s8010] ss:$16 sm:%s8011]
    %vm8013 = vcmask 1043458
    %v8014 = vsel %vm8013, %v8012, %v8009
    %s8015 = scalar_lea.vmem [#allocation1], 390
    %s8016 = smov 48
    %v8017 = vld [vmem:[%s8015] ss:$16 sm:%s8016]
    %vm8018 = vcmask 1045508
    %v8019 = vsel %vm8018, %v8017, %v8014
    %s8020 = scalar_lea.vmem [#allocation1], 390
    %s8021 = smov 192
    %v8022 = vld [vmem:[%s8020] ss:$16 sm:%s8021]
    %vm8023 = vcmask 1047558
    %v8024 = vsel %vm8023, %v8022, %v8019
    %8025 = vrot.lane.b32.xlu0 %v8024, 48
    %v8026 = vpop.permute.xlu0 %8025
    %vm8027 = vcmask 458112
    %s8028 = scalar_lea.vmem [#allocation0], 24
    %8029 = vst.msk [vmem:[%s8028] sm:$0xff] %vm8027, %v8026
    %s8030 = scalar_lea.vmem [#allocation1], 902
    %s8031 = smov 3
    %v8032 = vld [vmem:[%s8030] ss:$16 sm:%s8031]
    %s8033 = scalar_lea.vmem [#allocation1], 902
    %s8034 = smov 12
    %v8035 = vld [vmem:[%s8033] ss:$16 sm:%s8034]
    %vm8036 = vcmask 1043458
    %v8037 = vsel %vm8036, %v8035, %v8032
    %s8038 = scalar_lea.vmem [#allocation1], 902
    %s8039 = smov 48
    %v8040 = vld [vmem:[%s8038] ss:$16 sm:%s8039]
    %vm8041 = vcmask 1045508
    %v8042 = vsel %vm8041, %v8040, %v8037
    %s8043 = scalar_lea.vmem [#allocation1], 902
    %s8044 = smov 192
    %v8045 = vld [vmem:[%s8043] ss:$16 sm:%s8044]
    %vm8046 = vcmask 1047558
    %v8047 = vsel %vm8046, %v8045, %v8042
    %8048 = vrot.lane.b32.xlu0 %v8047, 48
    %v8049 = vpop.permute.xlu0 %8048
    %vm8050 = vcmask 458112
    %s8051 = scalar_lea.vmem [#allocation0], 56
    %8052 = vst.msk [vmem:[%s8051] sm:$0xff] %vm8050, %v8049
    %s8053 = scalar_lea.vmem [#allocation1], 1414
    %s8054 = smov 3
    %v8055 = vld [vmem:[%s8053] ss:$16 sm:%s8054]
    %s8056 = scalar_lea.vmem [#allocation1], 1414
    %s8057 = smov 12
    %v8058 = vld [vmem:[%s8056] ss:$16 sm:%s8057]
    %vm8059 = vcmask 1043458
    %v8060 = vsel %vm8059, %v8058, %v8055
    %s8061 = scalar_lea.vmem [#allocation1], 1414
    %s8062 = smov 48
    %v8063 = vld [vmem:[%s8061] ss:$16 sm:%s8062]
    %vm8064 = vcmask 1045508
    %v8065 = vsel %vm8064, %v8063, %v8060
    %s8066 = scalar_lea.vmem [#allocation1], 1414
    %s8067 = smov 192
    %v8068 = vld [vmem:[%s8066] ss:$16 sm:%s8067]
    %vm8069 = vcmask 1047558
    %v8070 = vsel %vm8069, %v8068, %v8065
    %8071 = vrot.lane.b32.xlu0 %v8070, 48
    %v8072 = vpop.permute.xlu0 %8071
    %vm8073 = vcmask 458112
    %s8074 = scalar_lea.vmem [#allocation0], 88
    %8075 = vst.msk [vmem:[%s8074] sm:$0xff] %vm8073, %v8072
    %s8076 = scalar_lea.vmem [#allocation1], 1926
    %s8077 = smov 3
    %v8078 = vld [vmem:[%s8076] ss:$16 sm:%s8077]
    %s8079 = scalar_lea.vmem [#allocation1], 1926
    %s8080 = smov 12
    %v8081 = vld [vmem:[%s8079] ss:$16 sm:%s8080]
    %vm8082 = vcmask 1043458
    %v8083 = vsel %vm8082, %v8081, %v8078
    %s8084 = scalar_lea.vmem [#allocation1], 1926
    %s8085 = smov 48
    %v8086 = vld [vmem:[%s8084] ss:$16 sm:%s8085]
    %vm8087 = vcmask 1045508
    %v8088 = vsel %vm8087, %v8086, %v8083
    %s8089 = scalar_lea.vmem [#allocation1], 1926
    %s8090 = smov 192
    %v8091 = vld [vmem:[%s8089] ss:$16 sm:%s8090]
    %vm8092 = vcmask 1047558
    %v8093 = vsel %vm8092, %v8091, %v8088
    %8094 = vrot.lane.b32.xlu0 %v8093, 48
    %v8095 = vpop.permute.xlu0 %8094
    %vm8096 = vcmask 458112
    %s8097 = scalar_lea.vmem [#allocation0], 120
    %8098 = vst.msk [vmem:[%s8097] sm:$0xff] %vm8096, %v8095
    %s8099 = scalar_lea.vmem [#allocation1], 5
    %s8100 = smov 3
    %v8101 = vld [vmem:[%s8099] ss:$16 sm:%s8100]
    %s8102 = scalar_lea.vmem [#allocation1], 5
    %s8103 = smov 12
    %v8104 = vld [vmem:[%s8102] ss:$16 sm:%s8103]
    %vm8105 = vcmask 1043458
    %v8106 = vsel %vm8105, %v8104, %v8101
    %s8107 = scalar_lea.vmem [#allocation1], 5
    %s8108 = smov 48
    %v8109 = vld [vmem:[%s8107] ss:$16 sm:%s8108]
    %vm8110 = vcmask 1045508
    %v8111 = vsel %vm8110, %v8109, %v8106
    %s8112 = scalar_lea.vmem [#allocation1], 5
    %s8113 = smov 192
    %v8114 = vld [vmem:[%s8112] ss:$16 sm:%s8113]
    %vm8115 = vcmask 1047558
    %v8116 = vsel %vm8115, %v8114, %v8111
    %8117 = vrot.lane.b32.xlu0 %v8116, 40
    %v8118 = vpop.permute.xlu0 %8117
    %vm8119 = vcmask 392512
    %8120 = vst.msk [vmem:[#allocation0] sm:$0xff] %vm8119, %v8118
    %s8121 = scalar_lea.vmem [#allocation1], 517
    %s8122 = smov 3
    %v8123 = vld [vmem:[%s8121] ss:$16 sm:%s8122]
    %s8124 = scalar_lea.vmem [#allocation1], 517
    %s8125 = smov 12
    %v8126 = vld [vmem:[%s8124] ss:$16 sm:%s8125]
    %vm8127 = vcmask 1043458
    %v8128 = vsel %vm8127, %v8126, %v8123
    %s8129 = scalar_lea.vmem [#allocation1], 517
    %s8130 = smov 48
    %v8131 = vld [vmem:[%s8129] ss:$16 sm:%s8130]
    %vm8132 = vcmask 1045508
    %v8133 = vsel %vm8132, %v8131, %v8128
    %s8134 = scalar_lea.vmem [#allocation1], 517
    %s8135 = smov 192
    %v8136 = vld [vmem:[%s8134] ss:$16 sm:%s8135]
    %vm8137 = vcmask 1047558
    %v8138 = vsel %vm8137, %v8136, %v8133
    %8139 = vrot.lane.b32.xlu0 %v8138, 40
    %v8140 = vpop.permute.xlu0 %8139
    %vm8141 = vcmask 392512
    %s8142 = scalar_lea.vmem [#allocation0], 32
    %8143 = vst.msk [vmem:[%s8142] sm:$0xff] %vm8141, %v8140
    %s8144 = scalar_lea.vmem [#allocation1], 1029
    %s8145 = smov 3
    %v8146 = vld [vmem:[%s8144] ss:$16 sm:%s8145]
    %s8147 = scalar_lea.vmem [#allocation1], 1029
    %s8148 = smov 12
    %v8149 = vld [vmem:[%s8147] ss:$16 sm:%s8148]
    %vm8150 = vcmask 1043458
    %v8151 = vsel %vm8150, %v8149, %v8146
    %s8152 = scalar_lea.vmem [#allocation1], 1029
    %s8153 = smov 48
    %v8154 = vld [vmem:[%s8152] ss:$16 sm:%s8153]
    %vm8155 = vcmask 1045508
    %v8156 = vsel %vm8155, %v8154, %v8151
    %s8157 = scalar_lea.vmem [#allocation1], 1029
    %s8158 = smov 192
    %v8159 = vld [vmem:[%s8157] ss:$16 sm:%s8158]
    %vm8160 = vcmask 1047558
    %v8161 = vsel %vm8160, %v8159, %v8156
    %8162 = vrot.lane.b32.xlu0 %v8161, 40
    %v8163 = vpop.permute.xlu0 %8162
    %vm8164 = vcmask 392512
    %s8165 = scalar_lea.vmem [#allocation0], 64
    %8166 = vst.msk [vmem:[%s8165] sm:$0xff] %vm8164, %v8163
    %s8167 = scalar_lea.vmem [#allocation1], 1541
    %s8168 = smov 3
    %v8169 = vld [vmem:[%s8167] ss:$16 sm:%s8168]
    %s8170 = scalar_lea.vmem [#allocation1], 1541
    %s8171 = smov 12
    %v8172 = vld [vmem:[%s8170] ss:$16 sm:%s8171]
    %vm8173 = vcmask 1043458
    %v8174 = vsel %vm8173, %v8172, %v8169
    %s8175 = scalar_lea.vmem [#allocation1], 1541
    %s8176 = smov 48
    %v8177 = vld [vmem:[%s8175] ss:$16 sm:%s8176]
    %vm8178 = vcmask 1045508
    %v8179 = vsel %vm8178, %v8177, %v8174
    %s8180 = scalar_lea.vmem [#allocation1], 1541
    %s8181 = smov 192
    %v8182 = vld [vmem:[%s8180] ss:$16 sm:%s8181]
    %vm8183 = vcmask 1047558
    %v8184 = vsel %vm8183, %v8182, %v8179
    %8185 = vrot.lane.b32.xlu0 %v8184, 40
    %v8186 = vpop.permute.xlu0 %8185
    %vm8187 = vcmask 392512
    %s8188 = scalar_lea.vmem [#allocation0], 96
    %8189 = vst.msk [vmem:[%s8188] sm:$0xff] %vm8187, %v8186
    %s8190 = scalar_lea.vmem [#allocation1], 133
    %s8191 = smov 3
    %v8192 = vld [vmem:[%s8190] ss:$16 sm:%s8191]
    %s8193 = scalar_lea.vmem [#allocation1], 133
    %s8194 = smov 12
    %v8195 = vld [vmem:[%s8193] ss:$16 sm:%s8194]
    %vm8196 = vcmask 1043458
    %v8197 = vsel %vm8196, %v8195, %v8192
    %s8198 = scalar_lea.vmem [#allocation1], 133
    %s8199 = smov 48
    %v8200 = vld [vmem:[%s8198] ss:$16 sm:%s8199]
    %vm8201 = vcmask 1045508
    %v8202 = vsel %vm8201, %v8200, %v8197
    %s8203 = scalar_lea.vmem [#allocation1], 133
    %s8204 = smov 192
    %v8205 = vld [vmem:[%s8203] ss:$16 sm:%s8204]
    %vm8206 = vcmask 1047558
    %v8207 = vsel %vm8206, %v8205, %v8202
    %8208 = vrot.lane.b32.xlu0 %v8207, 40
    %v8209 = vpop.permute.xlu0 %8208
    %vm8210 = vcmask 392512
    %s8211 = scalar_lea.vmem [#allocation0], 8
    %8212 = vst.msk [vmem:[%s8211] sm:$0xff] %vm8210, %v8209
    %s8213 = scalar_lea.vmem [#allocation1], 645
    %s8214 = smov 3
    %v8215 = vld [vmem:[%s8213] ss:$16 sm:%s8214]
    %s8216 = scalar_lea.vmem [#allocation1], 645
    %s8217 = smov 12
    %v8218 = vld [vmem:[%s8216] ss:$16 sm:%s8217]
    %vm8219 = vcmask 1043458
    %v8220 = vsel %vm8219, %v8218, %v8215
    %s8221 = scalar_lea.vmem [#allocation1], 645
    %s8222 = smov 48
    %v8223 = vld [vmem:[%s8221] ss:$16 sm:%s8222]
    %vm8224 = vcmask 1045508
    %v8225 = vsel %vm8224, %v8223, %v8220
    %s8226 = scalar_lea.vmem [#allocation1], 645
    %s8227 = smov 192
    %v8228 = vld [vmem:[%s8226] ss:$16 sm:%s8227]
    %vm8229 = vcmask 1047558
    %v8230 = vsel %vm8229, %v8228, %v8225
    %8231 = vrot.lane.b32.xlu0 %v8230, 40
    %v8232 = vpop.permute.xlu0 %8231
    %vm8233 = vcmask 392512
    %s8234 = scalar_lea.vmem [#allocation0], 40
    %8235 = vst.msk [vmem:[%s8234] sm:$0xff] %vm8233, %v8232
    %s8236 = scalar_lea.vmem [#allocation1], 1157
    %s8237 = smov 3
    %v8238 = vld [vmem:[%s8236] ss:$16 sm:%s8237]
    %s8239 = scalar_lea.vmem [#allocation1], 1157
    %s8240 = smov 12
    %v8241 = vld [vmem:[%s8239] ss:$16 sm:%s8240]
    %vm8242 = vcmask 1043458
    %v8243 = vsel %vm8242, %v8241, %v8238
    %s8244 = scalar_lea.vmem [#allocation1], 1157
    %s8245 = smov 48
    %v8246 = vld [vmem:[%s8244] ss:$16 sm:%s8245]
    %vm8247 = vcmask 1045508
    %v8248 = vsel %vm8247, %v8246, %v8243
    %s8249 = scalar_lea.vmem [#allocation1], 1157
    %s8250 = smov 192
    %v8251 = vld [vmem:[%s8249] ss:$16 sm:%s8250]
    %vm8252 = vcmask 1047558
    %v8253 = vsel %vm8252, %v8251, %v8248
    %8254 = vrot.lane.b32.xlu0 %v8253, 40
    %v8255 = vpop.permute.xlu0 %8254
    %vm8256 = vcmask 392512
    %s8257 = scalar_lea.vmem [#allocation0], 72
    %8258 = vst.msk [vmem:[%s8257] sm:$0xff] %vm8256, %v8255
    %s8259 = scalar_lea.vmem [#allocation1], 1669
    %s8260 = smov 3
    %v8261 = vld [vmem:[%s8259] ss:$16 sm:%s8260]
    %s8262 = scalar_lea.vmem [#allocation1], 1669
    %s8263 = smov 12
    %v8264 = vld [vmem:[%s8262] ss:$16 sm:%s8263]
    %vm8265 = vcmask 1043458
    %v8266 = vsel %vm8265, %v8264, %v8261
    %s8267 = scalar_lea.vmem [#allocation1], 1669
    %s8268 = smov 48
    %v8269 = vld [vmem:[%s8267] ss:$16 sm:%s8268]
    %vm8270 = vcmask 1045508
    %v8271 = vsel %vm8270, %v8269, %v8266
    %s8272 = scalar_lea.vmem [#allocation1], 1669
    %s8273 = smov 192
    %v8274 = vld [vmem:[%s8272] ss:$16 sm:%s8273]
    %vm8275 = vcmask 1047558
    %v8276 = vsel %vm8275, %v8274, %v8271
    %8277 = vrot.lane.b32.xlu0 %v8276, 40
    %v8278 = vpop.permute.xlu0 %8277
    %vm8279 = vcmask 392512
    %s8280 = scalar_lea.vmem [#allocation0], 104
    %8281 = vst.msk [vmem:[%s8280] sm:$0xff] %vm8279, %v8278
    %s8282 = scalar_lea.vmem [#allocation1], 261
    %s8283 = smov 3
    %v8284 = vld [vmem:[%s8282] ss:$16 sm:%s8283]
    %s8285 = scalar_lea.vmem [#allocation1], 261
    %s8286 = smov 12
    %v8287 = vld [vmem:[%s8285] ss:$16 sm:%s8286]
    %vm8288 = vcmask 1043458
    %v8289 = vsel %vm8288, %v8287, %v8284
    %s8290 = scalar_lea.vmem [#allocation1], 261
    %s8291 = smov 48
    %v8292 = vld [vmem:[%s8290] ss:$16 sm:%s8291]
    %vm8293 = vcmask 1045508
    %v8294 = vsel %vm8293, %v8292, %v8289
    %s8295 = scalar_lea.vmem [#allocation1], 261
    %s8296 = smov 192
    %v8297 = vld [vmem:[%s8295] ss:$16 sm:%s8296]
    %vm8298 = vcmask 1047558
    %v8299 = vsel %vm8298, %v8297, %v8294
    %8300 = vrot.lane.b32.xlu0 %v8299, 40
    %v8301 = vpop.permute.xlu0 %8300
    %vm8302 = vcmask 392512
    %s8303 = scalar_lea.vmem [#allocation0], 16
    %8304 = vst.msk [vmem:[%s8303] sm:$0xff] %vm8302, %v8301
    %s8305 = scalar_lea.vmem [#allocation1], 773
    %s8306 = smov 3
    %v8307 = vld [vmem:[%s8305] ss:$16 sm:%s8306]
    %s8308 = scalar_lea.vmem [#allocation1], 773
    %s8309 = smov 12
    %v8310 = vld [vmem:[%s8308] ss:$16 sm:%s8309]
    %vm8311 = vcmask 1043458
    %v8312 = vsel %vm8311, %v8310, %v8307
    %s8313 = scalar_lea.vmem [#allocation1], 773
    %s8314 = smov 48
    %v8315 = vld [vmem:[%s8313] ss:$16 sm:%s8314]
    %vm8316 = vcmask 1045508
    %v8317 = vsel %vm8316, %v8315, %v8312
    %s8318 = scalar_lea.vmem [#allocation1], 773
    %s8319 = smov 192
    %v8320 = vld [vmem:[%s8318] ss:$16 sm:%s8319]
    %vm8321 = vcmask 1047558
    %v8322 = vsel %vm8321, %v8320, %v8317
    %8323 = vrot.lane.b32.xlu0 %v8322, 40
    %v8324 = vpop.permute.xlu0 %8323
    %vm8325 = vcmask 392512
    %s8326 = scalar_lea.vmem [#allocation0], 48
    %8327 = vst.msk [vmem:[%s8326] sm:$0xff] %vm8325, %v8324
    %s8328 = scalar_lea.vmem [#allocation1], 1285
    %s8329 = smov 3
    %v8330 = vld [vmem:[%s8328] ss:$16 sm:%s8329]
    %s8331 = scalar_lea.vmem [#allocation1], 1285
    %s8332 = smov 12
    %v8333 = vld [vmem:[%s8331] ss:$16 sm:%s8332]
    %vm8334 = vcmask 1043458
    %v8335 = vsel %vm8334, %v8333, %v8330
    %s8336 = scalar_lea.vmem [#allocation1], 1285
    %s8337 = smov 48
    %v8338 = vld [vmem:[%s8336] ss:$16 sm:%s8337]
    %vm8339 = vcmask 1045508
    %v8340 = vsel %vm8339, %v8338, %v8335
    %s8341 = scalar_lea.vmem [#allocation1], 1285
    %s8342 = smov 192
    %v8343 = vld [vmem:[%s8341] ss:$16 sm:%s8342]
    %vm8344 = vcmask 1047558
    %v8345 = vsel %vm8344, %v8343, %v8340
    %8346 = vrot.lane.b32.xlu0 %v8345, 40
    %v8347 = vpop.permute.xlu0 %8346
    %vm8348 = vcmask 392512
    %s8349 = scalar_lea.vmem [#allocation0], 80
    %8350 = vst.msk [vmem:[%s8349] sm:$0xff] %vm8348, %v8347
    %s8351 = scalar_lea.vmem [#allocation1], 1797
    %s8352 = smov 3
    %v8353 = vld [vmem:[%s8351] ss:$16 sm:%s8352]
    %s8354 = scalar_lea.vmem [#allocation1], 1797
    %s8355 = smov 12
    %v8356 = vld [vmem:[%s8354] ss:$16 sm:%s8355]
    %vm8357 = vcmask 1043458
    %v8358 = vsel %vm8357, %v8356, %v8353
    %s8359 = scalar_lea.vmem [#allocation1], 1797
    %s8360 = smov 48
    %v8361 = vld [vmem:[%s8359] ss:$16 sm:%s8360]
    %vm8362 = vcmask 1045508
    %v8363 = vsel %vm8362, %v8361, %v8358
    %s8364 = scalar_lea.vmem [#allocation1], 1797
    %s8365 = smov 192
    %v8366 = vld [vmem:[%s8364] ss:$16 sm:%s8365]
    %vm8367 = vcmask 1047558
    %v8368 = vsel %vm8367, %v8366, %v8363
    %8369 = vrot.lane.b32.xlu0 %v8368, 40
    %v8370 = vpop.permute.xlu0 %8369
    %vm8371 = vcmask 392512
    %s8372 = scalar_lea.vmem [#allocation0], 112
    %8373 = vst.msk [vmem:[%s8372] sm:$0xff] %vm8371, %v8370
    %s8374 = scalar_lea.vmem [#allocation1], 389
    %s8375 = smov 3
    %v8376 = vld [vmem:[%s8374] ss:$16 sm:%s8375]
    %s8377 = scalar_lea.vmem [#allocation1], 389
    %s8378 = smov 12
    %v8379 = vld [vmem:[%s8377] ss:$16 sm:%s8378]
    %vm8380 = vcmask 1043458
    %v8381 = vsel %vm8380, %v8379, %v8376
    %s8382 = scalar_lea.vmem [#allocation1], 389
    %s8383 = smov 48
    %v8384 = vld [vmem:[%s8382] ss:$16 sm:%s8383]
    %vm8385 = vcmask 1045508
    %v8386 = vsel %vm8385, %v8384, %v8381
    %s8387 = scalar_lea.vmem [#allocation1], 389
    %s8388 = smov 192
    %v8389 = vld [vmem:[%s8387] ss:$16 sm:%s8388]
    %vm8390 = vcmask 1047558
    %v8391 = vsel %vm8390, %v8389, %v8386
    %8392 = vrot.lane.b32.xlu0 %v8391, 40
    %v8393 = vpop.permute.xlu0 %8392
    %vm8394 = vcmask 392512
    %s8395 = scalar_lea.vmem [#allocation0], 24
    %8396 = vst.msk [vmem:[%s8395] sm:$0xff] %vm8394, %v8393
    %s8397 = scalar_lea.vmem [#allocation1], 901
    %s8398 = smov 3
    %v8399 = vld [vmem:[%s8397] ss:$16 sm:%s8398]
    %s8400 = scalar_lea.vmem [#allocation1], 901
    %s8401 = smov 12
    %v8402 = vld [vmem:[%s8400] ss:$16 sm:%s8401]
    %vm8403 = vcmask 1043458
    %v8404 = vsel %vm8403, %v8402, %v8399
    %s8405 = scalar_lea.vmem [#allocation1], 901
    %s8406 = smov 48
    %v8407 = vld [vmem:[%s8405] ss:$16 sm:%s8406]
    %vm8408 = vcmask 1045508
    %v8409 = vsel %vm8408, %v8407, %v8404
    %s8410 = scalar_lea.vmem [#allocation1], 901
    %s8411 = smov 192
    %v8412 = vld [vmem:[%s8410] ss:$16 sm:%s8411]
    %vm8413 = vcmask 1047558
    %v8414 = vsel %vm8413, %v8412, %v8409
    %8415 = vrot.lane.b32.xlu0 %v8414, 40
    %v8416 = vpop.permute.xlu0 %8415
    %vm8417 = vcmask 392512
    %s8418 = scalar_lea.vmem [#allocation0], 56
    %8419 = vst.msk [vmem:[%s8418] sm:$0xff] %vm8417, %v8416
    %s8420 = scalar_lea.vmem [#allocation1], 1413
    %s8421 = smov 3
    %v8422 = vld [vmem:[%s8420] ss:$16 sm:%s8421]
    %s8423 = scalar_lea.vmem [#allocation1], 1413
    %s8424 = smov 12
    %v8425 = vld [vmem:[%s8423] ss:$16 sm:%s8424]
    %vm8426 = vcmask 1043458
    %v8427 = vsel %vm8426, %v8425, %v8422
    %s8428 = scalar_lea.vmem [#allocation1], 1413
    %s8429 = smov 48
    %v8430 = vld [vmem:[%s8428] ss:$16 sm:%s8429]
    %vm8431 = vcmask 1045508
    %v8432 = vsel %vm8431, %v8430, %v8427
    %s8433 = scalar_lea.vmem [#allocation1], 1413
    %s8434 = smov 192
    %v8435 = vld [vmem:[%s8433] ss:$16 sm:%s8434]
    %vm8436 = vcmask 1047558
    %v8437 = vsel %vm8436, %v8435, %v8432
    %8438 = vrot.lane.b32.xlu0 %v8437, 40
    %v8439 = vpop.permute.xlu0 %8438
    %vm8440 = vcmask 392512
    %s8441 = scalar_lea.vmem [#allocation0], 88
    %8442 = vst.msk [vmem:[%s8441] sm:$0xff] %vm8440, %v8439
    %s8443 = scalar_lea.vmem [#allocation1], 1925
    %s8444 = smov 3
    %v8445 = vld [vmem:[%s8443] ss:$16 sm:%s8444]
    %s8446 = scalar_lea.vmem [#allocation1], 1925
    %s8447 = smov 12
    %v8448 = vld [vmem:[%s8446] ss:$16 sm:%s8447]
    %vm8449 = vcmask 1043458
    %v8450 = vsel %vm8449, %v8448, %v8445
    %s8451 = scalar_lea.vmem [#allocation1], 1925
    %s8452 = smov 48
    %v8453 = vld [vmem:[%s8451] ss:$16 sm:%s8452]
    %vm8454 = vcmask 1045508
    %v8455 = vsel %vm8454, %v8453, %v8450
    %s8456 = scalar_lea.vmem [#allocation1], 1925
    %s8457 = smov 192
    %v8458 = vld [vmem:[%s8456] ss:$16 sm:%s8457]
    %vm8459 = vcmask 1047558
    %v8460 = vsel %vm8459, %v8458, %v8455
    %8461 = vrot.lane.b32.xlu0 %v8460, 40
    %v8462 = vpop.permute.xlu0 %8461
    %vm8463 = vcmask 392512
    %s8464 = scalar_lea.vmem [#allocation0], 120
    %8465 = vst.msk [vmem:[%s8464] sm:$0xff] %vm8463, %v8462
    %s8466 = scalar_lea.vmem [#allocation1], 4
    %s8467 = smov 3
    %v8468 = vld [vmem:[%s8466] ss:$16 sm:%s8467]
    %s8469 = scalar_lea.vmem [#allocation1], 4
    %s8470 = smov 12
    %v8471 = vld [vmem:[%s8469] ss:$16 sm:%s8470]
    %vm8472 = vcmask 1043458
    %v8473 = vsel %vm8472, %v8471, %v8468
    %s8474 = scalar_lea.vmem [#allocation1], 4
    %s8475 = smov 48
    %v8476 = vld [vmem:[%s8474] ss:$16 sm:%s8475]
    %vm8477 = vcmask 1045508
    %v8478 = vsel %vm8477, %v8476, %v8473
    %s8479 = scalar_lea.vmem [#allocation1], 4
    %s8480 = smov 192
    %v8481 = vld [vmem:[%s8479] ss:$16 sm:%s8480]
    %vm8482 = vcmask 1047558
    %v8483 = vsel %vm8482, %v8481, %v8478
    %8484 = vrot.lane.b32.xlu0 %v8483, 32
    %v8485 = vpop.permute.xlu0 %8484
    %vm8486 = vcmask 326912
    %8487 = vst.msk [vmem:[#allocation0] sm:$0xff] %vm8486, %v8485
    %s8488 = scalar_lea.vmem [#allocation1], 516
    %s8489 = smov 3
    %v8490 = vld [vmem:[%s8488] ss:$16 sm:%s8489]
    %s8491 = scalar_lea.vmem [#allocation1], 516
    %s8492 = smov 12
    %v8493 = vld [vmem:[%s8491] ss:$16 sm:%s8492]
    %vm8494 = vcmask 1043458
    %v8495 = vsel %vm8494, %v8493, %v8490
    %s8496 = scalar_lea.vmem [#allocation1], 516
    %s8497 = smov 48
    %v8498 = vld [vmem:[%s8496] ss:$16 sm:%s8497]
    %vm8499 = vcmask 1045508
    %v8500 = vsel %vm8499, %v8498, %v8495
    %s8501 = scalar_lea.vmem [#allocation1], 516
    %s8502 = smov 192
    %v8503 = vld [vmem:[%s8501] ss:$16 sm:%s8502]
    %vm8504 = vcmask 1047558
    %v8505 = vsel %vm8504, %v8503, %v8500
    %8506 = vrot.lane.b32.xlu0 %v8505, 32
    %v8507 = vpop.permute.xlu0 %8506
    %vm8508 = vcmask 326912
    %s8509 = scalar_lea.vmem [#allocation0], 32
    %8510 = vst.msk [vmem:[%s8509] sm:$0xff] %vm8508, %v8507
    %s8511 = scalar_lea.vmem [#allocation1], 1028
    %s8512 = smov 3
    %v8513 = vld [vmem:[%s8511] ss:$16 sm:%s8512]
    %s8514 = scalar_lea.vmem [#allocation1], 1028
    %s8515 = smov 12
    %v8516 = vld [vmem:[%s8514] ss:$16 sm:%s8515]
    %vm8517 = vcmask 1043458
    %v8518 = vsel %vm8517, %v8516, %v8513
    %s8519 = scalar_lea.vmem [#allocation1], 1028
    %s8520 = smov 48
    %v8521 = vld [vmem:[%s8519] ss:$16 sm:%s8520]
    %vm8522 = vcmask 1045508
    %v8523 = vsel %vm8522, %v8521, %v8518
    %s8524 = scalar_lea.vmem [#allocation1], 1028
    %s8525 = smov 192
    %v8526 = vld [vmem:[%s8524] ss:$16 sm:%s8525]
    %vm8527 = vcmask 1047558
    %v8528 = vsel %vm8527, %v8526, %v8523
    %8529 = vrot.lane.b32.xlu0 %v8528, 32
    %v8530 = vpop.permute.xlu0 %8529
    %vm8531 = vcmask 326912
    %s8532 = scalar_lea.vmem [#allocation0], 64
    %8533 = vst.msk [vmem:[%s8532] sm:$0xff] %vm8531, %v8530
    %s8534 = scalar_lea.vmem [#allocation1], 1540
    %s8535 = smov 3
    %v8536 = vld [vmem:[%s8534] ss:$16 sm:%s8535]
    %s8537 = scalar_lea.vmem [#allocation1], 1540
    %s8538 = smov 12
    %v8539 = vld [vmem:[%s8537] ss:$16 sm:%s8538]
    %vm8540 = vcmask 1043458
    %v8541 = vsel %vm8540, %v8539, %v8536
    %s8542 = scalar_lea.vmem [#allocation1], 1540
    %s8543 = smov 48
    %v8544 = vld [vmem:[%s8542] ss:$16 sm:%s8543]
    %vm8545 = vcmask 1045508
    %v8546 = vsel %vm8545, %v8544, %v8541
    %s8547 = scalar_lea.vmem [#allocation1], 1540
    %s8548 = smov 192
    %v8549 = vld [vmem:[%s8547] ss:$16 sm:%s8548]
    %vm8550 = vcmask 1047558
    %v8551 = vsel %vm8550, %v8549, %v8546
    %8552 = vrot.lane.b32.xlu0 %v8551, 32
    %v8553 = vpop.permute.xlu0 %8552
    %vm8554 = vcmask 326912
    %s8555 = scalar_lea.vmem [#allocation0], 96
    %8556 = vst.msk [vmem:[%s8555] sm:$0xff] %vm8554, %v8553
    %s8557 = scalar_lea.vmem [#allocation1], 132
    %s8558 = smov 3
    %v8559 = vld [vmem:[%s8557] ss:$16 sm:%s8558]
    %s8560 = scalar_lea.vmem [#allocation1], 132
    %s8561 = smov 12
    %v8562 = vld [vmem:[%s8560] ss:$16 sm:%s8561]
    %vm8563 = vcmask 1043458
    %v8564 = vsel %vm8563, %v8562, %v8559
    %s8565 = scalar_lea.vmem [#allocation1], 132
    %s8566 = smov 48
    %v8567 = vld [vmem:[%s8565] ss:$16 sm:%s8566]
    %vm8568 = vcmask 1045508
    %v8569 = vsel %vm8568, %v8567, %v8564
    %s8570 = scalar_lea.vmem [#allocation1], 132
    %s8571 = smov 192
    %v8572 = vld [vmem:[%s8570] ss:$16 sm:%s8571]
    %vm8573 = vcmask 1047558
    %v8574 = vsel %vm8573, %v8572, %v8569
    %8575 = vrot.lane.b32.xlu0 %v8574, 32
    %v8576 = vpop.permute.xlu0 %8575
    %vm8577 = vcmask 326912
    %s8578 = scalar_lea.vmem [#allocation0], 8
    %8579 = vst.msk [vmem:[%s8578] sm:$0xff] %vm8577, %v8576
    %s8580 = scalar_lea.vmem [#allocation1], 644
    %s8581 = smov 3
    %v8582 = vld [vmem:[%s8580] ss:$16 sm:%s8581]
    %s8583 = scalar_lea.vmem [#allocation1], 644
    %s8584 = smov 12
    %v8585 = vld [vmem:[%s8583] ss:$16 sm:%s8584]
    %vm8586 = vcmask 1043458
    %v8587 = vsel %vm8586, %v8585, %v8582
    %s8588 = scalar_lea.vmem [#allocation1], 644
    %s8589 = smov 48
    %v8590 = vld [vmem:[%s8588] ss:$16 sm:%s8589]
    %vm8591 = vcmask 1045508
    %v8592 = vsel %vm8591, %v8590, %v8587
    %s8593 = scalar_lea.vmem [#allocation1], 644
    %s8594 = smov 192
    %v8595 = vld [vmem:[%s8593] ss:$16 sm:%s8594]
    %vm8596 = vcmask 1047558
    %v8597 = vsel %vm8596, %v8595, %v8592
    %8598 = vrot.lane.b32.xlu0 %v8597, 32
    %v8599 = vpop.permute.xlu0 %8598
    %vm8600 = vcmask 326912
    %s8601 = scalar_lea.vmem [#allocation0], 40
    %8602 = vst.msk [vmem:[%s8601] sm:$0xff] %vm8600, %v8599
    %s8603 = scalar_lea.vmem [#allocation1], 1156
    %s8604 = smov 3
    %v8605 = vld [vmem:[%s8603] ss:$16 sm:%s8604]
    %s8606 = scalar_lea.vmem [#allocation1], 1156
    %s8607 = smov 12
    %v8608 = vld [vmem:[%s8606] ss:$16 sm:%s8607]
    %vm8609 = vcmask 1043458
    %v8610 = vsel %vm8609, %v8608, %v8605
    %s8611 = scalar_lea.vmem [#allocation1], 1156
    %s8612 = smov 48
    %v8613 = vld [vmem:[%s8611] ss:$16 sm:%s8612]
    %vm8614 = vcmask 1045508
    %v8615 = vsel %vm8614, %v8613, %v8610
    %s8616 = scalar_lea.vmem [#allocation1], 1156
    %s8617 = smov 192
    %v8618 = vld [vmem:[%s8616] ss:$16 sm:%s8617]
    %vm8619 = vcmask 1047558
    %v8620 = vsel %vm8619, %v8618, %v8615
    %8621 = vrot.lane.b32.xlu0 %v8620, 32
    %v8622 = vpop.permute.xlu0 %8621
    %vm8623 = vcmask 326912
    %s8624 = scalar_lea.vmem [#allocation0], 72
    %8625 = vst.msk [vmem:[%s8624] sm:$0xff] %vm8623, %v8622
    %s8626 = scalar_lea.vmem [#allocation1], 1668
    %s8627 = smov 3
    %v8628 = vld [vmem:[%s8626] ss:$16 sm:%s8627]
    %s8629 = scalar_lea.vmem [#allocation1], 1668
    %s8630 = smov 12
    %v8631 = vld [vmem:[%s8629] ss:$16 sm:%s8630]
    %vm8632 = vcmask 1043458
    %v8633 = vsel %vm8632, %v8631, %v8628
    %s8634 = scalar_lea.vmem [#allocation1], 1668
    %s8635 = smov 48
    %v8636 = vld [vmem:[%s8634] ss:$16 sm:%s8635]
    %vm8637 = vcmask 1045508
    %v8638 = vsel %vm8637, %v8636, %v8633
    %s8639 = scalar_lea.vmem [#allocation1], 1668
    %s8640 = smov 192
    %v8641 = vld [vmem:[%s8639] ss:$16 sm:%s8640]
    %vm8642 = vcmask 1047558
    %v8643 = vsel %vm8642, %v8641, %v8638
    %8644 = vrot.lane.b32.xlu0 %v8643, 32
    %v8645 = vpop.permute.xlu0 %8644
    %vm8646 = vcmask 326912
    %s8647 = scalar_lea.vmem [#allocation0], 104
    %8648 = vst.msk [vmem:[%s8647] sm:$0xff] %vm8646, %v8645
    %s8649 = scalar_lea.vmem [#allocation1], 260
    %s8650 = smov 3
    %v8651 = vld [vmem:[%s8649] ss:$16 sm:%s8650]
    %s8652 = scalar_lea.vmem [#allocation1], 260
    %s8653 = smov 12
    %v8654 = vld [vmem:[%s8652] ss:$16 sm:%s8653]
    %vm8655 = vcmask 1043458
    %v8656 = vsel %vm8655, %v8654, %v8651
    %s8657 = scalar_lea.vmem [#allocation1], 260
    %s8658 = smov 48
    %v8659 = vld [vmem:[%s8657] ss:$16 sm:%s8658]
    %vm8660 = vcmask 1045508
    %v8661 = vsel %vm8660, %v8659, %v8656
    %s8662 = scalar_lea.vmem [#allocation1], 260
    %s8663 = smov 192
    %v8664 = vld [vmem:[%s8662] ss:$16 sm:%s8663]
    %vm8665 = vcmask 1047558
    %v8666 = vsel %vm8665, %v8664, %v8661
    %8667 = vrot.lane.b32.xlu0 %v8666, 32
    %v8668 = vpop.permute.xlu0 %8667
    %vm8669 = vcmask 326912
    %s8670 = scalar_lea.vmem [#allocation0], 16
    %8671 = vst.msk [vmem:[%s8670] sm:$0xff] %vm8669, %v8668
    %s8672 = scalar_lea.vmem [#allocation1], 772
    %s8673 = smov 3
    %v8674 = vld [vmem:[%s8672] ss:$16 sm:%s8673]
    %s8675 = scalar_lea.vmem [#allocation1], 772
    %s8676 = smov 12
    %v8677 = vld [vmem:[%s8675] ss:$16 sm:%s8676]
    %vm8678 = vcmask 1043458
    %v8679 = vsel %vm8678, %v8677, %v8674
    %s8680 = scalar_lea.vmem [#allocation1], 772
    %s8681 = smov 48
    %v8682 = vld [vmem:[%s8680] ss:$16 sm:%s8681]
    %vm8683 = vcmask 1045508
    %v8684 = vsel %vm8683, %v8682, %v8679
    %s8685 = scalar_lea.vmem [#allocation1], 772
    %s8686 = smov 192
    %v8687 = vld [vmem:[%s8685] ss:$16 sm:%s8686]
    %vm8688 = vcmask 1047558
    %v8689 = vsel %vm8688, %v8687, %v8684
    %8690 = vrot.lane.b32.xlu0 %v8689, 32
    %v8691 = vpop.permute.xlu0 %8690
    %vm8692 = vcmask 326912
    %s8693 = scalar_lea.vmem [#allocation0], 48
    %8694 = vst.msk [vmem:[%s8693] sm:$0xff] %vm8692, %v8691
    %s8695 = scalar_lea.vmem [#allocation1], 1284
    %s8696 = smov 3
    %v8697 = vld [vmem:[%s8695] ss:$16 sm:%s8696]
    %s8698 = scalar_lea.vmem [#allocation1], 1284
    %s8699 = smov 12
    %v8700 = vld [vmem:[%s8698] ss:$16 sm:%s8699]
    %vm8701 = vcmask 1043458
    %v8702 = vsel %vm8701, %v8700, %v8697
    %s8703 = scalar_lea.vmem [#allocation1], 1284
    %s8704 = smov 48
    %v8705 = vld [vmem:[%s8703] ss:$16 sm:%s8704]
    %vm8706 = vcmask 1045508
    %v8707 = vsel %vm8706, %v8705, %v8702
    %s8708 = scalar_lea.vmem [#allocation1], 1284
    %s8709 = smov 192
    %v8710 = vld [vmem:[%s8708] ss:$16 sm:%s8709]
    %vm8711 = vcmask 1047558
    %v8712 = vsel %vm8711, %v8710, %v8707
    %8713 = vrot.lane.b32.xlu0 %v8712, 32
    %v8714 = vpop.permute.xlu0 %8713
    %vm8715 = vcmask 326912
    %s8716 = scalar_lea.vmem [#allocation0], 80
    %8717 = vst.msk [vmem:[%s8716] sm:$0xff] %vm8715, %v8714
    %s8718 = scalar_lea.vmem [#allocation1], 1796
    %s8719 = smov 3
    %v8720 = vld [vmem:[%s8718] ss:$16 sm:%s8719]
    %s8721 = scalar_lea.vmem [#allocation1], 1796
    %s8722 = smov 12
    %v8723 = vld [vmem:[%s8721] ss:$16 sm:%s8722]
    %vm8724 = vcmask 1043458
    %v8725 = vsel %vm8724, %v8723, %v8720
    %s8726 = scalar_lea.vmem [#allocation1], 1796
    %s8727 = smov 48
    %v8728 = vld [vmem:[%s8726] ss:$16 sm:%s8727]
    %vm8729 = vcmask 1045508
    %v8730 = vsel %vm8729, %v8728, %v8725
    %s8731 = scalar_lea.vmem [#allocation1], 1796
    %s8732 = smov 192
    %v8733 = vld [vmem:[%s8731] ss:$16 sm:%s8732]
    %vm8734 = vcmask 1047558
    %v8735 = vsel %vm8734, %v8733, %v8730
    %8736 = vrot.lane.b32.xlu0 %v8735, 32
    %v8737 = vpop.permute.xlu0 %8736
    %vm8738 = vcmask 326912
    %s8739 = scalar_lea.vmem [#allocation0], 112
    %8740 = vst.msk [vmem:[%s8739] sm:$0xff] %vm8738, %v8737
    %s8741 = scalar_lea.vmem [#allocation1], 388
    %s8742 = smov 3
    %v8743 = vld [vmem:[%s8741] ss:$16 sm:%s8742]
    %s8744 = scalar_lea.vmem [#allocation1], 388
    %s8745 = smov 12
    %v8746 = vld [vmem:[%s8744] ss:$16 sm:%s8745]
    %vm8747 = vcmask 1043458
    %v8748 = vsel %vm8747, %v8746, %v8743
    %s8749 = scalar_lea.vmem [#allocation1], 388
    %s8750 = smov 48
    %v8751 = vld [vmem:[%s8749] ss:$16 sm:%s8750]
    %vm8752 = vcmask 1045508
    %v8753 = vsel %vm8752, %v8751, %v8748
    %s8754 = scalar_lea.vmem [#allocation1], 388
    %s8755 = smov 192
    %v8756 = vld [vmem:[%s8754] ss:$16 sm:%s8755]
    %vm8757 = vcmask 1047558
    %v8758 = vsel %vm8757, %v8756, %v8753
    %8759 = vrot.lane.b32.xlu0 %v8758, 32
    %v8760 = vpop.permute.xlu0 %8759
    %vm8761 = vcmask 326912
    %s8762 = scalar_lea.vmem [#allocation0], 24
    %8763 = vst.msk [vmem:[%s8762] sm:$0xff] %vm8761, %v8760
    %s8764 = scalar_lea.vmem [#allocation1], 900
    %s8765 = smov 3
    %v8766 = vld [vmem:[%s8764] ss:$16 sm:%s8765]
    %s8767 = scalar_lea.vmem [#allocation1], 900
    %s8768 = smov 12
    %v8769 = vld [vmem:[%s8767] ss:$16 sm:%s8768]
    %vm8770 = vcmask 1043458
    %v8771 = vsel %vm8770, %v8769, %v8766
    %s8772 = scalar_lea.vmem [#allocation1], 900
    %s8773 = smov 48
    %v8774 = vld [vmem:[%s8772] ss:$16 sm:%s8773]
    %vm8775 = vcmask 1045508
    %v8776 = vsel %vm8775, %v8774, %v8771
    %s8777 = scalar_lea.vmem [#allocation1], 900
    %s8778 = smov 192
    %v8779 = vld [vmem:[%s8777] ss:$16 sm:%s8778]
    %vm8780 = vcmask 1047558
    %v8781 = vsel %vm8780, %v8779, %v8776
    %8782 = vrot.lane.b32.xlu0 %v8781, 32
    %v8783 = vpop.permute.xlu0 %8782
    %vm8784 = vcmask 326912
    %s8785 = scalar_lea.vmem [#allocation0], 56
    %8786 = vst.msk [vmem:[%s8785] sm:$0xff] %vm8784, %v8783
    %s8787 = scalar_lea.vmem [#allocation1], 1412
    %s8788 = smov 3
    %v8789 = vld [vmem:[%s8787] ss:$16 sm:%s8788]
    %s8790 = scalar_lea.vmem [#allocation1], 1412
    %s8791 = smov 12
    %v8792 = vld [vmem:[%s8790] ss:$16 sm:%s8791]
    %vm8793 = vcmask 1043458
    %v8794 = vsel %vm8793, %v8792, %v8789
    %s8795 = scalar_lea.vmem [#allocation1], 1412
    %s8796 = smov 48
    %v8797 = vld [vmem:[%s8795] ss:$16 sm:%s8796]
    %vm8798 = vcmask 1045508
    %v8799 = vsel %vm8798, %v8797, %v8794
    %s8800 = scalar_lea.vmem [#allocation1], 1412
    %s8801 = smov 192
    %v8802 = vld [vmem:[%s8800] ss:$16 sm:%s8801]
    %vm8803 = vcmask 1047558
    %v8804 = vsel %vm8803, %v8802, %v8799
    %8805 = vrot.lane.b32.xlu0 %v8804, 32
    %v8806 = vpop.permute.xlu0 %8805
    %vm8807 = vcmask 326912
    %s8808 = scalar_lea.vmem [#allocation0], 88
    %8809 = vst.msk [vmem:[%s8808] sm:$0xff] %vm8807, %v8806
    %s8810 = scalar_lea.vmem [#allocation1], 1924
    %s8811 = smov 3
    %v8812 = vld [vmem:[%s8810] ss:$16 sm:%s8811]
    %s8813 = scalar_lea.vmem [#allocation1], 1924
    %s8814 = smov 12
    %v8815 = vld [vmem:[%s8813] ss:$16 sm:%s8814]
    %vm8816 = vcmask 1043458
    %v8817 = vsel %vm8816, %v8815, %v8812
    %s8818 = scalar_lea.vmem [#allocation1], 1924
    %s8819 = smov 48
    %v8820 = vld [vmem:[%s8818] ss:$16 sm:%s8819]
    %vm8821 = vcmask 1045508
    %v8822 = vsel %vm8821, %v8820, %v8817
    %s8823 = scalar_lea.vmem [#allocation1], 1924
    %s8824 = smov 192
    %v8825 = vld [vmem:[%s8823] ss:$16 sm:%s8824]
    %vm8826 = vcmask 1047558
    %v8827 = vsel %vm8826, %v8825, %v8822
    %8828 = vrot.lane.b32.xlu0 %v8827, 32
    %v8829 = vpop.permute.xlu0 %8828
    %vm8830 = vcmask 326912
    %s8831 = scalar_lea.vmem [#allocation0], 120
    %8832 = vst.msk [vmem:[%s8831] sm:$0xff] %vm8830, %v8829
    %s8833 = scalar_lea.vmem [#allocation1], 3
    %s8834 = smov 3
    %v8835 = vld [vmem:[%s8833] ss:$16 sm:%s8834]
    %s8836 = scalar_lea.vmem [#allocation1], 3
    %s8837 = smov 12
    %v8838 = vld [vmem:[%s8836] ss:$16 sm:%s8837]
    %vm8839 = vcmask 1043458
    %v8840 = vsel %vm8839, %v8838, %v8835
    %s8841 = scalar_lea.vmem [#allocation1], 3
    %s8842 = smov 48
    %v8843 = vld [vmem:[%s8841] ss:$16 sm:%s8842]
    %vm8844 = vcmask 1045508
    %v8845 = vsel %vm8844, %v8843, %v8840
    %s8846 = scalar_lea.vmem [#allocation1], 3
    %s8847 = smov 192
    %v8848 = vld [vmem:[%s8846] ss:$16 sm:%s8847]
    %vm8849 = vcmask 1047558
    %v8850 = vsel %vm8849, %v8848, %v8845
    %8851 = vrot.lane.b32.xlu0 %v8850, 24
    %v8852 = vpop.permute.xlu0 %8851
    %vm8853 = vcmask 261312
    %8854 = vst.msk [vmem:[#allocation0] sm:$0xff] %vm8853, %v8852
    %s8855 = scalar_lea.vmem [#allocation1], 515
    %s8856 = smov 3
    %v8857 = vld [vmem:[%s8855] ss:$16 sm:%s8856]
    %s8858 = scalar_lea.vmem [#allocation1], 515
    %s8859 = smov 12
    %v8860 = vld [vmem:[%s8858] ss:$16 sm:%s8859]
    %vm8861 = vcmask 1043458
    %v8862 = vsel %vm8861, %v8860, %v8857
    %s8863 = scalar_lea.vmem [#allocation1], 515
    %s8864 = smov 48
    %v8865 = vld [vmem:[%s8863] ss:$16 sm:%s8864]
    %vm8866 = vcmask 1045508
    %v8867 = vsel %vm8866, %v8865, %v8862
    %s8868 = scalar_lea.vmem [#allocation1], 515
    %s8869 = smov 192
    %v8870 = vld [vmem:[%s8868] ss:$16 sm:%s8869]
    %vm8871 = vcmask 1047558
    %v8872 = vsel %vm8871, %v8870, %v8867
    %8873 = vrot.lane.b32.xlu0 %v8872, 24
    %v8874 = vpop.permute.xlu0 %8873
    %vm8875 = vcmask 261312
    %s8876 = scalar_lea.vmem [#allocation0], 32
    %8877 = vst.msk [vmem:[%s8876] sm:$0xff] %vm8875, %v8874
    %s8878 = scalar_lea.vmem [#allocation1], 1027
    %s8879 = smov 3
    %v8880 = vld [vmem:[%s8878] ss:$16 sm:%s8879]
    %s8881 = scalar_lea.vmem [#allocation1], 1027
    %s8882 = smov 12
    %v8883 = vld [vmem:[%s8881] ss:$16 sm:%s8882]
    %vm8884 = vcmask 1043458
    %v8885 = vsel %vm8884, %v8883, %v8880
    %s8886 = scalar_lea.vmem [#allocation1], 1027
    %s8887 = smov 48
    %v8888 = vld [vmem:[%s8886] ss:$16 sm:%s8887]
    %vm8889 = vcmask 1045508
    %v8890 = vsel %vm8889, %v8888, %v8885
    %s8891 = scalar_lea.vmem [#allocation1], 1027
    %s8892 = smov 192
    %v8893 = vld [vmem:[%s8891] ss:$16 sm:%s8892]
    %vm8894 = vcmask 1047558
    %v8895 = vsel %vm8894, %v8893, %v8890
    %8896 = vrot.lane.b32.xlu0 %v8895, 24
    %v8897 = vpop.permute.xlu0 %8896
    %vm8898 = vcmask 261312
    %s8899 = scalar_lea.vmem [#allocation0], 64
    %8900 = vst.msk [vmem:[%s8899] sm:$0xff] %vm8898, %v8897
    %s8901 = scalar_lea.vmem [#allocation1], 1539
    %s8902 = smov 3
    %v8903 = vld [vmem:[%s8901] ss:$16 sm:%s8902]
    %s8904 = scalar_lea.vmem [#allocation1], 1539
    %s8905 = smov 12
    %v8906 = vld [vmem:[%s8904] ss:$16 sm:%s8905]
    %vm8907 = vcmask 1043458
    %v8908 = vsel %vm8907, %v8906, %v8903
    %s8909 = scalar_lea.vmem [#allocation1], 1539
    %s8910 = smov 48
    %v8911 = vld [vmem:[%s8909] ss:$16 sm:%s8910]
    %vm8912 = vcmask 1045508
    %v8913 = vsel %vm8912, %v8911, %v8908
    %s8914 = scalar_lea.vmem [#allocation1], 1539
    %s8915 = smov 192
    %v8916 = vld [vmem:[%s8914] ss:$16 sm:%s8915]
    %vm8917 = vcmask 1047558
    %v8918 = vsel %vm8917, %v8916, %v8913
    %8919 = vrot.lane.b32.xlu0 %v8918, 24
    %v8920 = vpop.permute.xlu0 %8919
    %vm8921 = vcmask 261312
    %s8922 = scalar_lea.vmem [#allocation0], 96
    %8923 = vst.msk [vmem:[%s8922] sm:$0xff] %vm8921, %v8920
    %s8924 = scalar_lea.vmem [#allocation1], 131
    %s8925 = smov 3
    %v8926 = vld [vmem:[%s8924] ss:$16 sm:%s8925]
    %s8927 = scalar_lea.vmem [#allocation1], 131
    %s8928 = smov 12
    %v8929 = vld [vmem:[%s8927] ss:$16 sm:%s8928]
    %vm8930 = vcmask 1043458
    %v8931 = vsel %vm8930, %v8929, %v8926
    %s8932 = scalar_lea.vmem [#allocation1], 131
    %s8933 = smov 48
    %v8934 = vld [vmem:[%s8932] ss:$16 sm:%s8933]
    %vm8935 = vcmask 1045508
    %v8936 = vsel %vm8935, %v8934, %v8931
    %s8937 = scalar_lea.vmem [#allocation1], 131
    %s8938 = smov 192
    %v8939 = vld [vmem:[%s8937] ss:$16 sm:%s8938]
    %vm8940 = vcmask 1047558
    %v8941 = vsel %vm8940, %v8939, %v8936
    %8942 = vrot.lane.b32.xlu0 %v8941, 24
    %v8943 = vpop.permute.xlu0 %8942
    %vm8944 = vcmask 261312
    %s8945 = scalar_lea.vmem [#allocation0], 8
    %8946 = vst.msk [vmem:[%s8945] sm:$0xff] %vm8944, %v8943
    %s8947 = scalar_lea.vmem [#allocation1], 643
    %s8948 = smov 3
    %v8949 = vld [vmem:[%s8947] ss:$16 sm:%s8948]
    %s8950 = scalar_lea.vmem [#allocation1], 643
    %s8951 = smov 12
    %v8952 = vld [vmem:[%s8950] ss:$16 sm:%s8951]
    %vm8953 = vcmask 1043458
    %v8954 = vsel %vm8953, %v8952, %v8949
    %s8955 = scalar_lea.vmem [#allocation1], 643
    %s8956 = smov 48
    %v8957 = vld [vmem:[%s8955] ss:$16 sm:%s8956]
    %vm8958 = vcmask 1045508
    %v8959 = vsel %vm8958, %v8957, %v8954
    %s8960 = scalar_lea.vmem [#allocation1], 643
    %s8961 = smov 192
    %v8962 = vld [vmem:[%s8960] ss:$16 sm:%s8961]
    %vm8963 = vcmask 1047558
    %v8964 = vsel %vm8963, %v8962, %v8959
    %8965 = vrot.lane.b32.xlu0 %v8964, 24
    %v8966 = vpop.permute.xlu0 %8965
    %vm8967 = vcmask 261312
    %s8968 = scalar_lea.vmem [#allocation0], 40
    %8969 = vst.msk [vmem:[%s8968] sm:$0xff] %vm8967, %v8966
    %s8970 = scalar_lea.vmem [#allocation1], 1155
    %s8971 = smov 3
    %v8972 = vld [vmem:[%s8970] ss:$16 sm:%s8971]
    %s8973 = scalar_lea.vmem [#allocation1], 1155
    %s8974 = smov 12
    %v8975 = vld [vmem:[%s8973] ss:$16 sm:%s8974]
    %vm8976 = vcmask 1043458
    %v8977 = vsel %vm8976, %v8975, %v8972
    %s8978 = scalar_lea.vmem [#allocation1], 1155
    %s8979 = smov 48
    %v8980 = vld [vmem:[%s8978] ss:$16 sm:%s8979]
    %vm8981 = vcmask 1045508
    %v8982 = vsel %vm8981, %v8980, %v8977
    %s8983 = scalar_lea.vmem [#allocation1], 1155
    %s8984 = smov 192
    %v8985 = vld [vmem:[%s8983] ss:$16 sm:%s8984]
    %vm8986 = vcmask 1047558
    %v8987 = vsel %vm8986, %v8985, %v8982
    %8988 = vrot.lane.b32.xlu0 %v8987, 24
    %v8989 = vpop.permute.xlu0 %8988
    %vm8990 = vcmask 261312
    %s8991 = scalar_lea.vmem [#allocation0], 72
    %8992 = vst.msk [vmem:[%s8991] sm:$0xff] %vm8990, %v8989
    %s8993 = scalar_lea.vmem [#allocation1], 1667
    %s8994 = smov 3
    %v8995 = vld [vmem:[%s8993] ss:$16 sm:%s8994]
    %s8996 = scalar_lea.vmem [#allocation1], 1667
    %s8997 = smov 12
    %v8998 = vld [vmem:[%s8996] ss:$16 sm:%s8997]
    %vm8999 = vcmask 1043458
    %v9000 = vsel %vm8999, %v8998, %v8995
    %s9001 = scalar_lea.vmem [#allocation1], 1667
    %s9002 = smov 48
    %v9003 = vld [vmem:[%s9001] ss:$16 sm:%s9002]
    %vm9004 = vcmask 1045508
    %v9005 = vsel %vm9004, %v9003, %v9000
    %s9006 = scalar_lea.vmem [#allocation1], 1667
    %s9007 = smov 192
    %v9008 = vld [vmem:[%s9006] ss:$16 sm:%s9007]
    %vm9009 = vcmask 1047558
    %v9010 = vsel %vm9009, %v9008, %v9005
    %9011 = vrot.lane.b32.xlu0 %v9010, 24
    %v9012 = vpop.permute.xlu0 %9011
    %vm9013 = vcmask 261312
    %s9014 = scalar_lea.vmem [#allocation0], 104
    %9015 = vst.msk [vmem:[%s9014] sm:$0xff] %vm9013, %v9012
    %s9016 = scalar_lea.vmem [#allocation1], 259
    %s9017 = smov 3
    %v9018 = vld [vmem:[%s9016] ss:$16 sm:%s9017]
    %s9019 = scalar_lea.vmem [#allocation1], 259
    %s9020 = smov 12
    %v9021 = vld [vmem:[%s9019] ss:$16 sm:%s9020]
    %vm9022 = vcmask 1043458
    %v9023 = vsel %vm9022, %v9021, %v9018
    %s9024 = scalar_lea.vmem [#allocation1], 259
    %s9025 = smov 48
    %v9026 = vld [vmem:[%s9024] ss:$16 sm:%s9025]
    %vm9027 = vcmask 1045508
    %v9028 = vsel %vm9027, %v9026, %v9023
    %s9029 = scalar_lea.vmem [#allocation1], 259
    %s9030 = smov 192
    %v9031 = vld [vmem:[%s9029] ss:$16 sm:%s9030]
    %vm9032 = vcmask 1047558
    %v9033 = vsel %vm9032, %v9031, %v9028
    %9034 = vrot.lane.b32.xlu0 %v9033, 24
    %v9035 = vpop.permute.xlu0 %9034
    %vm9036 = vcmask 261312
    %s9037 = scalar_lea.vmem [#allocation0], 16
    %9038 = vst.msk [vmem:[%s9037] sm:$0xff] %vm9036, %v9035
    %s9039 = scalar_lea.vmem [#allocation1], 771
    %s9040 = smov 3
    %v9041 = vld [vmem:[%s9039] ss:$16 sm:%s9040]
    %s9042 = scalar_lea.vmem [#allocation1], 771
    %s9043 = smov 12
    %v9044 = vld [vmem:[%s9042] ss:$16 sm:%s9043]
    %vm9045 = vcmask 1043458
    %v9046 = vsel %vm9045, %v9044, %v9041
    %s9047 = scalar_lea.vmem [#allocation1], 771
    %s9048 = smov 48
    %v9049 = vld [vmem:[%s9047] ss:$16 sm:%s9048]
    %vm9050 = vcmask 1045508
    %v9051 = vsel %vm9050, %v9049, %v9046
    %s9052 = scalar_lea.vmem [#allocation1], 771
    %s9053 = smov 192
    %v9054 = vld [vmem:[%s9052] ss:$16 sm:%s9053]
    %vm9055 = vcmask 1047558
    %v9056 = vsel %vm9055, %v9054, %v9051
    %9057 = vrot.lane.b32.xlu0 %v9056, 24
    %v9058 = vpop.permute.xlu0 %9057
    %vm9059 = vcmask 261312
    %s9060 = scalar_lea.vmem [#allocation0], 48
    %9061 = vst.msk [vmem:[%s9060] sm:$0xff] %vm9059, %v9058
    %s9062 = scalar_lea.vmem [#allocation1], 1283
    %s9063 = smov 3
    %v9064 = vld [vmem:[%s9062] ss:$16 sm:%s9063]
    %s9065 = scalar_lea.vmem [#allocation1], 1283
    %s9066 = smov 12
    %v9067 = vld [vmem:[%s9065] ss:$16 sm:%s9066]
    %vm9068 = vcmask 1043458
    %v9069 = vsel %vm9068, %v9067, %v9064
    %s9070 = scalar_lea.vmem [#allocation1], 1283
    %s9071 = smov 48
    %v9072 = vld [vmem:[%s9070] ss:$16 sm:%s9071]
    %vm9073 = vcmask 1045508
    %v9074 = vsel %vm9073, %v9072, %v9069
    %s9075 = scalar_lea.vmem [#allocation1], 1283
    %s9076 = smov 192
    %v9077 = vld [vmem:[%s9075] ss:$16 sm:%s9076]
    %vm9078 = vcmask 1047558
    %v9079 = vsel %vm9078, %v9077, %v9074
    %9080 = vrot.lane.b32.xlu0 %v9079, 24
    %v9081 = vpop.permute.xlu0 %9080
    %vm9082 = vcmask 261312
    %s9083 = scalar_lea.vmem [#allocation0], 80
    %9084 = vst.msk [vmem:[%s9083] sm:$0xff] %vm9082, %v9081
    %s9085 = scalar_lea.vmem [#allocation1], 1795
    %s9086 = smov 3
    %v9087 = vld [vmem:[%s9085] ss:$16 sm:%s9086]
    %s9088 = scalar_lea.vmem [#allocation1], 1795
    %s9089 = smov 12
    %v9090 = vld [vmem:[%s9088] ss:$16 sm:%s9089]
    %vm9091 = vcmask 1043458
    %v9092 = vsel %vm9091, %v9090, %v9087
    %s9093 = scalar_lea.vmem [#allocation1], 1795
    %s9094 = smov 48
    %v9095 = vld [vmem:[%s9093] ss:$16 sm:%s9094]
    %vm9096 = vcmask 1045508
    %v9097 = vsel %vm9096, %v9095, %v9092
    %s9098 = scalar_lea.vmem [#allocation1], 1795
    %s9099 = smov 192
    %v9100 = vld [vmem:[%s9098] ss:$16 sm:%s9099]
    %vm9101 = vcmask 1047558
    %v9102 = vsel %vm9101, %v9100, %v9097
    %9103 = vrot.lane.b32.xlu0 %v9102, 24
    %v9104 = vpop.permute.xlu0 %9103
    %vm9105 = vcmask 261312
    %s9106 = scalar_lea.vmem [#allocation0], 112
    %9107 = vst.msk [vmem:[%s9106] sm:$0xff] %vm9105, %v9104
    %s9108 = scalar_lea.vmem [#allocation1], 387
    %s9109 = smov 3
    %v9110 = vld [vmem:[%s9108] ss:$16 sm:%s9109]
    %s9111 = scalar_lea.vmem [#allocation1], 387
    %s9112 = smov 12
    %v9113 = vld [vmem:[%s9111] ss:$16 sm:%s9112]
    %vm9114 = vcmask 1043458
    %v9115 = vsel %vm9114, %v9113, %v9110
    %s9116 = scalar_lea.vmem [#allocation1], 387
    %s9117 = smov 48
    %v9118 = vld [vmem:[%s9116] ss:$16 sm:%s9117]
    %vm9119 = vcmask 1045508
    %v9120 = vsel %vm9119, %v9118, %v9115
    %s9121 = scalar_lea.vmem [#allocation1], 387
    %s9122 = smov 192
    %v9123 = vld [vmem:[%s9121] ss:$16 sm:%s9122]
    %vm9124 = vcmask 1047558
    %v9125 = vsel %vm9124, %v9123, %v9120
    %9126 = vrot.lane.b32.xlu0 %v9125, 24
    %v9127 = vpop.permute.xlu0 %9126
    %vm9128 = vcmask 261312
    %s9129 = scalar_lea.vmem [#allocation0], 24
    %9130 = vst.msk [vmem:[%s9129] sm:$0xff] %vm9128, %v9127
    %s9131 = scalar_lea.vmem [#allocation1], 899
    %s9132 = smov 3
    %v9133 = vld [vmem:[%s9131] ss:$16 sm:%s9132]
    %s9134 = scalar_lea.vmem [#allocation1], 899
    %s9135 = smov 12
    %v9136 = vld [vmem:[%s9134] ss:$16 sm:%s9135]
    %vm9137 = vcmask 1043458
    %v9138 = vsel %vm9137, %v9136, %v9133
    %s9139 = scalar_lea.vmem [#allocation1], 899
    %s9140 = smov 48
    %v9141 = vld [vmem:[%s9139] ss:$16 sm:%s9140]
    %vm9142 = vcmask 1045508
    %v9143 = vsel %vm9142, %v9141, %v9138
    %s9144 = scalar_lea.vmem [#allocation1], 899
    %s9145 = smov 192
    %v9146 = vld [vmem:[%s9144] ss:$16 sm:%s9145]
    %vm9147 = vcmask 1047558
    %v9148 = vsel %vm9147, %v9146, %v9143
    %9149 = vrot.lane.b32.xlu0 %v9148, 24
    %v9150 = vpop.permute.xlu0 %9149
    %vm9151 = vcmask 261312
    %s9152 = scalar_lea.vmem [#allocation0], 56
    %9153 = vst.msk [vmem:[%s9152] sm:$0xff] %vm9151, %v9150
    %s9154 = scalar_lea.vmem [#allocation1], 1411
    %s9155 = smov 3
    %v9156 = vld [vmem:[%s9154] ss:$16 sm:%s9155]
    %s9157 = scalar_lea.vmem [#allocation1], 1411
    %s9158 = smov 12
    %v9159 = vld [vmem:[%s9157] ss:$16 sm:%s9158]
    %vm9160 = vcmask 1043458
    %v9161 = vsel %vm9160, %v9159, %v9156
    %s9162 = scalar_lea.vmem [#allocation1], 1411
    %s9163 = smov 48
    %v9164 = vld [vmem:[%s9162] ss:$16 sm:%s9163]
    %vm9165 = vcmask 1045508
    %v9166 = vsel %vm9165, %v9164, %v9161
    %s9167 = scalar_lea.vmem [#allocation1], 1411
    %s9168 = smov 192
    %v9169 = vld [vmem:[%s9167] ss:$16 sm:%s9168]
    %vm9170 = vcmask 1047558
    %v9171 = vsel %vm9170, %v9169, %v9166
    %9172 = vrot.lane.b32.xlu0 %v9171, 24
    %v9173 = vpop.permute.xlu0 %9172
    %vm9174 = vcmask 261312
    %s9175 = scalar_lea.vmem [#allocation0], 88
    %9176 = vst.msk [vmem:[%s9175] sm:$0xff] %vm9174, %v9173
    %s9177 = scalar_lea.vmem [#allocation1], 1923
    %s9178 = smov 3
    %v9179 = vld [vmem:[%s9177] ss:$16 sm:%s9178]
    %s9180 = scalar_lea.vmem [#allocation1], 1923
    %s9181 = smov 12
    %v9182 = vld [vmem:[%s9180] ss:$16 sm:%s9181]
    %vm9183 = vcmask 1043458
    %v9184 = vsel %vm9183, %v9182, %v9179
    %s9185 = scalar_lea.vmem [#allocation1], 1923
    %s9186 = smov 48
    %v9187 = vld [vmem:[%s9185] ss:$16 sm:%s9186]
    %vm9188 = vcmask 1045508
    %v9189 = vsel %vm9188, %v9187, %v9184
    %s9190 = scalar_lea.vmem [#allocation1], 1923
    %s9191 = smov 192
    %v9192 = vld [vmem:[%s9190] ss:$16 sm:%s9191]
    %vm9193 = vcmask 1047558
    %v9194 = vsel %vm9193, %v9192, %v9189
    %9195 = vrot.lane.b32.xlu0 %v9194, 24
    %v9196 = vpop.permute.xlu0 %9195
    %vm9197 = vcmask 261312
    %s9198 = scalar_lea.vmem [#allocation0], 120
    %9199 = vst.msk [vmem:[%s9198] sm:$0xff] %vm9197, %v9196
    %s9200 = scalar_lea.vmem [#allocation1], 2
    %s9201 = smov 3
    %v9202 = vld [vmem:[%s9200] ss:$16 sm:%s9201]
    %s9203 = scalar_lea.vmem [#allocation1], 2
    %s9204 = smov 12
    %v9205 = vld [vmem:[%s9203] ss:$16 sm:%s9204]
    %vm9206 = vcmask 1043458
    %v9207 = vsel %vm9206, %v9205, %v9202
    %s9208 = scalar_lea.vmem [#allocation1], 2
    %s9209 = smov 48
    %v9210 = vld [vmem:[%s9208] ss:$16 sm:%s9209]
    %vm9211 = vcmask 1045508
    %v9212 = vsel %vm9211, %v9210, %v9207
    %s9213 = scalar_lea.vmem [#allocation1], 2
    %s9214 = smov 192
    %v9215 = vld [vmem:[%s9213] ss:$16 sm:%s9214]
    %vm9216 = vcmask 1047558
    %v9217 = vsel %vm9216, %v9215, %v9212
    %9218 = vrot.lane.b32.xlu0 %v9217, 16
    %v9219 = vpop.permute.xlu0 %9218
    %vm9220 = vcmask 195712
    %9221 = vst.msk [vmem:[#allocation0] sm:$0xff] %vm9220, %v9219
    %s9222 = scalar_lea.vmem [#allocation1], 514
    %s9223 = smov 3
    %v9224 = vld [vmem:[%s9222] ss:$16 sm:%s9223]
    %s9225 = scalar_lea.vmem [#allocation1], 514
    %s9226 = smov 12
    %v9227 = vld [vmem:[%s9225] ss:$16 sm:%s9226]
    %vm9228 = vcmask 1043458
    %v9229 = vsel %vm9228, %v9227, %v9224
    %s9230 = scalar_lea.vmem [#allocation1], 514
    %s9231 = smov 48
    %v9232 = vld [vmem:[%s9230] ss:$16 sm:%s9231]
    %vm9233 = vcmask 1045508
    %v9234 = vsel %vm9233, %v9232, %v9229
    %s9235 = scalar_lea.vmem [#allocation1], 514
    %s9236 = smov 192
    %v9237 = vld [vmem:[%s9235] ss:$16 sm:%s9236]
    %vm9238 = vcmask 1047558
    %v9239 = vsel %vm9238, %v9237, %v9234
    %9240 = vrot.lane.b32.xlu0 %v9239, 16
    %v9241 = vpop.permute.xlu0 %9240
    %vm9242 = vcmask 195712
    %s9243 = scalar_lea.vmem [#allocation0], 32
    %9244 = vst.msk [vmem:[%s9243] sm:$0xff] %vm9242, %v9241
    %s9245 = scalar_lea.vmem [#allocation1], 1026
    %s9246 = smov 3
    %v9247 = vld [vmem:[%s9245] ss:$16 sm:%s9246]
    %s9248 = scalar_lea.vmem [#allocation1], 1026
    %s9249 = smov 12
    %v9250 = vld [vmem:[%s9248] ss:$16 sm:%s9249]
    %vm9251 = vcmask 1043458
    %v9252 = vsel %vm9251, %v9250, %v9247
    %s9253 = scalar_lea.vmem [#allocation1], 1026
    %s9254 = smov 48
    %v9255 = vld [vmem:[%s9253] ss:$16 sm:%s9254]
    %vm9256 = vcmask 1045508
    %v9257 = vsel %vm9256, %v9255, %v9252
    %s9258 = scalar_lea.vmem [#allocation1], 1026
    %s9259 = smov 192
    %v9260 = vld [vmem:[%s9258] ss:$16 sm:%s9259]
    %vm9261 = vcmask 1047558
    %v9262 = vsel %vm9261, %v9260, %v9257
    %9263 = vrot.lane.b32.xlu0 %v9262, 16
    %v9264 = vpop.permute.xlu0 %9263
    %vm9265 = vcmask 195712
    %s9266 = scalar_lea.vmem [#allocation0], 64
    %9267 = vst.msk [vmem:[%s9266] sm:$0xff] %vm9265, %v9264
    %s9268 = scalar_lea.vmem [#allocation1], 1538
    %s9269 = smov 3
    %v9270 = vld [vmem:[%s9268] ss:$16 sm:%s9269]
    %s9271 = scalar_lea.vmem [#allocation1], 1538
    %s9272 = smov 12
    %v9273 = vld [vmem:[%s9271] ss:$16 sm:%s9272]
    %vm9274 = vcmask 1043458
    %v9275 = vsel %vm9274, %v9273, %v9270
    %s9276 = scalar_lea.vmem [#allocation1], 1538
    %s9277 = smov 48
    %v9278 = vld [vmem:[%s9276] ss:$16 sm:%s9277]
    %vm9279 = vcmask 1045508
    %v9280 = vsel %vm9279, %v9278, %v9275
    %s9281 = scalar_lea.vmem [#allocation1], 1538
    %s9282 = smov 192
    %v9283 = vld [vmem:[%s9281] ss:$16 sm:%s9282]
    %vm9284 = vcmask 1047558
    %v9285 = vsel %vm9284, %v9283, %v9280
    %9286 = vrot.lane.b32.xlu0 %v9285, 16
    %v9287 = vpop.permute.xlu0 %9286
    %vm9288 = vcmask 195712
    %s9289 = scalar_lea.vmem [#allocation0], 96
    %9290 = vst.msk [vmem:[%s9289] sm:$0xff] %vm9288, %v9287
    %s9291 = scalar_lea.vmem [#allocation1], 130
    %s9292 = smov 3
    %v9293 = vld [vmem:[%s9291] ss:$16 sm:%s9292]
    %s9294 = scalar_lea.vmem [#allocation1], 130
    %s9295 = smov 12
    %v9296 = vld [vmem:[%s9294] ss:$16 sm:%s9295]
    %vm9297 = vcmask 1043458
    %v9298 = vsel %vm9297, %v9296, %v9293
    %s9299 = scalar_lea.vmem [#allocation1], 130
    %s9300 = smov 48
    %v9301 = vld [vmem:[%s9299] ss:$16 sm:%s9300]
    %vm9302 = vcmask 1045508
    %v9303 = vsel %vm9302, %v9301, %v9298
    %s9304 = scalar_lea.vmem [#allocation1], 130
    %s9305 = smov 192
    %v9306 = vld [vmem:[%s9304] ss:$16 sm:%s9305]
    %vm9307 = vcmask 1047558
    %v9308 = vsel %vm9307, %v9306, %v9303
    %9309 = vrot.lane.b32.xlu0 %v9308, 16
    %v9310 = vpop.permute.xlu0 %9309
    %vm9311 = vcmask 195712
    %s9312 = scalar_lea.vmem [#allocation0], 8
    %9313 = vst.msk [vmem:[%s9312] sm:$0xff] %vm9311, %v9310
    %s9314 = scalar_lea.vmem [#allocation1], 642
    %s9315 = smov 3
    %v9316 = vld [vmem:[%s9314] ss:$16 sm:%s9315]
    %s9317 = scalar_lea.vmem [#allocation1], 642
    %s9318 = smov 12
    %v9319 = vld [vmem:[%s9317] ss:$16 sm:%s9318]
    %vm9320 = vcmask 1043458
    %v9321 = vsel %vm9320, %v9319, %v9316
    %s9322 = scalar_lea.vmem [#allocation1], 642
    %s9323 = smov 48
    %v9324 = vld [vmem:[%s9322] ss:$16 sm:%s9323]
    %vm9325 = vcmask 1045508
    %v9326 = vsel %vm9325, %v9324, %v9321
    %s9327 = scalar_lea.vmem [#allocation1], 642
    %s9328 = smov 192
    %v9329 = vld [vmem:[%s9327] ss:$16 sm:%s9328]
    %vm9330 = vcmask 1047558
    %v9331 = vsel %vm9330, %v9329, %v9326
    %9332 = vrot.lane.b32.xlu0 %v9331, 16
    %v9333 = vpop.permute.xlu0 %9332
    %vm9334 = vcmask 195712
    %s9335 = scalar_lea.vmem [#allocation0], 40
    %9336 = vst.msk [vmem:[%s9335] sm:$0xff] %vm9334, %v9333
    %s9337 = scalar_lea.vmem [#allocation1], 1154
    %s9338 = smov 3
    %v9339 = vld [vmem:[%s9337] ss:$16 sm:%s9338]
    %s9340 = scalar_lea.vmem [#allocation1], 1154
    %s9341 = smov 12
    %v9342 = vld [vmem:[%s9340] ss:$16 sm:%s9341]
    %vm9343 = vcmask 1043458
    %v9344 = vsel %vm9343, %v9342, %v9339
    %s9345 = scalar_lea.vmem [#allocation1], 1154
    %s9346 = smov 48
    %v9347 = vld [vmem:[%s9345] ss:$16 sm:%s9346]
    %vm9348 = vcmask 1045508
    %v9349 = vsel %vm9348, %v9347, %v9344
    %s9350 = scalar_lea.vmem [#allocation1], 1154
    %s9351 = smov 192
    %v9352 = vld [vmem:[%s9350] ss:$16 sm:%s9351]
    %vm9353 = vcmask 1047558
    %v9354 = vsel %vm9353, %v9352, %v9349
    %9355 = vrot.lane.b32.xlu0 %v9354, 16
    %v9356 = vpop.permute.xlu0 %9355
    %vm9357 = vcmask 195712
    %s9358 = scalar_lea.vmem [#allocation0], 72
    %9359 = vst.msk [vmem:[%s9358] sm:$0xff] %vm9357, %v9356
    %s9360 = scalar_lea.vmem [#allocation1], 1666
    %s9361 = smov 3
    %v9362 = vld [vmem:[%s9360] ss:$16 sm:%s9361]
    %s9363 = scalar_lea.vmem [#allocation1], 1666
    %s9364 = smov 12
    %v9365 = vld [vmem:[%s9363] ss:$16 sm:%s9364]
    %vm9366 = vcmask 1043458
    %v9367 = vsel %vm9366, %v9365, %v9362
    %s9368 = scalar_lea.vmem [#allocation1], 1666
    %s9369 = smov 48
    %v9370 = vld [vmem:[%s9368] ss:$16 sm:%s9369]
    %vm9371 = vcmask 1045508
    %v9372 = vsel %vm9371, %v9370, %v9367
    %s9373 = scalar_lea.vmem [#allocation1], 1666
    %s9374 = smov 192
    %v9375 = vld [vmem:[%s9373] ss:$16 sm:%s9374]
    %vm9376 = vcmask 1047558
    %v9377 = vsel %vm9376, %v9375, %v9372
    %9378 = vrot.lane.b32.xlu0 %v9377, 16
    %v9379 = vpop.permute.xlu0 %9378
    %vm9380 = vcmask 195712
    %s9381 = scalar_lea.vmem [#allocation0], 104
    %9382 = vst.msk [vmem:[%s9381] sm:$0xff] %vm9380, %v9379
    %s9383 = scalar_lea.vmem [#allocation1], 258
    %s9384 = smov 3
    %v9385 = vld [vmem:[%s9383] ss:$16 sm:%s9384]
    %s9386 = scalar_lea.vmem [#allocation1], 258
    %s9387 = smov 12
    %v9388 = vld [vmem:[%s9386] ss:$16 sm:%s9387]
    %vm9389 = vcmask 1043458
    %v9390 = vsel %vm9389, %v9388, %v9385
    %s9391 = scalar_lea.vmem [#allocation1], 258
    %s9392 = smov 48
    %v9393 = vld [vmem:[%s9391] ss:$16 sm:%s9392]
    %vm9394 = vcmask 1045508
    %v9395 = vsel %vm9394, %v9393, %v9390
    %s9396 = scalar_lea.vmem [#allocation1], 258
    %s9397 = smov 192
    %v9398 = vld [vmem:[%s9396] ss:$16 sm:%s9397]
    %vm9399 = vcmask 1047558
    %v9400 = vsel %vm9399, %v9398, %v9395
    %9401 = vrot.lane.b32.xlu0 %v9400, 16
    %v9402 = vpop.permute.xlu0 %9401
    %vm9403 = vcmask 195712
    %s9404 = scalar_lea.vmem [#allocation0], 16
    %9405 = vst.msk [vmem:[%s9404] sm:$0xff] %vm9403, %v9402
    %s9406 = scalar_lea.vmem [#allocation1], 770
    %s9407 = smov 3
    %v9408 = vld [vmem:[%s9406] ss:$16 sm:%s9407]
    %s9409 = scalar_lea.vmem [#allocation1], 770
    %s9410 = smov 12
    %v9411 = vld [vmem:[%s9409] ss:$16 sm:%s9410]
    %vm9412 = vcmask 1043458
    %v9413 = vsel %vm9412, %v9411, %v9408
    %s9414 = scalar_lea.vmem [#allocation1], 770
    %s9415 = smov 48
    %v9416 = vld [vmem:[%s9414] ss:$16 sm:%s9415]
    %vm9417 = vcmask 1045508
    %v9418 = vsel %vm9417, %v9416, %v9413
    %s9419 = scalar_lea.vmem [#allocation1], 770
    %s9420 = smov 192
    %v9421 = vld [vmem:[%s9419] ss:$16 sm:%s9420]
    %vm9422 = vcmask 1047558
    %v9423 = vsel %vm9422, %v9421, %v9418
    %9424 = vrot.lane.b32.xlu0 %v9423, 16
    %v9425 = vpop.permute.xlu0 %9424
    %vm9426 = vcmask 195712
    %s9427 = scalar_lea.vmem [#allocation0], 48
    %9428 = vst.msk [vmem:[%s9427] sm:$0xff] %vm9426, %v9425
    %s9429 = scalar_lea.vmem [#allocation1], 1282
    %s9430 = smov 3
    %v9431 = vld [vmem:[%s9429] ss:$16 sm:%s9430]
    %s9432 = scalar_lea.vmem [#allocation1], 1282
    %s9433 = smov 12
    %v9434 = vld [vmem:[%s9432] ss:$16 sm:%s9433]
    %vm9435 = vcmask 1043458
    %v9436 = vsel %vm9435, %v9434, %v9431
    %s9437 = scalar_lea.vmem [#allocation1], 1282
    %s9438 = smov 48
    %v9439 = vld [vmem:[%s9437] ss:$16 sm:%s9438]
    %vm9440 = vcmask 1045508
    %v9441 = vsel %vm9440, %v9439, %v9436
    %s9442 = scalar_lea.vmem [#allocation1], 1282
    %s9443 = smov 192
    %v9444 = vld [vmem:[%s9442] ss:$16 sm:%s9443]
    %vm9445 = vcmask 1047558
    %v9446 = vsel %vm9445, %v9444, %v9441
    %9447 = vrot.lane.b32.xlu0 %v9446, 16
    %v9448 = vpop.permute.xlu0 %9447
    %vm9449 = vcmask 195712
    %s9450 = scalar_lea.vmem [#allocation0], 80
    %9451 = vst.msk [vmem:[%s9450] sm:$0xff] %vm9449, %v9448
    %s9452 = scalar_lea.vmem [#allocation1], 1794
    %s9453 = smov 3
    %v9454 = vld [vmem:[%s9452] ss:$16 sm:%s9453]
    %s9455 = scalar_lea.vmem [#allocation1], 1794
    %s9456 = smov 12
    %v9457 = vld [vmem:[%s9455] ss:$16 sm:%s9456]
    %vm9458 = vcmask 1043458
    %v9459 = vsel %vm9458, %v9457, %v9454
    %s9460 = scalar_lea.vmem [#allocation1], 1794
    %s9461 = smov 48
    %v9462 = vld [vmem:[%s9460] ss:$16 sm:%s9461]
    %vm9463 = vcmask 1045508
    %v9464 = vsel %vm9463, %v9462, %v9459
    %s9465 = scalar_lea.vmem [#allocation1], 1794
    %s9466 = smov 192
    %v9467 = vld [vmem:[%s9465] ss:$16 sm:%s9466]
    %vm9468 = vcmask 1047558
    %v9469 = vsel %vm9468, %v9467, %v9464
    %9470 = vrot.lane.b32.xlu0 %v9469, 16
    %v9471 = vpop.permute.xlu0 %9470
    %vm9472 = vcmask 195712
    %s9473 = scalar_lea.vmem [#allocation0], 112
    %9474 = vst.msk [vmem:[%s9473] sm:$0xff] %vm9472, %v9471
    %s9475 = scalar_lea.vmem [#allocation1], 386
    %s9476 = smov 3
    %v9477 = vld [vmem:[%s9475] ss:$16 sm:%s9476]
    %s9478 = scalar_lea.vmem [#allocation1], 386
    %s9479 = smov 12
    %v9480 = vld [vmem:[%s9478] ss:$16 sm:%s9479]
    %vm9481 = vcmask 1043458
    %v9482 = vsel %vm9481, %v9480, %v9477
    %s9483 = scalar_lea.vmem [#allocation1], 386
    %s9484 = smov 48
    %v9485 = vld [vmem:[%s9483] ss:$16 sm:%s9484]
    %vm9486 = vcmask 1045508
    %v9487 = vsel %vm9486, %v9485, %v9482
    %s9488 = scalar_lea.vmem [#allocation1], 386
    %s9489 = smov 192
    %v9490 = vld [vmem:[%s9488] ss:$16 sm:%s9489]
    %vm9491 = vcmask 1047558
    %v9492 = vsel %vm9491, %v9490, %v9487
    %9493 = vrot.lane.b32.xlu0 %v9492, 16
    %v9494 = vpop.permute.xlu0 %9493
    %vm9495 = vcmask 195712
    %s9496 = scalar_lea.vmem [#allocation0], 24
    %9497 = vst.msk [vmem:[%s9496] sm:$0xff] %vm9495, %v9494
    %s9498 = scalar_lea.vmem [#allocation1], 898
    %s9499 = smov 3
    %v9500 = vld [vmem:[%s9498] ss:$16 sm:%s9499]
    %s9501 = scalar_lea.vmem [#allocation1], 898
    %s9502 = smov 12
    %v9503 = vld [vmem:[%s9501] ss:$16 sm:%s9502]
    %vm9504 = vcmask 1043458
    %v9505 = vsel %vm9504, %v9503, %v9500
    %s9506 = scalar_lea.vmem [#allocation1], 898
    %s9507 = smov 48
    %v9508 = vld [vmem:[%s9506] ss:$16 sm:%s9507]
    %vm9509 = vcmask 1045508
    %v9510 = vsel %vm9509, %v9508, %v9505
    %s9511 = scalar_lea.vmem [#allocation1], 898
    %s9512 = smov 192
    %v9513 = vld [vmem:[%s9511] ss:$16 sm:%s9512]
    %vm9514 = vcmask 1047558
    %v9515 = vsel %vm9514, %v9513, %v9510
    %9516 = vrot.lane.b32.xlu0 %v9515, 16
    %v9517 = vpop.permute.xlu0 %9516
    %vm9518 = vcmask 195712
    %s9519 = scalar_lea.vmem [#allocation0], 56
    %9520 = vst.msk [vmem:[%s9519] sm:$0xff] %vm9518, %v9517
    %s9521 = scalar_lea.vmem [#allocation1], 1410
    %s9522 = smov 3
    %v9523 = vld [vmem:[%s9521] ss:$16 sm:%s9522]
    %s9524 = scalar_lea.vmem [#allocation1], 1410
    %s9525 = smov 12
    %v9526 = vld [vmem:[%s9524] ss:$16 sm:%s9525]
    %vm9527 = vcmask 1043458
    %v9528 = vsel %vm9527, %v9526, %v9523
    %s9529 = scalar_lea.vmem [#allocation1], 1410
    %s9530 = smov 48
    %v9531 = vld [vmem:[%s9529] ss:$16 sm:%s9530]
    %vm9532 = vcmask 1045508
    %v9533 = vsel %vm9532, %v9531, %v9528
    %s9534 = scalar_lea.vmem [#allocation1], 1410
    %s9535 = smov 192
    %v9536 = vld [vmem:[%s9534] ss:$16 sm:%s9535]
    %vm9537 = vcmask 1047558
    %v9538 = vsel %vm9537, %v9536, %v9533
    %9539 = vrot.lane.b32.xlu0 %v9538, 16
    %v9540 = vpop.permute.xlu0 %9539
    %vm9541 = vcmask 195712
    %s9542 = scalar_lea.vmem [#allocation0], 88
    %9543 = vst.msk [vmem:[%s9542] sm:$0xff] %vm9541, %v9540
    %s9544 = scalar_lea.vmem [#allocation1], 1922
    %s9545 = smov 3
    %v9546 = vld [vmem:[%s9544] ss:$16 sm:%s9545]
    %s9547 = scalar_lea.vmem [#allocation1], 1922
    %s9548 = smov 12
    %v9549 = vld [vmem:[%s9547] ss:$16 sm:%s9548]
    %vm9550 = vcmask 1043458
    %v9551 = vsel %vm9550, %v9549, %v9546
    %s9552 = scalar_lea.vmem [#allocation1], 1922
    %s9553 = smov 48
    %v9554 = vld [vmem:[%s9552] ss:$16 sm:%s9553]
    %vm9555 = vcmask 1045508
    %v9556 = vsel %vm9555, %v9554, %v9551
    %s9557 = scalar_lea.vmem [#allocation1], 1922
    %s9558 = smov 192
    %v9559 = vld [vmem:[%s9557] ss:$16 sm:%s9558]
    %vm9560 = vcmask 1047558
    %v9561 = vsel %vm9560, %v9559, %v9556
    %9562 = vrot.lane.b32.xlu0 %v9561, 16
    %v9563 = vpop.permute.xlu0 %9562
    %vm9564 = vcmask 195712
    %s9565 = scalar_lea.vmem [#allocation0], 120
    %9566 = vst.msk [vmem:[%s9565] sm:$0xff] %vm9564, %v9563
    %s9567 = scalar_lea.vmem [#allocation1], 1
    %s9568 = smov 3
    %v9569 = vld [vmem:[%s9567] ss:$16 sm:%s9568]
    %s9570 = scalar_lea.vmem [#allocation1], 1
    %s9571 = smov 12
    %v9572 = vld [vmem:[%s9570] ss:$16 sm:%s9571]
    %vm9573 = vcmask 1043458
    %v9574 = vsel %vm9573, %v9572, %v9569
    %s9575 = scalar_lea.vmem [#allocation1], 1
    %s9576 = smov 48
    %v9577 = vld [vmem:[%s9575] ss:$16 sm:%s9576]
    %vm9578 = vcmask 1045508
    %v9579 = vsel %vm9578, %v9577, %v9574
    %s9580 = scalar_lea.vmem [#allocation1], 1
    %s9581 = smov 192
    %v9582 = vld [vmem:[%s9580] ss:$16 sm:%s9581]
    %vm9583 = vcmask 1047558
    %v9584 = vsel %vm9583, %v9582, %v9579
    %9585 = vrot.lane.b32.xlu0 %v9584, 8
    %v9586 = vpop.permute.xlu0 %9585
    %vm9587 = vcmask 130112
    %9588 = vst.msk [vmem:[#allocation0] sm:$0xff] %vm9587, %v9586
    %s9589 = scalar_lea.vmem [#allocation1], 513
    %s9590 = smov 3
    %v9591 = vld [vmem:[%s9589] ss:$16 sm:%s9590]
    %s9592 = scalar_lea.vmem [#allocation1], 513
    %s9593 = smov 12
    %v9594 = vld [vmem:[%s9592] ss:$16 sm:%s9593]
    %vm9595 = vcmask 1043458
    %v9596 = vsel %vm9595, %v9594, %v9591
    %s9597 = scalar_lea.vmem [#allocation1], 513
    %s9598 = smov 48
    %v9599 = vld [vmem:[%s9597] ss:$16 sm:%s9598]
    %vm9600 = vcmask 1045508
    %v9601 = vsel %vm9600, %v9599, %v9596
    %s9602 = scalar_lea.vmem [#allocation1], 513
    %s9603 = smov 192
    %v9604 = vld [vmem:[%s9602] ss:$16 sm:%s9603]
    %vm9605 = vcmask 1047558
    %v9606 = vsel %vm9605, %v9604, %v9601
    %9607 = vrot.lane.b32.xlu0 %v9606, 8
    %v9608 = vpop.permute.xlu0 %9607
    %vm9609 = vcmask 130112
    %s9610 = scalar_lea.vmem [#allocation0], 32
    %9611 = vst.msk [vmem:[%s9610] sm:$0xff] %vm9609, %v9608
    %s9612 = scalar_lea.vmem [#allocation1], 1025
    %s9613 = smov 3
    %v9614 = vld [vmem:[%s9612] ss:$16 sm:%s9613]
    %s9615 = scalar_lea.vmem [#allocation1], 1025
    %s9616 = smov 12
    %v9617 = vld [vmem:[%s9615] ss:$16 sm:%s9616]
    %vm9618 = vcmask 1043458
    %v9619 = vsel %vm9618, %v9617, %v9614
    %s9620 = scalar_lea.vmem [#allocation1], 1025
    %s9621 = smov 48
    %v9622 = vld [vmem:[%s9620] ss:$16 sm:%s9621]
    %vm9623 = vcmask 1045508
    %v9624 = vsel %vm9623, %v9622, %v9619
    %s9625 = scalar_lea.vmem [#allocation1], 1025
    %s9626 = smov 192
    %v9627 = vld [vmem:[%s9625] ss:$16 sm:%s9626]
    %vm9628 = vcmask 1047558
    %v9629 = vsel %vm9628, %v9627, %v9624
    %9630 = vrot.lane.b32.xlu0 %v9629, 8
    %v9631 = vpop.permute.xlu0 %9630
    %vm9632 = vcmask 130112
    %s9633 = scalar_lea.vmem [#allocation0], 64
    %9634 = vst.msk [vmem:[%s9633] sm:$0xff] %vm9632, %v9631
    %s9635 = scalar_lea.vmem [#allocation1], 1537
    %s9636 = smov 3
    %v9637 = vld [vmem:[%s9635] ss:$16 sm:%s9636]
    %s9638 = scalar_lea.vmem [#allocation1], 1537
    %s9639 = smov 12
    %v9640 = vld [vmem:[%s9638] ss:$16 sm:%s9639]
    %vm9641 = vcmask 1043458
    %v9642 = vsel %vm9641, %v9640, %v9637
    %s9643 = scalar_lea.vmem [#allocation1], 1537
    %s9644 = smov 48
    %v9645 = vld [vmem:[%s9643] ss:$16 sm:%s9644]
    %vm9646 = vcmask 1045508
    %v9647 = vsel %vm9646, %v9645, %v9642
    %s9648 = scalar_lea.vmem [#allocation1], 1537
    %s9649 = smov 192
    %v9650 = vld [vmem:[%s9648] ss:$16 sm:%s9649]
    %vm9651 = vcmask 1047558
    %v9652 = vsel %vm9651, %v9650, %v9647
    %9653 = vrot.lane.b32.xlu0 %v9652, 8
    %v9654 = vpop.permute.xlu0 %9653
    %vm9655 = vcmask 130112
    %s9656 = scalar_lea.vmem [#allocation0], 96
    %9657 = vst.msk [vmem:[%s9656] sm:$0xff] %vm9655, %v9654
    %s9658 = scalar_lea.vmem [#allocation1], 129
    %s9659 = smov 3
    %v9660 = vld [vmem:[%s9658] ss:$16 sm:%s9659]
    %s9661 = scalar_lea.vmem [#allocation1], 129
    %s9662 = smov 12
    %v9663 = vld [vmem:[%s9661] ss:$16 sm:%s9662]
    %vm9664 = vcmask 1043458
    %v9665 = vsel %vm9664, %v9663, %v9660
    %s9666 = scalar_lea.vmem [#allocation1], 129
    %s9667 = smov 48
    %v9668 = vld [vmem:[%s9666] ss:$16 sm:%s9667]
    %vm9669 = vcmask 1045508
    %v9670 = vsel %vm9669, %v9668, %v9665
    %s9671 = scalar_lea.vmem [#allocation1], 129
    %s9672 = smov 192
    %v9673 = vld [vmem:[%s9671] ss:$16 sm:%s9672]
    %vm9674 = vcmask 1047558
    %v9675 = vsel %vm9674, %v9673, %v9670
    %9676 = vrot.lane.b32.xlu0 %v9675, 8
    %v9677 = vpop.permute.xlu0 %9676
    %vm9678 = vcmask 130112
    %s9679 = scalar_lea.vmem [#allocation0], 8
    %9680 = vst.msk [vmem:[%s9679] sm:$0xff] %vm9678, %v9677
    %s9681 = scalar_lea.vmem [#allocation1], 641
    %s9682 = smov 3
    %v9683 = vld [vmem:[%s9681] ss:$16 sm:%s9682]
    %s9684 = scalar_lea.vmem [#allocation1], 641
    %s9685 = smov 12
    %v9686 = vld [vmem:[%s9684] ss:$16 sm:%s9685]
    %vm9687 = vcmask 1043458
    %v9688 = vsel %vm9687, %v9686, %v9683
    %s9689 = scalar_lea.vmem [#allocation1], 641
    %s9690 = smov 48
    %v9691 = vld [vmem:[%s9689] ss:$16 sm:%s9690]
    %vm9692 = vcmask 1045508
    %v9693 = vsel %vm9692, %v9691, %v9688
    %s9694 = scalar_lea.vmem [#allocation1], 641
    %s9695 = smov 192
    %v9696 = vld [vmem:[%s9694] ss:$16 sm:%s9695]
    %vm9697 = vcmask 1047558
    %v9698 = vsel %vm9697, %v9696, %v9693
    %9699 = vrot.lane.b32.xlu0 %v9698, 8
    %v9700 = vpop.permute.xlu0 %9699
    %vm9701 = vcmask 130112
    %s9702 = scalar_lea.vmem [#allocation0], 40
    %9703 = vst.msk [vmem:[%s9702] sm:$0xff] %vm9701, %v9700
    %s9704 = scalar_lea.vmem [#allocation1], 1153
    %s9705 = smov 3
    %v9706 = vld [vmem:[%s9704] ss:$16 sm:%s9705]
    %s9707 = scalar_lea.vmem [#allocation1], 1153
    %s9708 = smov 12
    %v9709 = vld [vmem:[%s9707] ss:$16 sm:%s9708]
    %vm9710 = vcmask 1043458
    %v9711 = vsel %vm9710, %v9709, %v9706
    %s9712 = scalar_lea.vmem [#allocation1], 1153
    %s9713 = smov 48
    %v9714 = vld [vmem:[%s9712] ss:$16 sm:%s9713]
    %vm9715 = vcmask 1045508
    %v9716 = vsel %vm9715, %v9714, %v9711
    %s9717 = scalar_lea.vmem [#allocation1], 1153
    %s9718 = smov 192
    %v9719 = vld [vmem:[%s9717] ss:$16 sm:%s9718]
    %vm9720 = vcmask 1047558
    %v9721 = vsel %vm9720, %v9719, %v9716
    %9722 = vrot.lane.b32.xlu0 %v9721, 8
    %v9723 = vpop.permute.xlu0 %9722
    %vm9724 = vcmask 130112
    %s9725 = scalar_lea.vmem [#allocation0], 72
    %9726 = vst.msk [vmem:[%s9725] sm:$0xff] %vm9724, %v9723
    %s9727 = scalar_lea.vmem [#allocation1], 1665
    %s9728 = smov 3
    %v9729 = vld [vmem:[%s9727] ss:$16 sm:%s9728]
    %s9730 = scalar_lea.vmem [#allocation1], 1665
    %s9731 = smov 12
    %v9732 = vld [vmem:[%s9730] ss:$16 sm:%s9731]
    %vm9733 = vcmask 1043458
    %v9734 = vsel %vm9733, %v9732, %v9729
    %s9735 = scalar_lea.vmem [#allocation1], 1665
    %s9736 = smov 48
    %v9737 = vld [vmem:[%s9735] ss:$16 sm:%s9736]
    %vm9738 = vcmask 1045508
    %v9739 = vsel %vm9738, %v9737, %v9734
    %s9740 = scalar_lea.vmem [#allocation1], 1665
    %s9741 = smov 192
    %v9742 = vld [vmem:[%s9740] ss:$16 sm:%s9741]
    %vm9743 = vcmask 1047558
    %v9744 = vsel %vm9743, %v9742, %v9739
    %9745 = vrot.lane.b32.xlu0 %v9744, 8
    %v9746 = vpop.permute.xlu0 %9745
    %vm9747 = vcmask 130112
    %s9748 = scalar_lea.vmem [#allocation0], 104
    %9749 = vst.msk [vmem:[%s9748] sm:$0xff] %vm9747, %v9746
    %s9750 = scalar_lea.vmem [#allocation1], 257
    %s9751 = smov 3
    %v9752 = vld [vmem:[%s9750] ss:$16 sm:%s9751]
    %s9753 = scalar_lea.vmem [#allocation1], 257
    %s9754 = smov 12
    %v9755 = vld [vmem:[%s9753] ss:$16 sm:%s9754]
    %vm9756 = vcmask 1043458
    %v9757 = vsel %vm9756, %v9755, %v9752
    %s9758 = scalar_lea.vmem [#allocation1], 257
    %s9759 = smov 48
    %v9760 = vld [vmem:[%s9758] ss:$16 sm:%s9759]
    %vm9761 = vcmask 1045508
    %v9762 = vsel %vm9761, %v9760, %v9757
    %s9763 = scalar_lea.vmem [#allocation1], 257
    %s9764 = smov 192
    %v9765 = vld [vmem:[%s9763] ss:$16 sm:%s9764]
    %vm9766 = vcmask 1047558
    %v9767 = vsel %vm9766, %v9765, %v9762
    %9768 = vrot.lane.b32.xlu0 %v9767, 8
    %v9769 = vpop.permute.xlu0 %9768
    %vm9770 = vcmask 130112
    %s9771 = scalar_lea.vmem [#allocation0], 16
    %9772 = vst.msk [vmem:[%s9771] sm:$0xff] %vm9770, %v9769
    %s9773 = scalar_lea.vmem [#allocation1], 769
    %s9774 = smov 3
    %v9775 = vld [vmem:[%s9773] ss:$16 sm:%s9774]
    %s9776 = scalar_lea.vmem [#allocation1], 769
    %s9777 = smov 12
    %v9778 = vld [vmem:[%s9776] ss:$16 sm:%s9777]
    %vm9779 = vcmask 1043458
    %v9780 = vsel %vm9779, %v9778, %v9775
    %s9781 = scalar_lea.vmem [#allocation1], 769
    %s9782 = smov 48
    %v9783 = vld [vmem:[%s9781] ss:$16 sm:%s9782]
    %vm9784 = vcmask 1045508
    %v9785 = vsel %vm9784, %v9783, %v9780
    %s9786 = scalar_lea.vmem [#allocation1], 769
    %s9787 = smov 192
    %v9788 = vld [vmem:[%s9786] ss:$16 sm:%s9787]
    %vm9789 = vcmask 1047558
    %v9790 = vsel %vm9789, %v9788, %v9785
    %9791 = vrot.lane.b32.xlu0 %v9790, 8
    %v9792 = vpop.permute.xlu0 %9791
    %vm9793 = vcmask 130112
    %s9794 = scalar_lea.vmem [#allocation0], 48
    %9795 = vst.msk [vmem:[%s9794] sm:$0xff] %vm9793, %v9792
    %s9796 = scalar_lea.vmem [#allocation1], 1281
    %s9797 = smov 3
    %v9798 = vld [vmem:[%s9796] ss:$16 sm:%s9797]
    %s9799 = scalar_lea.vmem [#allocation1], 1281
    %s9800 = smov 12
    %v9801 = vld [vmem:[%s9799] ss:$16 sm:%s9800]
    %vm9802 = vcmask 1043458
    %v9803 = vsel %vm9802, %v9801, %v9798
    %s9804 = scalar_lea.vmem [#allocation1], 1281
    %s9805 = smov 48
    %v9806 = vld [vmem:[%s9804] ss:$16 sm:%s9805]
    %vm9807 = vcmask 1045508
    %v9808 = vsel %vm9807, %v9806, %v9803
    %s9809 = scalar_lea.vmem [#allocation1], 1281
    %s9810 = smov 192
    %v9811 = vld [vmem:[%s9809] ss:$16 sm:%s9810]
    %vm9812 = vcmask 1047558
    %v9813 = vsel %vm9812, %v9811, %v9808
    %9814 = vrot.lane.b32.xlu0 %v9813, 8
    %v9815 = vpop.permute.xlu0 %9814
    %vm9816 = vcmask 130112
    %s9817 = scalar_lea.vmem [#allocation0], 80
    %9818 = vst.msk [vmem:[%s9817] sm:$0xff] %vm9816, %v9815
    %s9819 = scalar_lea.vmem [#allocation1], 1793
    %s9820 = smov 3
    %v9821 = vld [vmem:[%s9819] ss:$16 sm:%s9820]
    %s9822 = scalar_lea.vmem [#allocation1], 1793
    %s9823 = smov 12
    %v9824 = vld [vmem:[%s9822] ss:$16 sm:%s9823]
    %vm9825 = vcmask 1043458
    %v9826 = vsel %vm9825, %v9824, %v9821
    %s9827 = scalar_lea.vmem [#allocation1], 1793
    %s9828 = smov 48
    %v9829 = vld [vmem:[%s9827] ss:$16 sm:%s9828]
    %vm9830 = vcmask 1045508
    %v9831 = vsel %vm9830, %v9829, %v9826
    %s9832 = scalar_lea.vmem [#allocation1], 1793
    %s9833 = smov 192
    %v9834 = vld [vmem:[%s9832] ss:$16 sm:%s9833]
    %vm9835 = vcmask 1047558
    %v9836 = vsel %vm9835, %v9834, %v9831
    %9837 = vrot.lane.b32.xlu0 %v9836, 8
    %v9838 = vpop.permute.xlu0 %9837
    %vm9839 = vcmask 130112
    %s9840 = scalar_lea.vmem [#allocation0], 112
    %9841 = vst.msk [vmem:[%s9840] sm:$0xff] %vm9839, %v9838
    %s9842 = scalar_lea.vmem [#allocation1], 385
    %s9843 = smov 3
    %v9844 = vld [vmem:[%s9842] ss:$16 sm:%s9843]
    %s9845 = scalar_lea.vmem [#allocation1], 385
    %s9846 = smov 12
    %v9847 = vld [vmem:[%s9845] ss:$16 sm:%s9846]
    %vm9848 = vcmask 1043458
    %v9849 = vsel %vm9848, %v9847, %v9844
    %s9850 = scalar_lea.vmem [#allocation1], 385
    %s9851 = smov 48
    %v9852 = vld [vmem:[%s9850] ss:$16 sm:%s9851]
    %vm9853 = vcmask 1045508
    %v9854 = vsel %vm9853, %v9852, %v9849
    %s9855 = scalar_lea.vmem [#allocation1], 385
    %s9856 = smov 192
    %v9857 = vld [vmem:[%s9855] ss:$16 sm:%s9856]
    %vm9858 = vcmask 1047558
    %v9859 = vsel %vm9858, %v9857, %v9854
    %9860 = vrot.lane.b32.xlu0 %v9859, 8
    %v9861 = vpop.permute.xlu0 %9860
    %vm9862 = vcmask 130112
    %s9863 = scalar_lea.vmem [#allocation0], 24
    %9864 = vst.msk [vmem:[%s9863] sm:$0xff] %vm9862, %v9861
    %s9865 = scalar_lea.vmem [#allocation1], 897
    %s9866 = smov 3
    %v9867 = vld [vmem:[%s9865] ss:$16 sm:%s9866]
    %s9868 = scalar_lea.vmem [#allocation1], 897
    %s9869 = smov 12
    %v9870 = vld [vmem:[%s9868] ss:$16 sm:%s9869]
    %vm9871 = vcmask 1043458
    %v9872 = vsel %vm9871, %v9870, %v9867
    %s9873 = scalar_lea.vmem [#allocation1], 897
    %s9874 = smov 48
    %v9875 = vld [vmem:[%s9873] ss:$16 sm:%s9874]
    %vm9876 = vcmask 1045508
    %v9877 = vsel %vm9876, %v9875, %v9872
    %s9878 = scalar_lea.vmem [#allocation1], 897
    %s9879 = smov 192
    %v9880 = vld [vmem:[%s9878] ss:$16 sm:%s9879]
    %vm9881 = vcmask 1047558
    %v9882 = vsel %vm9881, %v9880, %v9877
    %9883 = vrot.lane.b32.xlu0 %v9882, 8
    %v9884 = vpop.permute.xlu0 %9883
    %vm9885 = vcmask 130112
    %s9886 = scalar_lea.vmem [#allocation0], 56
    %9887 = vst.msk [vmem:[%s9886] sm:$0xff] %vm9885, %v9884
    %s9888 = scalar_lea.vmem [#allocation1], 1409
    %s9889 = smov 3
    %v9890 = vld [vmem:[%s9888] ss:$16 sm:%s9889]
    %s9891 = scalar_lea.vmem [#allocation1], 1409
    %s9892 = smov 12
    %v9893 = vld [vmem:[%s9891] ss:$16 sm:%s9892]
    %vm9894 = vcmask 1043458
    %v9895 = vsel %vm9894, %v9893, %v9890
    %s9896 = scalar_lea.vmem [#allocation1], 1409
    %s9897 = smov 48
    %v9898 = vld [vmem:[%s9896] ss:$16 sm:%s9897]
    %vm9899 = vcmask 1045508
    %v9900 = vsel %vm9899, %v9898, %v9895
    %s9901 = scalar_lea.vmem [#allocation1], 1409
    %s9902 = smov 192
    %v9903 = vld [vmem:[%s9901] ss:$16 sm:%s9902]
    %vm9904 = vcmask 1047558
    %v9905 = vsel %vm9904, %v9903, %v9900
    %9906 = vrot.lane.b32.xlu0 %v9905, 8
    %v9907 = vpop.permute.xlu0 %9906
    %vm9908 = vcmask 130112
    %s9909 = scalar_lea.vmem [#allocation0], 88
    %9910 = vst.msk [vmem:[%s9909] sm:$0xff] %vm9908, %v9907
    %s9911 = scalar_lea.vmem [#allocation1], 1921
    %s9912 = smov 3
    %v9913 = vld [vmem:[%s9911] ss:$16 sm:%s9912]
    %s9914 = scalar_lea.vmem [#allocation1], 1921
    %s9915 = smov 12
    %v9916 = vld [vmem:[%s9914] ss:$16 sm:%s9915]
    %vm9917 = vcmask 1043458
    %v9918 = vsel %vm9917, %v9916, %v9913
    %s9919 = scalar_lea.vmem [#allocation1], 1921
    %s9920 = smov 48
    %v9921 = vld [vmem:[%s9919] ss:$16 sm:%s9920]
    %vm9922 = vcmask 1045508
    %v9923 = vsel %vm9922, %v9921, %v9918
    %s9924 = scalar_lea.vmem [#allocation1], 1921
    %s9925 = smov 192
    %v9926 = vld [vmem:[%s9924] ss:$16 sm:%s9925]
    %vm9927 = vcmask 1047558
    %v9928 = vsel %vm9927, %v9926, %v9923
    %9929 = vrot.lane.b32.xlu0 %v9928, 8
    %v9930 = vpop.permute.xlu0 %9929
    %vm9931 = vcmask 130112
    %s9932 = scalar_lea.vmem [#allocation0], 120
    %9933 = vst.msk [vmem:[%s9932] sm:$0xff] %vm9931, %v9930
    %s9935 = smul.u32 4, 2
    %s9936 = sshll.u32 1, %s9935
    %s9937 = ssub.s32 %s9936, 1
    %s9938 = sshrl.u32 %s9935, 1
    %v9939 = vld [vmem:[#allocation0] sm:%s9937]
    %v9940 = vpack.c.bf16 0.0, %v9939
    %s9941 = sshll.u32 1, %s9938
    %s9942 = ssub.s32 %s9941, 1
    %9943 = vst [vmem:[%s1] sm:%s9942] %v9940
    %s9944 = scalar_lea.vmem [#allocation0], 8
    %v9945 = vld [vmem:[%s9944] sm:%s9937]
    %v9946 = vpack.c.bf16 0.0, %v9945
    %s9947 = sshll.u32 1, %s9938
    %s9948 = ssub.s32 %s9947, 1
    %s9949 = scalar_lea.vmem %s1, 4
    %9950 = vst [vmem:[%s9949] sm:%s9948] %v9946
    %s9951 = scalar_lea.vmem [#allocation0], 16
    %v9952 = vld [vmem:[%s9951] sm:%s9937]
    %v9953 = vpack.c.bf16 0.0, %v9952
    %s9954 = sshll.u32 1, %s9938
    %s9955 = ssub.s32 %s9954, 1
    %s9956 = smul.addr 4, 2
    %s9957 = scalar_lea.vmem %s1, %s9956
    %9958 = vst [vmem:[%s9957] sm:%s9955] %v9953
    %s9959 = scalar_lea.vmem [#allocation0], 24
    %v9960 = vld [vmem:[%s9959] sm:%s9937]
    %v9961 = vpack.c.bf16 0.0, %v9960
    %s9962 = sshll.u32 1, %s9938
    %s9963 = ssub.s32 %s9962, 1
    %s9964 = smul.addr 4, 3
    %s9965 = scalar_lea.vmem %s1, %s9964
    %9966 = vst [vmem:[%s9965] sm:%s9963] %v9961
    %s9967 = scalar_lea.vmem [#allocation0], 32
    %v9968 = vld [vmem:[%s9967] sm:%s9937]
    %v9969 = vpack.c.bf16 0.0, %v9968
    %s9970 = sshll.u32 1, %s9938
    %s9971 = ssub.s32 %s9970, 1
    %s9972 = smul.addr 4, 4
    %s9973 = scalar_lea.vmem %s1, %s9972
    %9974 = vst [vmem:[%s9973] sm:%s9971] %v9969
    %s9975 = scalar_lea.vmem [#allocation0], 40
    %v9976 = vld [vmem:[%s9975] sm:%s9937]
    %v9977 = vpack.c.bf16 0.0, %v9976
    %s9978 = sshll.u32 1, %s9938
    %s9979 = ssub.s32 %s9978, 1
    %s9980 = smul.addr 4, 5
    %s9981 = scalar_lea.vmem %s1, %s9980
    %9982 = vst [vmem:[%s9981] sm:%s9979] %v9977
    %s9983 = scalar_lea.vmem [#allocation0], 48
    %v9984 = vld [vmem:[%s9983] sm:%s9937]
    %v9985 = vpack.c.bf16 0.0, %v9984
    %s9986 = sshll.u32 1, %s9938
    %s9987 = ssub.s32 %s9986, 1
    %s9988 = smul.addr 4, 6
    %s9989 = scalar_lea.vmem %s1, %s9988
    %9990 = vst [vmem:[%s9989] sm:%s9987] %v9985
    %s9991 = scalar_lea.vmem [#allocation0], 56
    %v9992 = vld [vmem:[%s9991] sm:%s9937]
    %v9993 = vpack.c.bf16 0.0, %v9992
    %s9994 = sshll.u32 1, %s9938
    %s9995 = ssub.s32 %s9994, 1
    %s9996 = smul.addr 4, 7
    %s9997 = scalar_lea.vmem %s1, %s9996
    %9998 = vst [vmem:[%s9997] sm:%s9995] %v9993
    %s9999 = scalar_lea.vmem [#allocation0], 64
    %v10000 = vld [vmem:[%s9999] sm:%s9937]
    %v10001 = vpack.c.bf16 0.0, %v10000
    %s10002 = sshll.u32 1, %s9938
    %s10003 = ssub.s32 %s10002, 1
    %s10004 = smul.addr 4, 8
    %s10005 = scalar_lea.vmem %s1, %s10004
    %10006 = vst [vmem:[%s10005] sm:%s10003] %v10001
    %s10007 = scalar_lea.vmem [#allocation0], 72
    %v10008 = vld [vmem:[%s10007] sm:%s9937]
    %v10009 = vpack.c.bf16 0.0, %v10008
    %s10010 = sshll.u32 1, %s9938
    %s10011 = ssub.s32 %s10010, 1
    %s10012 = smul.addr 4, 9
    %s10013 = scalar_lea.vmem %s1, %s10012
    %10014 = vst [vmem:[%s10013] sm:%s10011] %v10009
    %s10015 = scalar_lea.vmem [#allocation0], 80
    %v10016 = vld [vmem:[%s10015] sm:%s9937]
    %v10017 = vpack.c.bf16 0.0, %v10016
    %s10018 = sshll.u32 1, %s9938
    %s10019 = ssub.s32 %s10018, 1
    %s10020 = smul.addr 4, 10
    %s10021 = scalar_lea.vmem %s1, %s10020
    %10022 = vst [vmem:[%s10021] sm:%s10019] %v10017
    %s10023 = scalar_lea.vmem [#allocation0], 88
    %v10024 = vld [vmem:[%s10023] sm:%s9937]
    %v10025 = vpack.c.bf16 0.0, %v10024
    %s10026 = sshll.u32 1, %s9938
    %s10027 = ssub.s32 %s10026, 1
    %s10028 = smul.addr 4, 11
    %s10029 = scalar_lea.vmem %s1, %s10028
    %10030 = vst [vmem:[%s10029] sm:%s10027] %v10025
    %s10031 = scalar_lea.vmem [#allocation0], 96
    %v10032 = vld [vmem:[%s10031] sm:%s9937]
    %v10033 = vpack.c.bf16 0.0, %v10032
    %s10034 = sshll.u32 1, %s9938
    %s10035 = ssub.s32 %s10034, 1
    %s10036 = smul.addr 4, 12
    %s10037 = scalar_lea.vmem %s1, %s10036
    %10038 = vst [vmem:[%s10037] sm:%s10035] %v10033
    %s10039 = scalar_lea.vmem [#allocation0], 104
    %v10040 = vld [vmem:[%s10039] sm:%s9937]
    %v10041 = vpack.c.bf16 0.0, %v10040
    %s10042 = sshll.u32 1, %s9938
    %s10043 = ssub.s32 %s10042, 1
    %s10044 = smul.addr 4, 13
    %s10045 = scalar_lea.vmem %s1, %s10044
    %10046 = vst [vmem:[%s10045] sm:%s10043] %v10041
    %s10047 = scalar_lea.vmem [#allocation0], 112
    %v10048 = vld [vmem:[%s10047] sm:%s9937]
    %v10049 = vpack.c.bf16 0.0, %v10048
    %s10050 = sshll.u32 1, %s9938
    %s10051 = ssub.s32 %s10050, 1
    %s10052 = smul.addr 4, 14
    %s10053 = scalar_lea.vmem %s1, %s10052
    %10054 = vst [vmem:[%s10053] sm:%s10051] %v10049
    %s10055 = scalar_lea.vmem [#allocation0], 120
    %v10056 = vld [vmem:[%s10055] sm:%s9937]
    %v10057 = vpack.c.bf16 0.0, %v10056
    %s10058 = sshll.u32 1, %s9938
    %s10059 = ssub.s32 %s10058, 1
    %s10060 = smul.addr 4, 15
    %s10061 = scalar_lea.vmem %s1, %s10060
    %10062 = vst [vmem:[%s10061] sm:%s10059] %v10057

// kernel: tile.23
$region0: #{tile.23}
  #allocation0 [shape = 's32[1]{0}', space=sflag, size = 0x4, scoped, tag = 'scoped memory for tile.23']
  %s0 = inlined_call_operand.vmem [shape: f32[8], index: 0, kind: input, shape index: {}]
  %s1 = inlined_call_operand.vmem [shape: f32[16,8], index: 1, kind: output, shape index: {}]
  // Predicated region
  $region2: #{tile.23} parent=0 // pred_check
    _
  $region3: #{tile.23} parent=0 // pred_check_branch
    %3 = sbr.rel (0) target = $region5
  $region4: #{tile.23} parent=0 // pred_region
    _
  $region5: #{tile.23} parent=0 // pred_fallthru
    _
  %v4 = vld [vmem:[%s0] ss:$0 sm:$0xff]
  %5 = vst [vmem:[%s1] sm:$0xff] %v4
  %s6 = scalar_lea.vmem %s1, 8
  %7 = vst [vmem:[%s6] sm:$0xff] %v4

// kernel: tile.24
$region0: #{tile.24}
  %s0 = inlined_call_operand.vmem [shape: f32[16,8], index: 0, kind: input, shape index: {}]
  %s1 = inlined_call_operand.vmem [shape: f32[1,128], index: 1, kind: output, shape index: {}]
  $region1: #{tile.24} parent=0
    #allocation0 [shape = 'u8[4096]{0}', space=vmem, size = 0x1000, scoped, tag = 'scoped mem for output reshape']
    %v2 = vld [vmem:[%s0] sm:$0x1]
    %vm3 = vcmask 64512
    %4 = vst.msk [vmem:[#allocation0] sm:$0x1] %vm3, %v2
    %s5 = scalar_lea.vmem %s0, 15
    %v6 = vld [vmem:[%s5] sm:$0x1]
    %7 = vrot.lane.b32.xlu0 %v6, 120
    %v8 = vpop.permute.xlu0 %7
    %vm9 = vcmask 1048512
    %10 = vst.msk [vmem:[#allocation0] sm:$0x1] %vm9, %v8
    %s11 = scalar_lea.vmem %s0, 14
    %v12 = vld [vmem:[%s11] sm:$0x1]
    %13 = vrot.lane.b32.xlu0 %v12, 112
    %v14 = vpop.permute.xlu0 %13
    %vm15 = vcmask 982912
    %16 = vst.msk [vmem:[#allocation0] sm:$0x1] %vm15, %v14
    %s17 = scalar_lea.vmem %s0, 13
    %v18 = vld [vmem:[%s17] sm:$0x1]
    %19 = vrot.lane.b32.xlu0 %v18, 104
    %v20 = vpop.permute.xlu0 %19
    %vm21 = vcmask 917312
    %22 = vst.msk [vmem:[#allocation0] sm:$0x1] %vm21, %v20
    %s23 = scalar_lea.vmem %s0, 12
    %v24 = vld [vmem:[%s23] sm:$0x1]
    %25 = vrot.lane.b32.xlu0 %v24, 96
    %v26 = vpop.permute.xlu0 %25
    %vm27 = vcmask 851712
    %28 = vst.msk [vmem:[#allocation0] sm:$0x1] %vm27, %v26
    %s29 = scalar_lea.vmem %s0, 11
    %v30 = vld [vmem:[%s29] sm:$0x1]
    %31 = vrot.lane.b32.xlu0 %v30, 88
    %v32 = vpop.permute.xlu0 %31
    %vm33 = vcmask 786112
    %34 = vst.msk [vmem:[#allocation0] sm:$0x1] %vm33, %v32
    %s35 = scalar_lea.vmem %s0, 10
    %v36 = vld [vmem:[%s35] sm:$0x1]
    %37 = vrot.lane.b32.xlu0 %v36, 80
    %v38 = vpop.permute.xlu0 %37
    %vm39 = vcmask 720512
    %40 = vst.msk [vmem:[#allocation0] sm:$0x1] %vm39, %v38
    %s41 = scalar_lea.vmem %s0, 9
    %v42 = vld [vmem:[%s41] sm:$0x1]
    %43 = vrot.lane.b32.xlu0 %v42, 72
    %v44 = vpop.permute.xlu0 %43
    %vm45 = vcmask 654912
    %46 = vst.msk [vmem:[#allocation0] sm:$0x1] %vm45, %v44
    %s47 = scalar_lea.vmem %s0, 8
    %v48 = vld [vmem:[%s47] sm:$0x1]
    %49 = vrot.lane.b32.xlu0 %v48, 64
    %v50 = vpop.permute.xlu0 %49
    %vm51 = vcmask 589312
    %52 = vst.msk [vmem:[#allocation0] sm:$0x1] %vm51, %v50
    %s53 = scalar_lea.vmem %s0, 7
    %v54 = vld [vmem:[%s53] sm:$0x1]
    %55 = vrot.lane.b32.xlu0 %v54, 56
    %v56 = vpop.permute.xlu0 %55
    %vm57 = vcmask 523712
    %58 = vst.msk [vmem:[#allocation0] sm:$0x1] %vm57, %v56
    %s59 = scalar_lea.vmem %s0, 6
    %v60 = vld [vmem:[%s59] sm:$0x1]
    %61 = vrot.lane.b32.xlu0 %v60, 48
    %v62 = vpop.permute.xlu0 %61
    %vm63 = vcmask 458112
    %64 = vst.msk [vmem:[#allocation0] sm:$0x1] %vm63, %v62
    %s65 = scalar_lea.vmem %s0, 5
    %v66 = vld [vmem:[%s65] sm:$0x1]
    %67 = vrot.lane.b32.xlu0 %v66, 40
    %v68 = vpop.permute.xlu0 %67
    %vm69 = vcmask 392512
    %70 = vst.msk [vmem:[#allocation0] sm:$0x1] %vm69, %v68
    %s71 = scalar_lea.vmem %s0, 4
    %v72 = vld [vmem:[%s71] sm:$0x1]
    %73 = vrot.lane.b32.xlu0 %v72, 32
    %v74 = vpop.permute.xlu0 %73
    %vm75 = vcmask 326912
    %76 = vst.msk [vmem:[#allocation0] sm:$0x1] %vm75, %v74
    %s77 = scalar_lea.vmem %s0, 3
    %v78 = vld [vmem:[%s77] sm:$0x1]
    %79 = vrot.lane.b32.xlu0 %v78, 24
    %v80 = vpop.permute.xlu0 %79
    %vm81 = vcmask 261312
    %82 = vst.msk [vmem:[#allocation0] sm:$0x1] %vm81, %v80
    %s83 = scalar_lea.vmem %s0, 2
    %v84 = vld [vmem:[%s83] sm:$0x1]
    %85 = vrot.lane.b32.xlu0 %v84, 16
    %v86 = vpop.permute.xlu0 %85
    %vm87 = vcmask 195712
    %88 = vst.msk [vmem:[#allocation0] sm:$0x1] %vm87, %v86
    %s89 = scalar_lea.vmem %s0, 1
    %v90 = vld [vmem:[%s89] sm:$0x1]
    %91 = vrot.lane.b32.xlu0 %v90, 8
    %v92 = vpop.permute.xlu0 %91
    %vm93 = vcmask 130112
    %94 = vst.msk [vmem:[#allocation0] sm:$0x1] %vm93, %v92
    %s96 = sshll.u32 1, 1
    %s97 = ssub.s32 %s96, 1
    %v99 = vld [vmem:[#allocation0] sm:%s97]
    %s100 = sshll.u32 1, 1
    %s101 = ssub.s32 %s100, 1
    %102 = vst [vmem:[%s1] sm:%s101] %v99

// kernel: basic_block_forward.1
$region0: #{basic_block_forward.1}
  #allocation0 [shape = 'u32[]', space=smem, size = 0x4, offset = 0x4, fixed_abs, tag = 'smem constant byte address 0x4 - core index']
  #allocation1 [shape = 'u32[144,128]{1,0:T(1,128)}', space=vmem, size = 0x12000, scoped, tag = 'internal scratch']
  %s0 = inlined_call_operand.vmem [shape: f32[32,128], index: 0, kind: input, shape index: {}]
  %s1 = inlined_call_operand.vmem [shape: bf16[128,384], index: 1, kind: input, shape index: {}]
  %s2 = inlined_call_operand.vmem [shape: f32[1,128], index: 2, kind: input, shape index: {}]
  %s3 = inlined_call_operand.vmem [shape: f32[1,128], index: 3, kind: input, shape index: {}]
  %s4 = inlined_call_operand.vmem [shape: bf16[128,384], index: 4, kind: input, shape index: {}]
  %s5 = inlined_call_operand.vmem [shape: f32[1,128], index: 5, kind: input, shape index: {}]
  %s6 = inlined_call_operand.vmem [shape: f32[1,128], index: 6, kind: input, shape index: {}]
  %s7 = inlined_call_operand.vmem [shape: f32[32,128], index: 7, kind: output, shape index: {}]
  %s8 = sld [smem:[#allocation0]]
  $region61: #{basic_block_forward.1} parent=0
    _
  %s10 = ssub.s32 1, %s8
  %s11 = scalar_select 0, %s10, %s8
  loop: start=0, step=1, limit=4
  $region2: #{basic_block_forward.1} parent=0 // loop_pre_header
    _
  $region3: #{basic_block_forward.1} parent=0 // loop_header
    %s13 = sphi 0, %s17
    %p14 = scmp.ge.s32.totalorder %s13, 4
    %s23 = sphi 0, %s25
    %s26 = sphi 0, %s23
    %s27 = sphi 0, %s26
    %s43 = sphi 0, %s27
    %s47 = sphi 0, %s47
    %s49 = sphi 0, %s47
    %s50 = sphi 0, %s49
    %s64 = sphi 0, %s50
    %s68 = sphi 0, %s68
    %s70 = sphi 0, %s68
    %s71 = sphi 0, %s70
    %s85 = sphi 0, %s71
    %s89 = sphi 0, %s89
    %s91 = sphi 0, %s89
    %s92 = sphi 0, %s91
    %s106 = sphi 0, %s92
    %s110 = sphi 0, %s110
    %s112 = sphi 0, %s110
    %s113 = sphi 0, %s112
    %s127 = sphi 0, %s113
    %s131 = sphi 0, %s131
    %s133 = sphi 0, %s131
    %s134 = sphi 0, %s133
    %s148 = sphi 0, %s134
    %s152 = sphi 0, %s152
    %s154 = sphi 0, %s152
    %s155 = sphi 0, %s154
    %s169 = sphi 0, %s155
    %s175 = sphi 0, %s177
    %s178 = sphi 0, %s175
    %s179 = sphi 0, %s178
    %s195 = sphi 0, %s179
  $region4: #{basic_block_forward.1} parent=0 // loop_header_branch
    %16 = sbr.rel (%p14) target = $region8
  $region5: #{basic_block_forward.1} parent=0 // loop_body
    %s18 = ssub.s32 %s13, 1
    %s19 = ssub.s32 %s13, 2
    %s20 = sadd.s32 %s13, 1
    %s21 = ssub.s32 %s13, %s20
    %p22 = scmp.eq.s32.totalorder %s21, 0
    %s24 = sadd.s32 %s23, 1
    %s25 = scalar_select %p22, %s23, %s24
    %p28 = pneg %p22
    %p29 = scmp.eq.s32.totalorder %s13, 1
    %p30 = por %p28, %p29
    %p31 = scmp.ne.s32.totalorder %s23, %s26
    %p32 = scmp.eq.s32.totalorder %s13, 0
    %p33 = por %p31, %p32
    %p34 = scmp.ne.s32.totalorder %s23, %s26
    %p35 = scmp.eq.s32.totalorder %s18, 1
    %p36 = por %p34, %p35
    %p37 = scmp.ne.s32.totalorder %s26, %s27
    %p38 = scmp.eq.s32.totalorder %s18, 0
    %p39 = por %p37, %p38
    %p40 = scmp.ne.s32.totalorder %s26, %s27
    %p41 = scmp.eq.s32.totalorder %s19, 1
    %p42 = por %p40, %p41
    %p44 = scmp.ne.s32.totalorder %s27, %s43
    %p45 = scmp.eq.s32.totalorder %s19, 0
    %p46 = por %p44, %p45
    %s48 = sadd.s32 %s47, 1
    %p51 = scmp.eq.s32.totalorder %s13, 1
    %p52 = scmp.ne.s32.totalorder %s47, %s49
    %p53 = scmp.eq.s32.totalorder %s13, 0
    %p54 = por %p52, %p53
    %p55 = scmp.ne.s32.totalorder %s47, %s49
    %p56 = scmp.eq.s32.totalorder %s18, 1
    %p57 = por %p55, %p56
    %p58 = scmp.ne.s32.totalorder %s49, %s50
    %p59 = scmp.eq.s32.totalorder %s18, 0
    %p60 = por %p58, %p59
    %p61 = scmp.ne.s32.totalorder %s49, %s50
    %p62 = scmp.eq.s32.totalorder %s19, 1
    %p63 = por %p61, %p62
    %p65 = scmp.ne.s32.totalorder %s50, %s64
    %p66 = scmp.eq.s32.totalorder %s19, 0
    %p67 = por %p65, %p66
    %s69 = sadd.s32 %s68, 1
    %p72 = scmp.eq.s32.totalorder %s13, 1
    %p73 = scmp.ne.s32.totalorder %s68, %s70
    %p74 = scmp.eq.s32.totalorder %s13, 0
    %p75 = por %p73, %p74
    %p76 = scmp.ne.s32.totalorder %s68, %s70
    %p77 = scmp.eq.s32.totalorder %s18, 1
    %p78 = por %p76, %p77
    %p79 = scmp.ne.s32.totalorder %s70, %s71
    %p80 = scmp.eq.s32.totalorder %s18, 0
    %p81 = por %p79, %p80
    %p82 = scmp.ne.s32.totalorder %s70, %s71
    %p83 = scmp.eq.s32.totalorder %s19, 1
    %p84 = por %p82, %p83
    %p86 = scmp.ne.s32.totalorder %s71, %s85
    %p87 = scmp.eq.s32.totalorder %s19, 0
    %p88 = por %p86, %p87
    %s90 = sadd.s32 %s89, 1
    %p93 = scmp.eq.s32.totalorder %s13, 1
    %p94 = scmp.ne.s32.totalorder %s89, %s91
    %p95 = scmp.eq.s32.totalorder %s13, 0
    %p96 = por %p94, %p95
    %p97 = scmp.ne.s32.totalorder %s89, %s91
    %p98 = scmp.eq.s32.totalorder %s18, 1
    %p99 = por %p97, %p98
    %p100 = scmp.ne.s32.totalorder %s91, %s92
    %p101 = scmp.eq.s32.totalorder %s18, 0
    %p102 = por %p100, %p101
    %p103 = scmp.ne.s32.totalorder %s91, %s92
    %p104 = scmp.eq.s32.totalorder %s19, 1
    %p105 = por %p103, %p104
    %p107 = scmp.ne.s32.totalorder %s92, %s106
    %p108 = scmp.eq.s32.totalorder %s19, 0
    %p109 = por %p107, %p108
    %s111 = sadd.s32 %s110, 1
    %p114 = scmp.eq.s32.totalorder %s13, 1
    %p115 = scmp.ne.s32.totalorder %s110, %s112
    %p116 = scmp.eq.s32.totalorder %s13, 0
    %p117 = por %p115, %p116
    %p118 = scmp.ne.s32.totalorder %s110, %s112
    %p119 = scmp.eq.s32.totalorder %s18, 1
    %p120 = por %p118, %p119
    %p121 = scmp.ne.s32.totalorder %s112, %s113
    %p122 = scmp.eq.s32.totalorder %s18, 0
    %p123 = por %p121, %p122
    %p124 = scmp.ne.s32.totalorder %s112, %s113
    %p125 = scmp.eq.s32.totalorder %s19, 1
    %p126 = por %p124, %p125
    %p128 = scmp.ne.s32.totalorder %s113, %s127
    %p129 = scmp.eq.s32.totalorder %s19, 0
    %p130 = por %p128, %p129
    %s132 = sadd.s32 %s131, 1
    %p135 = scmp.eq.s32.totalorder %s13, 1
    %p136 = scmp.ne.s32.totalorder %s131, %s133
    %p137 = scmp.eq.s32.totalorder %s13, 0
    %p138 = por %p136, %p137
    %p139 = scmp.ne.s32.totalorder %s131, %s133
    %p140 = scmp.eq.s32.totalorder %s18, 1
    %p141 = por %p139, %p140
    %p142 = scmp.ne.s32.totalorder %s133, %s134
    %p143 = scmp.eq.s32.totalorder %s18, 0
    %p144 = por %p142, %p143
    %p145 = scmp.ne.s32.totalorder %s133, %s134
    %p146 = scmp.eq.s32.totalorder %s19, 1
    %p147 = por %p145, %p146
    %p149 = scmp.ne.s32.totalorder %s134, %s148
    %p150 = scmp.eq.s32.totalorder %s19, 0
    %p151 = por %p149, %p150
    %s153 = sadd.s32 %s152, 1
    %p156 = scmp.eq.s32.totalorder %s13, 1
    %p157 = scmp.ne.s32.totalorder %s152, %s154
    %p158 = scmp.eq.s32.totalorder %s13, 0
    %p159 = por %p157, %p158
    %p160 = scmp.ne.s32.totalorder %s152, %s154
    %p161 = scmp.eq.s32.totalorder %s18, 1
    %p162 = por %p160, %p161
    %p163 = scmp.ne.s32.totalorder %s154, %s155
    %p164 = scmp.eq.s32.totalorder %s18, 0
    %p165 = por %p163, %p164
    %p166 = scmp.ne.s32.totalorder %s154, %s155
    %p167 = scmp.eq.s32.totalorder %s19, 1
    %p168 = por %p166, %p167
    %p170 = scmp.ne.s32.totalorder %s155, %s169
    %p171 = scmp.eq.s32.totalorder %s19, 0
    %p172 = por %p170, %p171
    %s173 = ssub.s32 %s13, %s20
    %p174 = scmp.eq.s32.totalorder %s173, 0
    %s176 = sadd.s32 %s175, 1
    %s177 = scalar_select %p174, %s175, %s176
    %p180 = pneg %p174
    %p181 = scmp.eq.s32.totalorder %s13, 1
    %p182 = por %p180, %p181
    %p183 = scmp.ne.s32.totalorder %s175, %s178
    %p184 = scmp.eq.s32.totalorder %s13, 0
    %p185 = por %p183, %p184
    %p186 = scmp.ne.s32.totalorder %s175, %s178
    %p187 = scmp.eq.s32.totalorder %s18, 1
    %p188 = por %p186, %p187
    %p189 = scmp.ne.s32.totalorder %s178, %s179
    %p190 = scmp.eq.s32.totalorder %s18, 0
    %p191 = por %p189, %p190
    %p192 = scmp.ne.s32.totalorder %s178, %s179
    %p193 = scmp.eq.s32.totalorder %s19, 1
    %p194 = por %p192, %p193
    %p196 = scmp.ne.s32.totalorder %s179, %s195
    %p197 = scmp.eq.s32.totalorder %s19, 0
    %p198 = por %p196, %p197
    %p199 = scmp.le.s32.totalorder 1, %s13
    %p200 = scmp.lt.s32.totalorder %s13, 3
    %p201 = pnand %p199, %p200
    %p202 = pneg %p201
    // Predicated region
    $region9: #{basic_block_forward.1} parent=5 // pred_check
      _
    $region10: #{basic_block_forward.1} parent=5 // pred_check_branch
      %204 = sbr.rel (%p201) target = $region12
    $region11: #{basic_block_forward.1} parent=5 // pred_region
      %s205 = ssub.s32 %s13, 1
      // Predicated region
      $region13: #{basic_block_forward.1} parent=11 // pred_check
        %p206 = pneg %p60
      $region14: #{basic_block_forward.1} parent=11 // pred_check_branch
        %208 = sbr.rel (%p206) target = $region16
      $region15: #{basic_block_forward.1} parent=11 // pred_region
        _
      $region16: #{basic_block_forward.1} parent=11 // pred_fallthru
        _
      // Predicated region
      $region17: #{basic_block_forward.1} parent=11 // pred_check
        %p209 = pneg %p81
      $region18: #{basic_block_forward.1} parent=11 // pred_check_branch
        %211 = sbr.rel (%p209) target = $region20
      $region19: #{basic_block_forward.1} parent=11 // pred_region
        _
      $region20: #{basic_block_forward.1} parent=11 // pred_fallthru
        _
      // Predicated region
      $region21: #{basic_block_forward.1} parent=11 // pred_check
        %p212 = pneg %p102
      $region22: #{basic_block_forward.1} parent=11 // pred_check_branch
        %214 = sbr.rel (%p212) target = $region24
      $region23: #{basic_block_forward.1} parent=11 // pred_region
        _
      $region24: #{basic_block_forward.1} parent=11 // pred_fallthru
        _
      // Predicated region
      $region25: #{basic_block_forward.1} parent=11 // pred_check
        %p215 = pneg %p123
      $region26: #{basic_block_forward.1} parent=11 // pred_check_branch
        %217 = sbr.rel (%p215) target = $region28
      $region27: #{basic_block_forward.1} parent=11 // pred_region
        _
      $region28: #{basic_block_forward.1} parent=11 // pred_fallthru
        _
      // Predicated region
      $region29: #{basic_block_forward.1} parent=11 // pred_check
        %p218 = pneg %p144
      $region30: #{basic_block_forward.1} parent=11 // pred_check_branch
        %220 = sbr.rel (%p218) target = $region32
      $region31: #{basic_block_forward.1} parent=11 // pred_region
        _
      $region32: #{basic_block_forward.1} parent=11 // pred_fallthru
        _
      // Predicated region
      $region33: #{basic_block_forward.1} parent=11 // pred_check
        %p221 = pneg %p165
      $region34: #{basic_block_forward.1} parent=11 // pred_check_branch
        %223 = sbr.rel (%p221) target = $region36
      $region35: #{basic_block_forward.1} parent=11 // pred_region
        _
      $region36: #{basic_block_forward.1} parent=11 // pred_fallthru
        _
    $region12: #{basic_block_forward.1} parent=5 // pred_fallthru
      _
    %p224 = scmp.lt.s32.totalorder %s13, 2
    // Predicated region
    $region37: #{basic_block_forward.1} parent=5 // pred_check
      %p225 = pneg %p224
    $region38: #{basic_block_forward.1} parent=5 // pred_check_branch
      %227 = sbr.rel (%p225) target = $region40
    $region39: #{basic_block_forward.1} parent=5 // pred_region
      // Predicated region
      $region41: #{basic_block_forward.1} parent=39 // pred_check
        %p228 = pneg %p33
      $region42: #{basic_block_forward.1} parent=39 // pred_check_branch
        %230 = sbr.rel (%p228) target = $region44
      $region43: #{basic_block_forward.1} parent=39 // pred_region
        %s231 = smul.u32 2, %s13
        %p232 = scmp.lt.s32.totalorder %s231, 3
        %s233 = scalar_select %p232, %s231, 3
        %s234 = smul.addr %s233, 8
        %s235 = scalar_lea.vmem %s0, %s234
        %s236 = smul.u32 2, %s13
      $region44: #{basic_block_forward.1} parent=39 // pred_fallthru
        _
    $region40: #{basic_block_forward.1} parent=5 // pred_fallthru
      _
    %p237 = scmp.le.s32.totalorder 1, %s13
    %p238 = scmp.lt.s32.totalorder %s13, 3
    %p239 = pnand %p237, %p238
    %p240 = pneg %p239
    // Predicated region
    $region45: #{basic_block_forward.1} parent=5 // pred_check
      _
    $region46: #{basic_block_forward.1} parent=5 // pred_check_branch
      %242 = sbr.rel (%p239) target = $region48
    $region47: #{basic_block_forward.1} parent=5 // pred_region
      %s243 = ssub.s32 %s13, 1
      %s244 = smul.u32 2, %s18
      %p245 = scmp.lt.s32.totalorder %s244, 3
      %s246 = scalar_select %p245, %s244, 3
      %s247 = smul.addr %s246, 8
      %s248 = scalar_lea.vmem %s0, %s247
      %p249 = pneg %p39
      %p250 = pneg %p36
      %p251 = pneg %p60
      %p252 = pneg %p57
      %p253 = pneg %p81
      %p254 = pneg %p78
      %p255 = pneg %p102
      %p256 = pneg %p99
      %p257 = pneg %p123
      %p258 = pneg %p120
      %p259 = pneg %p144
      %p260 = pneg %p141
      %p261 = pneg %p165
      %p262 = pneg %p162
      %p263 = pneg %p191
      %p264 = pneg %p188
      %s265 = smul.u32 2, %s18
      %p266 = scmp.lt.s32.totalorder %s265, 3
      %s267 = scalar_select %p266, %s265, 3
      %s268 = smul.addr %s267, 8
      %s269 = scalar_lea.vmem %s7, %s268
      %s270 = smul.u32 2, %s18
      %p271 = scmp.lt.s32.totalorder %s270, 3
      %s272 = scalar_select %p271, %s270, 3
      %s273 = smul.addr %s272, 8
      %s274 = scalar_lea.vmem %s0, %s273
      %s275 = smul.u32 2, %s18
      %s276 = smul.u32 2, %s18
      %p277 = scmp.lt.s32.totalorder %s276, 3
      %s278 = scalar_select %p277, %s276, 3
      %s279 = smul.addr %s278, 8
      %s280 = scalar_lea.vmem %s7, %s279
      %s281 = smul.u32 2, %s18
      %v283 = vld [vmem:[%s274] sm:$0xff]
      %v284 = vld [vmem:[%s274 + $0x8] sm:$0xff]
      %v285 = vlaneseq
      %v286 = vshrl.u32 %v285, 7
      %v287 = vadd.s32 %v286, 8
      %v288 = vlaneseq
      %v289 = vand.u32 %v288, 127
      %v290 = vsub.s32 %v286, 1
      %v291 = vsub.s32 %v287, 1
      %vm292 = vcmp.eq.s32.totalorder %v289, %v290
      %vm293 = vcmp.eq.s32.totalorder %v289, %v291
      %vm294 = vcmp.lt.s32.totalorder %v286, 0
      %v295 = vsub.s32 0, %v286
      %v296 = vsel %vm294, %v295, %v286
      %v297 = vshrl.u32 %v296, 4
      %v298 = vand.u32 %v296, 15
      %v299 = vsub.s32 0, %v298
      %v300 = vsel %vm294, %v299, %v298
      %vm301 = vcmp.lt.s32.totalorder %v287, 0
      %v302 = vsub.s32 0, %v287
      %v303 = vsel %vm301, %v302, %v287
      %v304 = vshrl.u32 %v303, 4
      %v305 = vand.u32 %v303, 15
      %v306 = vsub.s32 0, %v305
      %v307 = vsel %vm301, %v306, %v305
      %vm308 = vcmp.ne.s32.totalorder %v300, 0
      %vm309 = vcmp.ne.s32.totalorder %v307, 0
      %vm310 = vcmp.lt.s32.totalorder %v300, 0
      %vm311 = vcmp.lt.s32.totalorder %v307, 0
      %vm312 = vmand %vm310, %vm308
      %vm313 = vmand %vm311, %vm309
      %v314 = vadd.s32 %v300, 16
      %v315 = vadd.s32 %v307, 16
      %v316 = vsel %vm312, %v314, %v300
      %v317 = vsel %vm313, %v315, %v307
      %vm318 = vcmp.ne.s32.totalorder %v316, 0
      %vm319 = vcmp.ne.s32.totalorder %v317, 0
      %vm320 = vmand %vm292, %vm318
      %vm321 = vmand %vm293, %vm319
      %v322 = vsel %vm320, 1.0, 0.0
      %v323 = vsel %vm321, 1.0, 0.0
      %v324 = vadd.s32 %v286, 1
      %v325 = vadd.s32 %v287, 1
      %vm326 = vcmp.eq.s32.totalorder %v289, %v324
      %vm327 = vcmp.eq.s32.totalorder %v289, %v325
      %vm328 = vcmp.ne.s32.totalorder %v316, 15
      %vm329 = vcmp.ne.s32.totalorder %v317, 15
      %vm330 = vmand %vm326, %vm328
      %vm331 = vmand %vm327, %vm329
      %v332 = vsel %vm330, 1.0, 0.0
      %v333 = vsel %vm331, 1.0, 0.0
      %v334 = vpack.c.bf16 %v284, %v283
      %v335 = vld [vmem:[%s1] sm:$0xff]
      %v336 = vld [vmem:[%s1 + $0x8] sm:$0xf]
      %v337 = vld [vmem:[%s1 + $0xc] sm:$0xff]
      %v338 = vld [vmem:[%s1 + $0x14] sm:$0xf]
      %v339 = vld [vmem:[%s1 + $0x18] sm:$0xff]
      %v340 = vld [vmem:[%s1 + $0x20] sm:$0xf]
      %v341 = vld [vmem:[%s1 + $0x24] sm:$0xff]
      %v342 = vld [vmem:[%s1 + $0x2c] sm:$0xf]
      %v343 = vld [vmem:[%s1 + $0x30] sm:$0xff]
      %v344 = vld [vmem:[%s1 + $0x38] sm:$0xf]
      %v345 = vld [vmem:[%s1 + $0x3c] sm:$0xff]
      %v346 = vld [vmem:[%s1 + $0x44] sm:$0xf]
      %v347 = vld [vmem:[%s1 + $0x48] sm:$0xff]
      %v348 = vld [vmem:[%s1 + $0x50] sm:$0xf]
      %v349 = vld [vmem:[%s1 + $0x54] sm:$0xff]
      %v350 = vld [vmem:[%s1 + $0x5c] sm:$0xf]
      %v351 = vld [vmem:[%s1 + $0x60] sm:$0xff]
      %v352 = vld [vmem:[%s1 + $0x68] sm:$0xf]
      %v353 = vld [vmem:[%s1 + $0x6c] sm:$0xff]
      %v354 = vld [vmem:[%s1 + $0x74] sm:$0xf]
      %v355 = vld [vmem:[%s1 + $0x78] sm:$0xff]
      %v356 = vld [vmem:[%s1 + $0x80] sm:$0xf]
      %v357 = vld [vmem:[%s1 + $0x84] sm:$0xff]
      %v358 = vld [vmem:[%s1 + $0x8c] sm:$0xf]
      %v359 = vld [vmem:[%s1 + $0x90] sm:$0xff]
      %v360 = vld [vmem:[%s1 + $0x98] sm:$0xf]
      %v361 = vld [vmem:[%s1 + $0x9c] sm:$0xff]
      %v362 = vld [vmem:[%s1 + $0xa4] sm:$0xf]
      %v363 = vld [vmem:[%s1 + $0xa8] sm:$0xff]
      %v364 = vld [vmem:[%s1 + $0xb0] sm:$0xf]
      %v365 = vld [vmem:[%s1 + $0xb4] sm:$0xff]
      %v366 = vld [vmem:[%s1 + $0xbc] sm:$0xf]
      %v399 = vunpack.c.l.b16 %v335
      %v400 = vunpack.c.h.b16 %v335
      %v401 = vunpack.c.l.b16 %v336
      %v402 = vunpack.c.l.b16 %v337
      %v403 = vunpack.c.h.b16 %v337
      %v404 = vunpack.c.l.b16 %v338
      %v405 = vunpack.c.l.b16 %v339
      %v406 = vunpack.c.h.b16 %v339
      %v407 = vunpack.c.l.b16 %v340
      %v408 = vunpack.c.l.b16 %v341
      %v409 = vunpack.c.h.b16 %v341
      %v410 = vunpack.c.l.b16 %v342
      %v411 = vunpack.c.l.b16 %v343
      %v412 = vunpack.c.h.b16 %v343
      %v413 = vunpack.c.l.b16 %v344
      %v414 = vunpack.c.l.b16 %v345
      %v415 = vunpack.c.h.b16 %v345
      %v416 = vunpack.c.l.b16 %v346
      %v417 = vunpack.c.l.b16 %v347
      %v418 = vunpack.c.h.b16 %v347
      %v419 = vunpack.c.l.b16 %v348
      %v420 = vunpack.c.l.b16 %v349
      %v421 = vunpack.c.h.b16 %v349
      %v422 = vunpack.c.l.b16 %v350
      %v423 = vunpack.c.l.b16 %v351
      %v424 = vunpack.c.h.b16 %v351
      %v425 = vunpack.c.l.b16 %v352
      %v426 = vunpack.c.l.b16 %v353
      %v427 = vunpack.c.h.b16 %v353
      %v428 = vunpack.c.l.b16 %v354
      %v429 = vunpack.c.l.b16 %v355
      %v430 = vunpack.c.h.b16 %v355
      %v431 = vunpack.c.l.b16 %v356
      %v432 = vunpack.c.l.b16 %v357
      %v433 = vunpack.c.h.b16 %v357
      %v434 = vunpack.c.l.b16 %v358
      %v435 = vunpack.c.l.b16 %v359
      %v436 = vunpack.c.h.b16 %v359
      %v437 = vunpack.c.l.b16 %v360
      %v438 = vunpack.c.l.b16 %v361
      %v439 = vunpack.c.h.b16 %v361
      %v440 = vunpack.c.l.b16 %v362
      %v441 = vunpack.c.l.b16 %v363
      %v442 = vunpack.c.h.b16 %v363
      %v443 = vunpack.c.l.b16 %v364
      %v444 = vunpack.c.l.b16 %v365
      %v445 = vunpack.c.h.b16 %v365
      %v446 = vunpack.c.l.b16 %v366
      %v447 = vpack.c.b16 %v402, %v399
      %v448 = vpack.c.b16 %v403, %v400
      %v449 = vpack.c.b16 %v404, %v401
      %v450 = vpack.c.b16 %v408, %v405
      %v451 = vpack.c.b16 %v409, %v406
      %v452 = vpack.c.b16 %v410, %v407
      %v453 = vpack.c.b16 %v414, %v411
      %v454 = vpack.c.b16 %v415, %v412
      %v455 = vpack.c.b16 %v416, %v413
      %v456 = vpack.c.b16 %v420, %v417
      %v457 = vpack.c.b16 %v421, %v418
      %v458 = vpack.c.b16 %v422, %v419
      %v459 = vpack.c.b16 %v426, %v423
      %v460 = vpack.c.b16 %v427, %v424
      %v461 = vpack.c.b16 %v428, %v425
      %v462 = vpack.c.b16 %v432, %v429
      %v463 = vpack.c.b16 %v433, %v430
      %v464 = vpack.c.b16 %v434, %v431
      %v465 = vpack.c.b16 %v438, %v435
      %v466 = vpack.c.b16 %v439, %v436
      %v467 = vpack.c.b16 %v440, %v437
      %v468 = vpack.c.b16 %v444, %v441
      %v469 = vpack.c.b16 %v445, %v442
      %v470 = vpack.c.b16 %v446, %v443
      %495 = vmatprep.subr.bf16.mxu0 %v469
      %496 = vmatpush1.bf16.msra.mxu0 %v468
      %497 = vmatprep.subr.bf16.mxu0 %v466
      %498 = vmatpush1.bf16.msra.mxu0 %v465
      %499 = vmatprep.subr.bf16.mxu0 %v463
      %500 = vmatpush1.bf16.msra.mxu0 %v462
      %501 = vmatprep.subr.bf16.mxu0 %v460
      %502 = vmatpush1.bf16.msra.mxu0 %v459
      %503 = vmatprep.subr.bf16.mxu0 %v457
      %504 = vmatpush1.bf16.msra.mxu0 %v456
      %505 = vmatprep.subr.bf16.mxu0 %v454
      %506 = vmatpush1.bf16.msra.mxu0 %v453
      %507 = vmatprep.subr.bf16.mxu0 %v451
      %508 = vmatpush1.bf16.msra.mxu0 %v450
      %509 = vmatprep.subr.bf16.mxu0 %v448
      %510 = vmatpush1.bf16.msra.mxu0 %v447
      %511 = vmatprep.subr.bf16.mxu0 0
      %512 = vmatpush2.bf16.msra.mxu0 0
      %513 = vmatprep.subr.bf16.mxu0 0
      %514 = vmatpush2.bf16.msra.mxu0 0
      %515 = vmatprep.subr.bf16.mxu0 0
      %516 = vmatpush2.bf16.msra.mxu0 0
      %517 = vmatprep.subr.bf16.mxu0 0
      %518 = vmatpush2.bf16.msra.mxu0 0
      %519 = vmatprep.subr.bf16.mxu0 0
      %520 = vmatpush2.bf16.msra.mxu0 0
      %521 = vmatprep.subr.bf16.mxu0 0
      %522 = vmatpush2.bf16.msra.mxu0 0
      %523 = vmatprep.subr.bf16.mxu0 0
      %524 = vmatpush2.bf16.msra.mxu0 0
      %525 = vmatprep.subr.bf16.mxu0 0
      %526 = vmatpush2.bf16.msra.mxu0 0
      %527 = vmatprep.mubr.bf16.mxu0 0
      %528 = vmatmul.mubr.bf16.gmra.mxu0 %v334
      %v529 = vpop.f32.mrf.mxu0
      %v530 = vadd.f32 0.0, %v529
      %v531 = vpop.f32.mrf.mxu0
      %v532 = vadd.f32 0.0, %v531
      %v533 = vpop.f32.mrf.mxu0
      %v534 = vadd.f32 0.0, %v533
      %v535 = vpop.f32.mrf.mxu0
      %v536 = vadd.f32 0.0, %v535
      %537 = vdwg.mxu0
      %538 = vmatprep.subr.bf16.mxu0 0
      %539 = vmatpush1.bf16.msra.mxu0 %v470
      %540 = vmatprep.subr.bf16.mxu0 0
      %541 = vmatpush1.bf16.msra.mxu0 %v467
      %542 = vmatprep.subr.bf16.mxu0 0
      %543 = vmatpush1.bf16.msra.mxu0 %v464
      %544 = vmatprep.subr.bf16.mxu0 0
      %545 = vmatpush1.bf16.msra.mxu0 %v461
      %546 = vmatprep.subr.bf16.mxu0 0
      %547 = vmatpush1.bf16.msra.mxu0 %v458
      %548 = vmatprep.subr.bf16.mxu0 0
      %549 = vmatpush1.bf16.msra.mxu0 %v455
      %550 = vmatprep.subr.bf16.mxu0 0
      %551 = vmatpush1.bf16.msra.mxu0 %v452
      %552 = vmatprep.subr.bf16.mxu0 0
      %553 = vmatpush1.bf16.msra.mxu0 %v449
      %554 = vmatprep.subr.bf16.mxu0 0
      %555 = vmatpush2.bf16.msra.mxu0 0
      %556 = vmatprep.subr.bf16.mxu0 0
      %557 = vmatpush2.bf16.msra.mxu0 0
      %558 = vmatprep.subr.bf16.mxu0 0
      %559 = vmatpush2.bf16.msra.mxu0 0
      %560 = vmatprep.subr.bf16.mxu0 0
      %561 = vmatpush2.bf16.msra.mxu0 0
      %562 = vmatprep.subr.bf16.mxu0 0
      %563 = vmatpush2.bf16.msra.mxu0 0
      %564 = vmatprep.subr.bf16.mxu0 0
      %565 = vmatpush2.bf16.msra.mxu0 0
      %566 = vmatprep.subr.bf16.mxu0 0
      %567 = vmatpush2.bf16.msra.mxu0 0
      %568 = vmatprep.subr.bf16.mxu0 0
      %569 = vmatpush2.bf16.msra.mxu0 0
      %570 = vmatprep.mubr.bf16.mxu0 0
      %571 = vmatmul.mubr.bf16.gmra.mxu0 %v334
      %v572 = vpop.f32.mrf.mxu0
      %v573 = vadd.f32 0.0, %v572
      %v574 = vpop.f32.mrf.mxu0
      %v575 = vpop.f32.mrf.mxu0
      %v576 = vadd.f32 0.0, %v575
      %v577 = vpop.f32.mrf.mxu0
      %578 = vdwg.mxu0
      %vm579 = vcmask 130048
      %v581 = vsel %vm579, %v322, 0
      %v584 = vsel %vm579, %v323, 0
      %586 = vmatprep.subr.mxu0 0.0
      %587 = vmatpush1.msra.mxu0 0.0
      %588 = vmatprep.subr.mxu0 0.0
      %589 = vmatpush1.msra.mxu0 0.0
      %590 = vmatprep.subr.mxu0 0.0
      %591 = vmatpush1.msra.mxu0 0.0
      %592 = vmatprep.subr.mxu0 0.0
      %593 = vmatpush1.msra.mxu0 0.0
      %594 = vmatprep.subr.mxu0 0.0
      %595 = vmatpush1.msra.mxu0 0.0
      %596 = vmatprep.subr.mxu0 0.0
      %597 = vmatpush1.msra.mxu0 0.0
      %598 = vmatprep.subr.mxu0 0.0
      %599 = vmatpush1.msra.mxu0 0.0
      %600 = vmatprep.subr.mxu0 0.0
      %601 = vmatpush1.msra.mxu0 0.0
      %602 = vmatprep.subr.mxu0 0.0
      %603 = vmatpush1.msra.mxu0 0.0
      %604 = vmatprep.subr.mxu0 0.0
      %605 = vmatpush1.msra.mxu0 0.0
      %606 = vmatprep.subr.mxu0 0.0
      %607 = vmatpush1.msra.mxu0 0.0
      %608 = vmatprep.subr.mxu0 0.0
      %609 = vmatpush1.msra.mxu0 0.0
      %610 = vmatprep.subr.mxu0 0.0
      %611 = vmatpush1.msra.mxu0 0.0
      %612 = vmatprep.subr.mxu0 0.0
      %613 = vmatpush1.msra.mxu0 0.0
      %614 = vmatprep.subr.mxu0 0.0
      %615 = vmatpush1.msra.mxu0 %v534
      %616 = vmatprep.subr.mxu0 0.0
      %617 = vmatpush1.msra.mxu0 %v530
      %618 = vmatprep.subr.mxu0 0.0
      %619 = vmatpush2.msra.mxu0 0.0
      %620 = vmatprep.subr.mxu0 0.0
      %621 = vmatpush2.msra.mxu0 0.0
      %622 = vmatprep.subr.mxu0 0.0
      %623 = vmatpush2.msra.mxu0 0.0
      %624 = vmatprep.subr.mxu0 0.0
      %625 = vmatpush2.msra.mxu0 0.0
      %626 = vmatprep.subr.mxu0 0.0
      %627 = vmatpush2.msra.mxu0 0.0
      %628 = vmatprep.subr.mxu0 0.0
      %629 = vmatpush2.msra.mxu0 0.0
      %630 = vmatprep.subr.mxu0 0.0
      %631 = vmatpush2.msra.mxu0 0.0
      %632 = vmatprep.subr.mxu0 0.0
      %633 = vmatpush2.msra.mxu0 0.0
      %634 = vmatprep.subr.mxu0 0.0
      %635 = vmatpush2.msra.mxu0 0.0
      %636 = vmatprep.subr.mxu0 0.0
      %637 = vmatpush2.msra.mxu0 0.0
      %638 = vmatprep.subr.mxu0 0.0
      %639 = vmatpush2.msra.mxu0 0.0
      %640 = vmatprep.subr.mxu0 0.0
      %641 = vmatpush2.msra.mxu0 0.0
      %642 = vmatprep.subr.mxu0 0.0
      %643 = vmatpush2.msra.mxu0 0.0
      %644 = vmatprep.subr.mxu0 0.0
      %645 = vmatpush2.msra.mxu0 0.0
      %646 = vmatprep.subr.mxu0 0.0
      %647 = vmatpush2.msra.mxu0 0.0
      %648 = vmatprep.subr.mxu0 0.0
      %649 = vmatpush2.msra.mxu0 0.0
      %650 = vmatprep.mubr.f32.mxu0 0.0
      %651 = vmatmul.mubr.f32.gmra.mxu0 %v581
      %v652 = vpop.f32.mrf.mxu0
      %v653 = vadd.f32 %v532, %v652
      %v654 = vpop.f32.mrf.mxu0
      %655 = vmatprep.mubr.f32.mxu0 0.0
      %656 = vmatmul.mubr.f32.gmra.mxu0 %v584
      %v657 = vpop.f32.mrf.mxu0
      %v658 = vadd.f32 %v536, %v657
      %v659 = vpop.f32.mrf.mxu0
      %660 = vdwg.mxu0
      %v662 = vsel %vm579, %v332, 0
      %v665 = vsel %vm579, %v333, 0
      %667 = vmatprep.subr.mxu0 0.0
      %668 = vmatpush1.msra.mxu0 0.0
      %669 = vmatprep.subr.mxu0 0.0
      %670 = vmatpush1.msra.mxu0 0.0
      %671 = vmatprep.subr.mxu0 0.0
      %672 = vmatpush1.msra.mxu0 0.0
      %673 = vmatprep.subr.mxu0 0.0
      %674 = vmatpush1.msra.mxu0 0.0
      %675 = vmatprep.subr.mxu0 0.0
      %676 = vmatpush1.msra.mxu0 0.0
      %677 = vmatprep.subr.mxu0 0.0
      %678 = vmatpush1.msra.mxu0 0.0
      %679 = vmatprep.subr.mxu0 0.0
      %680 = vmatpush1.msra.mxu0 0.0
      %681 = vmatprep.subr.mxu0 0.0
      %682 = vmatpush1.msra.mxu0 0.0
      %683 = vmatprep.subr.mxu0 0.0
      %684 = vmatpush1.msra.mxu0 0.0
      %685 = vmatprep.subr.mxu0 0.0
      %686 = vmatpush1.msra.mxu0 0.0
      %687 = vmatprep.subr.mxu0 0.0
      %688 = vmatpush1.msra.mxu0 0.0
      %689 = vmatprep.subr.mxu0 0.0
      %690 = vmatpush1.msra.mxu0 0.0
      %691 = vmatprep.subr.mxu0 0.0
      %692 = vmatpush1.msra.mxu0 0.0
      %693 = vmatprep.subr.mxu0 0.0
      %694 = vmatpush1.msra.mxu0 0.0
      %695 = vmatprep.subr.mxu0 0.0
      %696 = vmatpush1.msra.mxu0 %v576
      %697 = vmatprep.subr.mxu0 0.0
      %698 = vmatpush1.msra.mxu0 %v573
      %699 = vmatprep.subr.mxu0 0.0
      %700 = vmatpush2.msra.mxu0 0.0
      %701 = vmatprep.subr.mxu0 0.0
      %702 = vmatpush2.msra.mxu0 0.0
      %703 = vmatprep.subr.mxu0 0.0
      %704 = vmatpush2.msra.mxu0 0.0
      %705 = vmatprep.subr.mxu0 0.0
      %706 = vmatpush2.msra.mxu0 0.0
      %707 = vmatprep.subr.mxu0 0.0
      %708 = vmatpush2.msra.mxu0 0.0
      %709 = vmatprep.subr.mxu0 0.0
      %710 = vmatpush2.msra.mxu0 0.0
      %711 = vmatprep.subr.mxu0 0.0
      %712 = vmatpush2.msra.mxu0 0.0
      %713 = vmatprep.subr.mxu0 0.0
      %714 = vmatpush2.msra.mxu0 0.0
      %715 = vmatprep.subr.mxu0 0.0
      %716 = vmatpush2.msra.mxu0 0.0
      %717 = vmatprep.subr.mxu0 0.0
      %718 = vmatpush2.msra.mxu0 0.0
      %719 = vmatprep.subr.mxu0 0.0
      %720 = vmatpush2.msra.mxu0 0.0
      %721 = vmatprep.subr.mxu0 0.0
      %722 = vmatpush2.msra.mxu0 0.0
      %723 = vmatprep.subr.mxu0 0.0
      %724 = vmatpush2.msra.mxu0 0.0
      %725 = vmatprep.subr.mxu0 0.0
      %726 = vmatpush2.msra.mxu0 0.0
      %727 = vmatprep.subr.mxu0 0.0
      %728 = vmatpush2.msra.mxu0 0.0
      %729 = vmatprep.subr.mxu0 0.0
      %730 = vmatpush2.msra.mxu0 0.0
      %731 = vmatprep.mubr.f32.mxu0 0.0
      %732 = vmatmul.mubr.f32.gmra.mxu0 %v662
      %v733 = vpop.f32.mrf.mxu0
      %v734 = vadd.f32 0.0, %v733
      %v735 = vpop.f32.mrf.mxu0
      %736 = vmatprep.mubr.f32.mxu0 0.0
      %737 = vmatmul.mubr.f32.gmra.mxu0 %v665
      %v738 = vpop.f32.mrf.mxu0
      %v739 = vadd.f32 0.0, %v738
      %v740 = vpop.f32.mrf.mxu0
      %741 = vdwg.mxu0
      %v742 = vadd.f32 %v653, %v734
      %v743 = vadd.f32 %v658, %v739
      %v744 = vld [vmem:[%s2] sm:$0x1]
      %v746 = vlaneseq
      %v747 = vshrl.u32 %v746, 7
      %v748 = vsub.s32 0, %v747
      %v749 = vrot.slane %v744, %v748
      %v751 = vmul.f32 %v742, %v749
      %v752 = vmul.f32 %v743, %v749
      %v753 = vld [vmem:[%s3] sm:$0x1]
      %v755 = vlaneseq
      %v756 = vshrl.u32 %v755, 7
      %v757 = vsub.s32 0, %v756
      %v758 = vrot.slane %v753, %v757
      %v760 = vadd.f32 %v751, %v758
      %v761 = vadd.f32 %v752, %v758
      %v762 = vmax.f32 %v760, 0.0
      %v763 = vmax.f32 %v761, 0.0
      %v764 = vpack.c.bf16 %v763, %v762
      %v765 = vld [vmem:[%s4] sm:$0xff]
      %v766 = vld [vmem:[%s4 + $0x8] sm:$0xf]
      %v767 = vld [vmem:[%s4 + $0xc] sm:$0xff]
      %v768 = vld [vmem:[%s4 + $0x14] sm:$0xf]
      %v769 = vld [vmem:[%s4 + $0x18] sm:$0xff]
      %v770 = vld [vmem:[%s4 + $0x20] sm:$0xf]
      %v771 = vld [vmem:[%s4 + $0x24] sm:$0xff]
      %v772 = vld [vmem:[%s4 + $0x2c] sm:$0xf]
      %v773 = vld [vmem:[%s4 + $0x30] sm:$0xff]
      %v774 = vld [vmem:[%s4 + $0x38] sm:$0xf]
      %v775 = vld [vmem:[%s4 + $0x3c] sm:$0xff]
      %v776 = vld [vmem:[%s4 + $0x44] sm:$0xf]
      %v777 = vld [vmem:[%s4 + $0x48] sm:$0xff]
      %v778 = vld [vmem:[%s4 + $0x50] sm:$0xf]
      %v779 = vld [vmem:[%s4 + $0x54] sm:$0xff]
      %v780 = vld [vmem:[%s4 + $0x5c] sm:$0xf]
      %v781 = vld [vmem:[%s4 + $0x60] sm:$0xff]
      %v782 = vld [vmem:[%s4 + $0x68] sm:$0xf]
      %v783 = vld [vmem:[%s4 + $0x6c] sm:$0xff]
      %v784 = vld [vmem:[%s4 + $0x74] sm:$0xf]
      %v785 = vld [vmem:[%s4 + $0x78] sm:$0xff]
      %v786 = vld [vmem:[%s4 + $0x80] sm:$0xf]
      %v787 = vld [vmem:[%s4 + $0x84] sm:$0xff]
      %v788 = vld [vmem:[%s4 + $0x8c] sm:$0xf]
      %v789 = vld [vmem:[%s4 + $0x90] sm:$0xff]
      %v790 = vld [vmem:[%s4 + $0x98] sm:$0xf]
      %v791 = vld [vmem:[%s4 + $0x9c] sm:$0xff]
      %v792 = vld [vmem:[%s4 + $0xa4] sm:$0xf]
      %v793 = vld [vmem:[%s4 + $0xa8] sm:$0xff]
      %v794 = vld [vmem:[%s4 + $0xb0] sm:$0xf]
      %v795 = vld [vmem:[%s4 + $0xb4] sm:$0xff]
      %v796 = vld [vmem:[%s4 + $0xbc] sm:$0xf]
      %v829 = vunpack.c.l.b16 %v765
      %v830 = vunpack.c.h.b16 %v765
      %v831 = vunpack.c.l.b16 %v766
      %v832 = vunpack.c.l.b16 %v767
      %v833 = vunpack.c.h.b16 %v767
      %v834 = vunpack.c.l.b16 %v768
      %v835 = vunpack.c.l.b16 %v769
      %v836 = vunpack.c.h.b16 %v769
      %v837 = vunpack.c.l.b16 %v770
      %v838 = vunpack.c.l.b16 %v771
      %v839 = vunpack.c.h.b16 %v771
      %v840 = vunpack.c.l.b16 %v772
      %v841 = vunpack.c.l.b16 %v773
      %v842 = vunpack.c.h.b16 %v773
      %v843 = vunpack.c.l.b16 %v774
      %v844 = vunpack.c.l.b16 %v775
      %v845 = vunpack.c.h.b16 %v775
      %v846 = vunpack.c.l.b16 %v776
      %v847 = vunpack.c.l.b16 %v777
      %v848 = vunpack.c.h.b16 %v777
      %v849 = vunpack.c.l.b16 %v778
      %v850 = vunpack.c.l.b16 %v779
      %v851 = vunpack.c.h.b16 %v779
      %v852 = vunpack.c.l.b16 %v780
      %v853 = vunpack.c.l.b16 %v781
      %v854 = vunpack.c.h.b16 %v781
      %v855 = vunpack.c.l.b16 %v782
      %v856 = vunpack.c.l.b16 %v783
      %v857 = vunpack.c.h.b16 %v783
      %v858 = vunpack.c.l.b16 %v784
      %v859 = vunpack.c.l.b16 %v785
      %v860 = vunpack.c.h.b16 %v785
      %v861 = vunpack.c.l.b16 %v786
      %v862 = vunpack.c.l.b16 %v787
      %v863 = vunpack.c.h.b16 %v787
      %v864 = vunpack.c.l.b16 %v788
      %v865 = vunpack.c.l.b16 %v789
      %v866 = vunpack.c.h.b16 %v789
      %v867 = vunpack.c.l.b16 %v790
      %v868 = vunpack.c.l.b16 %v791
      %v869 = vunpack.c.h.b16 %v791
      %v870 = vunpack.c.l.b16 %v792
      %v871 = vunpack.c.l.b16 %v793
      %v872 = vunpack.c.h.b16 %v793
      %v873 = vunpack.c.l.b16 %v794
      %v874 = vunpack.c.l.b16 %v795
      %v875 = vunpack.c.h.b16 %v795
      %v876 = vunpack.c.l.b16 %v796
      %v877 = vpack.c.b16 %v832, %v829
      %v878 = vpack.c.b16 %v833, %v830
      %v879 = vpack.c.b16 %v834, %v831
      %v880 = vpack.c.b16 %v838, %v835
      %v881 = vpack.c.b16 %v839, %v836
      %v882 = vpack.c.b16 %v840, %v837
      %v883 = vpack.c.b16 %v844, %v841
      %v884 = vpack.c.b16 %v845, %v842
      %v885 = vpack.c.b16 %v846, %v843
      %v886 = vpack.c.b16 %v850, %v847
      %v887 = vpack.c.b16 %v851, %v848
      %v888 = vpack.c.b16 %v852, %v849
      %v889 = vpack.c.b16 %v856, %v853
      %v890 = vpack.c.b16 %v857, %v854
      %v891 = vpack.c.b16 %v858, %v855
      %v892 = vpack.c.b16 %v862, %v859
      %v893 = vpack.c.b16 %v863, %v860
      %v894 = vpack.c.b16 %v864, %v861
      %v895 = vpack.c.b16 %v868, %v865
      %v896 = vpack.c.b16 %v869, %v866
      %v897 = vpack.c.b16 %v870, %v867
      %v898 = vpack.c.b16 %v874, %v871
      %v899 = vpack.c.b16 %v875, %v872
      %v900 = vpack.c.b16 %v876, %v873
      %925 = vmatprep.subr.bf16.mxu0 %v899
      %926 = vmatpush1.bf16.msra.mxu0 %v898
      %927 = vmatprep.subr.bf16.mxu0 %v896
      %928 = vmatpush1.bf16.msra.mxu0 %v895
      %929 = vmatprep.subr.bf16.mxu0 %v893
      %930 = vmatpush1.bf16.msra.mxu0 %v892
      %931 = vmatprep.subr.bf16.mxu0 %v890
      %932 = vmatpush1.bf16.msra.mxu0 %v889
      %933 = vmatprep.subr.bf16.mxu0 %v887
      %934 = vmatpush1.bf16.msra.mxu0 %v886
      %935 = vmatprep.subr.bf16.mxu0 %v884
      %936 = vmatpush1.bf16.msra.mxu0 %v883
      %937 = vmatprep.subr.bf16.mxu0 %v881
      %938 = vmatpush1.bf16.msra.mxu0 %v880
      %939 = vmatprep.subr.bf16.mxu0 %v878
      %940 = vmatpush1.bf16.msra.mxu0 %v877
      %941 = vmatprep.subr.bf16.mxu0 0
      %942 = vmatpush2.bf16.msra.mxu0 0
      %943 = vmatprep.subr.bf16.mxu0 0
      %944 = vmatpush2.bf16.msra.mxu0 0
      %945 = vmatprep.subr.bf16.mxu0 0
      %946 = vmatpush2.bf16.msra.mxu0 0
      %947 = vmatprep.subr.bf16.mxu0 0
      %948 = vmatpush2.bf16.msra.mxu0 0
      %949 = vmatprep.subr.bf16.mxu0 0
      %950 = vmatpush2.bf16.msra.mxu0 0
      %951 = vmatprep.subr.bf16.mxu0 0
      %952 = vmatpush2.bf16.msra.mxu0 0
      %953 = vmatprep.subr.bf16.mxu0 0
      %954 = vmatpush2.bf16.msra.mxu0 0
      %955 = vmatprep.subr.bf16.mxu0 0
      %956 = vmatpush2.bf16.msra.mxu0 0
      %957 = vmatprep.mubr.bf16.mxu0 0
      %958 = vmatmul.mubr.bf16.gmra.mxu0 %v764
      %v959 = vpop.f32.mrf.mxu0
      %v960 = vadd.f32 0.0, %v959
      %v961 = vpop.f32.mrf.mxu0
      %v962 = vadd.f32 0.0, %v961
      %v963 = vpop.f32.mrf.mxu0
      %v964 = vadd.f32 0.0, %v963
      %v965 = vpop.f32.mrf.mxu0
      %v966 = vadd.f32 0.0, %v965
      %967 = vdwg.mxu0
      %968 = vmatprep.subr.bf16.mxu0 0
      %969 = vmatpush1.bf16.msra.mxu0 %v900
      %970 = vmatprep.subr.bf16.mxu0 0
      %971 = vmatpush1.bf16.msra.mxu0 %v897
      %972 = vmatprep.subr.bf16.mxu0 0
      %973 = vmatpush1.bf16.msra.mxu0 %v894
      %974 = vmatprep.subr.bf16.mxu0 0
      %975 = vmatpush1.bf16.msra.mxu0 %v891
      %976 = vmatprep.subr.bf16.mxu0 0
      %977 = vmatpush1.bf16.msra.mxu0 %v888
      %978 = vmatprep.subr.bf16.mxu0 0
      %979 = vmatpush1.bf16.msra.mxu0 %v885
      %980 = vmatprep.subr.bf16.mxu0 0
      %981 = vmatpush1.bf16.msra.mxu0 %v882
      %982 = vmatprep.subr.bf16.mxu0 0
      %983 = vmatpush1.bf16.msra.mxu0 %v879
      %984 = vmatprep.subr.bf16.mxu0 0
      %985 = vmatpush2.bf16.msra.mxu0 0
      %986 = vmatprep.subr.bf16.mxu0 0
      %987 = vmatpush2.bf16.msra.mxu0 0
      %988 = vmatprep.subr.bf16.mxu0 0
      %989 = vmatpush2.bf16.msra.mxu0 0
      %990 = vmatprep.subr.bf16.mxu0 0
      %991 = vmatpush2.bf16.msra.mxu0 0
      %992 = vmatprep.subr.bf16.mxu0 0
      %993 = vmatpush2.bf16.msra.mxu0 0
      %994 = vmatprep.subr.bf16.mxu0 0
      %995 = vmatpush2.bf16.msra.mxu0 0
      %996 = vmatprep.subr.bf16.mxu0 0
      %997 = vmatpush2.bf16.msra.mxu0 0
      %998 = vmatprep.subr.bf16.mxu0 0
      %999 = vmatpush2.bf16.msra.mxu0 0
      %1000 = vmatprep.mubr.bf16.mxu0 0
      %1001 = vmatmul.mubr.bf16.gmra.mxu0 %v764
      %v1002 = vpop.f32.mrf.mxu0
      %v1003 = vadd.f32 0.0, %v1002
      %v1004 = vpop.f32.mrf.mxu0
      %v1005 = vpop.f32.mrf.mxu0
      %v1006 = vadd.f32 0.0, %v1005
      %v1007 = vpop.f32.mrf.mxu0
      %1008 = vdwg.mxu0
      %1009 = vmatprep.subr.mxu0 0.0
      %1010 = vmatpush1.msra.mxu0 0.0
      %1011 = vmatprep.subr.mxu0 0.0
      %1012 = vmatpush1.msra.mxu0 0.0
      %1013 = vmatprep.subr.mxu0 0.0
      %1014 = vmatpush1.msra.mxu0 0.0
      %1015 = vmatprep.subr.mxu0 0.0
      %1016 = vmatpush1.msra.mxu0 0.0
      %1017 = vmatprep.subr.mxu0 0.0
      %1018 = vmatpush1.msra.mxu0 0.0
      %1019 = vmatprep.subr.mxu0 0.0
      %1020 = vmatpush1.msra.mxu0 0.0
      %1021 = vmatprep.subr.mxu0 0.0
      %1022 = vmatpush1.msra.mxu0 0.0
      %1023 = vmatprep.subr.mxu0 0.0
      %1024 = vmatpush1.msra.mxu0 0.0
      %1025 = vmatprep.subr.mxu0 0.0
      %1026 = vmatpush1.msra.mxu0 0.0
      %1027 = vmatprep.subr.mxu0 0.0
      %1028 = vmatpush1.msra.mxu0 0.0
      %1029 = vmatprep.subr.mxu0 0.0
      %1030 = vmatpush1.msra.mxu0 0.0
      %1031 = vmatprep.subr.mxu0 0.0
      %1032 = vmatpush1.msra.mxu0 0.0
      %1033 = vmatprep.subr.mxu0 0.0
      %1034 = vmatpush1.msra.mxu0 0.0
      %1035 = vmatprep.subr.mxu0 0.0
      %1036 = vmatpush1.msra.mxu0 0.0
      %1037 = vmatprep.subr.mxu0 0.0
      %1038 = vmatpush1.msra.mxu0 %v964
      %1039 = vmatprep.subr.mxu0 0.0
      %1040 = vmatpush1.msra.mxu0 %v960
      %1041 = vmatprep.subr.mxu0 0.0
      %1042 = vmatpush2.msra.mxu0 0.0
      %1043 = vmatprep.subr.mxu0 0.0
      %1044 = vmatpush2.msra.mxu0 0.0
      %1045 = vmatprep.subr.mxu0 0.0
      %1046 = vmatpush2.msra.mxu0 0.0
      %1047 = vmatprep.subr.mxu0 0.0
      %1048 = vmatpush2.msra.mxu0 0.0
      %1049 = vmatprep.subr.mxu0 0.0
      %1050 = vmatpush2.msra.mxu0 0.0
      %1051 = vmatprep.subr.mxu0 0.0
      %1052 = vmatpush2.msra.mxu0 0.0
      %1053 = vmatprep.subr.mxu0 0.0
      %1054 = vmatpush2.msra.mxu0 0.0
      %1055 = vmatprep.subr.mxu0 0.0
      %1056 = vmatpush2.msra.mxu0 0.0
      %1057 = vmatprep.subr.mxu0 0.0
      %1058 = vmatpush2.msra.mxu0 0.0
      %1059 = vmatprep.subr.mxu0 0.0
      %1060 = vmatpush2.msra.mxu0 0.0
      %1061 = vmatprep.subr.mxu0 0.0
      %1062 = vmatpush2.msra.mxu0 0.0
      %1063 = vmatprep.subr.mxu0 0.0
      %1064 = vmatpush2.msra.mxu0 0.0
      %1065 = vmatprep.subr.mxu0 0.0
      %1066 = vmatpush2.msra.mxu0 0.0
      %1067 = vmatprep.subr.mxu0 0.0
      %1068 = vmatpush2.msra.mxu0 0.0
      %1069 = vmatprep.subr.mxu0 0.0
      %1070 = vmatpush2.msra.mxu0 0.0
      %1071 = vmatprep.subr.mxu0 0.0
      %1072 = vmatpush2.msra.mxu0 0.0
      %1073 = vmatprep.mubr.f32.mxu0 0.0
      %1074 = vmatmul.mubr.f32.gmra.mxu0 %v581
      %v1075 = vpop.f32.mrf.mxu0
      %v1076 = vadd.f32 %v962, %v1075
      %v1077 = vpop.f32.mrf.mxu0
      %1078 = vmatprep.mubr.f32.mxu0 0.0
      %1079 = vmatmul.mubr.f32.gmra.mxu0 %v584
      %v1080 = vpop.f32.mrf.mxu0
      %v1081 = vadd.f32 %v966, %v1080
      %v1082 = vpop.f32.mrf.mxu0
      %1083 = vdwg.mxu0
      %1084 = vmatprep.subr.mxu0 0.0
      %1085 = vmatpush1.msra.mxu0 0.0
      %1086 = vmatprep.subr.mxu0 0.0
      %1087 = vmatpush1.msra.mxu0 0.0
      %1088 = vmatprep.subr.mxu0 0.0
      %1089 = vmatpush1.msra.mxu0 0.0
      %1090 = vmatprep.subr.mxu0 0.0
      %1091 = vmatpush1.msra.mxu0 0.0
      %1092 = vmatprep.subr.mxu0 0.0
      %1093 = vmatpush1.msra.mxu0 0.0
      %1094 = vmatprep.subr.mxu0 0.0
      %1095 = vmatpush1.msra.mxu0 0.0
      %1096 = vmatprep.subr.mxu0 0.0
      %1097 = vmatpush1.msra.mxu0 0.0
      %1098 = vmatprep.subr.mxu0 0.0
      %1099 = vmatpush1.msra.mxu0 0.0
      %1100 = vmatprep.subr.mxu0 0.0
      %1101 = vmatpush1.msra.mxu0 0.0
      %1102 = vmatprep.subr.mxu0 0.0
      %1103 = vmatpush1.msra.mxu0 0.0
      %1104 = vmatprep.subr.mxu0 0.0
      %1105 = vmatpush1.msra.mxu0 0.0
      %1106 = vmatprep.subr.mxu0 0.0
      %1107 = vmatpush1.msra.mxu0 0.0
      %1108 = vmatprep.subr.mxu0 0.0
      %1109 = vmatpush1.msra.mxu0 0.0
      %1110 = vmatprep.subr.mxu0 0.0
      %1111 = vmatpush1.msra.mxu0 0.0
      %1112 = vmatprep.subr.mxu0 0.0
      %1113 = vmatpush1.msra.mxu0 %v1006
      %1114 = vmatprep.subr.mxu0 0.0
      %1115 = vmatpush1.msra.mxu0 %v1003
      %1116 = vmatprep.subr.mxu0 0.0
      %1117 = vmatpush2.msra.mxu0 0.0
      %1118 = vmatprep.subr.mxu0 0.0
      %1119 = vmatpush2.msra.mxu0 0.0
      %1120 = vmatprep.subr.mxu0 0.0
      %1121 = vmatpush2.msra.mxu0 0.0
      %1122 = vmatprep.subr.mxu0 0.0
      %1123 = vmatpush2.msra.mxu0 0.0
      %1124 = vmatprep.subr.mxu0 0.0
      %1125 = vmatpush2.msra.mxu0 0.0
      %1126 = vmatprep.subr.mxu0 0.0
      %1127 = vmatpush2.msra.mxu0 0.0
      %1128 = vmatprep.subr.mxu0 0.0
      %1129 = vmatpush2.msra.mxu0 0.0
      %1130 = vmatprep.subr.mxu0 0.0
      %1131 = vmatpush2.msra.mxu0 0.0
      %1132 = vmatprep.subr.mxu0 0.0
      %1133 = vmatpush2.msra.mxu0 0.0
      %1134 = vmatprep.subr.mxu0 0.0
      %1135 = vmatpush2.msra.mxu0 0.0
      %1136 = vmatprep.subr.mxu0 0.0
      %1137 = vmatpush2.msra.mxu0 0.0
      %1138 = vmatprep.subr.mxu0 0.0
      %1139 = vmatpush2.msra.mxu0 0.0
      %1140 = vmatprep.subr.mxu0 0.0
      %1141 = vmatpush2.msra.mxu0 0.0
      %1142 = vmatprep.subr.mxu0 0.0
      %1143 = vmatpush2.msra.mxu0 0.0
      %1144 = vmatprep.subr.mxu0 0.0
      %1145 = vmatpush2.msra.mxu0 0.0
      %1146 = vmatprep.subr.mxu0 0.0
      %1147 = vmatpush2.msra.mxu0 0.0
      %1148 = vmatprep.mubr.f32.mxu0 0.0
      %1149 = vmatmul.mubr.f32.gmra.mxu0 %v662
      %v1150 = vpop.f32.mrf.mxu0
      %v1151 = vadd.f32 0.0, %v1150
      %v1152 = vpop.f32.mrf.mxu0
      %1153 = vmatprep.mubr.f32.mxu0 0.0
      %1154 = vmatmul.mubr.f32.gmra.mxu0 %v665
      %v1155 = vpop.f32.mrf.mxu0
      %v1156 = vadd.f32 0.0, %v1155
      %v1157 = vpop.f32.mrf.mxu0
      %1158 = vdwg.mxu0
      %v1159 = vadd.f32 %v1076, %v1151
      %v1160 = vadd.f32 %v1081, %v1156
      %v1161 = vld [vmem:[%s5] sm:$0x1]
      %v1163 = vlaneseq
      %v1164 = vshrl.u32 %v1163, 7
      %v1165 = vsub.s32 0, %v1164
      %v1166 = vrot.slane %v1161, %v1165
      %v1168 = vmul.f32 %v1159, %v1166
      %v1169 = vmul.f32 %v1160, %v1166
      %v1170 = vld [vmem:[%s6] sm:$0x1]
      %v1172 = vlaneseq
      %v1173 = vshrl.u32 %v1172, 7
      %v1174 = vsub.s32 0, %v1173
      %v1175 = vrot.slane %v1170, %v1174
      %v1177 = vadd.f32 %v1168, %v1175
      %v1178 = vadd.f32 %v1169, %v1175
      %v1179 = vadd.f32 %v1177, %v283
      %v1180 = vadd.f32 %v1178, %v284
      %v1181 = vmax.f32 %v1179, 0.0
      %v1182 = vmax.f32 %v1180, 0.0
      %1183 = vst [vmem:[%s280] sm:$0xff] %v1181
      %1184 = vst [vmem:[%s280 + $0x8] sm:$0xff] %v1182
      %s1185 = smul.u32 2, %s18
      %p1186 = scmp.lt.s32.totalorder %s1185, 3
      %s1187 = scalar_select %p1186, %s1185, 3
      %s1188 = smul.addr %s1187, 8
      %s1189 = scalar_lea.vmem %s7, %s1188
      // Predicated region
      $region49: #{basic_block_forward.1} parent=47 // pred_check
        %p1190 = pneg %p188
      $region50: #{basic_block_forward.1} parent=47 // pred_check_branch
        %1192 = sbr.rel (%p1190) target = $region52
      $region51: #{basic_block_forward.1} parent=47 // pred_region
        %s1193 = smul.u32 2, %s18
      $region52: #{basic_block_forward.1} parent=47 // pred_fallthru
        _
    $region48: #{basic_block_forward.1} parent=5 // pred_fallthru
      _
    %p1194 = scmp.le.s32.totalorder 2, %s13
    // Predicated region
    $region53: #{basic_block_forward.1} parent=5 // pred_check
      %p1195 = pneg %p1194
    $region54: #{basic_block_forward.1} parent=5 // pred_check_branch
      %1197 = sbr.rel (%p1195) target = $region56
    $region55: #{basic_block_forward.1} parent=5 // pred_region
      %s1198 = ssub.s32 %s13, 2
      // Predicated region
      $region57: #{basic_block_forward.1} parent=55 // pred_check
        %p1199 = pneg %p194
      $region58: #{basic_block_forward.1} parent=55 // pred_check_branch
        %1201 = sbr.rel (%p1199) target = $region60
      $region59: #{basic_block_forward.1} parent=55 // pred_region
        %s1202 = smul.u32 2, %s19
        %p1203 = scmp.lt.s32.totalorder %s1202, 3
        %s1204 = scalar_select %p1203, %s1202, 3
        %s1205 = smul.addr %s1204, 8
        %s1206 = scalar_lea.vmem %s7, %s1205
      $region60: #{basic_block_forward.1} parent=55 // pred_fallthru
        _
    $region56: #{basic_block_forward.1} parent=5 // pred_fallthru
      _
  $region6: #{basic_block_forward.1} parent=0 // loop_footer
    %s17 = sadd.s32 1, %s13
  $region7: #{basic_block_forward.1} parent=0 // loop_footer_branch
    %12 = sbr.rel target = $region3
  $region8: #{basic_block_forward.1} parent=0 // loop_exit
    _

</llo_original>
